<compile_context>
chip_gen: v7x
topology: tpu7x:2x2x1
jax: 0.10.0
libtpu: 0.0.40
codegen_flags: <defaults>
</compile_context>

<pallas_src>
import functools

import jax
import jax.numpy as jnp
from jax.experimental import pallas as pl
from jax.experimental.pallas import tpu as pltpu

LANES = 128  # pad every conv output-channel dim to a full vreg lane width


# ----------------------------- Pallas kernels ------------------------------

def _gemm_bias_kernel(a_ref, w_ref, b_ref, o_ref, *, relu):
    # y = patches @ W_folded + bias   (alpha + BN already folded into W/bias)
    y = jnp.dot(a_ref[...], w_ref[...], preferred_element_type=jnp.float32)
    y = y + b_ref[...]
    if relu:
        y = jnp.maximum(y, 0.0)
    o_ref[...] = y.astype(o_ref.dtype)


def _gemm_bias_res_kernel(a_ref, w_ref, b_ref, r_ref, o_ref, *, relu):
    # conv + bias + identity shortcut (+ relu), all in one epilogue
    y = jnp.dot(a_ref[...], w_ref[...], preferred_element_type=jnp.float32)
    y = y + b_ref[...] + r_ref[...].astype(jnp.float32)
    if relu:
        y = jnp.maximum(y, 0.0)
    o_ref[...] = y.astype(o_ref.dtype)


def _gemm_bias_dsres_kernel(a_ref, w_ref, b_ref, xs_ref, wd_ref, bd_ref,
                            o_ref, *, relu):
    # conv + bias + (1x1 downsample shortcut with its own folded BN) + relu
    y = jnp.dot(a_ref[...], w_ref[...], preferred_element_type=jnp.float32)
    sc = jnp.dot(xs_ref[...], wd_ref[...], preferred_element_type=jnp.float32)
    y = y + b_ref[...] + sc + bd_ref[...]
    if relu:
        y = jnp.maximum(y, 0.0)
    o_ref[...] = y.astype(o_ref.dtype)


def _avgpool_kernel(x_ref, o_ref):
    # global average pool over the flattened spatial axis (f32 accumulate)
    o_ref[...] = jnp.mean(x_ref[...].astype(jnp.float32), axis=1)


def _matmul_kernel(a_ref, b_ref, o_ref):
    o_ref[...] = jnp.dot(a_ref[...], b_ref[...],
                         preferred_element_type=jnp.float32).astype(o_ref.dtype)


# ----------------------------- kernel wrappers ------------------------------

def _pick_tm(M):
    """One block for small M (each grid step costs ~0.35us); two 'parallel'
    steps when M is large enough so a v7x megacore can use both TCs.
    The returned tm always divides M exactly (no dropped remainder rows)."""
    half = M // 2
    if M >= 256 and M % 2 == 0 and half % 8 == 0:
        return half
    return M


def fused_conv3x3(x, wmat, bias, stride, relu, residual=None, downsample=None):
    """Fused: 3x3 conv (alpha center-tap + BN folded into wmat/bias)
    + optional shortcut (identity residual OR 1x1 downsample GEMM) + ReLU."""
    N, H, W, Cin = x.shape
    patches, Ho, Wo = _im2col_3x3(x, stride)          # (M, 9*Cin) bf16
    M, K = patches.shape
    Cp = wmat.shape[1]
    tm = _pick_tm(M)
    assert M % tm == 0
    grid = (M // tm,)
    cparams = pltpu.CompilerParams(dimension_semantics=("parallel",))
    out_shape = jax.ShapeDtypeStruct((M, Cp), x.dtype)

    a_spec = pl.BlockSpec((tm, K), lambda i: (i, 0))
    w_spec = pl.BlockSpec((K, Cp), lambda i: (0, 0))
    b_spec = pl.BlockSpec((1, Cp), lambda i: (0, 0))
    o_spec = pl.BlockSpec((tm, Cp), lambda i: (i, 0))

    if downsample is not None:
        xs, wd, bd = downsample
        y = pl.pallas_call(
            functools.partial(_gemm_bias_dsres_kernel, relu=relu),
            out_shape=out_shape, grid=grid,
            in_specs=[a_spec, w_spec, b_spec,
                      pl.BlockSpec((tm, xs.shape[1]), lambda i: (i, 0)),
                      pl.BlockSpec(wd.shape, lambda i: (0, 0)),
                      pl.BlockSpec((1, Cp), lambda i: (0, 0))],
            out_specs=o_spec, compiler_params=cparams,
        )(patches, wmat, bias, xs, wd, bd)
    elif residual is not None:
        y = pl.pallas_call(
            functools.partial(_gemm_bias_res_kernel, relu=relu),
            out_shape=out_shape, grid=grid,
            in_specs=[a_spec, w_spec, b_spec,
                      pl.BlockSpec((tm, Cp), lambda i: (i, 0))],
            out_specs=o_spec, compiler_params=cparams,
        )(patches, wmat, bias, residual)
    else:
        y = pl.pallas_call(
            functools.partial(_gemm_bias_kernel, relu=relu),
            out_shape=out_shape, grid=grid,
            in_specs=[a_spec, w_spec, b_spec],
            out_specs=o_spec, compiler_params=cparams,
        )(patches, wmat, bias)
    return y.reshape(N, Ho, Wo, Cp)


def global_avgpool(x_nhwc):
    N, H, W, C = x_nhwc.shape
    xr = x_nhwc.reshape(N, H * W, C)
    return pl.pallas_call(
        _avgpool_kernel,
        out_shape=jax.ShapeDtypeStruct((N, C), jnp.float32),
    )(xr)


def pa_forward(beta_mat, feat):
    """pa.forward (the `beta` module): 1x1 conv on (B, D) features."""
    return pl.pallas_call(
        _matmul_kernel,
        out_shape=jax.ShapeDtypeStruct((feat.shape[0], beta_mat.shape[1]),
                                       jnp.float32),
    )(feat, beta_mat)


# ------------------------------- JAX glue -----------------------------------

def _im2col_3x3(x, stride):
    """x: (N,H,W,C), pad=1, 3x3 kernel -> (N*Ho*Wo, 9*C). Column-block order is
    (kh, kw) row-major with C innermost, matching the packed weight layout."""
    N, H, W, C = x.shape
    Ho = (H - 1) // stride + 1
    Wo = (W - 1) // stride + 1
    xp = jnp.pad(x, ((0, 0), (1, 1), (1, 1), (0, 0)))
    cols = []
    for kh in range(3):
        for kw in range(3):
            sl = xp[:, kh:kh + (Ho - 1) * stride + 1:stride,
                       kw:kw + (Wo - 1) * stride + 1:stride, :]
            cols.append(sl)
    patches = jnp.concatenate(cols, axis=-1)
    return patches.reshape(N * Ho * Wo, 9 * C), Ho, Wo


def basic_block(x, bp, stride):
    # conv1 (TSA 3x3, stride) + bn1 + relu          -- one fused kernel
    out = fused_conv3x3(x, bp['w1'], bp['b1'], stride, relu=True)
    # conv2 (TSA 3x3, stride 1) + bn2 + shortcut + relu -- one fused kernel
    if 'wd' in bp:
        N, H, W, C = x.shape
        Ho = (H - 1) // stride + 1
        Wo = (W - 1) // stride + 1
        xs = x[:, ::stride, ::stride, :].reshape(N * Ho * Wo, C)
        out = fused_conv3x3(out, bp['w2'], bp['b2'], 1, relu=True,
                            downsample=(xs, bp['wd'], bp['bd']))
    else:
        N, Ho, Wo, C = out.shape          # stride == 1 here -> identity shortcut
        res = x.reshape(N * Ho * Wo, C)
        out = fused_conv3x3(out, bp['w2'], bp['b2'], 1, relu=True, residual=res)
    return out


@functools.partial(jax.jit, static_argnames=('feat_dim',))
def resnet_tsa_forward(packed, x_nchw, feat_dim):
    """resnet_tsa.forward(x) == backbone.forward(x) (features after avgpool)."""
    x = jnp.transpose(x_nchw, (0, 2, 3, 1)).astype(jnp.bfloat16)   # NCHW->NHWC
    out = fused_conv3x3(x, packed['stem_w'], packed['stem_b'], 1, relu=True)
    for li, stride in enumerate((1, 2, 2, 2)):
        out = basic_block(out, packed[f'layer{li + 1}'], stride)
    pooled = global_avgpool(out)                  # (N, 128) f32
    return pooled[:, :feat_dim]                   # drop lane padding -> (N, D)


# ---------------------------- weight prepacking ------------------------------

def _pack_conv3x3(w_oihw, alpha, bn_s, bn_b, cin_total):
    """OIHW 3x3 weight -> (9*cin_total, LANES) bf16 GEMM matrix with
    TSA alpha folded into the center tap and inference BN folded into the
    columns; plus a (1, LANES) f32 bias row."""
    cout, cin, kh, kw = w_oihw.shape
    assert (kh, kw) == (3, 3)
    w = jnp.transpose(w_oihw, (2, 3, 1, 0)).astype(jnp.float32)   # (3,3,cin,cout)
    if alpha is not None:
        # Center-tap fusion: valid because the 3x3 conv uses pad=1 and the
        # 1x1 alpha conv uses pad=0 with the same stride.
        w = w.at[1, 1].add(jnp.transpose(alpha[:, :, 0, 0], (1, 0)))
    w = w * bn_s[None, None, None, :]
    wfull = jnp.zeros((3, 3, cin_total, LANES), jnp.float32)
    wfull = wfull.at[:, :, :cin, :cout].set(w)
    wmat = wfull.reshape(9 * cin_total, LANES).astype(jnp.bfloat16)
    bias = jnp.zeros((1, LANES), jnp.float32).at[0, :cout].set(bn_b)
    return wmat, bias


def _pack_conv1x1(w_oi11, bn_s, bn_b, cin_total):
    cout, cin = w_oi11.shape[:2]
    w = jnp.transpose(w_oi11[:, :, 0, 0], (1, 0)) * bn_s[None, :]
    wfull = jnp.zeros((cin_total, LANES), jnp.float32).at[:cin, :cout].set(w)
    bias = jnp.zeros((1, LANES), jnp.float32).at[0, :cout].set(bn_b)
    return wfull.astype(jnp.bfloat16), bias


def prepack_params(p):
    """One-time weight packing (hoisted out of the forward pass)."""
    packed = {}
    packed['stem_w'], packed['stem_b'] = _pack_conv3x3(
        p['stem_w'], None, p['stem_bn_s'], p['stem_bn_b'],
        cin_total=p['stem_w'].shape[1])
    for li in range(4):
        bp = p[f'layer{li + 1}']
        blk = {}
        blk['w1'], blk['b1'] = _pack_conv3x3(bp['conv1_w'], bp['alpha1'],
                                             bp['bn1_s'], bp['bn1_b'],
                                             cin_total=LANES)
        blk['w2'], blk['b2'] = _pack_conv3x3(bp['conv2_w'], bp['alpha2'],
                                             bp['bn2_s'], bp['bn2_b'],
                                             cin_total=LANES)
        if 'down_w' in bp:
            blk['wd'], blk['bd'] = _pack_conv1x1(bp['down_w'], bp['down_bn_s'],
                                                 bp['down_bn_b'],
                                                 cin_total=LANES)
        packed[f'layer{li + 1}'] = blk
    packed['beta'] = jnp.transpose(p['beta_w'][:, :, 0, 0], (1, 0)).astype(
        jnp.float32)
    return packed


# ------------------------------ param init ----------------------------------

def init_params(key, in_ch=4, widths=(8, 16, 32, 64)):
    keys = list(jax.random.split(key, 64))
    kit = iter(keys)

    def nrm(shape, scale=0.1):
        return (scale * jax.random.normal(next(kit), shape)).astype(jnp.float32)

    p = {}
    p['stem_w'] = nrm((widths[0], in_ch, 3, 3))
    p['stem_bn_s'] = 1.0 + nrm((widths[0],), 0.05)
    p['stem_bn_b'] = nrm((widths[0],), 0.05)

    cin = widths[0]
    for li, cout in enumerate(widths):
        stride = 1 if li == 0 else 2
        blk = {
            'conv1_w': nrm((cout, cin, 3, 3)),
            'alpha1': jnp.ones((cout, cin, 1, 1), jnp.float32),  # conv_tsa.__init__: torch.ones
            'bn1_s': 1.0 + nrm((cout,), 0.05),
            'bn1_b': nrm((cout,), 0.05),
            'conv2_w': nrm((cout, cout, 3, 3)),
            'alpha2': jnp.ones((cout, cout, 1, 1), jnp.float32),
            'bn2_s': 1.0 + nrm((cout,), 0.05),
            'bn2_b': nrm((cout,), 0.05),
        }
        if stride != 1 or cin != cout:
            blk['down_w'] = nrm((cout, cin, 1, 1))
            blk['down_bn_s'] = 1.0 + nrm((cout,), 0.05)
            blk['down_bn_b'] = nrm((cout,), 0.05)
        p[f'layer{li + 1}'] = blk
        cin = cout

    feat_dim = widths[-1]
    p['beta_w'] = jnp.ones((feat_dim, feat_dim, 1, 1), jnp.float32)  # pa.__init__: torch.ones
    # fc_clu / fc_loc are initialized but never used in resnet_tsa.forward
    # (sizes scaled down from the hard-coded 512 to the small feat_dim).
    p['fc_clu_w1'] = nrm((feat_dim, feat_dim))
    p['fc_clu_b1'] = jnp.zeros((feat_dim,), jnp.float32)
    p['fc_clu_w2'] = nrm((32, feat_dim))
    p['fc_clu_b2'] = jnp.zeros((32,), jnp.float32)
    p['fc_loc_w'] = nrm((4, feat_dim))
    p['fc_loc_b'] = jnp.zeros((4,), jnp.float32)
    return p


# --------------------------------- main --------------------------------------

if __name__ == "__main__":
    key = jax.random.PRNGKey(0)
    pkey, xkey = jax.random.split(key)
    raw_params = init_params(pkey, in_ch=4)
    feat_dim = int(raw_params['beta_w'].shape[0])
    packed = prepack_params(raw_params)          # one-time weight packing

    # PyTorch-convention NCHW input: batch=2, channels=4, spatial=16x16
    x = jax.random.normal(xkey, (2, 4, 16, 16), dtype=jnp.float32)

    feat = resnet_tsa_forward(packed, x, feat_dim=feat_dim)  # == module.forward(x)
    feat = jax.block_until_ready(feat)

    # Exercise the PA (beta) kernel as well (not part of forward, kept separate).
    pa_out = jax.block_until_ready(pa_forward(packed['beta'], feat))

    assert feat.shape == (2, feat_dim), feat.shape
    assert pa_out.shape == (2, feat_dim), pa_out.shape
    assert bool(jnp.all(jnp.isfinite(feat))) and bool(jnp.all(jnp.isfinite(pa_out)))
    print("KERNEL_OK")
</pallas_src>

<mosaic_0001>
module attributes {stable_mosaic.version = 11 : i64} {
  func.func @_gemm_bias_kernel(%arg0: i32, %arg1: memref<256x36xbf16, #tpu.memory_space<vmem>>, %arg2: memref<36x128xbf16, #tpu.memory_space<vmem>>, %arg3: memref<1x128xf32, #tpu.memory_space<vmem>>, %arg4: memref<256x128xbf16, #tpu.memory_space<vmem>>) attributes {dimension_semantics = [#tpu.dimension_semantics<parallel>], iteration_bounds = array<i64: 2>, scalar_prefetch = 0 : i64, scratch_operands = 0 : i64, tpu.core_type = #tpu.core_type<tc>, window_params = [{transform_indices = @transform_0, window_bounds = array<i64: 256, 36>}, {pipeline_mode = #tpu.pipeline_mode<synchronous>, transform_indices = @transform_1, window_bounds = array<i64: 36, 128>}, {pipeline_mode = #tpu.pipeline_mode<synchronous>, transform_indices = @transform_2, window_bounds = array<i64: 1, 128>}, {transform_indices = @transform_3, window_bounds = array<i64: 256, 128>}]} {
    %c0 = arith.constant 0 : index
    %c0_0 = arith.constant 0 : index
    %0 = vector.load %arg1[%c0, %c0_0] : memref<256x36xbf16, #tpu.memory_space<vmem>>, vector<256x36xbf16>
    %c0_1 = arith.constant 0 : index
    %c0_2 = arith.constant 0 : index
    %1 = vector.load %arg2[%c0_1, %c0_2] : memref<36x128xbf16, #tpu.memory_space<vmem>>, vector<36x128xbf16>
    %cst = arith.constant dense<0.000000e+00> : vector<256x128xf32>
    %2 = tpu.matmul %0, %1, %cst {dimension_numbers = #tpu.dot_dimension_numbers<[1], [0], [0], [1], [0, 0, 1, 1], [], []>} : vector<256x36xbf16>, vector<36x128xbf16>, vector<256x128xf32> -> vector<256x128xf32>
    %c0_3 = arith.constant 0 : index
    %c0_4 = arith.constant 0 : index
    %3 = vector.load %arg3[%c0_3, %c0_4] : memref<1x128xf32, #tpu.memory_space<vmem>>, vector<1x128xf32>
    %4 = vector.broadcast %3 : vector<1x128xf32> to vector<256x128xf32>
    %5 = arith.addf %2, %4 : vector<256x128xf32>
    %cst_5 = arith.constant 0.000000e+00 : f32
    %6 = vector.broadcast %cst_5 : f32 to vector<256x128xf32>
    %7 = arith.maximumf %5, %6 : vector<256x128xf32>
    %8 = arith.truncf %7 : vector<256x128xf32> to vector<256x128xbf16>
    %c0_6 = arith.constant 0 : index
    %c0_7 = arith.constant 0 : index
    %9 = vector.load %arg4[%c0_6, %c0_7] : memref<256x128xbf16, #tpu.memory_space<vmem>>, vector<256x128xbf16>
    tpu.vector_store %arg4[%c0_6, %c0_7], %8 {strides = array<i32>} : memref<256x128xbf16, #tpu.memory_space<vmem>>, vector<256x128xbf16>,
    return
  }
  func.func @transform_0(%arg0: i32) -> (i32, i32) {
    %c0_i32 = arith.constant 0 : i32
    %c0_i32_0 = arith.constant 0 : i32
    return %arg0, %c0_i32 : i32, i32
  }
  func.func @transform_1(%arg0: i32) -> (i32, i32) {
    %c0_i32 = arith.constant 0 : i32
    %c0_i32_0 = arith.constant 0 : i32
    %c0_i32_1 = arith.constant 0 : i32
    return %c0_i32, %c0_i32_0 : i32, i32
  }
  func.func @transform_2(%arg0: i32) -> (i32, i32) {
    %c0_i32 = arith.constant 0 : i32
    %c0_i32_0 = arith.constant 0 : i32
    %c0_i32_1 = arith.constant 0 : i32
    return %c0_i32, %c0_i32_0 : i32, i32
  }
  func.func @transform_3(%arg0: i32) -> (i32, i32) {
    %c0_i32 = arith.constant 0 : i32
    %c0_i32_0 = arith.constant 0 : i32
    return %arg0, %c0_i32 : i32, i32
  }
}

module attributes {stable_mosaic.version = 11 : i64} {
  func.func @_gemm_bias_res_kernel(%arg0: i32, %arg1: memref<256x1152xbf16, #tpu.memory_space<vmem>>, %arg2: memref<1152x128xbf16, #tpu.memory_space<vmem>>, %arg3: memref<1x128xf32, #tpu.memory_space<vmem>>, %arg4: memref<256x128xbf16, #tpu.memory_space<vmem>>, %arg5: memref<256x128xbf16, #tpu.memory_space<vmem>>) attributes {dimension_semantics = [#tpu.dimension_semantics<parallel>], iteration_bounds = array<i64: 2>, scalar_prefetch = 0 : i64, scratch_operands = 0 : i64, tpu.core_type = #tpu.core_type<tc>, window_params = [{transform_indices = @transform_0, window_bounds = array<i64: 256, 1152>}, {pipeline_mode = #tpu.pipeline_mode<synchronous>, transform_indices = @transform_1, window_bounds = array<i64: 1152, 128>}, {pipeline_mode = #tpu.pipeline_mode<synchronous>, transform_indices = @transform_2, window_bounds = array<i64: 1, 128>}, {transform_indices = @transform_3, window_bounds = array<i64: 256, 128>}, {transform_indices = @transform_4, window_bounds = array<i64: 256, 128>}]} {
    %c0 = arith.constant 0 : index
    %c0_0 = arith.constant 0 : index
    %0 = vector.load %arg1[%c0, %c0_0] : memref<256x1152xbf16, #tpu.memory_space<vmem>>, vector<256x1152xbf16>
    %c0_1 = arith.constant 0 : index
    %c0_2 = arith.constant 0 : index
    %1 = vector.load %arg2[%c0_1, %c0_2] : memref<1152x128xbf16, #tpu.memory_space<vmem>>, vector<1152x128xbf16>
    %cst = arith.constant dense<0.000000e+00> : vector<256x128xf32>
    %2 = tpu.matmul %0, %1, %cst {dimension_numbers = #tpu.dot_dimension_numbers<[1], [0], [0], [1], [0, 0, 1, 1], [], []>} : vector<256x1152xbf16>, vector<1152x128xbf16>, vector<256x128xf32> -> vector<256x128xf32>
    %c0_3 = arith.constant 0 : index
    %c0_4 = arith.constant 0 : index
    %3 = vector.load %arg3[%c0_3, %c0_4] : memref<1x128xf32, #tpu.memory_space<vmem>>, vector<1x128xf32>
    %4 = vector.broadcast %3 : vector<1x128xf32> to vector<256x128xf32>
    %5 = arith.addf %2, %4 : vector<256x128xf32>
    %c0_5 = arith.constant 0 : index
    %c0_6 = arith.constant 0 : index
    %6 = vector.load %arg4[%c0_5, %c0_6] : memref<256x128xbf16, #tpu.memory_space<vmem>>, vector<256x128xbf16>
    %7 = arith.extf %6 : vector<256x128xbf16> to vector<256x128xf32>
    %8 = arith.addf %5, %7 : vector<256x128xf32>
    %cst_7 = arith.constant 0.000000e+00 : f32
    %9 = vector.broadcast %cst_7 : f32 to vector<256x128xf32>
    %10 = arith.maximumf %8, %9 : vector<256x128xf32>
    %11 = arith.truncf %10 : vector<256x128xf32> to vector<256x128xbf16>
    %c0_8 = arith.constant 0 : index
    %c0_9 = arith.constant 0 : index
    %12 = vector.load %arg5[%c0_8, %c0_9] : memref<256x128xbf16, #tpu.memory_space<vmem>>, vector<256x128xbf16>
    tpu.vector_store %arg5[%c0_8, %c0_9], %11 {strides = array<i32>} : memref<256x128xbf16, #tpu.memory_space<vmem>>, vector<256x128xbf16>,
    return
  }
  func.func @transform_0(%arg0: i32) -> (i32, i32) {
    %c0_i32 = arith.constant 0 : i32
    %c0_i32_0 = arith.constant 0 : i32
    return %arg0, %c0_i32 : i32, i32
  }
  func.func @transform_1(%arg0: i32) -> (i32, i32) {
    %c0_i32 = arith.constant 0 : i32
    %c0_i32_0 = arith.constant 0 : i32
    %c0_i32_1 = arith.constant 0 : i32
    return %c0_i32, %c0_i32_0 : i32, i32
  }
  func.func @transform_2(%arg0: i32) -> (i32, i32) {
    %c0_i32 = arith.constant 0 : i32
    %c0_i32_0 = arith.constant 0 : i32
    %c0_i32_1 = arith.constant 0 : i32
    return %c0_i32, %c0_i32_0 : i32, i32
  }
  func.func @transform_3(%arg0: i32) -> (i32, i32) {
    %c0_i32 = arith.constant 0 : i32
    %c0_i32_0 = arith.constant 0 : i32
    return %arg0, %c0_i32 : i32, i32
  }
  func.func @transform_4(%arg0: i32) -> (i32, i32) {
    %c0_i32 = arith.constant 0 : i32
    %c0_i32_0 = arith.constant 0 : i32
    return %arg0, %c0_i32 : i32, i32
  }
}

module attributes {stable_mosaic.version = 11 : i64} {
  func.func @_gemm_bias_kernel(%arg0: i32, %arg1: memref<256x1152xbf16, #tpu.memory_space<vmem>>, %arg2: memref<1152x128xbf16, #tpu.memory_space<vmem>>, %arg3: memref<1x128xf32, #tpu.memory_space<vmem>>, %arg4: memref<256x128xbf16, #tpu.memory_space<vmem>>) attributes {dimension_semantics = [#tpu.dimension_semantics<parallel>], iteration_bounds = array<i64: 2>, scalar_prefetch = 0 : i64, scratch_operands = 0 : i64, tpu.core_type = #tpu.core_type<tc>, window_params = [{transform_indices = @transform_0, window_bounds = array<i64: 256, 1152>}, {pipeline_mode = #tpu.pipeline_mode<synchronous>, transform_indices = @transform_1, window_bounds = array<i64: 1152, 128>}, {pipeline_mode = #tpu.pipeline_mode<synchronous>, transform_indices = @transform_2, window_bounds = array<i64: 1, 128>}, {transform_indices = @transform_3, window_bounds = array<i64: 256, 128>}]} {
    %c0 = arith.constant 0 : index
    %c0_0 = arith.constant 0 : index
    %0 = vector.load %arg1[%c0, %c0_0] : memref<256x1152xbf16, #tpu.memory_space<vmem>>, vector<256x1152xbf16>
    %c0_1 = arith.constant 0 : index
    %c0_2 = arith.constant 0 : index
    %1 = vector.load %arg2[%c0_1, %c0_2] : memref<1152x128xbf16, #tpu.memory_space<vmem>>, vector<1152x128xbf16>
    %cst = arith.constant dense<0.000000e+00> : vector<256x128xf32>
    %2 = tpu.matmul %0, %1, %cst {dimension_numbers = #tpu.dot_dimension_numbers<[1], [0], [0], [1], [0, 0, 1, 1], [], []>} : vector<256x1152xbf16>, vector<1152x128xbf16>, vector<256x128xf32> -> vector<256x128xf32>
    %c0_3 = arith.constant 0 : index
    %c0_4 = arith.constant 0 : index
    %3 = vector.load %arg3[%c0_3, %c0_4] : memref<1x128xf32, #tpu.memory_space<vmem>>, vector<1x128xf32>
    %4 = vector.broadcast %3 : vector<1x128xf32> to vector<256x128xf32>
    %5 = arith.addf %2, %4 : vector<256x128xf32>
    %cst_5 = arith.constant 0.000000e+00 : f32
    %6 = vector.broadcast %cst_5 : f32 to vector<256x128xf32>
    %7 = arith.maximumf %5, %6 : vector<256x128xf32>
    %8 = arith.truncf %7 : vector<256x128xf32> to vector<256x128xbf16>
    %c0_6 = arith.constant 0 : index
    %c0_7 = arith.constant 0 : index
    %9 = vector.load %arg4[%c0_6, %c0_7] : memref<256x128xbf16, #tpu.memory_space<vmem>>, vector<256x128xbf16>
    tpu.vector_store %arg4[%c0_6, %c0_7], %8 {strides = array<i32>} : memref<256x128xbf16, #tpu.memory_space<vmem>>, vector<256x128xbf16>,
    return
  }
  func.func @transform_0(%arg0: i32) -> (i32, i32) {
    %c0_i32 = arith.constant 0 : i32
    %c0_i32_0 = arith.constant 0 : i32
    return %arg0, %c0_i32 : i32, i32
  }
  func.func @transform_1(%arg0: i32) -> (i32, i32) {
    %c0_i32 = arith.constant 0 : i32
    %c0_i32_0 = arith.constant 0 : i32
    %c0_i32_1 = arith.constant 0 : i32
    return %c0_i32, %c0_i32_0 : i32, i32
  }
  func.func @transform_2(%arg0: i32) -> (i32, i32) {
    %c0_i32 = arith.constant 0 : i32
    %c0_i32_0 = arith.constant 0 : i32
    %c0_i32_1 = arith.constant 0 : i32
    return %c0_i32, %c0_i32_0 : i32, i32
  }
  func.func @transform_3(%arg0: i32) -> (i32, i32) {
    %c0_i32 = arith.constant 0 : i32
    %c0_i32_0 = arith.constant 0 : i32
    return %arg0, %c0_i32 : i32, i32
  }
}

module attributes {stable_mosaic.version = 11 : i64} {
  func.func @_gemm_bias_kernel(%arg0: i32, %arg1: memref<128x1152xbf16, #tpu.memory_space<vmem>>, %arg2: memref<1152x128xbf16, #tpu.memory_space<vmem>>, %arg3: memref<1x128xf32, #tpu.memory_space<vmem>>, %arg4: memref<128x128xbf16, #tpu.memory_space<vmem>>) attributes {dimension_semantics = [#tpu.dimension_semantics<parallel>], iteration_bounds = array<i64: 1>, scalar_prefetch = 0 : i64, scratch_operands = 0 : i64, tpu.core_type = #tpu.core_type<tc>, window_params = [{transform_indices = @transform_0, window_bounds = array<i64: 128, 1152>}, {pipeline_mode = #tpu.pipeline_mode<synchronous>, transform_indices = @transform_1, window_bounds = array<i64: 1152, 128>}, {pipeline_mode = #tpu.pipeline_mode<synchronous>, transform_indices = @transform_2, window_bounds = array<i64: 1, 128>}, {transform_indices = @transform_3, window_bounds = array<i64: 128, 128>}]} {
    %c0 = arith.constant 0 : index
    %c0_0 = arith.constant 0 : index
    %0 = vector.load %arg1[%c0, %c0_0] : memref<128x1152xbf16, #tpu.memory_space<vmem>>, vector<128x1152xbf16>
    %c0_1 = arith.constant 0 : index
    %c0_2 = arith.constant 0 : index
    %1 = vector.load %arg2[%c0_1, %c0_2] : memref<1152x128xbf16, #tpu.memory_space<vmem>>, vector<1152x128xbf16>
    %cst = arith.constant dense<0.000000e+00> : vector<128x128xf32>
    %2 = tpu.matmul %0, %1, %cst {dimension_numbers = #tpu.dot_dimension_numbers<[1], [0], [0], [1], [0, 0, 1, 1], [], []>} : vector<128x1152xbf16>, vector<1152x128xbf16>, vector<128x128xf32> -> vector<128x128xf32>
    %c0_3 = arith.constant 0 : index
    %c0_4 = arith.constant 0 : index
    %3 = vector.load %arg3[%c0_3, %c0_4] : memref<1x128xf32, #tpu.memory_space<vmem>>, vector<1x128xf32>
    %4 = vector.broadcast %3 : vector<1x128xf32> to vector<128x128xf32>
    %5 = arith.addf %2, %4 : vector<128x128xf32>
    %cst_5 = arith.constant 0.000000e+00 : f32
    %6 = vector.broadcast %cst_5 : f32 to vector<128x128xf32>
    %7 = arith.maximumf %5, %6 : vector<128x128xf32>
    %8 = arith.truncf %7 : vector<128x128xf32> to vector<128x128xbf16>
    %c0_6 = arith.constant 0 : index
    %c0_7 = arith.constant 0 : index
    %9 = vector.load %arg4[%c0_6, %c0_7] : memref<128x128xbf16, #tpu.memory_space<vmem>>, vector<128x128xbf16>
    tpu.vector_store %arg4[%c0_6, %c0_7], %8 {strides = array<i32>} : memref<128x128xbf16, #tpu.memory_space<vmem>>, vector<128x128xbf16>,
    return
  }
  func.func @transform_0(%arg0: i32) -> (i32, i32) {
    %c0_i32 = arith.constant 0 : i32
    %c0_i32_0 = arith.constant 0 : i32
    return %arg0, %c0_i32 : i32, i32
  }
  func.func @transform_1(%arg0: i32) -> (i32, i32) {
    %c0_i32 = arith.constant 0 : i32
    %c0_i32_0 = arith.constant 0 : i32
    %c0_i32_1 = arith.constant 0 : i32
    return %c0_i32, %c0_i32_0 : i32, i32
  }
  func.func @transform_2(%arg0: i32) -> (i32, i32) {
    %c0_i32 = arith.constant 0 : i32
    %c0_i32_0 = arith.constant 0 : i32
    %c0_i32_1 = arith.constant 0 : i32
    return %c0_i32, %c0_i32_0 : i32, i32
  }
  func.func @transform_3(%arg0: i32) -> (i32, i32) {
    %c0_i32 = arith.constant 0 : i32
    %c0_i32_0 = arith.constant 0 : i32
    return %arg0, %c0_i32 : i32, i32
  }
}

module attributes {stable_mosaic.version = 11 : i64} {
  func.func @_gemm_bias_dsres_kernel(%arg0: i32, %arg1: memref<128x1152xbf16, #tpu.memory_space<vmem>>, %arg2: memref<1152x128xbf16, #tpu.memory_space<vmem>>, %arg3: memref<1x128xf32, #tpu.memory_space<vmem>>, %arg4: memref<128x128xbf16, #tpu.memory_space<vmem>>, %arg5: memref<128x128xbf16, #tpu.memory_space<vmem>>, %arg6: memref<1x128xf32, #tpu.memory_space<vmem>>, %arg7: memref<128x128xbf16, #tpu.memory_space<vmem>>) attributes {dimension_semantics = [#tpu.dimension_semantics<parallel>], iteration_bounds = array<i64: 1>, scalar_prefetch = 0 : i64, scratch_operands = 0 : i64, tpu.core_type = #tpu.core_type<tc>, window_params = [{transform_indices = @transform_0, window_bounds = array<i64: 128, 1152>}, {pipeline_mode = #tpu.pipeline_mode<synchronous>, transform_indices = @transform_1, window_bounds = array<i64: 1152, 128>}, {pipeline_mode = #tpu.pipeline_mode<synchronous>, transform_indices = @transform_2, window_bounds = array<i64: 1, 128>}, {transform_indices = @transform_3, window_bounds = array<i64: 128, 128>}, {pipeline_mode = #tpu.pipeline_mode<synchronous>, transform_indices = @transform_4, window_bounds = array<i64: 128, 128>}, {pipeline_mode = #tpu.pipeline_mode<synchronous>, transform_indices = @transform_5, window_bounds = array<i64: 1, 128>}, {transform_indices = @transform_6, window_bounds = array<i64: 128, 128>}]} {
    %c0 = arith.constant 0 : index
    %c0_0 = arith.constant 0 : index
    %0 = vector.load %arg1[%c0, %c0_0] : memref<128x1152xbf16, #tpu.memory_space<vmem>>, vector<128x1152xbf16>
    %c0_1 = arith.constant 0 : index
    %c0_2 = arith.constant 0 : index
    %1 = vector.load %arg2[%c0_1, %c0_2] : memref<1152x128xbf16, #tpu.memory_space<vmem>>, vector<1152x128xbf16>
    %cst = arith.constant dense<0.000000e+00> : vector<128x128xf32>
    %2 = tpu.matmul %0, %1, %cst {dimension_numbers = #tpu.dot_dimension_numbers<[1], [0], [0], [1], [0, 0, 1, 1], [], []>} : vector<128x1152xbf16>, vector<1152x128xbf16>, vector<128x128xf32> -> vector<128x128xf32>
    %c0_3 = arith.constant 0 : index
    %c0_4 = arith.constant 0 : index
    %3 = vector.load %arg4[%c0_3, %c0_4] : memref<128x128xbf16, #tpu.memory_space<vmem>>, vector<128x128xbf16>
    %c0_5 = arith.constant 0 : index
    %c0_6 = arith.constant 0 : index
    %4 = vector.load %arg5[%c0_5, %c0_6] : memref<128x128xbf16, #tpu.memory_space<vmem>>, vector<128x128xbf16>
    %cst_7 = arith.constant dense<0.000000e+00> : vector<128x128xf32>
    %5 = tpu.matmul %3, %4, %cst_7 {dimension_numbers = #tpu.dot_dimension_numbers<[1], [0], [0], [1], [0, 0, 1, 1], [], []>} : vector<128x128xbf16>, vector<128x128xbf16>, vector<128x128xf32> -> vector<128x128xf32>
    %c0_8 = arith.constant 0 : index
    %c0_9 = arith.constant 0 : index
    %6 = vector.load %arg3[%c0_8, %c0_9] : memref<1x128xf32, #tpu.memory_space<vmem>>, vector<1x128xf32>
    %7 = vector.broadcast %6 : vector<1x128xf32> to vector<128x128xf32>
    %8 = arith.addf %2, %7 : vector<128x128xf32>
    %9 = arith.addf %8, %5 : vector<128x128xf32>
    %c0_10 = arith.constant 0 : index
    %c0_11 = arith.constant 0 : index
    %10 = vector.load %arg6[%c0_10, %c0_11] : memref<1x128xf32, #tpu.memory_space<vmem>>, vector<1x128xf32>
    %11 = vector.broadcast %10 : vector<1x128xf32> to vector<128x128xf32>
    %12 = arith.addf %9, %11 : vector<128x128xf32>
    %cst_12 = arith.constant 0.000000e+00 : f32
    %13 = vector.broadcast %cst_12 : f32 to vector<128x128xf32>
    %14 = arith.maximumf %12, %13 : vector<128x128xf32>
    %15 = arith.truncf %14 : vector<128x128xf32> to vector<128x128xbf16>
    %c0_13 = arith.constant 0 : index
    %c0_14 = arith.constant 0 : index
    %16 = vector.load %arg7[%c0_13, %c0_14] : memref<128x128xbf16, #tpu.memory_space<vmem>>, vector<128x128xbf16>
    tpu.vector_store %arg7[%c0_13, %c0_14], %15 {strides = array<i32>} : memref<128x128xbf16, #tpu.memory_space<vmem>>, vector<128x128xbf16>,
    return
  }
  func.func @transform_0(%arg0: i32) -> (i32, i32) {
    %c0_i32 = arith.constant 0 : i32
    %c0_i32_0 = arith.constant 0 : i32
    return %arg0, %c0_i32 : i32, i32
  }
  func.func @transform_1(%arg0: i32) -> (i32, i32) {
    %c0_i32 = arith.constant 0 : i32
    %c0_i32_0 = arith.constant 0 : i32
    %c0_i32_1 = arith.constant 0 : i32
    return %c0_i32, %c0_i32_0 : i32, i32
  }
  func.func @transform_2(%arg0: i32) -> (i32, i32) {
    %c0_i32 = arith.constant 0 : i32
    %c0_i32_0 = arith.constant 0 : i32
    %c0_i32_1 = arith.constant 0 : i32
    return %c0_i32, %c0_i32_0 : i32, i32
  }
  func.func @transform_3(%arg0: i32) -> (i32, i32) {
    %c0_i32 = arith.constant 0 : i32
    %c0_i32_0 = arith.constant 0 : i32
    return %arg0, %c0_i32 : i32, i32
  }
  func.func @transform_4(%arg0: i32) -> (i32, i32) {
    %c0_i32 = arith.constant 0 : i32
    %c0_i32_0 = arith.constant 0 : i32
    %c0_i32_1 = arith.constant 0 : i32
    return %c0_i32, %c0_i32_0 : i32, i32
  }
  func.func @transform_5(%arg0: i32) -> (i32, i32) {
    %c0_i32 = arith.constant 0 : i32
    %c0_i32_0 = arith.constant 0 : i32
    %c0_i32_1 = arith.constant 0 : i32
    return %c0_i32, %c0_i32_0 : i32, i32
  }
  func.func @transform_6(%arg0: i32) -> (i32, i32) {
    %c0_i32 = arith.constant 0 : i32
    %c0_i32_0 = arith.constant 0 : i32
    return %arg0, %c0_i32 : i32, i32
  }
}

module attributes {stable_mosaic.version = 11 : i64} {
  func.func @_gemm_bias_kernel(%arg0: i32, %arg1: memref<32x1152xbf16, #tpu.memory_space<vmem>>, %arg2: memref<1152x128xbf16, #tpu.memory_space<vmem>>, %arg3: memref<1x128xf32, #tpu.memory_space<vmem>>, %arg4: memref<32x128xbf16, #tpu.memory_space<vmem>>) attributes {dimension_semantics = [#tpu.dimension_semantics<parallel>], iteration_bounds = array<i64: 1>, scalar_prefetch = 0 : i64, scratch_operands = 0 : i64, tpu.core_type = #tpu.core_type<tc>, window_params = [{transform_indices = @transform_0, window_bounds = array<i64: 32, 1152>}, {pipeline_mode = #tpu.pipeline_mode<synchronous>, transform_indices = @transform_1, window_bounds = array<i64: 1152, 128>}, {pipeline_mode = #tpu.pipeline_mode<synchronous>, transform_indices = @transform_2, window_bounds = array<i64: 1, 128>}, {transform_indices = @transform_3, window_bounds = array<i64: 32, 128>}]} {
    %c0 = arith.constant 0 : index
    %c0_0 = arith.constant 0 : index
    %0 = vector.load %arg1[%c0, %c0_0] : memref<32x1152xbf16, #tpu.memory_space<vmem>>, vector<32x1152xbf16>
    %c0_1 = arith.constant 0 : index
    %c0_2 = arith.constant 0 : index
    %1 = vector.load %arg2[%c0_1, %c0_2] : memref<1152x128xbf16, #tpu.memory_space<vmem>>, vector<1152x128xbf16>
    %cst = arith.constant dense<0.000000e+00> : vector<32x128xf32>
    %2 = tpu.matmul %0, %1, %cst {dimension_numbers = #tpu.dot_dimension_numbers<[1], [0], [0], [1], [0, 0, 1, 1], [], []>} : vector<32x1152xbf16>, vector<1152x128xbf16>, vector<32x128xf32> -> vector<32x128xf32>
    %c0_3 = arith.constant 0 : index
    %c0_4 = arith.constant 0 : index
    %3 = vector.load %arg3[%c0_3, %c0_4] : memref<1x128xf32, #tpu.memory_space<vmem>>, vector<1x128xf32>
    %4 = vector.broadcast %3 : vector<1x128xf32> to vector<32x128xf32>
    %5 = arith.addf %2, %4 : vector<32x128xf32>
    %cst_5 = arith.constant 0.000000e+00 : f32
    %6 = vector.broadcast %cst_5 : f32 to vector<32x128xf32>
    %7 = arith.maximumf %5, %6 : vector<32x128xf32>
    %8 = arith.truncf %7 : vector<32x128xf32> to vector<32x128xbf16>
    %c0_6 = arith.constant 0 : index
    %c0_7 = arith.constant 0 : index
    %9 = vector.load %arg4[%c0_6, %c0_7] : memref<32x128xbf16, #tpu.memory_space<vmem>>, vector<32x128xbf16>
    tpu.vector_store %arg4[%c0_6, %c0_7], %8 {strides = array<i32>} : memref<32x128xbf16, #tpu.memory_space<vmem>>, vector<32x128xbf16>,
    return
  }
  func.func @transform_0(%arg0: i32) -> (i32, i32) {
    %c0_i32 = arith.constant 0 : i32
    %c0_i32_0 = arith.constant 0 : i32
    return %arg0, %c0_i32 : i32, i32
  }
  func.func @transform_1(%arg0: i32) -> (i32, i32) {
    %c0_i32 = arith.constant 0 : i32
    %c0_i32_0 = arith.constant 0 : i32
    %c0_i32_1 = arith.constant 0 : i32
    return %c0_i32, %c0_i32_0 : i32, i32
  }
  func.func @transform_2(%arg0: i32) -> (i32, i32) {
    %c0_i32 = arith.constant 0 : i32
    %c0_i32_0 = arith.constant 0 : i32
    %c0_i32_1 = arith.constant 0 : i32
    return %c0_i32, %c0_i32_0 : i32, i32
  }
  func.func @transform_3(%arg0: i32) -> (i32, i32) {
    %c0_i32 = arith.constant 0 : i32
    %c0_i32_0 = arith.constant 0 : i32
    return %arg0, %c0_i32 : i32, i32
  }
}

module attributes {stable_mosaic.version = 11 : i64} {
  func.func @_gemm_bias_dsres_kernel(%arg0: i32, %arg1: memref<32x1152xbf16, #tpu.memory_space<vmem>>, %arg2: memref<1152x128xbf16, #tpu.memory_space<vmem>>, %arg3: memref<1x128xf32, #tpu.memory_space<vmem>>, %arg4: memref<32x128xbf16, #tpu.memory_space<vmem>>, %arg5: memref<128x128xbf16, #tpu.memory_space<vmem>>, %arg6: memref<1x128xf32, #tpu.memory_space<vmem>>, %arg7: memref<32x128xbf16, #tpu.memory_space<vmem>>) attributes {dimension_semantics = [#tpu.dimension_semantics<parallel>], iteration_bounds = array<i64: 1>, scalar_prefetch = 0 : i64, scratch_operands = 0 : i64, tpu.core_type = #tpu.core_type<tc>, window_params = [{transform_indices = @transform_0, window_bounds = array<i64: 32, 1152>}, {pipeline_mode = #tpu.pipeline_mode<synchronous>, transform_indices = @transform_1, window_bounds = array<i64: 1152, 128>}, {pipeline_mode = #tpu.pipeline_mode<synchronous>, transform_indices = @transform_2, window_bounds = array<i64: 1, 128>}, {transform_indices = @transform_3, window_bounds = array<i64: 32, 128>}, {pipeline_mode = #tpu.pipeline_mode<synchronous>, transform_indices = @transform_4, window_bounds = array<i64: 128, 128>}, {pipeline_mode = #tpu.pipeline_mode<synchronous>, transform_indices = @transform_5, window_bounds = array<i64: 1, 128>}, {transform_indices = @transform_6, window_bounds = array<i64: 32, 128>}]} {
    %c0 = arith.constant 0 : index
    %c0_0 = arith.constant 0 : index
    %0 = vector.load %arg1[%c0, %c0_0] : memref<32x1152xbf16, #tpu.memory_space<vmem>>, vector<32x1152xbf16>
    %c0_1 = arith.constant 0 : index
    %c0_2 = arith.constant 0 : index
    %1 = vector.load %arg2[%c0_1, %c0_2] : memref<1152x128xbf16, #tpu.memory_space<vmem>>, vector<1152x128xbf16>
    %cst = arith.constant dense<0.000000e+00> : vector<32x128xf32>
    %2 = tpu.matmul %0, %1, %cst {dimension_numbers = #tpu.dot_dimension_numbers<[1], [0], [0], [1], [0, 0, 1, 1], [], []>} : vector<32x1152xbf16>, vector<1152x128xbf16>, vector<32x128xf32> -> vector<32x128xf32>
    %c0_3 = arith.constant 0 : index
    %c0_4 = arith.constant 0 : index
    %3 = vector.load %arg4[%c0_3, %c0_4] : memref<32x128xbf16, #tpu.memory_space<vmem>>, vector<32x128xbf16>
    %c0_5 = arith.constant 0 : index
    %c0_6 = arith.constant 0 : index
    %4 = vector.load %arg5[%c0_5, %c0_6] : memref<128x128xbf16, #tpu.memory_space<vmem>>, vector<128x128xbf16>
    %cst_7 = arith.constant dense<0.000000e+00> : vector<32x128xf32>
    %5 = tpu.matmul %3, %4, %cst_7 {dimension_numbers = #tpu.dot_dimension_numbers<[1], [0], [0], [1], [0, 0, 1, 1], [], []>} : vector<32x128xbf16>, vector<128x128xbf16>, vector<32x128xf32> -> vector<32x128xf32>
    %c0_8 = arith.constant 0 : index
    %c0_9 = arith.constant 0 : index
    %6 = vector.load %arg3[%c0_8, %c0_9] : memref<1x128xf32, #tpu.memory_space<vmem>>, vector<1x128xf32>
    %7 = vector.broadcast %6 : vector<1x128xf32> to vector<32x128xf32>
    %8 = arith.addf %2, %7 : vector<32x128xf32>
    %9 = arith.addf %8, %5 : vector<32x128xf32>
    %c0_10 = arith.constant 0 : index
    %c0_11 = arith.constant 0 : index
    %10 = vector.load %arg6[%c0_10, %c0_11] : memref<1x128xf32, #tpu.memory_space<vmem>>, vector<1x128xf32>
    %11 = vector.broadcast %10 : vector<1x128xf32> to vector<32x128xf32>
    %12 = arith.addf %9, %11 : vector<32x128xf32>
    %cst_12 = arith.constant 0.000000e+00 : f32
    %13 = vector.broadcast %cst_12 : f32 to vector<32x128xf32>
    %14 = arith.maximumf %12, %13 : vector<32x128xf32>
    %15 = arith.truncf %14 : vector<32x128xf32> to vector<32x128xbf16>
    %c0_13 = arith.constant 0 : index
    %c0_14 = arith.constant 0 : index
    %16 = vector.load %arg7[%c0_13, %c0_14] : memref<32x128xbf16, #tpu.memory_space<vmem>>, vector<32x128xbf16>
    tpu.vector_store %arg7[%c0_13, %c0_14], %15 {strides = array<i32>} : memref<32x128xbf16, #tpu.memory_space<vmem>>, vector<32x128xbf16>,
    return
  }
  func.func @transform_0(%arg0: i32) -> (i32, i32) {
    %c0_i32 = arith.constant 0 : i32
    %c0_i32_0 = arith.constant 0 : i32
    return %arg0, %c0_i32 : i32, i32
  }
  func.func @transform_1(%arg0: i32) -> (i32, i32) {
    %c0_i32 = arith.constant 0 : i32
    %c0_i32_0 = arith.constant 0 : i32
    %c0_i32_1 = arith.constant 0 : i32
    return %c0_i32, %c0_i32_0 : i32, i32
  }
  func.func @transform_2(%arg0: i32) -> (i32, i32) {
    %c0_i32 = arith.constant 0 : i32
    %c0_i32_0 = arith.constant 0 : i32
    %c0_i32_1 = arith.constant 0 : i32
    return %c0_i32, %c0_i32_0 : i32, i32
  }
  func.func @transform_3(%arg0: i32) -> (i32, i32) {
    %c0_i32 = arith.constant 0 : i32
    %c0_i32_0 = arith.constant 0 : i32
    return %arg0, %c0_i32 : i32, i32
  }
  func.func @transform_4(%arg0: i32) -> (i32, i32) {
    %c0_i32 = arith.constant 0 : i32
    %c0_i32_0 = arith.constant 0 : i32
    %c0_i32_1 = arith.constant 0 : i32
    return %c0_i32, %c0_i32_0 : i32, i32
  }
  func.func @transform_5(%arg0: i32) -> (i32, i32) {
    %c0_i32 = arith.constant 0 : i32
    %c0_i32_0 = arith.constant 0 : i32
    %c0_i32_1 = arith.constant 0 : i32
    return %c0_i32, %c0_i32_0 : i32, i32
  }
  func.func @transform_6(%arg0: i32) -> (i32, i32) {
    %c0_i32 = arith.constant 0 : i32
    %c0_i32_0 = arith.constant 0 : i32
    return %arg0, %c0_i32 : i32, i32
  }
}

module attributes {stable_mosaic.version = 11 : i64} {
  func.func @_gemm_bias_kernel(%arg0: i32, %arg1: memref<8x1152xbf16, #tpu.memory_space<vmem>>, %arg2: memref<1152x128xbf16, #tpu.memory_space<vmem>>, %arg3: memref<1x128xf32, #tpu.memory_space<vmem>>, %arg4: memref<8x128xbf16, #tpu.memory_space<vmem>>) attributes {dimension_semantics = [#tpu.dimension_semantics<parallel>], iteration_bounds = array<i64: 1>, scalar_prefetch = 0 : i64, scratch_operands = 0 : i64, tpu.core_type = #tpu.core_type<tc>, window_params = [{transform_indices = @transform_0, window_bounds = array<i64: 8, 1152>}, {pipeline_mode = #tpu.pipeline_mode<synchronous>, transform_indices = @transform_1, window_bounds = array<i64: 1152, 128>}, {pipeline_mode = #tpu.pipeline_mode<synchronous>, transform_indices = @transform_2, window_bounds = array<i64: 1, 128>}, {transform_indices = @transform_3, window_bounds = array<i64: 8, 128>}]} {
    %c0 = arith.constant 0 : index
    %c0_0 = arith.constant 0 : index
    %0 = vector.load %arg1[%c0, %c0_0] : memref<8x1152xbf16, #tpu.memory_space<vmem>>, vector<8x1152xbf16>
    %c0_1 = arith.constant 0 : index
    %c0_2 = arith.constant 0 : index
    %1 = vector.load %arg2[%c0_1, %c0_2] : memref<1152x128xbf16, #tpu.memory_space<vmem>>, vector<1152x128xbf16>
    %cst = arith.constant dense<0.000000e+00> : vector<8x128xf32>
    %2 = tpu.matmul %0, %1, %cst {dimension_numbers = #tpu.dot_dimension_numbers<[1], [0], [0], [1], [0, 0, 1, 1], [], []>} : vector<8x1152xbf16>, vector<1152x128xbf16>, vector<8x128xf32> -> vector<8x128xf32>
    %c0_3 = arith.constant 0 : index
    %c0_4 = arith.constant 0 : index
    %3 = vector.load %arg3[%c0_3, %c0_4] : memref<1x128xf32, #tpu.memory_space<vmem>>, vector<1x128xf32>
    %4 = vector.broadcast %3 : vector<1x128xf32> to vector<8x128xf32>
    %5 = arith.addf %2, %4 : vector<8x128xf32>
    %cst_5 = arith.constant 0.000000e+00 : f32
    %6 = vector.broadcast %cst_5 : f32 to vector<8x128xf32>
    %7 = arith.maximumf %5, %6 : vector<8x128xf32>
    %8 = arith.truncf %7 : vector<8x128xf32> to vector<8x128xbf16>
    %c0_6 = arith.constant 0 : index
    %c0_7 = arith.constant 0 : index
    %9 = vector.load %arg4[%c0_6, %c0_7] : memref<8x128xbf16, #tpu.memory_space<vmem>>, vector<8x128xbf16>
    tpu.vector_store %arg4[%c0_6, %c0_7], %8 {strides = array<i32>} : memref<8x128xbf16, #tpu.memory_space<vmem>>, vector<8x128xbf16>,
    return
  }
  func.func @transform_0(%arg0: i32) -> (i32, i32) {
    %c0_i32 = arith.constant 0 : i32
    %c0_i32_0 = arith.constant 0 : i32
    return %arg0, %c0_i32 : i32, i32
  }
  func.func @transform_1(%arg0: i32) -> (i32, i32) {
    %c0_i32 = arith.constant 0 : i32
    %c0_i32_0 = arith.constant 0 : i32
    %c0_i32_1 = arith.constant 0 : i32
    return %c0_i32, %c0_i32_0 : i32, i32
  }
  func.func @transform_2(%arg0: i32) -> (i32, i32) {
    %c0_i32 = arith.constant 0 : i32
    %c0_i32_0 = arith.constant 0 : i32
    %c0_i32_1 = arith.constant 0 : i32
    return %c0_i32, %c0_i32_0 : i32, i32
  }
  func.func @transform_3(%arg0: i32) -> (i32, i32) {
    %c0_i32 = arith.constant 0 : i32
    %c0_i32_0 = arith.constant 0 : i32
    return %arg0, %c0_i32 : i32, i32
  }
}

module attributes {stable_mosaic.version = 11 : i64} {
  func.func @_avgpool_kernel(%arg0: memref<2x4x128xbf16, #tpu.memory_space<vmem>>, %arg1: memref<2x128xf32, #tpu.memory_space<vmem>>) attributes {dimension_semantics = [], scalar_prefetch = 0 : i64, scratch_operands = 0 : i64, tpu.core_type = #tpu.core_type<tc>} {
    %c0 = arith.constant 0 : index
    %c0_0 = arith.constant 0 : index
    %c0_1 = arith.constant 0 : index
    %0 = vector.load %arg0[%c0, %c0_0, %c0_1] : memref<2x4x128xbf16, #tpu.memory_space<vmem>>, vector<2x4x128xbf16>
    %1 = arith.extf %0 : vector<2x4x128xbf16> to vector<2x4x128xf32>
    %cst = arith.constant dense<0.000000e+00> : vector<2x128xf32>
    %2 = vector.multi_reduction <add>, %1, %cst [1] : vector<2x4x128xf32> to vector<2x128xf32>
    %cst_2 = arith.constant 4.000000e+00 : f32
    %3 = vector.broadcast %cst_2 : f32 to vector<2x128xf32>
    %4 = arith.divf %2, %3 : vector<2x128xf32>
    %c0_3 = arith.constant 0 : index
    %c0_4 = arith.constant 0 : index
    %5 = vector.load %arg1[%c0_3, %c0_4] : memref<2x128xf32, #tpu.memory_space<vmem>>, vector<2x128xf32>
    tpu.vector_store %arg1[%c0_3, %c0_4], %4 {strides = array<i32>} : memref<2x128xf32, #tpu.memory_space<vmem>>, vector<2x128xf32>,
    return
  }
}

module attributes {stable_mosaic.version = 11 : i64} {
  func.func @_gemm_bias_dsres_kernel(%arg0: i32, %arg1: memref<8x1152xbf16, #tpu.memory_space<vmem>>, %arg2: memref<1152x128xbf16, #tpu.memory_space<vmem>>, %arg3: memref<1x128xf32, #tpu.memory_space<vmem>>, %arg4: memref<8x128xbf16, #tpu.memory_space<vmem>>, %arg5: memref<128x128xbf16, #tpu.memory_space<vmem>>, %arg6: memref<1x128xf32, #tpu.memory_space<vmem>>, %arg7: memref<8x128xbf16, #tpu.memory_space<vmem>>) attributes {dimension_semantics = [#tpu.dimension_semantics<parallel>], iteration_bounds = array<i64: 1>, scalar_prefetch = 0 : i64, scratch_operands = 0 : i64, tpu.core_type = #tpu.core_type<tc>, window_params = [{transform_indices = @transform_0, window_bounds = array<i64: 8, 1152>}, {pipeline_mode = #tpu.pipeline_mode<synchronous>, transform_indices = @transform_1, window_bounds = array<i64: 1152, 128>}, {pipeline_mode = #tpu.pipeline_mode<synchronous>, transform_indices = @transform_2, window_bounds = array<i64: 1, 128>}, {transform_indices = @transform_3, window_bounds = array<i64: 8, 128>}, {pipeline_mode = #tpu.pipeline_mode<synchronous>, transform_indices = @transform_4, window_bounds = array<i64: 128, 128>}, {pipeline_mode = #tpu.pipeline_mode<synchronous>, transform_indices = @transform_5, window_bounds = array<i64: 1, 128>}, {transform_indices = @transform_6, window_bounds = array<i64: 8, 128>}]} {
    %c0 = arith.constant 0 : index
    %c0_0 = arith.constant 0 : index
    %0 = vector.load %arg1[%c0, %c0_0] : memref<8x1152xbf16, #tpu.memory_space<vmem>>, vector<8x1152xbf16>
    %c0_1 = arith.constant 0 : index
    %c0_2 = arith.constant 0 : index
    %1 = vector.load %arg2[%c0_1, %c0_2] : memref<1152x128xbf16, #tpu.memory_space<vmem>>, vector<1152x128xbf16>
    %cst = arith.constant dense<0.000000e+00> : vector<8x128xf32>
    %2 = tpu.matmul %0, %1, %cst {dimension_numbers = #tpu.dot_dimension_numbers<[1], [0], [0], [1], [0, 0, 1, 1], [], []>} : vector<8x1152xbf16>, vector<1152x128xbf16>, vector<8x128xf32> -> vector<8x128xf32>
    %c0_3 = arith.constant 0 : index
    %c0_4 = arith.constant 0 : index
    %3 = vector.load %arg4[%c0_3, %c0_4] : memref<8x128xbf16, #tpu.memory_space<vmem>>, vector<8x128xbf16>
    %c0_5 = arith.constant 0 : index
    %c0_6 = arith.constant 0 : index
    %4 = vector.load %arg5[%c0_5, %c0_6] : memref<128x128xbf16, #tpu.memory_space<vmem>>, vector<128x128xbf16>
    %cst_7 = arith.constant dense<0.000000e+00> : vector<8x128xf32>
    %5 = tpu.matmul %3, %4, %cst_7 {dimension_numbers = #tpu.dot_dimension_numbers<[1], [0], [0], [1], [0, 0, 1, 1], [], []>} : vector<8x128xbf16>, vector<128x128xbf16>, vector<8x128xf32> -> vector<8x128xf32>
    %c0_8 = arith.constant 0 : index
    %c0_9 = arith.constant 0 : index
    %6 = vector.load %arg3[%c0_8, %c0_9] : memref<1x128xf32, #tpu.memory_space<vmem>>, vector<1x128xf32>
    %7 = vector.broadcast %6 : vector<1x128xf32> to vector<8x128xf32>
    %8 = arith.addf %2, %7 : vector<8x128xf32>
    %9 = arith.addf %8, %5 : vector<8x128xf32>
    %c0_10 = arith.constant 0 : index
    %c0_11 = arith.constant 0 : index
    %10 = vector.load %arg6[%c0_10, %c0_11] : memref<1x128xf32, #tpu.memory_space<vmem>>, vector<1x128xf32>
    %11 = vector.broadcast %10 : vector<1x128xf32> to vector<8x128xf32>
    %12 = arith.addf %9, %11 : vector<8x128xf32>
    %cst_12 = arith.constant 0.000000e+00 : f32
    %13 = vector.broadcast %cst_12 : f32 to vector<8x128xf32>
    %14 = arith.maximumf %12, %13 : vector<8x128xf32>
    %15 = arith.truncf %14 : vector<8x128xf32> to vector<8x128xbf16>
    %c0_13 = arith.constant 0 : index
    %c0_14 = arith.constant 0 : index
    %16 = vector.load %arg7[%c0_13, %c0_14] : memref<8x128xbf16, #tpu.memory_space<vmem>>, vector<8x128xbf16>
    tpu.vector_store %arg7[%c0_13, %c0_14], %15 {strides = array<i32>} : memref<8x128xbf16, #tpu.memory_space<vmem>>, vector<8x128xbf16>,
    return
  }
  func.func @transform_0(%arg0: i32) -> (i32, i32) {
    %c0_i32 = arith.constant 0 : i32
    %c0_i32_0 = arith.constant 0 : i32
    return %arg0, %c0_i32 : i32, i32
  }
  func.func @transform_1(%arg0: i32) -> (i32, i32) {
    %c0_i32 = arith.constant 0 : i32
    %c0_i32_0 = arith.constant 0 : i32
    %c0_i32_1 = arith.constant 0 : i32
    return %c0_i32, %c0_i32_0 : i32, i32
  }
  func.func @transform_2(%arg0: i32) -> (i32, i32) {
    %c0_i32 = arith.constant 0 : i32
    %c0_i32_0 = arith.constant 0 : i32
    %c0_i32_1 = arith.constant 0 : i32
    return %c0_i32, %c0_i32_0 : i32, i32
  }
  func.func @transform_3(%arg0: i32) -> (i32, i32) {
    %c0_i32 = arith.constant 0 : i32
    %c0_i32_0 = arith.constant 0 : i32
    return %arg0, %c0_i32 : i32, i32
  }
  func.func @transform_4(%arg0: i32) -> (i32, i32) {
    %c0_i32 = arith.constant 0 : i32
    %c0_i32_0 = arith.constant 0 : i32
    %c0_i32_1 = arith.constant 0 : i32
    return %c0_i32, %c0_i32_0 : i32, i32
  }
  func.func @transform_5(%arg0: i32) -> (i32, i32) {
    %c0_i32 = arith.constant 0 : i32
    %c0_i32_0 = arith.constant 0 : i32
    %c0_i32_1 = arith.constant 0 : i32
    return %c0_i32, %c0_i32_0 : i32, i32
  }
  func.func @transform_6(%arg0: i32) -> (i32, i32) {
    %c0_i32 = arith.constant 0 : i32
    %c0_i32_0 = arith.constant 0 : i32
    return %arg0, %c0_i32 : i32, i32
  }
}

</mosaic_0001>

<llo_original>
// kernel: resnet_tsa_forward.10
$region0: #{resnet_tsa_forward.10}
  #allocation0 [shape = 'u32[]', space=smem, size = 0x4, offset = 0x4, fixed_abs, tag = 'smem constant byte address 0x4 - core index']
  #allocation1 [shape = 'u32[144,128]{1,0:T(1,128)}', space=vmem, size = 0x12000, scoped, tag = 'internal scratch']
  %s0 = inlined_call_operand.vmem [shape: bf16[512,36], index: 0, kind: input, shape index: {}]
  %s1 = inlined_call_operand.vmem [shape: bf16[36,128], index: 1, kind: input, shape index: {}]
  %s2 = inlined_call_operand.vmem [shape: f32[1,128], index: 2, kind: input, shape index: {}]
  %s3 = inlined_call_operand.vmem [shape: bf16[512,128], index: 3, kind: output, shape index: {}]
  %s4 = sld [smem:[#allocation0]]
  $region45: #{resnet_tsa_forward.10} parent=0
    _
  %s6 = ssub.s32 1, %s4
  %s7 = scalar_select 0, %s6, %s4
  loop: start=0, step=1, limit=4
  $region2: #{resnet_tsa_forward.10} parent=0 // loop_pre_header
    _
  $region3: #{resnet_tsa_forward.10} parent=0 // loop_header
    %s9 = sphi 0, %s13
    %p10 = scmp.ge.s32.totalorder %s9, 4
    %s19 = sphi 0, %s21
    %s22 = sphi 0, %s19
    %s23 = sphi 0, %s22
    %s39 = sphi 0, %s23
    %s43 = sphi 0, %s43
    %s45 = sphi 0, %s43
    %s46 = sphi 0, %s45
    %s60 = sphi 0, %s46
    %s64 = sphi 0, %s64
    %s66 = sphi 0, %s64
    %s67 = sphi 0, %s66
    %s81 = sphi 0, %s67
    %s87 = sphi 0, %s89
    %s90 = sphi 0, %s87
    %s91 = sphi 0, %s90
    %s107 = sphi 0, %s91
  $region4: #{resnet_tsa_forward.10} parent=0 // loop_header_branch
    %12 = sbr.rel (%p10) target = $region8
  $region5: #{resnet_tsa_forward.10} parent=0 // loop_body
    %s14 = ssub.s32 %s9, 1
    %s15 = ssub.s32 %s9, 2
    %s16 = sadd.s32 %s9, 1
    %s17 = ssub.s32 %s9, %s16
    %p18 = scmp.eq.s32.totalorder %s17, 0
    %s20 = sadd.s32 %s19, 1
    %s21 = scalar_select %p18, %s19, %s20
    %p24 = pneg %p18
    %p25 = scmp.eq.s32.totalorder %s9, 1
    %p26 = por %p24, %p25
    %p27 = scmp.ne.s32.totalorder %s19, %s22
    %p28 = scmp.eq.s32.totalorder %s9, 0
    %p29 = por %p27, %p28
    %p30 = scmp.ne.s32.totalorder %s19, %s22
    %p31 = scmp.eq.s32.totalorder %s14, 1
    %p32 = por %p30, %p31
    %p33 = scmp.ne.s32.totalorder %s22, %s23
    %p34 = scmp.eq.s32.totalorder %s14, 0
    %p35 = por %p33, %p34
    %p36 = scmp.ne.s32.totalorder %s22, %s23
    %p37 = scmp.eq.s32.totalorder %s15, 1
    %p38 = por %p36, %p37
    %p40 = scmp.ne.s32.totalorder %s23, %s39
    %p41 = scmp.eq.s32.totalorder %s15, 0
    %p42 = por %p40, %p41
    %s44 = sadd.s32 %s43, 1
    %p47 = scmp.eq.s32.totalorder %s9, 1
    %p48 = scmp.ne.s32.totalorder %s43, %s45
    %p49 = scmp.eq.s32.totalorder %s9, 0
    %p50 = por %p48, %p49
    %p51 = scmp.ne.s32.totalorder %s43, %s45
    %p52 = scmp.eq.s32.totalorder %s14, 1
    %p53 = por %p51, %p52
    %p54 = scmp.ne.s32.totalorder %s45, %s46
    %p55 = scmp.eq.s32.totalorder %s14, 0
    %p56 = por %p54, %p55
    %p57 = scmp.ne.s32.totalorder %s45, %s46
    %p58 = scmp.eq.s32.totalorder %s15, 1
    %p59 = por %p57, %p58
    %p61 = scmp.ne.s32.totalorder %s46, %s60
    %p62 = scmp.eq.s32.totalorder %s15, 0
    %p63 = por %p61, %p62
    %s65 = sadd.s32 %s64, 1
    %p68 = scmp.eq.s32.totalorder %s9, 1
    %p69 = scmp.ne.s32.totalorder %s64, %s66
    %p70 = scmp.eq.s32.totalorder %s9, 0
    %p71 = por %p69, %p70
    %p72 = scmp.ne.s32.totalorder %s64, %s66
    %p73 = scmp.eq.s32.totalorder %s14, 1
    %p74 = por %p72, %p73
    %p75 = scmp.ne.s32.totalorder %s66, %s67
    %p76 = scmp.eq.s32.totalorder %s14, 0
    %p77 = por %p75, %p76
    %p78 = scmp.ne.s32.totalorder %s66, %s67
    %p79 = scmp.eq.s32.totalorder %s15, 1
    %p80 = por %p78, %p79
    %p82 = scmp.ne.s32.totalorder %s67, %s81
    %p83 = scmp.eq.s32.totalorder %s15, 0
    %p84 = por %p82, %p83
    %s85 = ssub.s32 %s9, %s16
    %p86 = scmp.eq.s32.totalorder %s85, 0
    %s88 = sadd.s32 %s87, 1
    %s89 = scalar_select %p86, %s87, %s88
    %p92 = pneg %p86
    %p93 = scmp.eq.s32.totalorder %s9, 1
    %p94 = por %p92, %p93
    %p95 = scmp.ne.s32.totalorder %s87, %s90
    %p96 = scmp.eq.s32.totalorder %s9, 0
    %p97 = por %p95, %p96
    %p98 = scmp.ne.s32.totalorder %s87, %s90
    %p99 = scmp.eq.s32.totalorder %s14, 1
    %p100 = por %p98, %p99
    %p101 = scmp.ne.s32.totalorder %s90, %s91
    %p102 = scmp.eq.s32.totalorder %s14, 0
    %p103 = por %p101, %p102
    %p104 = scmp.ne.s32.totalorder %s90, %s91
    %p105 = scmp.eq.s32.totalorder %s15, 1
    %p106 = por %p104, %p105
    %p108 = scmp.ne.s32.totalorder %s91, %s107
    %p109 = scmp.eq.s32.totalorder %s15, 0
    %p110 = por %p108, %p109
    %p111 = scmp.le.s32.totalorder 1, %s9
    %p112 = scmp.lt.s32.totalorder %s9, 3
    %p113 = pnand %p111, %p112
    %p114 = pneg %p113
    // Predicated region
    $region9: #{resnet_tsa_forward.10} parent=5 // pred_check
      _
    $region10: #{resnet_tsa_forward.10} parent=5 // pred_check_branch
      %116 = sbr.rel (%p113) target = $region12
    $region11: #{resnet_tsa_forward.10} parent=5 // pred_region
      %s117 = ssub.s32 %s9, 1
      // Predicated region
      $region13: #{resnet_tsa_forward.10} parent=11 // pred_check
        %p118 = pneg %p56
      $region14: #{resnet_tsa_forward.10} parent=11 // pred_check_branch
        %120 = sbr.rel (%p118) target = $region16
      $region15: #{resnet_tsa_forward.10} parent=11 // pred_region
        _
      $region16: #{resnet_tsa_forward.10} parent=11 // pred_fallthru
        _
      // Predicated region
      $region17: #{resnet_tsa_forward.10} parent=11 // pred_check
        %p121 = pneg %p77
      $region18: #{resnet_tsa_forward.10} parent=11 // pred_check_branch
        %123 = sbr.rel (%p121) target = $region20
      $region19: #{resnet_tsa_forward.10} parent=11 // pred_region
        _
      $region20: #{resnet_tsa_forward.10} parent=11 // pred_fallthru
        _
    $region12: #{resnet_tsa_forward.10} parent=5 // pred_fallthru
      _
    %p124 = scmp.lt.s32.totalorder %s9, 2
    // Predicated region
    $region21: #{resnet_tsa_forward.10} parent=5 // pred_check
      %p125 = pneg %p124
    $region22: #{resnet_tsa_forward.10} parent=5 // pred_check_branch
      %127 = sbr.rel (%p125) target = $region24
    $region23: #{resnet_tsa_forward.10} parent=5 // pred_region
      // Predicated region
      $region25: #{resnet_tsa_forward.10} parent=23 // pred_check
        %p128 = pneg %p29
      $region26: #{resnet_tsa_forward.10} parent=23 // pred_check_branch
        %130 = sbr.rel (%p128) target = $region28
      $region27: #{resnet_tsa_forward.10} parent=23 // pred_region
        %s131 = smul.u32 32, %s9
        %p132 = scmp.lt.s32.totalorder %s131, 63
        %s133 = scalar_select %p132, %s131, 63
        %s134 = smul.addr %s133, 4
        %s135 = scalar_lea.vmem %s0, %s134
        %s136 = smul.u32 32, %s9
      $region28: #{resnet_tsa_forward.10} parent=23 // pred_fallthru
        _
    $region24: #{resnet_tsa_forward.10} parent=5 // pred_fallthru
      _
    %p137 = scmp.le.s32.totalorder 1, %s9
    %p138 = scmp.lt.s32.totalorder %s9, 3
    %p139 = pnand %p137, %p138
    %p140 = pneg %p139
    // Predicated region
    $region29: #{resnet_tsa_forward.10} parent=5 // pred_check
      _
    $region30: #{resnet_tsa_forward.10} parent=5 // pred_check_branch
      %142 = sbr.rel (%p139) target = $region32
    $region31: #{resnet_tsa_forward.10} parent=5 // pred_region
      %s143 = ssub.s32 %s9, 1
      %s144 = smul.u32 32, %s14
      %p145 = scmp.lt.s32.totalorder %s144, 63
      %s146 = scalar_select %p145, %s144, 63
      %s147 = smul.addr %s146, 4
      %s148 = scalar_lea.vmem %s0, %s147
      %p149 = pneg %p35
      %p150 = pneg %p32
      %p151 = pneg %p56
      %p152 = pneg %p53
      %p153 = pneg %p77
      %p154 = pneg %p74
      %p155 = pneg %p103
      %p156 = pneg %p100
      %s157 = smul.u32 32, %s14
      %p158 = scmp.lt.s32.totalorder %s157, 63
      %s159 = scalar_select %p158, %s157, 63
      %s160 = smul.addr %s159, 4
      %s161 = scalar_lea.vmem %s3, %s160
      %s162 = smul.u32 32, %s14
      %p163 = scmp.lt.s32.totalorder %s162, 63
      %s164 = scalar_select %p163, %s162, 63
      %s165 = smul.addr %s164, 4
      %s166 = scalar_lea.vmem %s0, %s165
      %s167 = smul.u32 32, %s14
      %s168 = smul.u32 32, %s14
      %p169 = scmp.lt.s32.totalorder %s168, 63
      %s170 = scalar_select %p169, %s168, 63
      %s171 = smul.addr %s170, 4
      %s172 = scalar_lea.vmem %s3, %s171
      %s173 = smul.u32 32, %s14
      %v175 = vld [vmem:[%s166] sm:$0xf]
      %v176 = vld [vmem:[%s166 + $0x4] sm:$0xf]
      %v177 = vld [vmem:[%s166 + $0x8] sm:$0xf]
      %v178 = vld [vmem:[%s166 + $0xc] sm:$0xf]
      %v179 = vld [vmem:[%s166 + $0x10] sm:$0xf]
      %v180 = vld [vmem:[%s166 + $0x14] sm:$0xf]
      %v181 = vld [vmem:[%s166 + $0x18] sm:$0xf]
      %v182 = vld [vmem:[%s166 + $0x1c] sm:$0xf]
      %v183 = vld [vmem:[%s166 + $0x20] sm:$0xf]
      %v184 = vld [vmem:[%s166 + $0x24] sm:$0xf]
      %v185 = vld [vmem:[%s166 + $0x28] sm:$0xf]
      %v186 = vld [vmem:[%s166 + $0x2c] sm:$0xf]
      %v187 = vld [vmem:[%s166 + $0x30] sm:$0xf]
      %v188 = vld [vmem:[%s166 + $0x34] sm:$0xf]
      %v189 = vld [vmem:[%s166 + $0x38] sm:$0xf]
      %v190 = vld [vmem:[%s166 + $0x3c] sm:$0xf]
      %v191 = vld [vmem:[%s166 + $0x40] sm:$0xf]
      %v192 = vld [vmem:[%s166 + $0x44] sm:$0xf]
      %v193 = vld [vmem:[%s166 + $0x48] sm:$0xf]
      %v194 = vld [vmem:[%s166 + $0x4c] sm:$0xf]
      %v195 = vld [vmem:[%s166 + $0x50] sm:$0xf]
      %v196 = vld [vmem:[%s166 + $0x54] sm:$0xf]
      %v197 = vld [vmem:[%s166 + $0x58] sm:$0xf]
      %v198 = vld [vmem:[%s166 + $0x5c] sm:$0xf]
      %v199 = vld [vmem:[%s166 + $0x60] sm:$0xf]
      %v200 = vld [vmem:[%s166 + $0x64] sm:$0xf]
      %v201 = vld [vmem:[%s166 + $0x68] sm:$0xf]
      %v202 = vld [vmem:[%s166 + $0x6c] sm:$0xf]
      %v203 = vld [vmem:[%s166 + $0x70] sm:$0xf]
      %v204 = vld [vmem:[%s166 + $0x74] sm:$0xf]
      %v205 = vld [vmem:[%s166 + $0x78] sm:$0xf]
      %v206 = vld [vmem:[%s166 + $0x7c] sm:$0xf]
      %v207 = vld [vmem:[%s1] sm:$0xf]
      %v208 = vld [vmem:[%s1 + $0x4] sm:$0xf]
      %v209 = vld [vmem:[%s1 + $0x8] sm:$0xf]
      %v210 = vld [vmem:[%s1 + $0xc] sm:$0xf]
      %v211 = vld [vmem:[%s1 + $0x10] sm:$0x3]
      %v212 = vld [vmem:[%s2] sm:$0x1]
      %v214 = vlaneseq
      %v215 = vshrl.u32 %v214, 7
      %v216 = vsub.s32 0, %v215
      %v217 = vrot.slane %v212, %v216
      %v251 = vunpack.c.l.b16 %v175
      %v252 = vunpack.c.l.b16 %v176
      %v253 = vunpack.c.l.b16 %v177
      %v254 = vunpack.c.l.b16 %v178
      %v255 = vunpack.c.l.b16 %v179
      %v256 = vunpack.c.l.b16 %v180
      %v257 = vunpack.c.l.b16 %v181
      %v258 = vunpack.c.l.b16 %v182
      %v259 = vunpack.c.l.b16 %v183
      %v260 = vunpack.c.l.b16 %v184
      %v261 = vunpack.c.l.b16 %v185
      %v262 = vunpack.c.l.b16 %v186
      %v263 = vunpack.c.l.b16 %v187
      %v264 = vunpack.c.l.b16 %v188
      %v265 = vunpack.c.l.b16 %v189
      %v266 = vunpack.c.l.b16 %v190
      %v267 = vunpack.c.l.b16 %v191
      %v268 = vunpack.c.l.b16 %v192
      %v269 = vunpack.c.l.b16 %v193
      %v270 = vunpack.c.l.b16 %v194
      %v271 = vunpack.c.l.b16 %v195
      %v272 = vunpack.c.l.b16 %v196
      %v273 = vunpack.c.l.b16 %v197
      %v274 = vunpack.c.l.b16 %v198
      %v275 = vunpack.c.l.b16 %v199
      %v276 = vunpack.c.l.b16 %v200
      %v277 = vunpack.c.l.b16 %v201
      %v278 = vunpack.c.l.b16 %v202
      %v279 = vunpack.c.l.b16 %v203
      %v280 = vunpack.c.l.b16 %v204
      %v281 = vunpack.c.l.b16 %v205
      %v282 = vunpack.c.l.b16 %v206
      %v283 = vpack.c.b16 %v252, %v251
      %v284 = vpack.c.b16 %v254, %v253
      %v285 = vpack.c.b16 %v256, %v255
      %v286 = vpack.c.b16 %v258, %v257
      %v287 = vpack.c.b16 %v260, %v259
      %v288 = vpack.c.b16 %v262, %v261
      %v289 = vpack.c.b16 %v264, %v263
      %v290 = vpack.c.b16 %v266, %v265
      %v291 = vpack.c.b16 %v268, %v267
      %v292 = vpack.c.b16 %v270, %v269
      %v293 = vpack.c.b16 %v272, %v271
      %v294 = vpack.c.b16 %v274, %v273
      %v295 = vpack.c.b16 %v276, %v275
      %v296 = vpack.c.b16 %v278, %v277
      %v297 = vpack.c.b16 %v280, %v279
      %v298 = vpack.c.b16 %v282, %v281
      %v304 = vunpack.c.l.b16 %v207
      %v305 = vunpack.c.l.b16 %v208
      %v306 = vunpack.c.l.b16 %v209
      %v307 = vunpack.c.l.b16 %v210
      %v308 = vunpack.c.l.b16 %v211
      %v309 = vpack.c.b16 %v305, %v304
      %v310 = vpack.c.b16 %v307, %v306
      %v311 = vpack.c.b16 %v308, %v308
      %vm314 = vcmask 293888
      %v316 = vsel %vm314, %v283, 0
      %v319 = vsel %vm314, %v284, 0
      %v322 = vsel %vm314, %v285, 0
      %v325 = vsel %vm314, %v286, 0
      %v328 = vsel %vm314, %v287, 0
      %v331 = vsel %vm314, %v288, 0
      %v334 = vsel %vm314, %v289, 0
      %v337 = vsel %vm314, %v290, 0
      %v340 = vsel %vm314, %v291, 0
      %v343 = vsel %vm314, %v292, 0
      %v346 = vsel %vm314, %v293, 0
      %v349 = vsel %vm314, %v294, 0
      %v352 = vsel %vm314, %v295, 0
      %v355 = vsel %vm314, %v296, 0
      %v358 = vsel %vm314, %v297, 0
      %v361 = vsel %vm314, %v298, 0
      %vm363 = vcmask 1041408
      %v365 = vsel %vm363, %v311, 0
      %367 = vmatprep.subr.bf16.mxu0 0
      %368 = vmatpush1.bf16.msra.mxu0 %v309
      %369 = vmatprep.subr.bf16.mxu0 0
      %370 = vmatpush1.bf16.msra.mxu0 %v310
      %371 = vmatprep.subr.bf16.mxu0 0
      %372 = vmatpush1.bf16.msra.mxu0 %v365
      %373 = vmatprep.subr.bf16.mxu0 0
      %374 = vmatpush1.bf16.msra.mxu0 0
      %375 = vmatprep.subr.bf16.mxu0 0
      %376 = vmatpush1.bf16.msra.mxu0 0
      %377 = vmatprep.subr.bf16.mxu0 0
      %378 = vmatpush1.bf16.msra.mxu0 0
      %379 = vmatprep.subr.bf16.mxu0 0
      %380 = vmatpush1.bf16.msra.mxu0 0
      %381 = vmatprep.subr.bf16.mxu0 0
      %382 = vmatpush1.bf16.msra.mxu0 0
      %383 = vmatprep.subr.bf16.mxu0 0
      %384 = vmatpush1.bf16.msra.mxu0 0
      %385 = vmatprep.subr.bf16.mxu0 0
      %386 = vmatpush1.bf16.msra.mxu0 0
      %387 = vmatprep.subr.bf16.mxu0 0
      %388 = vmatpush1.bf16.msra.mxu0 0
      %389 = vmatprep.subr.bf16.mxu0 0
      %390 = vmatpush1.bf16.msra.mxu0 0
      %391 = vmatprep.subr.bf16.mxu0 0
      %392 = vmatpush1.bf16.msra.mxu0 0
      %393 = vmatprep.subr.bf16.mxu0 0
      %394 = vmatpush1.bf16.msra.mxu0 0
      %395 = vmatprep.subr.bf16.mxu0 0
      %396 = vmatpush1.bf16.msra.mxu0 0
      %397 = vmatprep.subr.bf16.mxu0 0
      %398 = vmatpush1.bf16.msra.mxu0 0
      %399 = vmatprep.mubr.bf16.mxu0 0
      %400 = vmatmul.mubr.bf16.gmra.mrb[0].mxu0 %v316
      %v401 = vpop.f32.mrb[0].mxu0
      %v402 = vadd.f32 %v217, %v401
      %v403 = vpop.f32.mrb[0].mxu0
      %v404 = vpop.f32.mrb[0].mxu0
      %v405 = vadd.f32 %v217, %v404
      %v406 = vpop.f32.mrb[0].mxu0
      %407 = vmatprep.mubr.bf16.mxu0 0
      %408 = vmatmul.mubr.bf16.gmra.mrb[0].mxu0 %v319
      %v409 = vpop.f32.mrb[0].mxu0
      %v410 = vadd.f32 %v217, %v409
      %v411 = vpop.f32.mrb[0].mxu0
      %v412 = vpop.f32.mrb[0].mxu0
      %v413 = vadd.f32 %v217, %v412
      %v414 = vpop.f32.mrb[0].mxu0
      %415 = vmatprep.mubr.bf16.mxu0 0
      %416 = vmatmul.mubr.bf16.gmra.mrb[0].mxu0 %v322
      %v417 = vpop.f32.mrb[0].mxu0
      %v418 = vadd.f32 %v217, %v417
      %v419 = vpop.f32.mrb[0].mxu0
      %v420 = vpop.f32.mrb[0].mxu0
      %v421 = vadd.f32 %v217, %v420
      %v422 = vpop.f32.mrb[0].mxu0
      %423 = vmatprep.mubr.bf16.mxu0 0
      %424 = vmatmul.mubr.bf16.gmra.mrb[0].mxu0 %v325
      %v425 = vpop.f32.mrb[0].mxu0
      %v426 = vadd.f32 %v217, %v425
      %v427 = vpop.f32.mrb[0].mxu0
      %v428 = vpop.f32.mrb[0].mxu0
      %v429 = vadd.f32 %v217, %v428
      %v430 = vpop.f32.mrb[0].mxu0
      %431 = vmatprep.mubr.bf16.mxu0 0
      %432 = vmatmul.mubr.bf16.gmra.mrb[0].mxu0 %v328
      %v433 = vpop.f32.mrb[0].mxu0
      %v434 = vadd.f32 %v217, %v433
      %v435 = vpop.f32.mrb[0].mxu0
      %v436 = vpop.f32.mrb[0].mxu0
      %v437 = vadd.f32 %v217, %v436
      %v438 = vpop.f32.mrb[0].mxu0
      %439 = vmatprep.mubr.bf16.mxu0 0
      %440 = vmatmul.mubr.bf16.gmra.mrb[0].mxu0 %v331
      %v441 = vpop.f32.mrb[0].mxu0
      %v442 = vadd.f32 %v217, %v441
      %v443 = vpop.f32.mrb[0].mxu0
      %v444 = vpop.f32.mrb[0].mxu0
      %v445 = vadd.f32 %v217, %v444
      %v446 = vpop.f32.mrb[0].mxu0
      %447 = vmatprep.mubr.bf16.mxu0 0
      %448 = vmatmul.mubr.bf16.gmra.mrb[0].mxu0 %v334
      %v449 = vpop.f32.mrb[0].mxu0
      %v450 = vadd.f32 %v217, %v449
      %v451 = vpop.f32.mrb[0].mxu0
      %v452 = vpop.f32.mrb[0].mxu0
      %v453 = vadd.f32 %v217, %v452
      %v454 = vpop.f32.mrb[0].mxu0
      %455 = vmatprep.mubr.bf16.mxu0 0
      %456 = vmatmul.mubr.bf16.gmra.mrb[0].mxu0 %v337
      %v457 = vpop.f32.mrb[0].mxu0
      %v458 = vadd.f32 %v217, %v457
      %v459 = vpop.f32.mrb[0].mxu0
      %v460 = vpop.f32.mrb[0].mxu0
      %v461 = vadd.f32 %v217, %v460
      %v462 = vpop.f32.mrb[0].mxu0
      %463 = vmatprep.mubr.bf16.mxu0 0
      %464 = vmatmul.mubr.bf16.gmra.mrb[0].mxu0 %v340
      %v465 = vpop.f32.mrb[0].mxu0
      %v466 = vadd.f32 %v217, %v465
      %v467 = vpop.f32.mrb[0].mxu0
      %v468 = vpop.f32.mrb[0].mxu0
      %v469 = vadd.f32 %v217, %v468
      %v470 = vpop.f32.mrb[0].mxu0
      %471 = vmatprep.mubr.bf16.mxu0 0
      %472 = vmatmul.mubr.bf16.gmra.mrb[0].mxu0 %v343
      %v473 = vpop.f32.mrb[0].mxu0
      %v474 = vadd.f32 %v217, %v473
      %v475 = vpop.f32.mrb[0].mxu0
      %v476 = vpop.f32.mrb[0].mxu0
      %v477 = vadd.f32 %v217, %v476
      %v478 = vpop.f32.mrb[0].mxu0
      %479 = vmatprep.mubr.bf16.mxu0 0
      %480 = vmatmul.mubr.bf16.gmra.mrb[0].mxu0 %v346
      %v481 = vpop.f32.mrb[0].mxu0
      %v482 = vadd.f32 %v217, %v481
      %v483 = vpop.f32.mrb[0].mxu0
      %v484 = vpop.f32.mrb[0].mxu0
      %v485 = vadd.f32 %v217, %v484
      %v486 = vpop.f32.mrb[0].mxu0
      %487 = vmatprep.mubr.bf16.mxu0 0
      %488 = vmatmul.mubr.bf16.gmra.mrb[0].mxu0 %v349
      %v489 = vpop.f32.mrb[0].mxu0
      %v490 = vadd.f32 %v217, %v489
      %v491 = vpop.f32.mrb[0].mxu0
      %v492 = vpop.f32.mrb[0].mxu0
      %v493 = vadd.f32 %v217, %v492
      %v494 = vpop.f32.mrb[0].mxu0
      %495 = vmatprep.mubr.bf16.mxu0 0
      %496 = vmatmul.mubr.bf16.gmra.mrb[0].mxu0 %v352
      %v497 = vpop.f32.mrb[0].mxu0
      %v498 = vadd.f32 %v217, %v497
      %v499 = vpop.f32.mrb[0].mxu0
      %v500 = vpop.f32.mrb[0].mxu0
      %v501 = vadd.f32 %v217, %v500
      %v502 = vpop.f32.mrb[0].mxu0
      %503 = vmatprep.mubr.bf16.mxu0 0
      %504 = vmatmul.mubr.bf16.gmra.mrb[0].mxu0 %v355
      %v505 = vpop.f32.mrb[0].mxu0
      %v506 = vadd.f32 %v217, %v505
      %v507 = vpop.f32.mrb[0].mxu0
      %v508 = vpop.f32.mrb[0].mxu0
      %v509 = vadd.f32 %v217, %v508
      %v510 = vpop.f32.mrb[0].mxu0
      %511 = vmatprep.mubr.bf16.mxu0 0
      %512 = vmatmul.mubr.bf16.gmra.mrb[0].mxu0 %v358
      %v513 = vpop.f32.mrb[0].mxu0
      %v514 = vadd.f32 %v217, %v513
      %v515 = vpop.f32.mrb[0].mxu0
      %v516 = vpop.f32.mrb[0].mxu0
      %v517 = vadd.f32 %v217, %v516
      %v518 = vpop.f32.mrb[0].mxu0
      %519 = vmatprep.mubr.bf16.mxu0 0
      %520 = vmatmul.mubr.bf16.gmra.mrb[0].mxu0 %v361
      %v521 = vpop.f32.mrb[0].mxu0
      %v522 = vadd.f32 %v217, %v521
      %v523 = vpop.f32.mrb[0].mxu0
      %v524 = vpop.f32.mrb[0].mxu0
      %v525 = vadd.f32 %v217, %v524
      %v526 = vpop.f32.mrb[0].mxu0
      %527 = vdwg.mxu0
      %v528 = vmax.f32 %v402, 0.0
      %v529 = vmax.f32 %v405, 0.0
      %v530 = vmax.f32 %v410, 0.0
      %v531 = vmax.f32 %v413, 0.0
      %v532 = vmax.f32 %v418, 0.0
      %v533 = vmax.f32 %v421, 0.0
      %v534 = vmax.f32 %v426, 0.0
      %v535 = vmax.f32 %v429, 0.0
      %v536 = vmax.f32 %v434, 0.0
      %v537 = vmax.f32 %v437, 0.0
      %v538 = vmax.f32 %v442, 0.0
      %v539 = vmax.f32 %v445, 0.0
      %v540 = vmax.f32 %v450, 0.0
      %v541 = vmax.f32 %v453, 0.0
      %v542 = vmax.f32 %v458, 0.0
      %v543 = vmax.f32 %v461, 0.0
      %v544 = vmax.f32 %v466, 0.0
      %v545 = vmax.f32 %v469, 0.0
      %v546 = vmax.f32 %v474, 0.0
      %v547 = vmax.f32 %v477, 0.0
      %v548 = vmax.f32 %v482, 0.0
      %v549 = vmax.f32 %v485, 0.0
      %v550 = vmax.f32 %v490, 0.0
      %v551 = vmax.f32 %v493, 0.0
      %v552 = vmax.f32 %v498, 0.0
      %v553 = vmax.f32 %v501, 0.0
      %v554 = vmax.f32 %v506, 0.0
      %v555 = vmax.f32 %v509, 0.0
      %v556 = vmax.f32 %v514, 0.0
      %v557 = vmax.f32 %v517, 0.0
      %v558 = vmax.f32 %v522, 0.0
      %v559 = vmax.f32 %v525, 0.0
      %v560 = vpack.c.bf16 %v529, %v528
      %v561 = vpack.c.bf16 %v531, %v530
      %v562 = vpack.c.bf16 %v533, %v532
      %v563 = vpack.c.bf16 %v535, %v534
      %v564 = vpack.c.bf16 %v537, %v536
      %v565 = vpack.c.bf16 %v539, %v538
      %v566 = vpack.c.bf16 %v541, %v540
      %v567 = vpack.c.bf16 %v543, %v542
      %v568 = vpack.c.bf16 %v545, %v544
      %v569 = vpack.c.bf16 %v547, %v546
      %v570 = vpack.c.bf16 %v549, %v548
      %v571 = vpack.c.bf16 %v551, %v550
      %v572 = vpack.c.bf16 %v553, %v552
      %v573 = vpack.c.bf16 %v555, %v554
      %v574 = vpack.c.bf16 %v557, %v556
      %v575 = vpack.c.bf16 %v559, %v558
      %v592 = vunpack.c.l.b16 %v560
      %v593 = vunpack.c.h.b16 %v560
      %v594 = vunpack.c.l.b16 %v561
      %v595 = vunpack.c.h.b16 %v561
      %v596 = vunpack.c.l.b16 %v562
      %v597 = vunpack.c.h.b16 %v562
      %v598 = vunpack.c.l.b16 %v563
      %v599 = vunpack.c.h.b16 %v563
      %v600 = vunpack.c.l.b16 %v564
      %v601 = vunpack.c.h.b16 %v564
      %v602 = vunpack.c.l.b16 %v565
      %v603 = vunpack.c.h.b16 %v565
      %v604 = vunpack.c.l.b16 %v566
      %v605 = vunpack.c.h.b16 %v566
      %v606 = vunpack.c.l.b16 %v567
      %v607 = vunpack.c.h.b16 %v567
      %v608 = vunpack.c.l.b16 %v568
      %v609 = vunpack.c.h.b16 %v568
      %v610 = vunpack.c.l.b16 %v569
      %v611 = vunpack.c.h.b16 %v569
      %v612 = vunpack.c.l.b16 %v570
      %v613 = vunpack.c.h.b16 %v570
      %v614 = vunpack.c.l.b16 %v571
      %v615 = vunpack.c.h.b16 %v571
      %v616 = vunpack.c.l.b16 %v572
      %v617 = vunpack.c.h.b16 %v572
      %v618 = vunpack.c.l.b16 %v573
      %v619 = vunpack.c.h.b16 %v573
      %v620 = vunpack.c.l.b16 %v574
      %v621 = vunpack.c.h.b16 %v574
      %v622 = vunpack.c.l.b16 %v575
      %v623 = vunpack.c.h.b16 %v575
      %v624 = vpack.c.b16 %v592, %v592
      %v625 = vpack.c.b16 %v593, %v593
      %v626 = vpack.c.b16 %v594, %v594
      %v627 = vpack.c.b16 %v595, %v595
      %v628 = vpack.c.b16 %v596, %v596
      %v629 = vpack.c.b16 %v597, %v597
      %v630 = vpack.c.b16 %v598, %v598
      %v631 = vpack.c.b16 %v599, %v599
      %v632 = vpack.c.b16 %v600, %v600
      %v633 = vpack.c.b16 %v601, %v601
      %v634 = vpack.c.b16 %v602, %v602
      %v635 = vpack.c.b16 %v603, %v603
      %v636 = vpack.c.b16 %v604, %v604
      %v637 = vpack.c.b16 %v605, %v605
      %v638 = vpack.c.b16 %v606, %v606
      %v639 = vpack.c.b16 %v607, %v607
      %v640 = vpack.c.b16 %v608, %v608
      %v641 = vpack.c.b16 %v609, %v609
      %v642 = vpack.c.b16 %v610, %v610
      %v643 = vpack.c.b16 %v611, %v611
      %v644 = vpack.c.b16 %v612, %v612
      %v645 = vpack.c.b16 %v613, %v613
      %v646 = vpack.c.b16 %v614, %v614
      %v647 = vpack.c.b16 %v615, %v615
      %v648 = vpack.c.b16 %v616, %v616
      %v649 = vpack.c.b16 %v617, %v617
      %v650 = vpack.c.b16 %v618, %v618
      %v651 = vpack.c.b16 %v619, %v619
      %v652 = vpack.c.b16 %v620, %v620
      %v653 = vpack.c.b16 %v621, %v621
      %v654 = vpack.c.b16 %v622, %v622
      %v655 = vpack.c.b16 %v623, %v623
      %688 = vst [vmem:[%s172] sm:$0xf] %v624
      %689 = vst [vmem:[%s172 + $0x4] sm:$0xf] %v625
      %690 = vst [vmem:[%s172 + $0x8] sm:$0xf] %v626
      %691 = vst [vmem:[%s172 + $0xc] sm:$0xf] %v627
      %692 = vst [vmem:[%s172 + $0x10] sm:$0xf] %v628
      %693 = vst [vmem:[%s172 + $0x14] sm:$0xf] %v629
      %694 = vst [vmem:[%s172 + $0x18] sm:$0xf] %v630
      %695 = vst [vmem:[%s172 + $0x1c] sm:$0xf] %v631
      %696 = vst [vmem:[%s172 + $0x20] sm:$0xf] %v632
      %697 = vst [vmem:[%s172 + $0x24] sm:$0xf] %v633
      %698 = vst [vmem:[%s172 + $0x28] sm:$0xf] %v634
      %699 = vst [vmem:[%s172 + $0x2c] sm:$0xf] %v635
      %700 = vst [vmem:[%s172 + $0x30] sm:$0xf] %v636
      %701 = vst [vmem:[%s172 + $0x34] sm:$0xf] %v637
      %702 = vst [vmem:[%s172 + $0x38] sm:$0xf] %v638
      %703 = vst [vmem:[%s172 + $0x3c] sm:$0xf] %v639
      %704 = vst [vmem:[%s172 + $0x40] sm:$0xf] %v640
      %705 = vst [vmem:[%s172 + $0x44] sm:$0xf] %v641
      %706 = vst [vmem:[%s172 + $0x48] sm:$0xf] %v642
      %707 = vst [vmem:[%s172 + $0x4c] sm:$0xf] %v643
      %708 = vst [vmem:[%s172 + $0x50] sm:$0xf] %v644
      %709 = vst [vmem:[%s172 + $0x54] sm:$0xf] %v645
      %710 = vst [vmem:[%s172 + $0x58] sm:$0xf] %v646
      %711 = vst [vmem:[%s172 + $0x5c] sm:$0xf] %v647
      %712 = vst [vmem:[%s172 + $0x60] sm:$0xf] %v648
      %713 = vst [vmem:[%s172 + $0x64] sm:$0xf] %v649
      %714 = vst [vmem:[%s172 + $0x68] sm:$0xf] %v650
      %715 = vst [vmem:[%s172 + $0x6c] sm:$0xf] %v651
      %716 = vst [vmem:[%s172 + $0x70] sm:$0xf] %v652
      %717 = vst [vmem:[%s172 + $0x74] sm:$0xf] %v653
      %718 = vst [vmem:[%s172 + $0x78] sm:$0xf] %v654
      %719 = vst [vmem:[%s172 + $0x7c] sm:$0xf] %v655
      %s720 = smul.u32 32, %s14
      %p721 = scmp.lt.s32.totalorder %s720, 63
      %s722 = scalar_select %p721, %s720, 63
      %s723 = smul.addr %s722, 4
      %s724 = scalar_lea.vmem %s3, %s723
      // Predicated region
      $region33: #{resnet_tsa_forward.10} parent=31 // pred_check
        %p725 = pneg %p100
      $region34: #{resnet_tsa_forward.10} parent=31 // pred_check_branch
        %727 = sbr.rel (%p725) target = $region36
      $region35: #{resnet_tsa_forward.10} parent=31 // pred_region
        %s728 = smul.u32 32, %s14
      $region36: #{resnet_tsa_forward.10} parent=31 // pred_fallthru
        _
    $region32: #{resnet_tsa_forward.10} parent=5 // pred_fallthru
      _
    %p729 = scmp.le.s32.totalorder 2, %s9
    // Predicated region
    $region37: #{resnet_tsa_forward.10} parent=5 // pred_check
      %p730 = pneg %p729
    $region38: #{resnet_tsa_forward.10} parent=5 // pred_check_branch
      %732 = sbr.rel (%p730) target = $region40
    $region39: #{resnet_tsa_forward.10} parent=5 // pred_region
      %s733 = ssub.s32 %s9, 2
      // Predicated region
      $region41: #{resnet_tsa_forward.10} parent=39 // pred_check
        %p734 = pneg %p106
      $region42: #{resnet_tsa_forward.10} parent=39 // pred_check_branch
        %736 = sbr.rel (%p734) target = $region44
      $region43: #{resnet_tsa_forward.10} parent=39 // pred_region
        %s737 = smul.u32 32, %s15
        %p738 = scmp.lt.s32.totalorder %s737, 63
        %s739 = scalar_select %p738, %s737, 63
        %s740 = smul.addr %s739, 4
        %s741 = scalar_lea.vmem %s3, %s740
      $region44: #{resnet_tsa_forward.10} parent=39 // pred_fallthru
        _
    $region40: #{resnet_tsa_forward.10} parent=5 // pred_fallthru
      _
  $region6: #{resnet_tsa_forward.10} parent=0 // loop_footer
    %s13 = sadd.s32 1, %s9
  $region7: #{resnet_tsa_forward.10} parent=0 // loop_footer_branch
    %8 = sbr.rel target = $region3
  $region8: #{resnet_tsa_forward.10} parent=0 // loop_exit
    _

// kernel: resnet_tsa_forward.11
$region0: #{resnet_tsa_forward.11}
  #allocation0 [shape = 'u32[]', space=smem, size = 0x4, offset = 0x4, fixed_abs, tag = 'smem constant byte address 0x4 - core index']
  #allocation1 [shape = 'u32[144,128]{1,0:T(1,128)}', space=vmem, size = 0x12000, scoped, tag = 'internal scratch']
  %s0 = inlined_call_operand.vmem [shape: bf16[512,1152], index: 0, kind: input, shape index: {}]
  %s1 = inlined_call_operand.vmem [shape: bf16[1152,128], index: 1, kind: input, shape index: {}]
  %s2 = inlined_call_operand.vmem [shape: f32[1,128], index: 2, kind: input, shape index: {}]
  %s3 = inlined_call_operand.vmem [shape: bf16[512,128], index: 3, kind: output, shape index: {}]
  %s4 = sld [smem:[#allocation0]]
  $region45: #{resnet_tsa_forward.11} parent=0
    _
  %s6 = ssub.s32 1, %s4
  %s7 = scalar_select 0, %s6, %s4
  loop: start=0, step=1, limit=4
  $region2: #{resnet_tsa_forward.11} parent=0 // loop_pre_header
    _
  $region3: #{resnet_tsa_forward.11} parent=0 // loop_header
    %s9 = sphi 0, %s13
    %p10 = scmp.ge.s32.totalorder %s9, 4
    %s19 = sphi 0, %s21
    %s22 = sphi 0, %s19
    %s23 = sphi 0, %s22
    %s39 = sphi 0, %s23
    %s43 = sphi 0, %s43
    %s45 = sphi 0, %s43
    %s46 = sphi 0, %s45
    %s60 = sphi 0, %s46
    %s64 = sphi 0, %s64
    %s66 = sphi 0, %s64
    %s67 = sphi 0, %s66
    %s81 = sphi 0, %s67
    %s87 = sphi 0, %s89
    %s90 = sphi 0, %s87
    %s91 = sphi 0, %s90
    %s107 = sphi 0, %s91
  $region4: #{resnet_tsa_forward.11} parent=0 // loop_header_branch
    %12 = sbr.rel (%p10) target = $region8
  $region5: #{resnet_tsa_forward.11} parent=0 // loop_body
    %s14 = ssub.s32 %s9, 1
    %s15 = ssub.s32 %s9, 2
    %s16 = sadd.s32 %s9, 1
    %s17 = ssub.s32 %s9, %s16
    %p18 = scmp.eq.s32.totalorder %s17, 0
    %s20 = sadd.s32 %s19, 1
    %s21 = scalar_select %p18, %s19, %s20
    %p24 = pneg %p18
    %p25 = scmp.eq.s32.totalorder %s9, 1
    %p26 = por %p24, %p25
    %p27 = scmp.ne.s32.totalorder %s19, %s22
    %p28 = scmp.eq.s32.totalorder %s9, 0
    %p29 = por %p27, %p28
    %p30 = scmp.ne.s32.totalorder %s19, %s22
    %p31 = scmp.eq.s32.totalorder %s14, 1
    %p32 = por %p30, %p31
    %p33 = scmp.ne.s32.totalorder %s22, %s23
    %p34 = scmp.eq.s32.totalorder %s14, 0
    %p35 = por %p33, %p34
    %p36 = scmp.ne.s32.totalorder %s22, %s23
    %p37 = scmp.eq.s32.totalorder %s15, 1
    %p38 = por %p36, %p37
    %p40 = scmp.ne.s32.totalorder %s23, %s39
    %p41 = scmp.eq.s32.totalorder %s15, 0
    %p42 = por %p40, %p41
    %s44 = sadd.s32 %s43, 1
    %p47 = scmp.eq.s32.totalorder %s9, 1
    %p48 = scmp.ne.s32.totalorder %s43, %s45
    %p49 = scmp.eq.s32.totalorder %s9, 0
    %p50 = por %p48, %p49
    %p51 = scmp.ne.s32.totalorder %s43, %s45
    %p52 = scmp.eq.s32.totalorder %s14, 1
    %p53 = por %p51, %p52
    %p54 = scmp.ne.s32.totalorder %s45, %s46
    %p55 = scmp.eq.s32.totalorder %s14, 0
    %p56 = por %p54, %p55
    %p57 = scmp.ne.s32.totalorder %s45, %s46
    %p58 = scmp.eq.s32.totalorder %s15, 1
    %p59 = por %p57, %p58
    %p61 = scmp.ne.s32.totalorder %s46, %s60
    %p62 = scmp.eq.s32.totalorder %s15, 0
    %p63 = por %p61, %p62
    %s65 = sadd.s32 %s64, 1
    %p68 = scmp.eq.s32.totalorder %s9, 1
    %p69 = scmp.ne.s32.totalorder %s64, %s66
    %p70 = scmp.eq.s32.totalorder %s9, 0
    %p71 = por %p69, %p70
    %p72 = scmp.ne.s32.totalorder %s64, %s66
    %p73 = scmp.eq.s32.totalorder %s14, 1
    %p74 = por %p72, %p73
    %p75 = scmp.ne.s32.totalorder %s66, %s67
    %p76 = scmp.eq.s32.totalorder %s14, 0
    %p77 = por %p75, %p76
    %p78 = scmp.ne.s32.totalorder %s66, %s67
    %p79 = scmp.eq.s32.totalorder %s15, 1
    %p80 = por %p78, %p79
    %p82 = scmp.ne.s32.totalorder %s67, %s81
    %p83 = scmp.eq.s32.totalorder %s15, 0
    %p84 = por %p82, %p83
    %s85 = ssub.s32 %s9, %s16
    %p86 = scmp.eq.s32.totalorder %s85, 0
    %s88 = sadd.s32 %s87, 1
    %s89 = scalar_select %p86, %s87, %s88
    %p92 = pneg %p86
    %p93 = scmp.eq.s32.totalorder %s9, 1
    %p94 = por %p92, %p93
    %p95 = scmp.ne.s32.totalorder %s87, %s90
    %p96 = scmp.eq.s32.totalorder %s9, 0
    %p97 = por %p95, %p96
    %p98 = scmp.ne.s32.totalorder %s87, %s90
    %p99 = scmp.eq.s32.totalorder %s14, 1
    %p100 = por %p98, %p99
    %p101 = scmp.ne.s32.totalorder %s90, %s91
    %p102 = scmp.eq.s32.totalorder %s14, 0
    %p103 = por %p101, %p102
    %p104 = scmp.ne.s32.totalorder %s90, %s91
    %p105 = scmp.eq.s32.totalorder %s15, 1
    %p106 = por %p104, %p105
    %p108 = scmp.ne.s32.totalorder %s91, %s107
    %p109 = scmp.eq.s32.totalorder %s15, 0
    %p110 = por %p108, %p109
    %p111 = scmp.le.s32.totalorder 1, %s9
    %p112 = scmp.lt.s32.totalorder %s9, 3
    %p113 = pnand %p111, %p112
    %p114 = pneg %p113
    // Predicated region
    $region9: #{resnet_tsa_forward.11} parent=5 // pred_check
      _
    $region10: #{resnet_tsa_forward.11} parent=5 // pred_check_branch
      %116 = sbr.rel (%p113) target = $region12
    $region11: #{resnet_tsa_forward.11} parent=5 // pred_region
      %s117 = ssub.s32 %s9, 1
      // Predicated region
      $region13: #{resnet_tsa_forward.11} parent=11 // pred_check
        %p118 = pneg %p56
      $region14: #{resnet_tsa_forward.11} parent=11 // pred_check_branch
        %120 = sbr.rel (%p118) target = $region16
      $region15: #{resnet_tsa_forward.11} parent=11 // pred_region
        _
      $region16: #{resnet_tsa_forward.11} parent=11 // pred_fallthru
        _
      // Predicated region
      $region17: #{resnet_tsa_forward.11} parent=11 // pred_check
        %p121 = pneg %p77
      $region18: #{resnet_tsa_forward.11} parent=11 // pred_check_branch
        %123 = sbr.rel (%p121) target = $region20
      $region19: #{resnet_tsa_forward.11} parent=11 // pred_region
        _
      $region20: #{resnet_tsa_forward.11} parent=11 // pred_fallthru
        _
    $region12: #{resnet_tsa_forward.11} parent=5 // pred_fallthru
      _
    %p124 = scmp.lt.s32.totalorder %s9, 2
    // Predicated region
    $region21: #{resnet_tsa_forward.11} parent=5 // pred_check
      %p125 = pneg %p124
    $region22: #{resnet_tsa_forward.11} parent=5 // pred_check_branch
      %127 = sbr.rel (%p125) target = $region24
    $region23: #{resnet_tsa_forward.11} parent=5 // pred_region
      // Predicated region
      $region25: #{resnet_tsa_forward.11} parent=23 // pred_check
        %p128 = pneg %p29
      $region26: #{resnet_tsa_forward.11} parent=23 // pred_check_branch
        %130 = sbr.rel (%p128) target = $region28
      $region27: #{resnet_tsa_forward.11} parent=23 // pred_region
        %s131 = smul.u32 32, %s9
        %p132 = scmp.lt.s32.totalorder %s131, 63
        %s133 = scalar_select %p132, %s131, 63
        %s134 = smul.addr %s133, 9
        %s135 = smul.addr %s134, 4
        %s136 = scalar_lea.vmem %s0, %s135
        %s137 = smul.u32 32, %s9
      $region28: #{resnet_tsa_forward.11} parent=23 // pred_fallthru
        _
    $region24: #{resnet_tsa_forward.11} parent=5 // pred_fallthru
      _
    %p138 = scmp.le.s32.totalorder 1, %s9
    %p139 = scmp.lt.s32.totalorder %s9, 3
    %p140 = pnand %p138, %p139
    %p141 = pneg %p140
    // Predicated region
    $region29: #{resnet_tsa_forward.11} parent=5 // pred_check
      _
    $region30: #{resnet_tsa_forward.11} parent=5 // pred_check_branch
      %143 = sbr.rel (%p140) target = $region32
    $region31: #{resnet_tsa_forward.11} parent=5 // pred_region
      %s144 = ssub.s32 %s9, 1
      %s145 = smul.u32 32, %s14
      %p146 = scmp.lt.s32.totalorder %s145, 63
      %s147 = scalar_select %p146, %s145, 63
      %s148 = smul.addr %s147, 9
      %s149 = smul.addr %s148, 4
      %s150 = scalar_lea.vmem %s0, %s149
      %p151 = pneg %p35
      %p152 = pneg %p32
      %p153 = pneg %p56
      %p154 = pneg %p53
      %p155 = pneg %p77
      %p156 = pneg %p74
      %p157 = pneg %p103
      %p158 = pneg %p100
      %s159 = smul.u32 32, %s14
      %p160 = scmp.lt.s32.totalorder %s159, 63
      %s161 = scalar_select %p160, %s159, 63
      %s162 = smul.addr %s161, 4
      %s163 = scalar_lea.vmem %s3, %s162
      %s164 = smul.u32 32, %s14
      %p165 = scmp.lt.s32.totalorder %s164, 63
      %s166 = scalar_select %p165, %s164, 63
      %s167 = smul.addr %s166, 9
      %s168 = smul.addr %s167, 4
      %s169 = scalar_lea.vmem %s0, %s168
      %s170 = smul.u32 32, %s14
      %s171 = smul.u32 32, %s14
      %p172 = scmp.lt.s32.totalorder %s171, 63
      %s173 = scalar_select %p172, %s171, 63
      %s174 = smul.addr %s173, 4
      %s175 = scalar_lea.vmem %s3, %s174
      %s176 = smul.u32 32, %s14
      %v178 = vld [vmem:[%s169] sm:$0xff]
      %v179 = vld [vmem:[%s169 + $0x8] sm:$0xff]
      %v180 = vld [vmem:[%s169 + $0x10] sm:$0xff]
      %v181 = vld [vmem:[%s169 + $0x18] sm:$0xff]
      %v182 = vld [vmem:[%s169 + $0x20] sm:$0xf]
      %v183 = vld [vmem:[%s169 + $0x24] sm:$0xff]
      %v184 = vld [vmem:[%s169 + $0x2c] sm:$0xff]
      %v185 = vld [vmem:[%s169 + $0x34] sm:$0xff]
      %v186 = vld [vmem:[%s169 + $0x3c] sm:$0xff]
      %v187 = vld [vmem:[%s169 + $0x44] sm:$0xf]
      %v188 = vld [vmem:[%s169 + $0x48] sm:$0xff]
      %v189 = vld [vmem:[%s169 + $0x50] sm:$0xff]
      %v190 = vld [vmem:[%s169 + $0x58] sm:$0xff]
      %v191 = vld [vmem:[%s169 + $0x60] sm:$0xff]
      %v192 = vld [vmem:[%s169 + $0x68] sm:$0xf]
      %v193 = vld [vmem:[%s169 + $0x6c] sm:$0xff]
      %v194 = vld [vmem:[%s169 + $0x74] sm:$0xff]
      %v195 = vld [vmem:[%s169 + $0x7c] sm:$0xff]
      %v196 = vld [vmem:[%s169 + $0x84] sm:$0xff]
      %v197 = vld [vmem:[%s169 + $0x8c] sm:$0xf]
      %v198 = vld [vmem:[%s169 + $0x90] sm:$0xff]
      %v199 = vld [vmem:[%s169 + $0x98] sm:$0xff]
      %v200 = vld [vmem:[%s169 + $0xa0] sm:$0xff]
      %v201 = vld [vmem:[%s169 + $0xa8] sm:$0xff]
      %v202 = vld [vmem:[%s169 + $0xb0] sm:$0xf]
      %v203 = vld [vmem:[%s169 + $0xb4] sm:$0xff]
      %v204 = vld [vmem:[%s169 + $0xbc] sm:$0xff]
      %v205 = vld [vmem:[%s169 + $0xc4] sm:$0xff]
      %v206 = vld [vmem:[%s169 + $0xcc] sm:$0xff]
      %v207 = vld [vmem:[%s169 + $0xd4] sm:$0xf]
      %v208 = vld [vmem:[%s169 + $0xd8] sm:$0xff]
      %v209 = vld [vmem:[%s169 + $0xe0] sm:$0xff]
      %v210 = vld [vmem:[%s169 + $0xe8] sm:$0xff]
      %v211 = vld [vmem:[%s169 + $0xf0] sm:$0xff]
      %v212 = vld [vmem:[%s169 + $0xf8] sm:$0xf]
      %v213 = vld [vmem:[%s169 + $0xfc] sm:$0xff]
      %v214 = vld [vmem:[%s169 + $0x104] sm:$0xff]
      %v215 = vld [vmem:[%s169 + $0x10c] sm:$0xff]
      %v216 = vld [vmem:[%s169 + $0x114] sm:$0xff]
      %v217 = vld [vmem:[%s169 + $0x11c] sm:$0xf]
      %v218 = vld [vmem:[%s169 + $0x120] sm:$0xff]
      %v219 = vld [vmem:[%s169 + $0x128] sm:$0xff]
      %v220 = vld [vmem:[%s169 + $0x130] sm:$0xff]
      %v221 = vld [vmem:[%s169 + $0x138] sm:$0xff]
      %v222 = vld [vmem:[%s169 + $0x140] sm:$0xf]
      %v223 = vld [vmem:[%s169 + $0x144] sm:$0xff]
      %v224 = vld [vmem:[%s169 + $0x14c] sm:$0xff]
      %v225 = vld [vmem:[%s169 + $0x154] sm:$0xff]
      %v226 = vld [vmem:[%s169 + $0x15c] sm:$0xff]
      %v227 = vld [vmem:[%s169 + $0x164] sm:$0xf]
      %v228 = vld [vmem:[%s169 + $0x168] sm:$0xff]
      %v229 = vld [vmem:[%s169 + $0x170] sm:$0xff]
      %v230 = vld [vmem:[%s169 + $0x178] sm:$0xff]
      %v231 = vld [vmem:[%s169 + $0x180] sm:$0xff]
      %v232 = vld [vmem:[%s169 + $0x188] sm:$0xf]
      %v233 = vld [vmem:[%s169 + $0x18c] sm:$0xff]
      %v234 = vld [vmem:[%s169 + $0x194] sm:$0xff]
      %v235 = vld [vmem:[%s169 + $0x19c] sm:$0xff]
      %v236 = vld [vmem:[%s169 + $0x1a4] sm:$0xff]
      %v237 = vld [vmem:[%s169 + $0x1ac] sm:$0xf]
      %v238 = vld [vmem:[%s169 + $0x1b0] sm:$0xff]
      %v239 = vld [vmem:[%s169 + $0x1b8] sm:$0xff]
      %v240 = vld [vmem:[%s169 + $0x1c0] sm:$0xff]
      %v241 = vld [vmem:[%s169 + $0x1c8] sm:$0xff]
      %v242 = vld [vmem:[%s169 + $0x1d0] sm:$0xf]
      %v243 = vld [vmem:[%s169 + $0x1d4] sm:$0xff]
      %v244 = vld [vmem:[%s169 + $0x1dc] sm:$0xff]
      %v245 = vld [vmem:[%s169 + $0x1e4] sm:$0xff]
      %v246 = vld [vmem:[%s169 + $0x1ec] sm:$0xff]
      %v247 = vld [vmem:[%s169 + $0x1f4] sm:$0xf]
      %v248 = vld [vmem:[%s169 + $0x1f8] sm:$0xff]
      %v249 = vld [vmem:[%s169 + $0x200] sm:$0xff]
      %v250 = vld [vmem:[%s169 + $0x208] sm:$0xff]
      %v251 = vld [vmem:[%s169 + $0x210] sm:$0xff]
      %v252 = vld [vmem:[%s169 + $0x218] sm:$0xf]
      %v253 = vld [vmem:[%s169 + $0x21c] sm:$0xff]
      %v254 = vld [vmem:[%s169 + $0x224] sm:$0xff]
      %v255 = vld [vmem:[%s169 + $0x22c] sm:$0xff]
      %v256 = vld [vmem:[%s169 + $0x234] sm:$0xff]
      %v257 = vld [vmem:[%s169 + $0x23c] sm:$0xf]
      %v258 = vld [vmem:[%s169 + $0x240] sm:$0xff]
      %v259 = vld [vmem:[%s169 + $0x248] sm:$0xff]
      %v260 = vld [vmem:[%s169 + $0x250] sm:$0xff]
      %v261 = vld [vmem:[%s169 + $0x258] sm:$0xff]
      %v262 = vld [vmem:[%s169 + $0x260] sm:$0xf]
      %v263 = vld [vmem:[%s169 + $0x264] sm:$0xff]
      %v264 = vld [vmem:[%s169 + $0x26c] sm:$0xff]
      %v265 = vld [vmem:[%s169 + $0x274] sm:$0xff]
      %v266 = vld [vmem:[%s169 + $0x27c] sm:$0xff]
      %v267 = vld [vmem:[%s169 + $0x284] sm:$0xf]
      %v268 = vld [vmem:[%s169 + $0x288] sm:$0xff]
      %v269 = vld [vmem:[%s169 + $0x290] sm:$0xff]
      %v270 = vld [vmem:[%s169 + $0x298] sm:$0xff]
      %v271 = vld [vmem:[%s169 + $0x2a0] sm:$0xff]
      %v272 = vld [vmem:[%s169 + $0x2a8] sm:$0xf]
      %v273 = vld [vmem:[%s169 + $0x2ac] sm:$0xff]
      %v274 = vld [vmem:[%s169 + $0x2b4] sm:$0xff]
      %v275 = vld [vmem:[%s169 + $0x2bc] sm:$0xff]
      %v276 = vld [vmem:[%s169 + $0x2c4] sm:$0xff]
      %v277 = vld [vmem:[%s169 + $0x2cc] sm:$0xf]
      %v278 = vld [vmem:[%s169 + $0x2d0] sm:$0xff]
      %v279 = vld [vmem:[%s169 + $0x2d8] sm:$0xff]
      %v280 = vld [vmem:[%s169 + $0x2e0] sm:$0xff]
      %v281 = vld [vmem:[%s169 + $0x2e8] sm:$0xff]
      %v282 = vld [vmem:[%s169 + $0x2f0] sm:$0xf]
      %v283 = vld [vmem:[%s169 + $0x2f4] sm:$0xff]
      %v284 = vld [vmem:[%s169 + $0x2fc] sm:$0xff]
      %v285 = vld [vmem:[%s169 + $0x304] sm:$0xff]
      %v286 = vld [vmem:[%s169 + $0x30c] sm:$0xff]
      %v287 = vld [vmem:[%s169 + $0x314] sm:$0xf]
      %v288 = vld [vmem:[%s169 + $0x318] sm:$0xff]
      %v289 = vld [vmem:[%s169 + $0x320] sm:$0xff]
      %v290 = vld [vmem:[%s169 + $0x328] sm:$0xff]
      %v291 = vld [vmem:[%s169 + $0x330] sm:$0xff]
      %v292 = vld [vmem:[%s169 + $0x338] sm:$0xf]
      %v293 = vld [vmem:[%s169 + $0x33c] sm:$0xff]
      %v294 = vld [vmem:[%s169 + $0x344] sm:$0xff]
      %v295 = vld [vmem:[%s169 + $0x34c] sm:$0xff]
      %v296 = vld [vmem:[%s169 + $0x354] sm:$0xff]
      %v297 = vld [vmem:[%s169 + $0x35c] sm:$0xf]
      %v298 = vld [vmem:[%s169 + $0x360] sm:$0xff]
      %v299 = vld [vmem:[%s169 + $0x368] sm:$0xff]
      %v300 = vld [vmem:[%s169 + $0x370] sm:$0xff]
      %v301 = vld [vmem:[%s169 + $0x378] sm:$0xff]
      %v302 = vld [vmem:[%s169 + $0x380] sm:$0xf]
      %v303 = vld [vmem:[%s169 + $0x384] sm:$0xff]
      %v304 = vld [vmem:[%s169 + $0x38c] sm:$0xff]
      %v305 = vld [vmem:[%s169 + $0x394] sm:$0xff]
      %v306 = vld [vmem:[%s169 + $0x39c] sm:$0xff]
      %v307 = vld [vmem:[%s169 + $0x3a4] sm:$0xf]
      %v308 = vld [vmem:[%s169 + $0x3a8] sm:$0xff]
      %v309 = vld [vmem:[%s169 + $0x3b0] sm:$0xff]
      %v310 = vld [vmem:[%s169 + $0x3b8] sm:$0xff]
      %v311 = vld [vmem:[%s169 + $0x3c0] sm:$0xff]
      %v312 = vld [vmem:[%s169 + $0x3c8] sm:$0xf]
      %v313 = vld [vmem:[%s169 + $0x3cc] sm:$0xff]
      %v314 = vld [vmem:[%s169 + $0x3d4] sm:$0xff]
      %v315 = vld [vmem:[%s169 + $0x3dc] sm:$0xff]
      %v316 = vld [vmem:[%s169 + $0x3e4] sm:$0xff]
      %v317 = vld [vmem:[%s169 + $0x3ec] sm:$0xf]
      %v318 = vld [vmem:[%s169 + $0x3f0] sm:$0xff]
      %v319 = vld [vmem:[%s169 + $0x3f8] sm:$0xff]
      %v320 = vld [vmem:[%s169 + $0x400] sm:$0xff]
      %v321 = vld [vmem:[%s169 + $0x408] sm:$0xff]
      %v322 = vld [vmem:[%s169 + $0x410] sm:$0xf]
      %v323 = vld [vmem:[%s169 + $0x414] sm:$0xff]
      %v324 = vld [vmem:[%s169 + $0x41c] sm:$0xff]
      %v325 = vld [vmem:[%s169 + $0x424] sm:$0xff]
      %v326 = vld [vmem:[%s169 + $0x42c] sm:$0xff]
      %v327 = vld [vmem:[%s169 + $0x434] sm:$0xf]
      %v328 = vld [vmem:[%s169 + $0x438] sm:$0xff]
      %v329 = vld [vmem:[%s169 + $0x440] sm:$0xff]
      %v330 = vld [vmem:[%s169 + $0x448] sm:$0xff]
      %v331 = vld [vmem:[%s169 + $0x450] sm:$0xff]
      %v332 = vld [vmem:[%s169 + $0x458] sm:$0xf]
      %v333 = vld [vmem:[%s169 + $0x45c] sm:$0xff]
      %v334 = vld [vmem:[%s169 + $0x464] sm:$0xff]
      %v335 = vld [vmem:[%s169 + $0x46c] sm:$0xff]
      %v336 = vld [vmem:[%s169 + $0x474] sm:$0xff]
      %v337 = vld [vmem:[%s169 + $0x47c] sm:$0xf]
      %v338 = vld [vmem:[%s1] sm:$0xf]
      %v339 = vld [vmem:[%s1 + $0x4] sm:$0xf]
      %v340 = vld [vmem:[%s1 + $0x8] sm:$0xf]
      %v341 = vld [vmem:[%s1 + $0xc] sm:$0xf]
      %v342 = vld [vmem:[%s1 + $0x10] sm:$0xf]
      %v343 = vld [vmem:[%s1 + $0x14] sm:$0xf]
      %v344 = vld [vmem:[%s1 + $0x18] sm:$0xf]
      %v345 = vld [vmem:[%s1 + $0x1c] sm:$0xf]
      %v346 = vld [vmem:[%s1 + $0x20] sm:$0xf]
      %v347 = vld [vmem:[%s1 + $0x24] sm:$0xf]
      %v348 = vld [vmem:[%s1 + $0x28] sm:$0xf]
      %v349 = vld [vmem:[%s1 + $0x2c] sm:$0xf]
      %v350 = vld [vmem:[%s1 + $0x30] sm:$0xf]
      %v351 = vld [vmem:[%s1 + $0x34] sm:$0xf]
      %v352 = vld [vmem:[%s1 + $0x38] sm:$0xf]
      %v353 = vld [vmem:[%s1 + $0x3c] sm:$0xf]
      %v354 = vld [vmem:[%s1 + $0x40] sm:$0xf]
      %v355 = vld [vmem:[%s1 + $0x44] sm:$0xf]
      %v356 = vld [vmem:[%s1 + $0x48] sm:$0xf]
      %v357 = vld [vmem:[%s1 + $0x4c] sm:$0xf]
      %v358 = vld [vmem:[%s1 + $0x50] sm:$0xf]
      %v359 = vld [vmem:[%s1 + $0x54] sm:$0xf]
      %v360 = vld [vmem:[%s1 + $0x58] sm:$0xf]
      %v361 = vld [vmem:[%s1 + $0x5c] sm:$0xf]
      %v362 = vld [vmem:[%s1 + $0x60] sm:$0xf]
      %v363 = vld [vmem:[%s1 + $0x64] sm:$0xf]
      %v364 = vld [vmem:[%s1 + $0x68] sm:$0xf]
      %v365 = vld [vmem:[%s1 + $0x6c] sm:$0xf]
      %v366 = vld [vmem:[%s1 + $0x70] sm:$0xf]
      %v367 = vld [vmem:[%s1 + $0x74] sm:$0xf]
      %v368 = vld [vmem:[%s1 + $0x78] sm:$0xf]
      %v369 = vld [vmem:[%s1 + $0x7c] sm:$0xf]
      %v370 = vld [vmem:[%s1 + $0x80] sm:$0xf]
      %v371 = vld [vmem:[%s1 + $0x84] sm:$0xf]
      %v372 = vld [vmem:[%s1 + $0x88] sm:$0xf]
      %v373 = vld [vmem:[%s1 + $0x8c] sm:$0xf]
      %v374 = vld [vmem:[%s1 + $0x90] sm:$0xf]
      %v375 = vld [vmem:[%s1 + $0x94] sm:$0xf]
      %v376 = vld [vmem:[%s1 + $0x98] sm:$0xf]
      %v377 = vld [vmem:[%s1 + $0x9c] sm:$0xf]
      %v378 = vld [vmem:[%s1 + $0xa0] sm:$0xf]
      %v379 = vld [vmem:[%s1 + $0xa4] sm:$0xf]
      %v380 = vld [vmem:[%s1 + $0xa8] sm:$0xf]
      %v381 = vld [vmem:[%s1 + $0xac] sm:$0xf]
      %v382 = vld [vmem:[%s1 + $0xb0] sm:$0xf]
      %v383 = vld [vmem:[%s1 + $0xb4] sm:$0xf]
      %v384 = vld [vmem:[%s1 + $0xb8] sm:$0xf]
      %v385 = vld [vmem:[%s1 + $0xbc] sm:$0xf]
      %v386 = vld [vmem:[%s1 + $0xc0] sm:$0xf]
      %v387 = vld [vmem:[%s1 + $0xc4] sm:$0xf]
      %v388 = vld [vmem:[%s1 + $0xc8] sm:$0xf]
      %v389 = vld [vmem:[%s1 + $0xcc] sm:$0xf]
      %v390 = vld [vmem:[%s1 + $0xd0] sm:$0xf]
      %v391 = vld [vmem:[%s1 + $0xd4] sm:$0xf]
      %v392 = vld [vmem:[%s1 + $0xd8] sm:$0xf]
      %v393 = vld [vmem:[%s1 + $0xdc] sm:$0xf]
      %v394 = vld [vmem:[%s1 + $0xe0] sm:$0xf]
      %v395 = vld [vmem:[%s1 + $0xe4] sm:$0xf]
      %v396 = vld [vmem:[%s1 + $0xe8] sm:$0xf]
      %v397 = vld [vmem:[%s1 + $0xec] sm:$0xf]
      %v398 = vld [vmem:[%s1 + $0xf0] sm:$0xf]
      %v399 = vld [vmem:[%s1 + $0xf4] sm:$0xf]
      %v400 = vld [vmem:[%s1 + $0xf8] sm:$0xf]
      %v401 = vld [vmem:[%s1 + $0xfc] sm:$0xf]
      %v402 = vld [vmem:[%s1 + $0x100] sm:$0xf]
      %v403 = vld [vmem:[%s1 + $0x104] sm:$0xf]
      %v404 = vld [vmem:[%s1 + $0x108] sm:$0xf]
      %v405 = vld [vmem:[%s1 + $0x10c] sm:$0xf]
      %v406 = vld [vmem:[%s1 + $0x110] sm:$0xf]
      %v407 = vld [vmem:[%s1 + $0x114] sm:$0xf]
      %v408 = vld [vmem:[%s1 + $0x118] sm:$0xf]
      %v409 = vld [vmem:[%s1 + $0x11c] sm:$0xf]
      %v410 = vld [vmem:[%s1 + $0x120] sm:$0xf]
      %v411 = vld [vmem:[%s1 + $0x124] sm:$0xf]
      %v412 = vld [vmem:[%s1 + $0x128] sm:$0xf]
      %v413 = vld [vmem:[%s1 + $0x12c] sm:$0xf]
      %v414 = vld [vmem:[%s1 + $0x130] sm:$0xf]
      %v415 = vld [vmem:[%s1 + $0x134] sm:$0xf]
      %v416 = vld [vmem:[%s1 + $0x138] sm:$0xf]
      %v417 = vld [vmem:[%s1 + $0x13c] sm:$0xf]
      %v418 = vld [vmem:[%s1 + $0x140] sm:$0xf]
      %v419 = vld [vmem:[%s1 + $0x144] sm:$0xf]
      %v420 = vld [vmem:[%s1 + $0x148] sm:$0xf]
      %v421 = vld [vmem:[%s1 + $0x14c] sm:$0xf]
      %v422 = vld [vmem:[%s1 + $0x150] sm:$0xf]
      %v423 = vld [vmem:[%s1 + $0x154] sm:$0xf]
      %v424 = vld [vmem:[%s1 + $0x158] sm:$0xf]
      %v425 = vld [vmem:[%s1 + $0x15c] sm:$0xf]
      %v426 = vld [vmem:[%s1 + $0x160] sm:$0xf]
      %v427 = vld [vmem:[%s1 + $0x164] sm:$0xf]
      %v428 = vld [vmem:[%s1 + $0x168] sm:$0xf]
      %v429 = vld [vmem:[%s1 + $0x16c] sm:$0xf]
      %v430 = vld [vmem:[%s1 + $0x170] sm:$0xf]
      %v431 = vld [vmem:[%s1 + $0x174] sm:$0xf]
      %v432 = vld [vmem:[%s1 + $0x178] sm:$0xf]
      %v433 = vld [vmem:[%s1 + $0x17c] sm:$0xf]
      %v434 = vld [vmem:[%s1 + $0x180] sm:$0xf]
      %v435 = vld [vmem:[%s1 + $0x184] sm:$0xf]
      %v436 = vld [vmem:[%s1 + $0x188] sm:$0xf]
      %v437 = vld [vmem:[%s1 + $0x18c] sm:$0xf]
      %v438 = vld [vmem:[%s1 + $0x190] sm:$0xf]
      %v439 = vld [vmem:[%s1 + $0x194] sm:$0xf]
      %v440 = vld [vmem:[%s1 + $0x198] sm:$0xf]
      %v441 = vld [vmem:[%s1 + $0x19c] sm:$0xf]
      %v442 = vld [vmem:[%s1 + $0x1a0] sm:$0xf]
      %v443 = vld [vmem:[%s1 + $0x1a4] sm:$0xf]
      %v444 = vld [vmem:[%s1 + $0x1a8] sm:$0xf]
      %v445 = vld [vmem:[%s1 + $0x1ac] sm:$0xf]
      %v446 = vld [vmem:[%s1 + $0x1b0] sm:$0xf]
      %v447 = vld [vmem:[%s1 + $0x1b4] sm:$0xf]
      %v448 = vld [vmem:[%s1 + $0x1b8] sm:$0xf]
      %v449 = vld [vmem:[%s1 + $0x1bc] sm:$0xf]
      %v450 = vld [vmem:[%s1 + $0x1c0] sm:$0xf]
      %v451 = vld [vmem:[%s1 + $0x1c4] sm:$0xf]
      %v452 = vld [vmem:[%s1 + $0x1c8] sm:$0xf]
      %v453 = vld [vmem:[%s1 + $0x1cc] sm:$0xf]
      %v454 = vld [vmem:[%s1 + $0x1d0] sm:$0xf]
      %v455 = vld [vmem:[%s1 + $0x1d4] sm:$0xf]
      %v456 = vld [vmem:[%s1 + $0x1d8] sm:$0xf]
      %v457 = vld [vmem:[%s1 + $0x1dc] sm:$0xf]
      %v458 = vld [vmem:[%s1 + $0x1e0] sm:$0xf]
      %v459 = vld [vmem:[%s1 + $0x1e4] sm:$0xf]
      %v460 = vld [vmem:[%s1 + $0x1e8] sm:$0xf]
      %v461 = vld [vmem:[%s1 + $0x1ec] sm:$0xf]
      %v462 = vld [vmem:[%s1 + $0x1f0] sm:$0xf]
      %v463 = vld [vmem:[%s1 + $0x1f4] sm:$0xf]
      %v464 = vld [vmem:[%s1 + $0x1f8] sm:$0xf]
      %v465 = vld [vmem:[%s1 + $0x1fc] sm:$0xf]
      %v466 = vld [vmem:[%s1 + $0x200] sm:$0xf]
      %v467 = vld [vmem:[%s1 + $0x204] sm:$0xf]
      %v468 = vld [vmem:[%s1 + $0x208] sm:$0xf]
      %v469 = vld [vmem:[%s1 + $0x20c] sm:$0xf]
      %v470 = vld [vmem:[%s1 + $0x210] sm:$0xf]
      %v471 = vld [vmem:[%s1 + $0x214] sm:$0xf]
      %v472 = vld [vmem:[%s1 + $0x218] sm:$0xf]
      %v473 = vld [vmem:[%s1 + $0x21c] sm:$0xf]
      %v474 = vld [vmem:[%s1 + $0x220] sm:$0xf]
      %v475 = vld [vmem:[%s1 + $0x224] sm:$0xf]
      %v476 = vld [vmem:[%s1 + $0x228] sm:$0xf]
      %v477 = vld [vmem:[%s1 + $0x22c] sm:$0xf]
      %v478 = vld [vmem:[%s1 + $0x230] sm:$0xf]
      %v479 = vld [vmem:[%s1 + $0x234] sm:$0xf]
      %v480 = vld [vmem:[%s1 + $0x238] sm:$0xf]
      %v481 = vld [vmem:[%s1 + $0x23c] sm:$0xf]
      %v482 = vld [vmem:[%s2] sm:$0x1]
      %v484 = vlaneseq
      %v485 = vshrl.u32 %v484, 7
      %v486 = vsub.s32 0, %v485
      %v487 = vrot.slane %v482, %v486
      %v649 = vunpack.c.l.b16 %v178
      %v650 = vunpack.c.h.b16 %v178
      %v651 = vunpack.c.l.b16 %v179
      %v652 = vunpack.c.h.b16 %v179
      %v653 = vunpack.c.l.b16 %v180
      %v654 = vunpack.c.h.b16 %v180
      %v655 = vunpack.c.l.b16 %v181
      %v656 = vunpack.c.h.b16 %v181
      %v657 = vunpack.c.l.b16 %v182
      %v658 = vunpack.c.l.b16 %v183
      %v659 = vunpack.c.h.b16 %v183
      %v660 = vunpack.c.l.b16 %v184
      %v661 = vunpack.c.h.b16 %v184
      %v662 = vunpack.c.l.b16 %v185
      %v663 = vunpack.c.h.b16 %v185
      %v664 = vunpack.c.l.b16 %v186
      %v665 = vunpack.c.h.b16 %v186
      %v666 = vunpack.c.l.b16 %v187
      %v667 = vunpack.c.l.b16 %v188
      %v668 = vunpack.c.h.b16 %v188
      %v669 = vunpack.c.l.b16 %v189
      %v670 = vunpack.c.h.b16 %v189
      %v671 = vunpack.c.l.b16 %v190
      %v672 = vunpack.c.h.b16 %v190
      %v673 = vunpack.c.l.b16 %v191
      %v674 = vunpack.c.h.b16 %v191
      %v675 = vunpack.c.l.b16 %v192
      %v676 = vunpack.c.l.b16 %v193
      %v677 = vunpack.c.h.b16 %v193
      %v678 = vunpack.c.l.b16 %v194
      %v679 = vunpack.c.h.b16 %v194
      %v680 = vunpack.c.l.b16 %v195
      %v681 = vunpack.c.h.b16 %v195
      %v682 = vunpack.c.l.b16 %v196
      %v683 = vunpack.c.h.b16 %v196
      %v684 = vunpack.c.l.b16 %v197
      %v685 = vunpack.c.l.b16 %v198
      %v686 = vunpack.c.h.b16 %v198
      %v687 = vunpack.c.l.b16 %v199
      %v688 = vunpack.c.h.b16 %v199
      %v689 = vunpack.c.l.b16 %v200
      %v690 = vunpack.c.h.b16 %v200
      %v691 = vunpack.c.l.b16 %v201
      %v692 = vunpack.c.h.b16 %v201
      %v693 = vunpack.c.l.b16 %v202
      %v694 = vunpack.c.l.b16 %v203
      %v695 = vunpack.c.h.b16 %v203
      %v696 = vunpack.c.l.b16 %v204
      %v697 = vunpack.c.h.b16 %v204
      %v698 = vunpack.c.l.b16 %v205
      %v699 = vunpack.c.h.b16 %v205
      %v700 = vunpack.c.l.b16 %v206
      %v701 = vunpack.c.h.b16 %v206
      %v702 = vunpack.c.l.b16 %v207
      %v703 = vunpack.c.l.b16 %v208
      %v704 = vunpack.c.h.b16 %v208
      %v705 = vunpack.c.l.b16 %v209
      %v706 = vunpack.c.h.b16 %v209
      %v707 = vunpack.c.l.b16 %v210
      %v708 = vunpack.c.h.b16 %v210
      %v709 = vunpack.c.l.b16 %v211
      %v710 = vunpack.c.h.b16 %v211
      %v711 = vunpack.c.l.b16 %v212
      %v712 = vunpack.c.l.b16 %v213
      %v713 = vunpack.c.h.b16 %v213
      %v714 = vunpack.c.l.b16 %v214
      %v715 = vunpack.c.h.b16 %v214
      %v716 = vunpack.c.l.b16 %v215
      %v717 = vunpack.c.h.b16 %v215
      %v718 = vunpack.c.l.b16 %v216
      %v719 = vunpack.c.h.b16 %v216
      %v720 = vunpack.c.l.b16 %v217
      %v721 = vunpack.c.l.b16 %v218
      %v722 = vunpack.c.h.b16 %v218
      %v723 = vunpack.c.l.b16 %v219
      %v724 = vunpack.c.h.b16 %v219
      %v725 = vunpack.c.l.b16 %v220
      %v726 = vunpack.c.h.b16 %v220
      %v727 = vunpack.c.l.b16 %v221
      %v728 = vunpack.c.h.b16 %v221
      %v729 = vunpack.c.l.b16 %v222
      %v730 = vunpack.c.l.b16 %v223
      %v731 = vunpack.c.h.b16 %v223
      %v732 = vunpack.c.l.b16 %v224
      %v733 = vunpack.c.h.b16 %v224
      %v734 = vunpack.c.l.b16 %v225
      %v735 = vunpack.c.h.b16 %v225
      %v736 = vunpack.c.l.b16 %v226
      %v737 = vunpack.c.h.b16 %v226
      %v738 = vunpack.c.l.b16 %v227
      %v739 = vunpack.c.l.b16 %v228
      %v740 = vunpack.c.h.b16 %v228
      %v741 = vunpack.c.l.b16 %v229
      %v742 = vunpack.c.h.b16 %v229
      %v743 = vunpack.c.l.b16 %v230
      %v744 = vunpack.c.h.b16 %v230
      %v745 = vunpack.c.l.b16 %v231
      %v746 = vunpack.c.h.b16 %v231
      %v747 = vunpack.c.l.b16 %v232
      %v748 = vunpack.c.l.b16 %v233
      %v749 = vunpack.c.h.b16 %v233
      %v750 = vunpack.c.l.b16 %v234
      %v751 = vunpack.c.h.b16 %v234
      %v752 = vunpack.c.l.b16 %v235
      %v753 = vunpack.c.h.b16 %v235
      %v754 = vunpack.c.l.b16 %v236
      %v755 = vunpack.c.h.b16 %v236
      %v756 = vunpack.c.l.b16 %v237
      %v757 = vunpack.c.l.b16 %v238
      %v758 = vunpack.c.h.b16 %v238
      %v759 = vunpack.c.l.b16 %v239
      %v760 = vunpack.c.h.b16 %v239
      %v761 = vunpack.c.l.b16 %v240
      %v762 = vunpack.c.h.b16 %v240
      %v763 = vunpack.c.l.b16 %v241
      %v764 = vunpack.c.h.b16 %v241
      %v765 = vunpack.c.l.b16 %v242
      %v766 = vunpack.c.l.b16 %v243
      %v767 = vunpack.c.h.b16 %v243
      %v768 = vunpack.c.l.b16 %v244
      %v769 = vunpack.c.h.b16 %v244
      %v770 = vunpack.c.l.b16 %v245
      %v771 = vunpack.c.h.b16 %v245
      %v772 = vunpack.c.l.b16 %v246
      %v773 = vunpack.c.h.b16 %v246
      %v774 = vunpack.c.l.b16 %v247
      %v775 = vunpack.c.l.b16 %v248
      %v776 = vunpack.c.h.b16 %v248
      %v777 = vunpack.c.l.b16 %v249
      %v778 = vunpack.c.h.b16 %v249
      %v779 = vunpack.c.l.b16 %v250
      %v780 = vunpack.c.h.b16 %v250
      %v781 = vunpack.c.l.b16 %v251
      %v782 = vunpack.c.h.b16 %v251
      %v783 = vunpack.c.l.b16 %v252
      %v784 = vunpack.c.l.b16 %v253
      %v785 = vunpack.c.h.b16 %v253
      %v786 = vunpack.c.l.b16 %v254
      %v787 = vunpack.c.h.b16 %v254
      %v788 = vunpack.c.l.b16 %v255
      %v789 = vunpack.c.h.b16 %v255
      %v790 = vunpack.c.l.b16 %v256
      %v791 = vunpack.c.h.b16 %v256
      %v792 = vunpack.c.l.b16 %v257
      %v793 = vunpack.c.l.b16 %v258
      %v794 = vunpack.c.h.b16 %v258
      %v795 = vunpack.c.l.b16 %v259
      %v796 = vunpack.c.h.b16 %v259
      %v797 = vunpack.c.l.b16 %v260
      %v798 = vunpack.c.h.b16 %v260
      %v799 = vunpack.c.l.b16 %v261
      %v800 = vunpack.c.h.b16 %v261
      %v801 = vunpack.c.l.b16 %v262
      %v802 = vunpack.c.l.b16 %v263
      %v803 = vunpack.c.h.b16 %v263
      %v804 = vunpack.c.l.b16 %v264
      %v805 = vunpack.c.h.b16 %v264
      %v806 = vunpack.c.l.b16 %v265
      %v807 = vunpack.c.h.b16 %v265
      %v808 = vunpack.c.l.b16 %v266
      %v809 = vunpack.c.h.b16 %v266
      %v810 = vunpack.c.l.b16 %v267
      %v811 = vunpack.c.l.b16 %v268
      %v812 = vunpack.c.h.b16 %v268
      %v813 = vunpack.c.l.b16 %v269
      %v814 = vunpack.c.h.b16 %v269
      %v815 = vunpack.c.l.b16 %v270
      %v816 = vunpack.c.h.b16 %v270
      %v817 = vunpack.c.l.b16 %v271
      %v818 = vunpack.c.h.b16 %v271
      %v819 = vunpack.c.l.b16 %v272
      %v820 = vunpack.c.l.b16 %v273
      %v821 = vunpack.c.h.b16 %v273
      %v822 = vunpack.c.l.b16 %v274
      %v823 = vunpack.c.h.b16 %v274
      %v824 = vunpack.c.l.b16 %v275
      %v825 = vunpack.c.h.b16 %v275
      %v826 = vunpack.c.l.b16 %v276
      %v827 = vunpack.c.h.b16 %v276
      %v828 = vunpack.c.l.b16 %v277
      %v829 = vunpack.c.l.b16 %v278
      %v830 = vunpack.c.h.b16 %v278
      %v831 = vunpack.c.l.b16 %v279
      %v832 = vunpack.c.h.b16 %v279
      %v833 = vunpack.c.l.b16 %v280
      %v834 = vunpack.c.h.b16 %v280
      %v835 = vunpack.c.l.b16 %v281
      %v836 = vunpack.c.h.b16 %v281
      %v837 = vunpack.c.l.b16 %v282
      %v838 = vunpack.c.l.b16 %v283
      %v839 = vunpack.c.h.b16 %v283
      %v840 = vunpack.c.l.b16 %v284
      %v841 = vunpack.c.h.b16 %v284
      %v842 = vunpack.c.l.b16 %v285
      %v843 = vunpack.c.h.b16 %v285
      %v844 = vunpack.c.l.b16 %v286
      %v845 = vunpack.c.h.b16 %v286
      %v846 = vunpack.c.l.b16 %v287
      %v847 = vunpack.c.l.b16 %v288
      %v848 = vunpack.c.h.b16 %v288
      %v849 = vunpack.c.l.b16 %v289
      %v850 = vunpack.c.h.b16 %v289
      %v851 = vunpack.c.l.b16 %v290
      %v852 = vunpack.c.h.b16 %v290
      %v853 = vunpack.c.l.b16 %v291
      %v854 = vunpack.c.h.b16 %v291
      %v855 = vunpack.c.l.b16 %v292
      %v856 = vunpack.c.l.b16 %v293
      %v857 = vunpack.c.h.b16 %v293
      %v858 = vunpack.c.l.b16 %v294
      %v859 = vunpack.c.h.b16 %v294
      %v860 = vunpack.c.l.b16 %v295
      %v861 = vunpack.c.h.b16 %v295
      %v862 = vunpack.c.l.b16 %v296
      %v863 = vunpack.c.h.b16 %v296
      %v864 = vunpack.c.l.b16 %v297
      %v865 = vunpack.c.l.b16 %v298
      %v866 = vunpack.c.h.b16 %v298
      %v867 = vunpack.c.l.b16 %v299
      %v868 = vunpack.c.h.b16 %v299
      %v869 = vunpack.c.l.b16 %v300
      %v870 = vunpack.c.h.b16 %v300
      %v871 = vunpack.c.l.b16 %v301
      %v872 = vunpack.c.h.b16 %v301
      %v873 = vunpack.c.l.b16 %v302
      %v874 = vunpack.c.l.b16 %v303
      %v875 = vunpack.c.h.b16 %v303
      %v876 = vunpack.c.l.b16 %v304
      %v877 = vunpack.c.h.b16 %v304
      %v878 = vunpack.c.l.b16 %v305
      %v879 = vunpack.c.h.b16 %v305
      %v880 = vunpack.c.l.b16 %v306
      %v881 = vunpack.c.h.b16 %v306
      %v882 = vunpack.c.l.b16 %v307
      %v883 = vunpack.c.l.b16 %v308
      %v884 = vunpack.c.h.b16 %v308
      %v885 = vunpack.c.l.b16 %v309
      %v886 = vunpack.c.h.b16 %v309
      %v887 = vunpack.c.l.b16 %v310
      %v888 = vunpack.c.h.b16 %v310
      %v889 = vunpack.c.l.b16 %v311
      %v890 = vunpack.c.h.b16 %v311
      %v891 = vunpack.c.l.b16 %v312
      %v892 = vunpack.c.l.b16 %v313
      %v893 = vunpack.c.h.b16 %v313
      %v894 = vunpack.c.l.b16 %v314
      %v895 = vunpack.c.h.b16 %v314
      %v896 = vunpack.c.l.b16 %v315
      %v897 = vunpack.c.h.b16 %v315
      %v898 = vunpack.c.l.b16 %v316
      %v899 = vunpack.c.h.b16 %v316
      %v900 = vunpack.c.l.b16 %v317
      %v901 = vunpack.c.l.b16 %v318
      %v902 = vunpack.c.h.b16 %v318
      %v903 = vunpack.c.l.b16 %v319
      %v904 = vunpack.c.h.b16 %v319
      %v905 = vunpack.c.l.b16 %v320
      %v906 = vunpack.c.h.b16 %v320
      %v907 = vunpack.c.l.b16 %v321
      %v908 = vunpack.c.h.b16 %v321
      %v909 = vunpack.c.l.b16 %v322
      %v910 = vunpack.c.l.b16 %v323
      %v911 = vunpack.c.h.b16 %v323
      %v912 = vunpack.c.l.b16 %v324
      %v913 = vunpack.c.h.b16 %v324
      %v914 = vunpack.c.l.b16 %v325
      %v915 = vunpack.c.h.b16 %v325
      %v916 = vunpack.c.l.b16 %v326
      %v917 = vunpack.c.h.b16 %v326
      %v918 = vunpack.c.l.b16 %v327
      %v919 = vunpack.c.l.b16 %v328
      %v920 = vunpack.c.h.b16 %v328
      %v921 = vunpack.c.l.b16 %v329
      %v922 = vunpack.c.h.b16 %v329
      %v923 = vunpack.c.l.b16 %v330
      %v924 = vunpack.c.h.b16 %v330
      %v925 = vunpack.c.l.b16 %v331
      %v926 = vunpack.c.h.b16 %v331
      %v927 = vunpack.c.l.b16 %v332
      %v928 = vunpack.c.l.b16 %v333
      %v929 = vunpack.c.h.b16 %v333
      %v930 = vunpack.c.l.b16 %v334
      %v931 = vunpack.c.h.b16 %v334
      %v932 = vunpack.c.l.b16 %v335
      %v933 = vunpack.c.h.b16 %v335
      %v934 = vunpack.c.l.b16 %v336
      %v935 = vunpack.c.h.b16 %v336
      %v936 = vunpack.c.l.b16 %v337
      %v937 = vpack.c.b16 %v658, %v649
      %v938 = vpack.c.b16 %v659, %v650
      %v939 = vpack.c.b16 %v660, %v651
      %v940 = vpack.c.b16 %v661, %v652
      %v941 = vpack.c.b16 %v662, %v653
      %v942 = vpack.c.b16 %v663, %v654
      %v943 = vpack.c.b16 %v664, %v655
      %v944 = vpack.c.b16 %v665, %v656
      %v945 = vpack.c.b16 %v666, %v657
      %v946 = vpack.c.b16 %v676, %v667
      %v947 = vpack.c.b16 %v677, %v668
      %v948 = vpack.c.b16 %v678, %v669
      %v949 = vpack.c.b16 %v679, %v670
      %v950 = vpack.c.b16 %v680, %v671
      %v951 = vpack.c.b16 %v681, %v672
      %v952 = vpack.c.b16 %v682, %v673
      %v953 = vpack.c.b16 %v683, %v674
      %v954 = vpack.c.b16 %v684, %v675
      %v955 = vpack.c.b16 %v694, %v685
      %v956 = vpack.c.b16 %v695, %v686
      %v957 = vpack.c.b16 %v696, %v687
      %v958 = vpack.c.b16 %v697, %v688
      %v959 = vpack.c.b16 %v698, %v689
      %v960 = vpack.c.b16 %v699, %v690
      %v961 = vpack.c.b16 %v700, %v691
      %v962 = vpack.c.b16 %v701, %v692
      %v963 = vpack.c.b16 %v702, %v693
      %v964 = vpack.c.b16 %v712, %v703
      %v965 = vpack.c.b16 %v713, %v704
      %v966 = vpack.c.b16 %v714, %v705
      %v967 = vpack.c.b16 %v715, %v706
      %v968 = vpack.c.b16 %v716, %v707
      %v969 = vpack.c.b16 %v717, %v708
      %v970 = vpack.c.b16 %v718, %v709
      %v971 = vpack.c.b16 %v719, %v710
      %v972 = vpack.c.b16 %v720, %v711
      %v973 = vpack.c.b16 %v730, %v721
      %v974 = vpack.c.b16 %v731, %v722
      %v975 = vpack.c.b16 %v732, %v723
      %v976 = vpack.c.b16 %v733, %v724
      %v977 = vpack.c.b16 %v734, %v725
      %v978 = vpack.c.b16 %v735, %v726
      %v979 = vpack.c.b16 %v736, %v727
      %v980 = vpack.c.b16 %v737, %v728
      %v981 = vpack.c.b16 %v738, %v729
      %v982 = vpack.c.b16 %v748, %v739
      %v983 = vpack.c.b16 %v749, %v740
      %v984 = vpack.c.b16 %v750, %v741
      %v985 = vpack.c.b16 %v751, %v742
      %v986 = vpack.c.b16 %v752, %v743
      %v987 = vpack.c.b16 %v753, %v744
      %v988 = vpack.c.b16 %v754, %v745
      %v989 = vpack.c.b16 %v755, %v746
      %v990 = vpack.c.b16 %v756, %v747
      %v991 = vpack.c.b16 %v766, %v757
      %v992 = vpack.c.b16 %v767, %v758
      %v993 = vpack.c.b16 %v768, %v759
      %v994 = vpack.c.b16 %v769, %v760
      %v995 = vpack.c.b16 %v770, %v761
      %v996 = vpack.c.b16 %v771, %v762
      %v997 = vpack.c.b16 %v772, %v763
      %v998 = vpack.c.b16 %v773, %v764
      %v999 = vpack.c.b16 %v774, %v765
      %v1000 = vpack.c.b16 %v784, %v775
      %v1001 = vpack.c.b16 %v785, %v776
      %v1002 = vpack.c.b16 %v786, %v777
      %v1003 = vpack.c.b16 %v787, %v778
      %v1004 = vpack.c.b16 %v788, %v779
      %v1005 = vpack.c.b16 %v789, %v780
      %v1006 = vpack.c.b16 %v790, %v781
      %v1007 = vpack.c.b16 %v791, %v782
      %v1008 = vpack.c.b16 %v792, %v783
      %v1009 = vpack.c.b16 %v802, %v793
      %v1010 = vpack.c.b16 %v803, %v794
      %v1011 = vpack.c.b16 %v804, %v795
      %v1012 = vpack.c.b16 %v805, %v796
      %v1013 = vpack.c.b16 %v806, %v797
      %v1014 = vpack.c.b16 %v807, %v798
      %v1015 = vpack.c.b16 %v808, %v799
      %v1016 = vpack.c.b16 %v809, %v800
      %v1017 = vpack.c.b16 %v810, %v801
      %v1018 = vpack.c.b16 %v820, %v811
      %v1019 = vpack.c.b16 %v821, %v812
      %v1020 = vpack.c.b16 %v822, %v813
      %v1021 = vpack.c.b16 %v823, %v814
      %v1022 = vpack.c.b16 %v824, %v815
      %v1023 = vpack.c.b16 %v825, %v816
      %v1024 = vpack.c.b16 %v826, %v817
      %v1025 = vpack.c.b16 %v827, %v818
      %v1026 = vpack.c.b16 %v828, %v819
      %v1027 = vpack.c.b16 %v838, %v829
      %v1028 = vpack.c.b16 %v839, %v830
      %v1029 = vpack.c.b16 %v840, %v831
      %v1030 = vpack.c.b16 %v841, %v832
      %v1031 = vpack.c.b16 %v842, %v833
      %v1032 = vpack.c.b16 %v843, %v834
      %v1033 = vpack.c.b16 %v844, %v835
      %v1034 = vpack.c.b16 %v845, %v836
      %v1035 = vpack.c.b16 %v846, %v837
      %v1036 = vpack.c.b16 %v856, %v847
      %v1037 = vpack.c.b16 %v857, %v848
      %v1038 = vpack.c.b16 %v858, %v849
      %v1039 = vpack.c.b16 %v859, %v850
      %v1040 = vpack.c.b16 %v860, %v851
      %v1041 = vpack.c.b16 %v861, %v852
      %v1042 = vpack.c.b16 %v862, %v853
      %v1043 = vpack.c.b16 %v863, %v854
      %v1044 = vpack.c.b16 %v864, %v855
      %v1045 = vpack.c.b16 %v874, %v865
      %v1046 = vpack.c.b16 %v875, %v866
      %v1047 = vpack.c.b16 %v876, %v867
      %v1048 = vpack.c.b16 %v877, %v868
      %v1049 = vpack.c.b16 %v878, %v869
      %v1050 = vpack.c.b16 %v879, %v870
      %v1051 = vpack.c.b16 %v880, %v871
      %v1052 = vpack.c.b16 %v881, %v872
      %v1053 = vpack.c.b16 %v882, %v873
      %v1054 = vpack.c.b16 %v892, %v883
      %v1055 = vpack.c.b16 %v893, %v884
      %v1056 = vpack.c.b16 %v894, %v885
      %v1057 = vpack.c.b16 %v895, %v886
      %v1058 = vpack.c.b16 %v896, %v887
      %v1059 = vpack.c.b16 %v897, %v888
      %v1060 = vpack.c.b16 %v898, %v889
      %v1061 = vpack.c.b16 %v899, %v890
      %v1062 = vpack.c.b16 %v900, %v891
      %v1063 = vpack.c.b16 %v910, %v901
      %v1064 = vpack.c.b16 %v911, %v902
      %v1065 = vpack.c.b16 %v912, %v903
      %v1066 = vpack.c.b16 %v913, %v904
      %v1067 = vpack.c.b16 %v914, %v905
      %v1068 = vpack.c.b16 %v915, %v906
      %v1069 = vpack.c.b16 %v916, %v907
      %v1070 = vpack.c.b16 %v917, %v908
      %v1071 = vpack.c.b16 %v918, %v909
      %v1072 = vpack.c.b16 %v928, %v919
      %v1073 = vpack.c.b16 %v929, %v920
      %v1074 = vpack.c.b16 %v930, %v921
      %v1075 = vpack.c.b16 %v931, %v922
      %v1076 = vpack.c.b16 %v932, %v923
      %v1077 = vpack.c.b16 %v933, %v924
      %v1078 = vpack.c.b16 %v934, %v925
      %v1079 = vpack.c.b16 %v935, %v926
      %v1080 = vpack.c.b16 %v936, %v927
      %v1369 = vunpack.c.l.b16 %v338
      %v1370 = vunpack.c.l.b16 %v339
      %v1371 = vunpack.c.l.b16 %v340
      %v1372 = vunpack.c.l.b16 %v341
      %v1373 = vunpack.c.l.b16 %v342
      %v1374 = vunpack.c.l.b16 %v343
      %v1375 = vunpack.c.l.b16 %v344
      %v1376 = vunpack.c.l.b16 %v345
      %v1377 = vunpack.c.l.b16 %v346
      %v1378 = vunpack.c.l.b16 %v347
      %v1379 = vunpack.c.l.b16 %v348
      %v1380 = vunpack.c.l.b16 %v349
      %v1381 = vunpack.c.l.b16 %v350
      %v1382 = vunpack.c.l.b16 %v351
      %v1383 = vunpack.c.l.b16 %v352
      %v1384 = vunpack.c.l.b16 %v353
      %v1385 = vunpack.c.l.b16 %v354
      %v1386 = vunpack.c.l.b16 %v355
      %v1387 = vunpack.c.l.b16 %v356
      %v1388 = vunpack.c.l.b16 %v357
      %v1389 = vunpack.c.l.b16 %v358
      %v1390 = vunpack.c.l.b16 %v359
      %v1391 = vunpack.c.l.b16 %v360
      %v1392 = vunpack.c.l.b16 %v361
      %v1393 = vunpack.c.l.b16 %v362
      %v1394 = vunpack.c.l.b16 %v363
      %v1395 = vunpack.c.l.b16 %v364
      %v1396 = vunpack.c.l.b16 %v365
      %v1397 = vunpack.c.l.b16 %v366
      %v1398 = vunpack.c.l.b16 %v367
      %v1399 = vunpack.c.l.b16 %v368
      %v1400 = vunpack.c.l.b16 %v369
      %v1401 = vunpack.c.l.b16 %v370
      %v1402 = vunpack.c.l.b16 %v371
      %v1403 = vunpack.c.l.b16 %v372
      %v1404 = vunpack.c.l.b16 %v373
      %v1405 = vunpack.c.l.b16 %v374
      %v1406 = vunpack.c.l.b16 %v375
      %v1407 = vunpack.c.l.b16 %v376
      %v1408 = vunpack.c.l.b16 %v377
      %v1409 = vunpack.c.l.b16 %v378
      %v1410 = vunpack.c.l.b16 %v379
      %v1411 = vunpack.c.l.b16 %v380
      %v1412 = vunpack.c.l.b16 %v381
      %v1413 = vunpack.c.l.b16 %v382
      %v1414 = vunpack.c.l.b16 %v383
      %v1415 = vunpack.c.l.b16 %v384
      %v1416 = vunpack.c.l.b16 %v385
      %v1417 = vunpack.c.l.b16 %v386
      %v1418 = vunpack.c.l.b16 %v387
      %v1419 = vunpack.c.l.b16 %v388
      %v1420 = vunpack.c.l.b16 %v389
      %v1421 = vunpack.c.l.b16 %v390
      %v1422 = vunpack.c.l.b16 %v391
      %v1423 = vunpack.c.l.b16 %v392
      %v1424 = vunpack.c.l.b16 %v393
      %v1425 = vunpack.c.l.b16 %v394
      %v1426 = vunpack.c.l.b16 %v395
      %v1427 = vunpack.c.l.b16 %v396
      %v1428 = vunpack.c.l.b16 %v397
      %v1429 = vunpack.c.l.b16 %v398
      %v1430 = vunpack.c.l.b16 %v399
      %v1431 = vunpack.c.l.b16 %v400
      %v1432 = vunpack.c.l.b16 %v401
      %v1433 = vunpack.c.l.b16 %v402
      %v1434 = vunpack.c.l.b16 %v403
      %v1435 = vunpack.c.l.b16 %v404
      %v1436 = vunpack.c.l.b16 %v405
      %v1437 = vunpack.c.l.b16 %v406
      %v1438 = vunpack.c.l.b16 %v407
      %v1439 = vunpack.c.l.b16 %v408
      %v1440 = vunpack.c.l.b16 %v409
      %v1441 = vunpack.c.l.b16 %v410
      %v1442 = vunpack.c.l.b16 %v411
      %v1443 = vunpack.c.l.b16 %v412
      %v1444 = vunpack.c.l.b16 %v413
      %v1445 = vunpack.c.l.b16 %v414
      %v1446 = vunpack.c.l.b16 %v415
      %v1447 = vunpack.c.l.b16 %v416
      %v1448 = vunpack.c.l.b16 %v417
      %v1449 = vunpack.c.l.b16 %v418
      %v1450 = vunpack.c.l.b16 %v419
      %v1451 = vunpack.c.l.b16 %v420
      %v1452 = vunpack.c.l.b16 %v421
      %v1453 = vunpack.c.l.b16 %v422
      %v1454 = vunpack.c.l.b16 %v423
      %v1455 = vunpack.c.l.b16 %v424
      %v1456 = vunpack.c.l.b16 %v425
      %v1457 = vunpack.c.l.b16 %v426
      %v1458 = vunpack.c.l.b16 %v427
      %v1459 = vunpack.c.l.b16 %v428
      %v1460 = vunpack.c.l.b16 %v429
      %v1461 = vunpack.c.l.b16 %v430
      %v1462 = vunpack.c.l.b16 %v431
      %v1463 = vunpack.c.l.b16 %v432
      %v1464 = vunpack.c.l.b16 %v433
      %v1465 = vunpack.c.l.b16 %v434
      %v1466 = vunpack.c.l.b16 %v435
      %v1467 = vunpack.c.l.b16 %v436
      %v1468 = vunpack.c.l.b16 %v437
      %v1469 = vunpack.c.l.b16 %v438
      %v1470 = vunpack.c.l.b16 %v439
      %v1471 = vunpack.c.l.b16 %v440
      %v1472 = vunpack.c.l.b16 %v441
      %v1473 = vunpack.c.l.b16 %v442
      %v1474 = vunpack.c.l.b16 %v443
      %v1475 = vunpack.c.l.b16 %v444
      %v1476 = vunpack.c.l.b16 %v445
      %v1477 = vunpack.c.l.b16 %v446
      %v1478 = vunpack.c.l.b16 %v447
      %v1479 = vunpack.c.l.b16 %v448
      %v1480 = vunpack.c.l.b16 %v449
      %v1481 = vunpack.c.l.b16 %v450
      %v1482 = vunpack.c.l.b16 %v451
      %v1483 = vunpack.c.l.b16 %v452
      %v1484 = vunpack.c.l.b16 %v453
      %v1485 = vunpack.c.l.b16 %v454
      %v1486 = vunpack.c.l.b16 %v455
      %v1487 = vunpack.c.l.b16 %v456
      %v1488 = vunpack.c.l.b16 %v457
      %v1489 = vunpack.c.l.b16 %v458
      %v1490 = vunpack.c.l.b16 %v459
      %v1491 = vunpack.c.l.b16 %v460
      %v1492 = vunpack.c.l.b16 %v461
      %v1493 = vunpack.c.l.b16 %v462
      %v1494 = vunpack.c.l.b16 %v463
      %v1495 = vunpack.c.l.b16 %v464
      %v1496 = vunpack.c.l.b16 %v465
      %v1497 = vunpack.c.l.b16 %v466
      %v1498 = vunpack.c.l.b16 %v467
      %v1499 = vunpack.c.l.b16 %v468
      %v1500 = vunpack.c.l.b16 %v469
      %v1501 = vunpack.c.l.b16 %v470
      %v1502 = vunpack.c.l.b16 %v471
      %v1503 = vunpack.c.l.b16 %v472
      %v1504 = vunpack.c.l.b16 %v473
      %v1505 = vunpack.c.l.b16 %v474
      %v1506 = vunpack.c.l.b16 %v475
      %v1507 = vunpack.c.l.b16 %v476
      %v1508 = vunpack.c.l.b16 %v477
      %v1509 = vunpack.c.l.b16 %v478
      %v1510 = vunpack.c.l.b16 %v479
      %v1511 = vunpack.c.l.b16 %v480
      %v1512 = vunpack.c.l.b16 %v481
      %v1513 = vpack.c.b16 %v1370, %v1369
      %v1514 = vpack.c.b16 %v1372, %v1371
      %v1515 = vpack.c.b16 %v1374, %v1373
      %v1516 = vpack.c.b16 %v1376, %v1375
      %v1517 = vpack.c.b16 %v1378, %v1377
      %v1518 = vpack.c.b16 %v1380, %v1379
      %v1519 = vpack.c.b16 %v1382, %v1381
      %v1520 = vpack.c.b16 %v1384, %v1383
      %v1521 = vpack.c.b16 %v1386, %v1385
      %v1522 = vpack.c.b16 %v1388, %v1387
      %v1523 = vpack.c.b16 %v1390, %v1389
      %v1524 = vpack.c.b16 %v1392, %v1391
      %v1525 = vpack.c.b16 %v1394, %v1393
      %v1526 = vpack.c.b16 %v1396, %v1395
      %v1527 = vpack.c.b16 %v1398, %v1397
      %v1528 = vpack.c.b16 %v1400, %v1399
      %v1529 = vpack.c.b16 %v1402, %v1401
      %v1530 = vpack.c.b16 %v1404, %v1403
      %v1531 = vpack.c.b16 %v1406, %v1405
      %v1532 = vpack.c.b16 %v1408, %v1407
      %v1533 = vpack.c.b16 %v1410, %v1409
      %v1534 = vpack.c.b16 %v1412, %v1411
      %v1535 = vpack.c.b16 %v1414, %v1413
      %v1536 = vpack.c.b16 %v1416, %v1415
      %v1537 = vpack.c.b16 %v1418, %v1417
      %v1538 = vpack.c.b16 %v1420, %v1419
      %v1539 = vpack.c.b16 %v1422, %v1421
      %v1540 = vpack.c.b16 %v1424, %v1423
      %v1541 = vpack.c.b16 %v1426, %v1425
      %v1542 = vpack.c.b16 %v1428, %v1427
      %v1543 = vpack.c.b16 %v1430, %v1429
      %v1544 = vpack.c.b16 %v1432, %v1431
      %v1545 = vpack.c.b16 %v1434, %v1433
      %v1546 = vpack.c.b16 %v1436, %v1435
      %v1547 = vpack.c.b16 %v1438, %v1437
      %v1548 = vpack.c.b16 %v1440, %v1439
      %v1549 = vpack.c.b16 %v1442, %v1441
      %v1550 = vpack.c.b16 %v1444, %v1443
      %v1551 = vpack.c.b16 %v1446, %v1445
      %v1552 = vpack.c.b16 %v1448, %v1447
      %v1553 = vpack.c.b16 %v1450, %v1449
      %v1554 = vpack.c.b16 %v1452, %v1451
      %v1555 = vpack.c.b16 %v1454, %v1453
      %v1556 = vpack.c.b16 %v1456, %v1455
      %v1557 = vpack.c.b16 %v1458, %v1457
      %v1558 = vpack.c.b16 %v1460, %v1459
      %v1559 = vpack.c.b16 %v1462, %v1461
      %v1560 = vpack.c.b16 %v1464, %v1463
      %v1561 = vpack.c.b16 %v1466, %v1465
      %v1562 = vpack.c.b16 %v1468, %v1467
      %v1563 = vpack.c.b16 %v1470, %v1469
      %v1564 = vpack.c.b16 %v1472, %v1471
      %v1565 = vpack.c.b16 %v1474, %v1473
      %v1566 = vpack.c.b16 %v1476, %v1475
      %v1567 = vpack.c.b16 %v1478, %v1477
      %v1568 = vpack.c.b16 %v1480, %v1479
      %v1569 = vpack.c.b16 %v1482, %v1481
      %v1570 = vpack.c.b16 %v1484, %v1483
      %v1571 = vpack.c.b16 %v1486, %v1485
      %v1572 = vpack.c.b16 %v1488, %v1487
      %v1573 = vpack.c.b16 %v1490, %v1489
      %v1574 = vpack.c.b16 %v1492, %v1491
      %v1575 = vpack.c.b16 %v1494, %v1493
      %v1576 = vpack.c.b16 %v1496, %v1495
      %v1577 = vpack.c.b16 %v1498, %v1497
      %v1578 = vpack.c.b16 %v1500, %v1499
      %v1579 = vpack.c.b16 %v1502, %v1501
      %v1580 = vpack.c.b16 %v1504, %v1503
      %v1581 = vpack.c.b16 %v1506, %v1505
      %v1582 = vpack.c.b16 %v1508, %v1507
      %v1583 = vpack.c.b16 %v1510, %v1509
      %v1584 = vpack.c.b16 %v1512, %v1511
      %1657 = vmatprep.subr.bf16.mxu0 0
      %1658 = vmatpush1.bf16.msra.mxu0 %v1513
      %1659 = vmatprep.subr.bf16.mxu0 0
      %1660 = vmatpush1.bf16.msra.mxu0 %v1514
      %1661 = vmatprep.subr.bf16.mxu0 0
      %1662 = vmatpush1.bf16.msra.mxu0 %v1515
      %1663 = vmatprep.subr.bf16.mxu0 0
      %1664 = vmatpush1.bf16.msra.mxu0 %v1516
      %1665 = vmatprep.subr.bf16.mxu0 0
      %1666 = vmatpush1.bf16.msra.mxu0 %v1517
      %1667 = vmatprep.subr.bf16.mxu0 0
      %1668 = vmatpush1.bf16.msra.mxu0 %v1518
      %1669 = vmatprep.subr.bf16.mxu0 0
      %1670 = vmatpush1.bf16.msra.mxu0 %v1519
      %1671 = vmatprep.subr.bf16.mxu0 0
      %1672 = vmatpush1.bf16.msra.mxu0 %v1520
      %1673 = vmatprep.subr.bf16.mxu0 0
      %1674 = vmatpush1.bf16.msra.mxu0 %v1521
      %1675 = vmatprep.subr.bf16.mxu0 0
      %1676 = vmatpush1.bf16.msra.mxu0 %v1522
      %1677 = vmatprep.subr.bf16.mxu0 0
      %1678 = vmatpush1.bf16.msra.mxu0 %v1523
      %1679 = vmatprep.subr.bf16.mxu0 0
      %1680 = vmatpush1.bf16.msra.mxu0 %v1524
      %1681 = vmatprep.subr.bf16.mxu0 0
      %1682 = vmatpush1.bf16.msra.mxu0 %v1525
      %1683 = vmatprep.subr.bf16.mxu0 0
      %1684 = vmatpush1.bf16.msra.mxu0 %v1526
      %1685 = vmatprep.subr.bf16.mxu0 0
      %1686 = vmatpush1.bf16.msra.mxu0 %v1527
      %1687 = vmatprep.subr.bf16.mxu0 0
      %1688 = vmatpush1.bf16.msra.mxu0 %v1528
      %1689 = vmatprep.mubr.bf16.mxu0 %v938
      %1690 = vmatmul.mubr.bf16.gmra.mrb[0].mxu0 %v937
      %v1691 = vpop.f32.mrb[0].mxu0
      %v1692 = vadd.f32 %v487, %v1691
      %v1693 = vpop.f32.mrb[0].mxu0
      %v1694 = vpop.f32.mrb[0].mxu0
      %v1695 = vadd.f32 %v487, %v1694
      %v1696 = vpop.f32.mrb[0].mxu0
      %1697 = vmatprep.mubr.bf16.mxu0 %v947
      %1698 = vmatmul.mubr.bf16.gmra.mrb[0].mxu0 %v946
      %v1699 = vpop.f32.mrb[0].mxu0
      %v1700 = vadd.f32 %v487, %v1699
      %v1701 = vpop.f32.mrb[0].mxu0
      %v1702 = vpop.f32.mrb[0].mxu0
      %v1703 = vadd.f32 %v487, %v1702
      %v1704 = vpop.f32.mrb[0].mxu0
      %1705 = vmatprep.mubr.bf16.mxu0 %v956
      %1706 = vmatmul.mubr.bf16.gmra.mrb[0].mxu0 %v955
      %v1707 = vpop.f32.mrb[0].mxu0
      %v1708 = vadd.f32 %v487, %v1707
      %v1709 = vpop.f32.mrb[0].mxu0
      %v1710 = vpop.f32.mrb[0].mxu0
      %v1711 = vadd.f32 %v487, %v1710
      %v1712 = vpop.f32.mrb[0].mxu0
      %1713 = vmatprep.mubr.bf16.mxu0 %v965
      %1714 = vmatmul.mubr.bf16.gmra.mrb[0].mxu0 %v964
      %v1715 = vpop.f32.mrb[0].mxu0
      %v1716 = vadd.f32 %v487, %v1715
      %v1717 = vpop.f32.mrb[0].mxu0
      %v1718 = vpop.f32.mrb[0].mxu0
      %v1719 = vadd.f32 %v487, %v1718
      %v1720 = vpop.f32.mrb[0].mxu0
      %1721 = vmatprep.mubr.bf16.mxu0 %v974
      %1722 = vmatmul.mubr.bf16.gmra.mrb[0].mxu0 %v973
      %v1723 = vpop.f32.mrb[0].mxu0
      %v1724 = vadd.f32 %v487, %v1723
      %v1725 = vpop.f32.mrb[0].mxu0
      %v1726 = vpop.f32.mrb[0].mxu0
      %v1727 = vadd.f32 %v487, %v1726
      %v1728 = vpop.f32.mrb[0].mxu0
      %1729 = vmatprep.mubr.bf16.mxu0 %v983
      %1730 = vmatmul.mubr.bf16.gmra.mrb[0].mxu0 %v982
      %v1731 = vpop.f32.mrb[0].mxu0
      %v1732 = vadd.f32 %v487, %v1731
      %v1733 = vpop.f32.mrb[0].mxu0
      %v1734 = vpop.f32.mrb[0].mxu0
      %v1735 = vadd.f32 %v487, %v1734
      %v1736 = vpop.f32.mrb[0].mxu0
      %1737 = vmatprep.mubr.bf16.mxu0 %v992
      %1738 = vmatmul.mubr.bf16.gmra.mrb[0].mxu0 %v991
      %v1739 = vpop.f32.mrb[0].mxu0
      %v1740 = vadd.f32 %v487, %v1739
      %v1741 = vpop.f32.mrb[0].mxu0
      %v1742 = vpop.f32.mrb[0].mxu0
      %v1743 = vadd.f32 %v487, %v1742
      %v1744 = vpop.f32.mrb[0].mxu0
      %1745 = vmatprep.mubr.bf16.mxu0 %v1001
      %1746 = vmatmul.mubr.bf16.gmra.mrb[0].mxu0 %v1000
      %v1747 = vpop.f32.mrb[0].mxu0
      %v1748 = vadd.f32 %v487, %v1747
      %v1749 = vpop.f32.mrb[0].mxu0
      %v1750 = vpop.f32.mrb[0].mxu0
      %v1751 = vadd.f32 %v487, %v1750
      %v1752 = vpop.f32.mrb[0].mxu0
      %1753 = vmatprep.mubr.bf16.mxu0 %v1010
      %1754 = vmatmul.mubr.bf16.gmra.mrb[0].mxu0 %v1009
      %v1755 = vpop.f32.mrb[0].mxu0
      %v1756 = vadd.f32 %v487, %v1755
      %v1757 = vpop.f32.mrb[0].mxu0
      %v1758 = vpop.f32.mrb[0].mxu0
      %v1759 = vadd.f32 %v487, %v1758
      %v1760 = vpop.f32.mrb[0].mxu0
      %1761 = vmatprep.mubr.bf16.mxu0 %v1019
      %1762 = vmatmul.mubr.bf16.gmra.mrb[0].mxu0 %v1018
      %v1763 = vpop.f32.mrb[0].mxu0
      %v1764 = vadd.f32 %v487, %v1763
      %v1765 = vpop.f32.mrb[0].mxu0
      %v1766 = vpop.f32.mrb[0].mxu0
      %v1767 = vadd.f32 %v487, %v1766
      %v1768 = vpop.f32.mrb[0].mxu0
      %1769 = vmatprep.mubr.bf16.mxu0 %v1028
      %1770 = vmatmul.mubr.bf16.gmra.mrb[0].mxu0 %v1027
      %v1771 = vpop.f32.mrb[0].mxu0
      %v1772 = vadd.f32 %v487, %v1771
      %v1773 = vpop.f32.mrb[0].mxu0
      %v1774 = vpop.f32.mrb[0].mxu0
      %v1775 = vadd.f32 %v487, %v1774
      %v1776 = vpop.f32.mrb[0].mxu0
      %1777 = vmatprep.mubr.bf16.mxu0 %v1037
      %1778 = vmatmul.mubr.bf16.gmra.mrb[0].mxu0 %v1036
      %v1779 = vpop.f32.mrb[0].mxu0
      %v1780 = vadd.f32 %v487, %v1779
      %v1781 = vpop.f32.mrb[0].mxu0
      %v1782 = vpop.f32.mrb[0].mxu0
      %v1783 = vadd.f32 %v487, %v1782
      %v1784 = vpop.f32.mrb[0].mxu0
      %1785 = vmatprep.mubr.bf16.mxu0 %v1046
      %1786 = vmatmul.mubr.bf16.gmra.mrb[0].mxu0 %v1045
      %v1787 = vpop.f32.mrb[0].mxu0
      %v1788 = vadd.f32 %v487, %v1787
      %v1789 = vpop.f32.mrb[0].mxu0
      %v1790 = vpop.f32.mrb[0].mxu0
      %v1791 = vadd.f32 %v487, %v1790
      %v1792 = vpop.f32.mrb[0].mxu0
      %1793 = vmatprep.mubr.bf16.mxu0 %v1055
      %1794 = vmatmul.mubr.bf16.gmra.mrb[0].mxu0 %v1054
      %v1795 = vpop.f32.mrb[0].mxu0
      %v1796 = vadd.f32 %v487, %v1795
      %v1797 = vpop.f32.mrb[0].mxu0
      %v1798 = vpop.f32.mrb[0].mxu0
      %v1799 = vadd.f32 %v487, %v1798
      %v1800 = vpop.f32.mrb[0].mxu0
      %1801 = vmatprep.mubr.bf16.mxu0 %v1064
      %1802 = vmatmul.mubr.bf16.gmra.mrb[0].mxu0 %v1063
      %v1803 = vpop.f32.mrb[0].mxu0
      %v1804 = vadd.f32 %v487, %v1803
      %v1805 = vpop.f32.mrb[0].mxu0
      %v1806 = vpop.f32.mrb[0].mxu0
      %v1807 = vadd.f32 %v487, %v1806
      %v1808 = vpop.f32.mrb[0].mxu0
      %1809 = vmatprep.mubr.bf16.mxu0 %v1073
      %1810 = vmatmul.mubr.bf16.gmra.mrb[0].mxu0 %v1072
      %v1811 = vpop.f32.mrb[0].mxu0
      %v1812 = vadd.f32 %v487, %v1811
      %v1813 = vpop.f32.mrb[0].mxu0
      %v1814 = vpop.f32.mrb[0].mxu0
      %v1815 = vadd.f32 %v487, %v1814
      %v1816 = vpop.f32.mrb[0].mxu0
      %1817 = vdwg.mxu0
      %1818 = vmatprep.subr.bf16.mxu0 0
      %1819 = vmatpush1.bf16.msra.mxu0 %v1529
      %1820 = vmatprep.subr.bf16.mxu0 0
      %1821 = vmatpush1.bf16.msra.mxu0 %v1530
      %1822 = vmatprep.subr.bf16.mxu0 0
      %1823 = vmatpush1.bf16.msra.mxu0 %v1531
      %1824 = vmatprep.subr.bf16.mxu0 0
      %1825 = vmatpush1.bf16.msra.mxu0 %v1532
      %1826 = vmatprep.subr.bf16.mxu0 0
      %1827 = vmatpush1.bf16.msra.mxu0 %v1533
      %1828 = vmatprep.subr.bf16.mxu0 0
      %1829 = vmatpush1.bf16.msra.mxu0 %v1534
      %1830 = vmatprep.subr.bf16.mxu0 0
      %1831 = vmatpush1.bf16.msra.mxu0 %v1535
      %1832 = vmatprep.subr.bf16.mxu0 0
      %1833 = vmatpush1.bf16.msra.mxu0 %v1536
      %1834 = vmatprep.subr.bf16.mxu0 0
      %1835 = vmatpush1.bf16.msra.mxu0 %v1537
      %1836 = vmatprep.subr.bf16.mxu0 0
      %1837 = vmatpush1.bf16.msra.mxu0 %v1538
      %1838 = vmatprep.subr.bf16.mxu0 0
      %1839 = vmatpush1.bf16.msra.mxu0 %v1539
      %1840 = vmatprep.subr.bf16.mxu0 0
      %1841 = vmatpush1.bf16.msra.mxu0 %v1540
      %1842 = vmatprep.subr.bf16.mxu0 0
      %1843 = vmatpush1.bf16.msra.mxu0 %v1541
      %1844 = vmatprep.subr.bf16.mxu0 0
      %1845 = vmatpush1.bf16.msra.mxu0 %v1542
      %1846 = vmatprep.subr.bf16.mxu0 0
      %1847 = vmatpush1.bf16.msra.mxu0 %v1543
      %1848 = vmatprep.subr.bf16.mxu0 0
      %1849 = vmatpush1.bf16.msra.mxu0 %v1544
      %1850 = vmatprep.mubr.bf16.mxu0 %v940
      %1851 = vmatmul.mubr.bf16.gmra.mrb[0].mxu0 %v939
      %v1852 = vpop.f32.mrb[0].mxu0
      %v1853 = vadd.f32 %v1692, %v1852
      %v1854 = vpop.f32.mrb[0].mxu0
      %v1855 = vpop.f32.mrb[0].mxu0
      %v1856 = vadd.f32 %v1695, %v1855
      %v1857 = vpop.f32.mrb[0].mxu0
      %1858 = vmatprep.mubr.bf16.mxu0 %v949
      %1859 = vmatmul.mubr.bf16.gmra.mrb[0].mxu0 %v948
      %v1860 = vpop.f32.mrb[0].mxu0
      %v1861 = vadd.f32 %v1700, %v1860
      %v1862 = vpop.f32.mrb[0].mxu0
      %v1863 = vpop.f32.mrb[0].mxu0
      %v1864 = vadd.f32 %v1703, %v1863
      %v1865 = vpop.f32.mrb[0].mxu0
      %1866 = vmatprep.mubr.bf16.mxu0 %v958
      %1867 = vmatmul.mubr.bf16.gmra.mrb[0].mxu0 %v957
      %v1868 = vpop.f32.mrb[0].mxu0
      %v1869 = vadd.f32 %v1708, %v1868
      %v1870 = vpop.f32.mrb[0].mxu0
      %v1871 = vpop.f32.mrb[0].mxu0
      %v1872 = vadd.f32 %v1711, %v1871
      %v1873 = vpop.f32.mrb[0].mxu0
      %1874 = vmatprep.mubr.bf16.mxu0 %v967
      %1875 = vmatmul.mubr.bf16.gmra.mrb[0].mxu0 %v966
      %v1876 = vpop.f32.mrb[0].mxu0
      %v1877 = vadd.f32 %v1716, %v1876
      %v1878 = vpop.f32.mrb[0].mxu0
      %v1879 = vpop.f32.mrb[0].mxu0
      %v1880 = vadd.f32 %v1719, %v1879
      %v1881 = vpop.f32.mrb[0].mxu0
      %1882 = vmatprep.mubr.bf16.mxu0 %v976
      %1883 = vmatmul.mubr.bf16.gmra.mrb[0].mxu0 %v975
      %v1884 = vpop.f32.mrb[0].mxu0
      %v1885 = vadd.f32 %v1724, %v1884
      %v1886 = vpop.f32.mrb[0].mxu0
      %v1887 = vpop.f32.mrb[0].mxu0
      %v1888 = vadd.f32 %v1727, %v1887
      %v1889 = vpop.f32.mrb[0].mxu0
      %1890 = vmatprep.mubr.bf16.mxu0 %v985
      %1891 = vmatmul.mubr.bf16.gmra.mrb[0].mxu0 %v984
      %v1892 = vpop.f32.mrb[0].mxu0
      %v1893 = vadd.f32 %v1732, %v1892
      %v1894 = vpop.f32.mrb[0].mxu0
      %v1895 = vpop.f32.mrb[0].mxu0
      %v1896 = vadd.f32 %v1735, %v1895
      %v1897 = vpop.f32.mrb[0].mxu0
      %1898 = vmatprep.mubr.bf16.mxu0 %v994
      %1899 = vmatmul.mubr.bf16.gmra.mrb[0].mxu0 %v993
      %v1900 = vpop.f32.mrb[0].mxu0
      %v1901 = vadd.f32 %v1740, %v1900
      %v1902 = vpop.f32.mrb[0].mxu0
      %v1903 = vpop.f32.mrb[0].mxu0
      %v1904 = vadd.f32 %v1743, %v1903
      %v1905 = vpop.f32.mrb[0].mxu0
      %1906 = vmatprep.mubr.bf16.mxu0 %v1003
      %1907 = vmatmul.mubr.bf16.gmra.mrb[0].mxu0 %v1002
      %v1908 = vpop.f32.mrb[0].mxu0
      %v1909 = vadd.f32 %v1748, %v1908
      %v1910 = vpop.f32.mrb[0].mxu0
      %v1911 = vpop.f32.mrb[0].mxu0
      %v1912 = vadd.f32 %v1751, %v1911
      %v1913 = vpop.f32.mrb[0].mxu0
      %1914 = vmatprep.mubr.bf16.mxu0 %v1012
      %1915 = vmatmul.mubr.bf16.gmra.mrb[0].mxu0 %v1011
      %v1916 = vpop.f32.mrb[0].mxu0
      %v1917 = vadd.f32 %v1756, %v1916
      %v1918 = vpop.f32.mrb[0].mxu0
      %v1919 = vpop.f32.mrb[0].mxu0
      %v1920 = vadd.f32 %v1759, %v1919
      %v1921 = vpop.f32.mrb[0].mxu0
      %1922 = vmatprep.mubr.bf16.mxu0 %v1021
      %1923 = vmatmul.mubr.bf16.gmra.mrb[0].mxu0 %v1020
      %v1924 = vpop.f32.mrb[0].mxu0
      %v1925 = vadd.f32 %v1764, %v1924
      %v1926 = vpop.f32.mrb[0].mxu0
      %v1927 = vpop.f32.mrb[0].mxu0
      %v1928 = vadd.f32 %v1767, %v1927
      %v1929 = vpop.f32.mrb[0].mxu0
      %1930 = vmatprep.mubr.bf16.mxu0 %v1030
      %1931 = vmatmul.mubr.bf16.gmra.mrb[0].mxu0 %v1029
      %v1932 = vpop.f32.mrb[0].mxu0
      %v1933 = vadd.f32 %v1772, %v1932
      %v1934 = vpop.f32.mrb[0].mxu0
      %v1935 = vpop.f32.mrb[0].mxu0
      %v1936 = vadd.f32 %v1775, %v1935
      %v1937 = vpop.f32.mrb[0].mxu0
      %1938 = vmatprep.mubr.bf16.mxu0 %v1039
      %1939 = vmatmul.mubr.bf16.gmra.mrb[0].mxu0 %v1038
      %v1940 = vpop.f32.mrb[0].mxu0
      %v1941 = vadd.f32 %v1780, %v1940
      %v1942 = vpop.f32.mrb[0].mxu0
      %v1943 = vpop.f32.mrb[0].mxu0
      %v1944 = vadd.f32 %v1783, %v1943
      %v1945 = vpop.f32.mrb[0].mxu0
      %1946 = vmatprep.mubr.bf16.mxu0 %v1048
      %1947 = vmatmul.mubr.bf16.gmra.mrb[0].mxu0 %v1047
      %v1948 = vpop.f32.mrb[0].mxu0
      %v1949 = vadd.f32 %v1788, %v1948
      %v1950 = vpop.f32.mrb[0].mxu0
      %v1951 = vpop.f32.mrb[0].mxu0
      %v1952 = vadd.f32 %v1791, %v1951
      %v1953 = vpop.f32.mrb[0].mxu0
      %1954 = vmatprep.mubr.bf16.mxu0 %v1057
      %1955 = vmatmul.mubr.bf16.gmra.mrb[0].mxu0 %v1056
      %v1956 = vpop.f32.mrb[0].mxu0
      %v1957 = vadd.f32 %v1796, %v1956
      %v1958 = vpop.f32.mrb[0].mxu0
      %v1959 = vpop.f32.mrb[0].mxu0
      %v1960 = vadd.f32 %v1799, %v1959
      %v1961 = vpop.f32.mrb[0].mxu0
      %1962 = vmatprep.mubr.bf16.mxu0 %v1066
      %1963 = vmatmul.mubr.bf16.gmra.mrb[0].mxu0 %v1065
      %v1964 = vpop.f32.mrb[0].mxu0
      %v1965 = vadd.f32 %v1804, %v1964
      %v1966 = vpop.f32.mrb[0].mxu0
      %v1967 = vpop.f32.mrb[0].mxu0
      %v1968 = vadd.f32 %v1807, %v1967
      %v1969 = vpop.f32.mrb[0].mxu0
      %1970 = vmatprep.mubr.bf16.mxu0 %v1075
      %1971 = vmatmul.mubr.bf16.gmra.mrb[0].mxu0 %v1074
      %v1972 = vpop.f32.mrb[0].mxu0
      %v1973 = vadd.f32 %v1812, %v1972
      %v1974 = vpop.f32.mrb[0].mxu0
      %v1975 = vpop.f32.mrb[0].mxu0
      %v1976 = vadd.f32 %v1815, %v1975
      %v1977 = vpop.f32.mrb[0].mxu0
      %1978 = vdwg.mxu0
      %1979 = vmatprep.subr.bf16.mxu0 0
      %1980 = vmatpush1.bf16.msra.mxu0 %v1545
      %1981 = vmatprep.subr.bf16.mxu0 0
      %1982 = vmatpush1.bf16.msra.mxu0 %v1546
      %1983 = vmatprep.subr.bf16.mxu0 0
      %1984 = vmatpush1.bf16.msra.mxu0 %v1547
      %1985 = vmatprep.subr.bf16.mxu0 0
      %1986 = vmatpush1.bf16.msra.mxu0 %v1548
      %1987 = vmatprep.subr.bf16.mxu0 0
      %1988 = vmatpush1.bf16.msra.mxu0 %v1549
      %1989 = vmatprep.subr.bf16.mxu0 0
      %1990 = vmatpush1.bf16.msra.mxu0 %v1550
      %1991 = vmatprep.subr.bf16.mxu0 0
      %1992 = vmatpush1.bf16.msra.mxu0 %v1551
      %1993 = vmatprep.subr.bf16.mxu0 0
      %1994 = vmatpush1.bf16.msra.mxu0 %v1552
      %1995 = vmatprep.subr.bf16.mxu0 0
      %1996 = vmatpush1.bf16.msra.mxu0 %v1553
      %1997 = vmatprep.subr.bf16.mxu0 0
      %1998 = vmatpush1.bf16.msra.mxu0 %v1554
      %1999 = vmatprep.subr.bf16.mxu0 0
      %2000 = vmatpush1.bf16.msra.mxu0 %v1555
      %2001 = vmatprep.subr.bf16.mxu0 0
      %2002 = vmatpush1.bf16.msra.mxu0 %v1556
      %2003 = vmatprep.subr.bf16.mxu0 0
      %2004 = vmatpush1.bf16.msra.mxu0 %v1557
      %2005 = vmatprep.subr.bf16.mxu0 0
      %2006 = vmatpush1.bf16.msra.mxu0 %v1558
      %2007 = vmatprep.subr.bf16.mxu0 0
      %2008 = vmatpush1.bf16.msra.mxu0 %v1559
      %2009 = vmatprep.subr.bf16.mxu0 0
      %2010 = vmatpush1.bf16.msra.mxu0 %v1560
      %2011 = vmatprep.mubr.bf16.mxu0 %v942
      %2012 = vmatmul.mubr.bf16.gmra.mrb[0].mxu0 %v941
      %v2013 = vpop.f32.mrb[0].mxu0
      %v2014 = vadd.f32 %v1853, %v2013
      %v2015 = vpop.f32.mrb[0].mxu0
      %v2016 = vpop.f32.mrb[0].mxu0
      %v2017 = vadd.f32 %v1856, %v2016
      %v2018 = vpop.f32.mrb[0].mxu0
      %2019 = vmatprep.mubr.bf16.mxu0 %v951
      %2020 = vmatmul.mubr.bf16.gmra.mrb[0].mxu0 %v950
      %v2021 = vpop.f32.mrb[0].mxu0
      %v2022 = vadd.f32 %v1861, %v2021
      %v2023 = vpop.f32.mrb[0].mxu0
      %v2024 = vpop.f32.mrb[0].mxu0
      %v2025 = vadd.f32 %v1864, %v2024
      %v2026 = vpop.f32.mrb[0].mxu0
      %2027 = vmatprep.mubr.bf16.mxu0 %v960
      %2028 = vmatmul.mubr.bf16.gmra.mrb[0].mxu0 %v959
      %v2029 = vpop.f32.mrb[0].mxu0
      %v2030 = vadd.f32 %v1869, %v2029
      %v2031 = vpop.f32.mrb[0].mxu0
      %v2032 = vpop.f32.mrb[0].mxu0
      %v2033 = vadd.f32 %v1872, %v2032
      %v2034 = vpop.f32.mrb[0].mxu0
      %2035 = vmatprep.mubr.bf16.mxu0 %v969
      %2036 = vmatmul.mubr.bf16.gmra.mrb[0].mxu0 %v968
      %v2037 = vpop.f32.mrb[0].mxu0
      %v2038 = vadd.f32 %v1877, %v2037
      %v2039 = vpop.f32.mrb[0].mxu0
      %v2040 = vpop.f32.mrb[0].mxu0
      %v2041 = vadd.f32 %v1880, %v2040
      %v2042 = vpop.f32.mrb[0].mxu0
      %2043 = vmatprep.mubr.bf16.mxu0 %v978
      %2044 = vmatmul.mubr.bf16.gmra.mrb[0].mxu0 %v977
      %v2045 = vpop.f32.mrb[0].mxu0
      %v2046 = vadd.f32 %v1885, %v2045
      %v2047 = vpop.f32.mrb[0].mxu0
      %v2048 = vpop.f32.mrb[0].mxu0
      %v2049 = vadd.f32 %v1888, %v2048
      %v2050 = vpop.f32.mrb[0].mxu0
      %2051 = vmatprep.mubr.bf16.mxu0 %v987
      %2052 = vmatmul.mubr.bf16.gmra.mrb[0].mxu0 %v986
      %v2053 = vpop.f32.mrb[0].mxu0
      %v2054 = vadd.f32 %v1893, %v2053
      %v2055 = vpop.f32.mrb[0].mxu0
      %v2056 = vpop.f32.mrb[0].mxu0
      %v2057 = vadd.f32 %v1896, %v2056
      %v2058 = vpop.f32.mrb[0].mxu0
      %2059 = vmatprep.mubr.bf16.mxu0 %v996
      %2060 = vmatmul.mubr.bf16.gmra.mrb[0].mxu0 %v995
      %v2061 = vpop.f32.mrb[0].mxu0
      %v2062 = vadd.f32 %v1901, %v2061
      %v2063 = vpop.f32.mrb[0].mxu0
      %v2064 = vpop.f32.mrb[0].mxu0
      %v2065 = vadd.f32 %v1904, %v2064
      %v2066 = vpop.f32.mrb[0].mxu0
      %2067 = vmatprep.mubr.bf16.mxu0 %v1005
      %2068 = vmatmul.mubr.bf16.gmra.mrb[0].mxu0 %v1004
      %v2069 = vpop.f32.mrb[0].mxu0
      %v2070 = vadd.f32 %v1909, %v2069
      %v2071 = vpop.f32.mrb[0].mxu0
      %v2072 = vpop.f32.mrb[0].mxu0
      %v2073 = vadd.f32 %v1912, %v2072
      %v2074 = vpop.f32.mrb[0].mxu0
      %2075 = vmatprep.mubr.bf16.mxu0 %v1014
      %2076 = vmatmul.mubr.bf16.gmra.mrb[0].mxu0 %v1013
      %v2077 = vpop.f32.mrb[0].mxu0
      %v2078 = vadd.f32 %v1917, %v2077
      %v2079 = vpop.f32.mrb[0].mxu0
      %v2080 = vpop.f32.mrb[0].mxu0
      %v2081 = vadd.f32 %v1920, %v2080
      %v2082 = vpop.f32.mrb[0].mxu0
      %2083 = vmatprep.mubr.bf16.mxu0 %v1023
      %2084 = vmatmul.mubr.bf16.gmra.mrb[0].mxu0 %v1022
      %v2085 = vpop.f32.mrb[0].mxu0
      %v2086 = vadd.f32 %v1925, %v2085
      %v2087 = vpop.f32.mrb[0].mxu0
      %v2088 = vpop.f32.mrb[0].mxu0
      %v2089 = vadd.f32 %v1928, %v2088
      %v2090 = vpop.f32.mrb[0].mxu0
      %2091 = vmatprep.mubr.bf16.mxu0 %v1032
      %2092 = vmatmul.mubr.bf16.gmra.mrb[0].mxu0 %v1031
      %v2093 = vpop.f32.mrb[0].mxu0
      %v2094 = vadd.f32 %v1933, %v2093
      %v2095 = vpop.f32.mrb[0].mxu0
      %v2096 = vpop.f32.mrb[0].mxu0
      %v2097 = vadd.f32 %v1936, %v2096
      %v2098 = vpop.f32.mrb[0].mxu0
      %2099 = vmatprep.mubr.bf16.mxu0 %v1041
      %2100 = vmatmul.mubr.bf16.gmra.mrb[0].mxu0 %v1040
      %v2101 = vpop.f32.mrb[0].mxu0
      %v2102 = vadd.f32 %v1941, %v2101
      %v2103 = vpop.f32.mrb[0].mxu0
      %v2104 = vpop.f32.mrb[0].mxu0
      %v2105 = vadd.f32 %v1944, %v2104
      %v2106 = vpop.f32.mrb[0].mxu0
      %2107 = vmatprep.mubr.bf16.mxu0 %v1050
      %2108 = vmatmul.mubr.bf16.gmra.mrb[0].mxu0 %v1049
      %v2109 = vpop.f32.mrb[0].mxu0
      %v2110 = vadd.f32 %v1949, %v2109
      %v2111 = vpop.f32.mrb[0].mxu0
      %v2112 = vpop.f32.mrb[0].mxu0
      %v2113 = vadd.f32 %v1952, %v2112
      %v2114 = vpop.f32.mrb[0].mxu0
      %2115 = vmatprep.mubr.bf16.mxu0 %v1059
      %2116 = vmatmul.mubr.bf16.gmra.mrb[0].mxu0 %v1058
      %v2117 = vpop.f32.mrb[0].mxu0
      %v2118 = vadd.f32 %v1957, %v2117
      %v2119 = vpop.f32.mrb[0].mxu0
      %v2120 = vpop.f32.mrb[0].mxu0
      %v2121 = vadd.f32 %v1960, %v2120
      %v2122 = vpop.f32.mrb[0].mxu0
      %2123 = vmatprep.mubr.bf16.mxu0 %v1068
      %2124 = vmatmul.mubr.bf16.gmra.mrb[0].mxu0 %v1067
      %v2125 = vpop.f32.mrb[0].mxu0
      %v2126 = vadd.f32 %v1965, %v2125
      %v2127 = vpop.f32.mrb[0].mxu0
      %v2128 = vpop.f32.mrb[0].mxu0
      %v2129 = vadd.f32 %v1968, %v2128
      %v2130 = vpop.f32.mrb[0].mxu0
      %2131 = vmatprep.mubr.bf16.mxu0 %v1077
      %2132 = vmatmul.mubr.bf16.gmra.mrb[0].mxu0 %v1076
      %v2133 = vpop.f32.mrb[0].mxu0
      %v2134 = vadd.f32 %v1973, %v2133
      %v2135 = vpop.f32.mrb[0].mxu0
      %v2136 = vpop.f32.mrb[0].mxu0
      %v2137 = vadd.f32 %v1976, %v2136
      %v2138 = vpop.f32.mrb[0].mxu0
      %2139 = vdwg.mxu0
      %2140 = vmatprep.subr.bf16.mxu0 0
      %2141 = vmatpush1.bf16.msra.mxu0 %v1561
      %2142 = vmatprep.subr.bf16.mxu0 0
      %2143 = vmatpush1.bf16.msra.mxu0 %v1562
      %2144 = vmatprep.subr.bf16.mxu0 0
      %2145 = vmatpush1.bf16.msra.mxu0 %v1563
      %2146 = vmatprep.subr.bf16.mxu0 0
      %2147 = vmatpush1.bf16.msra.mxu0 %v1564
      %2148 = vmatprep.subr.bf16.mxu0 0
      %2149 = vmatpush1.bf16.msra.mxu0 %v1565
      %2150 = vmatprep.subr.bf16.mxu0 0
      %2151 = vmatpush1.bf16.msra.mxu0 %v1566
      %2152 = vmatprep.subr.bf16.mxu0 0
      %2153 = vmatpush1.bf16.msra.mxu0 %v1567
      %2154 = vmatprep.subr.bf16.mxu0 0
      %2155 = vmatpush1.bf16.msra.mxu0 %v1568
      %2156 = vmatprep.subr.bf16.mxu0 0
      %2157 = vmatpush1.bf16.msra.mxu0 %v1569
      %2158 = vmatprep.subr.bf16.mxu0 0
      %2159 = vmatpush1.bf16.msra.mxu0 %v1570
      %2160 = vmatprep.subr.bf16.mxu0 0
      %2161 = vmatpush1.bf16.msra.mxu0 %v1571
      %2162 = vmatprep.subr.bf16.mxu0 0
      %2163 = vmatpush1.bf16.msra.mxu0 %v1572
      %2164 = vmatprep.subr.bf16.mxu0 0
      %2165 = vmatpush1.bf16.msra.mxu0 %v1573
      %2166 = vmatprep.subr.bf16.mxu0 0
      %2167 = vmatpush1.bf16.msra.mxu0 %v1574
      %2168 = vmatprep.subr.bf16.mxu0 0
      %2169 = vmatpush1.bf16.msra.mxu0 %v1575
      %2170 = vmatprep.subr.bf16.mxu0 0
      %2171 = vmatpush1.bf16.msra.mxu0 %v1576
      %2172 = vmatprep.mubr.bf16.mxu0 %v944
      %2173 = vmatmul.mubr.bf16.gmra.mrb[0].mxu0 %v943
      %v2174 = vpop.f32.mrb[0].mxu0
      %v2175 = vadd.f32 %v2014, %v2174
      %v2176 = vpop.f32.mrb[0].mxu0
      %v2177 = vpop.f32.mrb[0].mxu0
      %v2178 = vadd.f32 %v2017, %v2177
      %v2179 = vpop.f32.mrb[0].mxu0
      %2180 = vmatprep.mubr.bf16.mxu0 %v953
      %2181 = vmatmul.mubr.bf16.gmra.mrb[0].mxu0 %v952
      %v2182 = vpop.f32.mrb[0].mxu0
      %v2183 = vadd.f32 %v2022, %v2182
      %v2184 = vpop.f32.mrb[0].mxu0
      %v2185 = vpop.f32.mrb[0].mxu0
      %v2186 = vadd.f32 %v2025, %v2185
      %v2187 = vpop.f32.mrb[0].mxu0
      %2188 = vmatprep.mubr.bf16.mxu0 %v962
      %2189 = vmatmul.mubr.bf16.gmra.mrb[0].mxu0 %v961
      %v2190 = vpop.f32.mrb[0].mxu0
      %v2191 = vadd.f32 %v2030, %v2190
      %v2192 = vpop.f32.mrb[0].mxu0
      %v2193 = vpop.f32.mrb[0].mxu0
      %v2194 = vadd.f32 %v2033, %v2193
      %v2195 = vpop.f32.mrb[0].mxu0
      %2196 = vmatprep.mubr.bf16.mxu0 %v971
      %2197 = vmatmul.mubr.bf16.gmra.mrb[0].mxu0 %v970
      %v2198 = vpop.f32.mrb[0].mxu0
      %v2199 = vadd.f32 %v2038, %v2198
      %v2200 = vpop.f32.mrb[0].mxu0
      %v2201 = vpop.f32.mrb[0].mxu0
      %v2202 = vadd.f32 %v2041, %v2201
      %v2203 = vpop.f32.mrb[0].mxu0
      %2204 = vmatprep.mubr.bf16.mxu0 %v980
      %2205 = vmatmul.mubr.bf16.gmra.mrb[0].mxu0 %v979
      %v2206 = vpop.f32.mrb[0].mxu0
      %v2207 = vadd.f32 %v2046, %v2206
      %v2208 = vpop.f32.mrb[0].mxu0
      %v2209 = vpop.f32.mrb[0].mxu0
      %v2210 = vadd.f32 %v2049, %v2209
      %v2211 = vpop.f32.mrb[0].mxu0
      %2212 = vmatprep.mubr.bf16.mxu0 %v989
      %2213 = vmatmul.mubr.bf16.gmra.mrb[0].mxu0 %v988
      %v2214 = vpop.f32.mrb[0].mxu0
      %v2215 = vadd.f32 %v2054, %v2214
      %v2216 = vpop.f32.mrb[0].mxu0
      %v2217 = vpop.f32.mrb[0].mxu0
      %v2218 = vadd.f32 %v2057, %v2217
      %v2219 = vpop.f32.mrb[0].mxu0
      %2220 = vmatprep.mubr.bf16.mxu0 %v998
      %2221 = vmatmul.mubr.bf16.gmra.mrb[0].mxu0 %v997
      %v2222 = vpop.f32.mrb[0].mxu0
      %v2223 = vadd.f32 %v2062, %v2222
      %v2224 = vpop.f32.mrb[0].mxu0
      %v2225 = vpop.f32.mrb[0].mxu0
      %v2226 = vadd.f32 %v2065, %v2225
      %v2227 = vpop.f32.mrb[0].mxu0
      %2228 = vmatprep.mubr.bf16.mxu0 %v1007
      %2229 = vmatmul.mubr.bf16.gmra.mrb[0].mxu0 %v1006
      %v2230 = vpop.f32.mrb[0].mxu0
      %v2231 = vadd.f32 %v2070, %v2230
      %v2232 = vpop.f32.mrb[0].mxu0
      %v2233 = vpop.f32.mrb[0].mxu0
      %v2234 = vadd.f32 %v2073, %v2233
      %v2235 = vpop.f32.mrb[0].mxu0
      %2236 = vmatprep.mubr.bf16.mxu0 %v1016
      %2237 = vmatmul.mubr.bf16.gmra.mrb[0].mxu0 %v1015
      %v2238 = vpop.f32.mrb[0].mxu0
      %v2239 = vadd.f32 %v2078, %v2238
      %v2240 = vpop.f32.mrb[0].mxu0
      %v2241 = vpop.f32.mrb[0].mxu0
      %v2242 = vadd.f32 %v2081, %v2241
      %v2243 = vpop.f32.mrb[0].mxu0
      %2244 = vmatprep.mubr.bf16.mxu0 %v1025
      %2245 = vmatmul.mubr.bf16.gmra.mrb[0].mxu0 %v1024
      %v2246 = vpop.f32.mrb[0].mxu0
      %v2247 = vadd.f32 %v2086, %v2246
      %v2248 = vpop.f32.mrb[0].mxu0
      %v2249 = vpop.f32.mrb[0].mxu0
      %v2250 = vadd.f32 %v2089, %v2249
      %v2251 = vpop.f32.mrb[0].mxu0
      %2252 = vmatprep.mubr.bf16.mxu0 %v1034
      %2253 = vmatmul.mubr.bf16.gmra.mrb[0].mxu0 %v1033
      %v2254 = vpop.f32.mrb[0].mxu0
      %v2255 = vadd.f32 %v2094, %v2254
      %v2256 = vpop.f32.mrb[0].mxu0
      %v2257 = vpop.f32.mrb[0].mxu0
      %v2258 = vadd.f32 %v2097, %v2257
      %v2259 = vpop.f32.mrb[0].mxu0
      %2260 = vmatprep.mubr.bf16.mxu0 %v1043
      %2261 = vmatmul.mubr.bf16.gmra.mrb[0].mxu0 %v1042
      %v2262 = vpop.f32.mrb[0].mxu0
      %v2263 = vadd.f32 %v2102, %v2262
      %v2264 = vpop.f32.mrb[0].mxu0
      %v2265 = vpop.f32.mrb[0].mxu0
      %v2266 = vadd.f32 %v2105, %v2265
      %v2267 = vpop.f32.mrb[0].mxu0
      %2268 = vmatprep.mubr.bf16.mxu0 %v1052
      %2269 = vmatmul.mubr.bf16.gmra.mrb[0].mxu0 %v1051
      %v2270 = vpop.f32.mrb[0].mxu0
      %v2271 = vadd.f32 %v2110, %v2270
      %v2272 = vpop.f32.mrb[0].mxu0
      %v2273 = vpop.f32.mrb[0].mxu0
      %v2274 = vadd.f32 %v2113, %v2273
      %v2275 = vpop.f32.mrb[0].mxu0
      %2276 = vmatprep.mubr.bf16.mxu0 %v1061
      %2277 = vmatmul.mubr.bf16.gmra.mrb[0].mxu0 %v1060
      %v2278 = vpop.f32.mrb[0].mxu0
      %v2279 = vadd.f32 %v2118, %v2278
      %v2280 = vpop.f32.mrb[0].mxu0
      %v2281 = vpop.f32.mrb[0].mxu0
      %v2282 = vadd.f32 %v2121, %v2281
      %v2283 = vpop.f32.mrb[0].mxu0
      %2284 = vmatprep.mubr.bf16.mxu0 %v1070
      %2285 = vmatmul.mubr.bf16.gmra.mrb[0].mxu0 %v1069
      %v2286 = vpop.f32.mrb[0].mxu0
      %v2287 = vadd.f32 %v2126, %v2286
      %v2288 = vpop.f32.mrb[0].mxu0
      %v2289 = vpop.f32.mrb[0].mxu0
      %v2290 = vadd.f32 %v2129, %v2289
      %v2291 = vpop.f32.mrb[0].mxu0
      %2292 = vmatprep.mubr.bf16.mxu0 %v1079
      %2293 = vmatmul.mubr.bf16.gmra.mrb[0].mxu0 %v1078
      %v2294 = vpop.f32.mrb[0].mxu0
      %v2295 = vadd.f32 %v2134, %v2294
      %v2296 = vpop.f32.mrb[0].mxu0
      %v2297 = vpop.f32.mrb[0].mxu0
      %v2298 = vadd.f32 %v2137, %v2297
      %v2299 = vpop.f32.mrb[0].mxu0
      %2300 = vdwg.mxu0
      %2301 = vmatprep.subr.bf16.mxu0 0
      %2302 = vmatpush1.bf16.msra.mxu0 %v1577
      %2303 = vmatprep.subr.bf16.mxu0 0
      %2304 = vmatpush1.bf16.msra.mxu0 %v1578
      %2305 = vmatprep.subr.bf16.mxu0 0
      %2306 = vmatpush1.bf16.msra.mxu0 %v1579
      %2307 = vmatprep.subr.bf16.mxu0 0
      %2308 = vmatpush1.bf16.msra.mxu0 %v1580
      %2309 = vmatprep.subr.bf16.mxu0 0
      %2310 = vmatpush1.bf16.msra.mxu0 %v1581
      %2311 = vmatprep.subr.bf16.mxu0 0
      %2312 = vmatpush1.bf16.msra.mxu0 %v1582
      %2313 = vmatprep.subr.bf16.mxu0 0
      %2314 = vmatpush1.bf16.msra.mxu0 %v1583
      %2315 = vmatprep.subr.bf16.mxu0 0
      %2316 = vmatpush1.bf16.msra.mxu0 %v1584
      %2317 = vmatprep.subr.bf16.mxu0 0
      %2318 = vmatpush1.bf16.msra.mxu0 0
      %2319 = vmatprep.subr.bf16.mxu0 0
      %2320 = vmatpush1.bf16.msra.mxu0 0
      %2321 = vmatprep.subr.bf16.mxu0 0
      %2322 = vmatpush1.bf16.msra.mxu0 0
      %2323 = vmatprep.subr.bf16.mxu0 0
      %2324 = vmatpush1.bf16.msra.mxu0 0
      %2325 = vmatprep.subr.bf16.mxu0 0
      %2326 = vmatpush1.bf16.msra.mxu0 0
      %2327 = vmatprep.subr.bf16.mxu0 0
      %2328 = vmatpush1.bf16.msra.mxu0 0
      %2329 = vmatprep.subr.bf16.mxu0 0
      %2330 = vmatpush1.bf16.msra.mxu0 0
      %2331 = vmatprep.subr.bf16.mxu0 0
      %2332 = vmatpush1.bf16.msra.mxu0 0
      %2333 = vmatprep.mubr.bf16.mxu0 0
      %2334 = vmatmul.mubr.bf16.gmra.mrb[0].mxu0 %v945
      %v2335 = vpop.f32.mrb[0].mxu0
      %v2336 = vadd.f32 %v2175, %v2335
      %v2337 = vpop.f32.mrb[0].mxu0
      %v2338 = vpop.f32.mrb[0].mxu0
      %v2339 = vadd.f32 %v2178, %v2338
      %v2340 = vpop.f32.mrb[0].mxu0
      %2341 = vmatprep.mubr.bf16.mxu0 0
      %2342 = vmatmul.mubr.bf16.gmra.mrb[0].mxu0 %v954
      %v2343 = vpop.f32.mrb[0].mxu0
      %v2344 = vadd.f32 %v2183, %v2343
      %v2345 = vpop.f32.mrb[0].mxu0
      %v2346 = vpop.f32.mrb[0].mxu0
      %v2347 = vadd.f32 %v2186, %v2346
      %v2348 = vpop.f32.mrb[0].mxu0
      %2349 = vmatprep.mubr.bf16.mxu0 0
      %2350 = vmatmul.mubr.bf16.gmra.mrb[0].mxu0 %v963
      %v2351 = vpop.f32.mrb[0].mxu0
      %v2352 = vadd.f32 %v2191, %v2351
      %v2353 = vpop.f32.mrb[0].mxu0
      %v2354 = vpop.f32.mrb[0].mxu0
      %v2355 = vadd.f32 %v2194, %v2354
      %v2356 = vpop.f32.mrb[0].mxu0
      %2357 = vmatprep.mubr.bf16.mxu0 0
      %2358 = vmatmul.mubr.bf16.gmra.mrb[0].mxu0 %v972
      %v2359 = vpop.f32.mrb[0].mxu0
      %v2360 = vadd.f32 %v2199, %v2359
      %v2361 = vpop.f32.mrb[0].mxu0
      %v2362 = vpop.f32.mrb[0].mxu0
      %v2363 = vadd.f32 %v2202, %v2362
      %v2364 = vpop.f32.mrb[0].mxu0
      %2365 = vmatprep.mubr.bf16.mxu0 0
      %2366 = vmatmul.mubr.bf16.gmra.mrb[0].mxu0 %v981
      %v2367 = vpop.f32.mrb[0].mxu0
      %v2368 = vadd.f32 %v2207, %v2367
      %v2369 = vpop.f32.mrb[0].mxu0
      %v2370 = vpop.f32.mrb[0].mxu0
      %v2371 = vadd.f32 %v2210, %v2370
      %v2372 = vpop.f32.mrb[0].mxu0
      %2373 = vmatprep.mubr.bf16.mxu0 0
      %2374 = vmatmul.mubr.bf16.gmra.mrb[0].mxu0 %v990
      %v2375 = vpop.f32.mrb[0].mxu0
      %v2376 = vadd.f32 %v2215, %v2375
      %v2377 = vpop.f32.mrb[0].mxu0
      %v2378 = vpop.f32.mrb[0].mxu0
      %v2379 = vadd.f32 %v2218, %v2378
      %v2380 = vpop.f32.mrb[0].mxu0
      %2381 = vmatprep.mubr.bf16.mxu0 0
      %2382 = vmatmul.mubr.bf16.gmra.mrb[0].mxu0 %v999
      %v2383 = vpop.f32.mrb[0].mxu0
      %v2384 = vadd.f32 %v2223, %v2383
      %v2385 = vpop.f32.mrb[0].mxu0
      %v2386 = vpop.f32.mrb[0].mxu0
      %v2387 = vadd.f32 %v2226, %v2386
      %v2388 = vpop.f32.mrb[0].mxu0
      %2389 = vmatprep.mubr.bf16.mxu0 0
      %2390 = vmatmul.mubr.bf16.gmra.mrb[0].mxu0 %v1008
      %v2391 = vpop.f32.mrb[0].mxu0
      %v2392 = vadd.f32 %v2231, %v2391
      %v2393 = vpop.f32.mrb[0].mxu0
      %v2394 = vpop.f32.mrb[0].mxu0
      %v2395 = vadd.f32 %v2234, %v2394
      %v2396 = vpop.f32.mrb[0].mxu0
      %2397 = vmatprep.mubr.bf16.mxu0 0
      %2398 = vmatmul.mubr.bf16.gmra.mrb[0].mxu0 %v1017
      %v2399 = vpop.f32.mrb[0].mxu0
      %v2400 = vadd.f32 %v2239, %v2399
      %v2401 = vpop.f32.mrb[0].mxu0
      %v2402 = vpop.f32.mrb[0].mxu0
      %v2403 = vadd.f32 %v2242, %v2402
      %v2404 = vpop.f32.mrb[0].mxu0
      %2405 = vmatprep.mubr.bf16.mxu0 0
      %2406 = vmatmul.mubr.bf16.gmra.mrb[0].mxu0 %v1026
      %v2407 = vpop.f32.mrb[0].mxu0
      %v2408 = vadd.f32 %v2247, %v2407
      %v2409 = vpop.f32.mrb[0].mxu0
      %v2410 = vpop.f32.mrb[0].mxu0
      %v2411 = vadd.f32 %v2250, %v2410
      %v2412 = vpop.f32.mrb[0].mxu0
      %2413 = vmatprep.mubr.bf16.mxu0 0
      %2414 = vmatmul.mubr.bf16.gmra.mrb[0].mxu0 %v1035
      %v2415 = vpop.f32.mrb[0].mxu0
      %v2416 = vadd.f32 %v2255, %v2415
      %v2417 = vpop.f32.mrb[0].mxu0
      %v2418 = vpop.f32.mrb[0].mxu0
      %v2419 = vadd.f32 %v2258, %v2418
      %v2420 = vpop.f32.mrb[0].mxu0
      %2421 = vmatprep.mubr.bf16.mxu0 0
      %2422 = vmatmul.mubr.bf16.gmra.mrb[0].mxu0 %v1044
      %v2423 = vpop.f32.mrb[0].mxu0
      %v2424 = vadd.f32 %v2263, %v2423
      %v2425 = vpop.f32.mrb[0].mxu0
      %v2426 = vpop.f32.mrb[0].mxu0
      %v2427 = vadd.f32 %v2266, %v2426
      %v2428 = vpop.f32.mrb[0].mxu0
      %2429 = vmatprep.mubr.bf16.mxu0 0
      %2430 = vmatmul.mubr.bf16.gmra.mrb[0].mxu0 %v1053
      %v2431 = vpop.f32.mrb[0].mxu0
      %v2432 = vadd.f32 %v2271, %v2431
      %v2433 = vpop.f32.mrb[0].mxu0
      %v2434 = vpop.f32.mrb[0].mxu0
      %v2435 = vadd.f32 %v2274, %v2434
      %v2436 = vpop.f32.mrb[0].mxu0
      %2437 = vmatprep.mubr.bf16.mxu0 0
      %2438 = vmatmul.mubr.bf16.gmra.mrb[0].mxu0 %v1062
      %v2439 = vpop.f32.mrb[0].mxu0
      %v2440 = vadd.f32 %v2279, %v2439
      %v2441 = vpop.f32.mrb[0].mxu0
      %v2442 = vpop.f32.mrb[0].mxu0
      %v2443 = vadd.f32 %v2282, %v2442
      %v2444 = vpop.f32.mrb[0].mxu0
      %2445 = vmatprep.mubr.bf16.mxu0 0
      %2446 = vmatmul.mubr.bf16.gmra.mrb[0].mxu0 %v1071
      %v2447 = vpop.f32.mrb[0].mxu0
      %v2448 = vadd.f32 %v2287, %v2447
      %v2449 = vpop.f32.mrb[0].mxu0
      %v2450 = vpop.f32.mrb[0].mxu0
      %v2451 = vadd.f32 %v2290, %v2450
      %v2452 = vpop.f32.mrb[0].mxu0
      %2453 = vmatprep.mubr.bf16.mxu0 0
      %2454 = vmatmul.mubr.bf16.gmra.mrb[0].mxu0 %v1080
      %v2455 = vpop.f32.mrb[0].mxu0
      %v2456 = vadd.f32 %v2295, %v2455
      %v2457 = vpop.f32.mrb[0].mxu0
      %v2458 = vpop.f32.mrb[0].mxu0
      %v2459 = vadd.f32 %v2298, %v2458
      %v2460 = vpop.f32.mrb[0].mxu0
      %2461 = vdwg.mxu0
      %v2462 = vmax.f32 %v2336, 0.0
      %v2463 = vmax.f32 %v2339, 0.0
      %v2464 = vmax.f32 %v2344, 0.0
      %v2465 = vmax.f32 %v2347, 0.0
      %v2466 = vmax.f32 %v2352, 0.0
      %v2467 = vmax.f32 %v2355, 0.0
      %v2468 = vmax.f32 %v2360, 0.0
      %v2469 = vmax.f32 %v2363, 0.0
      %v2470 = vmax.f32 %v2368, 0.0
      %v2471 = vmax.f32 %v2371, 0.0
      %v2472 = vmax.f32 %v2376, 0.0
      %v2473 = vmax.f32 %v2379, 0.0
      %v2474 = vmax.f32 %v2384, 0.0
      %v2475 = vmax.f32 %v2387, 0.0
      %v2476 = vmax.f32 %v2392, 0.0
      %v2477 = vmax.f32 %v2395, 0.0
      %v2478 = vmax.f32 %v2400, 0.0
      %v2479 = vmax.f32 %v2403, 0.0
      %v2480 = vmax.f32 %v2408, 0.0
      %v2481 = vmax.f32 %v2411, 0.0
      %v2482 = vmax.f32 %v2416, 0.0
      %v2483 = vmax.f32 %v2419, 0.0
      %v2484 = vmax.f32 %v2424, 0.0
      %v2485 = vmax.f32 %v2427, 0.0
      %v2486 = vmax.f32 %v2432, 0.0
      %v2487 = vmax.f32 %v2435, 0.0
      %v2488 = vmax.f32 %v2440, 0.0
      %v2489 = vmax.f32 %v2443, 0.0
      %v2490 = vmax.f32 %v2448, 0.0
      %v2491 = vmax.f32 %v2451, 0.0
      %v2492 = vmax.f32 %v2456, 0.0
      %v2493 = vmax.f32 %v2459, 0.0
      %v2494 = vpack.c.bf16 %v2463, %v2462
      %v2495 = vpack.c.bf16 %v2465, %v2464
      %v2496 = vpack.c.bf16 %v2467, %v2466
      %v2497 = vpack.c.bf16 %v2469, %v2468
      %v2498 = vpack.c.bf16 %v2471, %v2470
      %v2499 = vpack.c.bf16 %v2473, %v2472
      %v2500 = vpack.c.bf16 %v2475, %v2474
      %v2501 = vpack.c.bf16 %v2477, %v2476
      %v2502 = vpack.c.bf16 %v2479, %v2478
      %v2503 = vpack.c.bf16 %v2481, %v2480
      %v2504 = vpack.c.bf16 %v2483, %v2482
      %v2505 = vpack.c.bf16 %v2485, %v2484
      %v2506 = vpack.c.bf16 %v2487, %v2486
      %v2507 = vpack.c.bf16 %v2489, %v2488
      %v2508 = vpack.c.bf16 %v2491, %v2490
      %v2509 = vpack.c.bf16 %v2493, %v2492
      %v2526 = vunpack.c.l.b16 %v2494
      %v2527 = vunpack.c.h.b16 %v2494
      %v2528 = vunpack.c.l.b16 %v2495
      %v2529 = vunpack.c.h.b16 %v2495
      %v2530 = vunpack.c.l.b16 %v2496
      %v2531 = vunpack.c.h.b16 %v2496
      %v2532 = vunpack.c.l.b16 %v2497
      %v2533 = vunpack.c.h.b16 %v2497
      %v2534 = vunpack.c.l.b16 %v2498
      %v2535 = vunpack.c.h.b16 %v2498
      %v2536 = vunpack.c.l.b16 %v2499
      %v2537 = vunpack.c.h.b16 %v2499
      %v2538 = vunpack.c.l.b16 %v2500
      %v2539 = vunpack.c.h.b16 %v2500
      %v2540 = vunpack.c.l.b16 %v2501
      %v2541 = vunpack.c.h.b16 %v2501
      %v2542 = vunpack.c.l.b16 %v2502
      %v2543 = vunpack.c.h.b16 %v2502
      %v2544 = vunpack.c.l.b16 %v2503
      %v2545 = vunpack.c.h.b16 %v2503
      %v2546 = vunpack.c.l.b16 %v2504
      %v2547 = vunpack.c.h.b16 %v2504
      %v2548 = vunpack.c.l.b16 %v2505
      %v2549 = vunpack.c.h.b16 %v2505
      %v2550 = vunpack.c.l.b16 %v2506
      %v2551 = vunpack.c.h.b16 %v2506
      %v2552 = vunpack.c.l.b16 %v2507
      %v2553 = vunpack.c.h.b16 %v2507
      %v2554 = vunpack.c.l.b16 %v2508
      %v2555 = vunpack.c.h.b16 %v2508
      %v2556 = vunpack.c.l.b16 %v2509
      %v2557 = vunpack.c.h.b16 %v2509
      %v2558 = vpack.c.b16 %v2526, %v2526
      %v2559 = vpack.c.b16 %v2527, %v2527
      %v2560 = vpack.c.b16 %v2528, %v2528
      %v2561 = vpack.c.b16 %v2529, %v2529
      %v2562 = vpack.c.b16 %v2530, %v2530
      %v2563 = vpack.c.b16 %v2531, %v2531
      %v2564 = vpack.c.b16 %v2532, %v2532
      %v2565 = vpack.c.b16 %v2533, %v2533
      %v2566 = vpack.c.b16 %v2534, %v2534
      %v2567 = vpack.c.b16 %v2535, %v2535
      %v2568 = vpack.c.b16 %v2536, %v2536
      %v2569 = vpack.c.b16 %v2537, %v2537
      %v2570 = vpack.c.b16 %v2538, %v2538
      %v2571 = vpack.c.b16 %v2539, %v2539
      %v2572 = vpack.c.b16 %v2540, %v2540
      %v2573 = vpack.c.b16 %v2541, %v2541
      %v2574 = vpack.c.b16 %v2542, %v2542
      %v2575 = vpack.c.b16 %v2543, %v2543
      %v2576 = vpack.c.b16 %v2544, %v2544
      %v2577 = vpack.c.b16 %v2545, %v2545
      %v2578 = vpack.c.b16 %v2546, %v2546
      %v2579 = vpack.c.b16 %v2547, %v2547
      %v2580 = vpack.c.b16 %v2548, %v2548
      %v2581 = vpack.c.b16 %v2549, %v2549
      %v2582 = vpack.c.b16 %v2550, %v2550
      %v2583 = vpack.c.b16 %v2551, %v2551
      %v2584 = vpack.c.b16 %v2552, %v2552
      %v2585 = vpack.c.b16 %v2553, %v2553
      %v2586 = vpack.c.b16 %v2554, %v2554
      %v2587 = vpack.c.b16 %v2555, %v2555
      %v2588 = vpack.c.b16 %v2556, %v2556
      %v2589 = vpack.c.b16 %v2557, %v2557
      %2622 = vst [vmem:[%s175] sm:$0xf] %v2558
      %2623 = vst [vmem:[%s175 + $0x4] sm:$0xf] %v2559
      %2624 = vst [vmem:[%s175 + $0x8] sm:$0xf] %v2560
      %2625 = vst [vmem:[%s175 + $0xc] sm:$0xf] %v2561
      %2626 = vst [vmem:[%s175 + $0x10] sm:$0xf] %v2562
      %2627 = vst [vmem:[%s175 + $0x14] sm:$0xf] %v2563
      %2628 = vst [vmem:[%s175 + $0x18] sm:$0xf] %v2564
      %2629 = vst [vmem:[%s175 + $0x1c] sm:$0xf] %v2565
      %2630 = vst [vmem:[%s175 + $0x20] sm:$0xf] %v2566
      %2631 = vst [vmem:[%s175 + $0x24] sm:$0xf] %v2567
      %2632 = vst [vmem:[%s175 + $0x28] sm:$0xf] %v2568
      %2633 = vst [vmem:[%s175 + $0x2c] sm:$0xf] %v2569
      %2634 = vst [vmem:[%s175 + $0x30] sm:$0xf] %v2570
      %2635 = vst [vmem:[%s175 + $0x34] sm:$0xf] %v2571
      %2636 = vst [vmem:[%s175 + $0x38] sm:$0xf] %v2572
      %2637 = vst [vmem:[%s175 + $0x3c] sm:$0xf] %v2573
      %2638 = vst [vmem:[%s175 + $0x40] sm:$0xf] %v2574
      %2639 = vst [vmem:[%s175 + $0x44] sm:$0xf] %v2575
      %2640 = vst [vmem:[%s175 + $0x48] sm:$0xf] %v2576
      %2641 = vst [vmem:[%s175 + $0x4c] sm:$0xf] %v2577
      %2642 = vst [vmem:[%s175 + $0x50] sm:$0xf] %v2578
      %2643 = vst [vmem:[%s175 + $0x54] sm:$0xf] %v2579
      %2644 = vst [vmem:[%s175 + $0x58] sm:$0xf] %v2580
      %2645 = vst [vmem:[%s175 + $0x5c] sm:$0xf] %v2581
      %2646 = vst [vmem:[%s175 + $0x60] sm:$0xf] %v2582
      %2647 = vst [vmem:[%s175 + $0x64] sm:$0xf] %v2583
      %2648 = vst [vmem:[%s175 + $0x68] sm:$0xf] %v2584
      %2649 = vst [vmem:[%s175 + $0x6c] sm:$0xf] %v2585
      %2650 = vst [vmem:[%s175 + $0x70] sm:$0xf] %v2586
      %2651 = vst [vmem:[%s175 + $0x74] sm:$0xf] %v2587
      %2652 = vst [vmem:[%s175 + $0x78] sm:$0xf] %v2588
      %2653 = vst [vmem:[%s175 + $0x7c] sm:$0xf] %v2589
      %s2654 = smul.u32 32, %s14
      %p2655 = scmp.lt.s32.totalorder %s2654, 63
      %s2656 = scalar_select %p2655, %s2654, 63
      %s2657 = smul.addr %s2656, 4
      %s2658 = scalar_lea.vmem %s3, %s2657
      // Predicated region
      $region33: #{resnet_tsa_forward.11} parent=31 // pred_check
        %p2659 = pneg %p100
      $region34: #{resnet_tsa_forward.11} parent=31 // pred_check_branch
        %2661 = sbr.rel (%p2659) target = $region36
      $region35: #{resnet_tsa_forward.11} parent=31 // pred_region
        %s2662 = smul.u32 32, %s14
      $region36: #{resnet_tsa_forward.11} parent=31 // pred_fallthru
        _
    $region32: #{resnet_tsa_forward.11} parent=5 // pred_fallthru
      _
    %p2663 = scmp.le.s32.totalorder 2, %s9
    // Predicated region
    $region37: #{resnet_tsa_forward.11} parent=5 // pred_check
      %p2664 = pneg %p2663
    $region38: #{resnet_tsa_forward.11} parent=5 // pred_check_branch
      %2666 = sbr.rel (%p2664) target = $region40
    $region39: #{resnet_tsa_forward.11} parent=5 // pred_region
      %s2667 = ssub.s32 %s9, 2
      // Predicated region
      $region41: #{resnet_tsa_forward.11} parent=39 // pred_check
        %p2668 = pneg %p106
      $region42: #{resnet_tsa_forward.11} parent=39 // pred_check_branch
        %2670 = sbr.rel (%p2668) target = $region44
      $region43: #{resnet_tsa_forward.11} parent=39 // pred_region
        %s2671 = smul.u32 32, %s15
        %p2672 = scmp.lt.s32.totalorder %s2671, 63
        %s2673 = scalar_select %p2672, %s2671, 63
        %s2674 = smul.addr %s2673, 4
        %s2675 = scalar_lea.vmem %s3, %s2674
      $region44: #{resnet_tsa_forward.11} parent=39 // pred_fallthru
        _
    $region40: #{resnet_tsa_forward.11} parent=5 // pred_fallthru
      _
  $region6: #{resnet_tsa_forward.11} parent=0 // loop_footer
    %s13 = sadd.s32 1, %s9
  $region7: #{resnet_tsa_forward.11} parent=0 // loop_footer_branch
    %8 = sbr.rel target = $region3
  $region8: #{resnet_tsa_forward.11} parent=0 // loop_exit
    _

// kernel: resnet_tsa_forward.12
$region0: #{resnet_tsa_forward.12}
  #allocation0 [shape = 'u32[]', space=smem, size = 0x4, offset = 0x4, fixed_abs, tag = 'smem constant byte address 0x4 - core index']
  #allocation1 [shape = 'u32[144,128]{1,0:T(1,128)}', space=vmem, size = 0x12000, scoped, tag = 'internal scratch']
  %s0 = inlined_call_operand.vmem [shape: bf16[512,1152], index: 0, kind: input, shape index: {}]
  %s1 = inlined_call_operand.vmem [shape: bf16[1152,128], index: 1, kind: input, shape index: {}]
  %s2 = inlined_call_operand.vmem [shape: f32[1,128], index: 2, kind: input, shape index: {}]
  %s3 = inlined_call_operand.vmem [shape: bf16[512,128], index: 3, kind: input, shape index: {}]
  %s4 = inlined_call_operand.vmem [shape: bf16[512,128], index: 4, kind: output, shape index: {}]
  %s5 = sld [smem:[#allocation0]]
  $region49: #{resnet_tsa_forward.12} parent=0
    _
  %s7 = ssub.s32 1, %s5
  %s8 = scalar_select 0, %s7, %s5
  loop: start=0, step=1, limit=4
  $region2: #{resnet_tsa_forward.12} parent=0 // loop_pre_header
    _
  $region3: #{resnet_tsa_forward.12} parent=0 // loop_header
    %s10 = sphi 0, %s14
    %p11 = scmp.ge.s32.totalorder %s10, 4
    %s20 = sphi 0, %s22
    %s23 = sphi 0, %s20
    %s24 = sphi 0, %s23
    %s40 = sphi 0, %s24
    %s44 = sphi 0, %s44
    %s46 = sphi 0, %s44
    %s47 = sphi 0, %s46
    %s61 = sphi 0, %s47
    %s65 = sphi 0, %s65
    %s67 = sphi 0, %s65
    %s68 = sphi 0, %s67
    %s82 = sphi 0, %s68
    %s88 = sphi 0, %s90
    %s91 = sphi 0, %s88
    %s92 = sphi 0, %s91
    %s108 = sphi 0, %s92
    %s114 = sphi 0, %s116
    %s117 = sphi 0, %s114
    %s118 = sphi 0, %s117
    %s134 = sphi 0, %s118
  $region4: #{resnet_tsa_forward.12} parent=0 // loop_header_branch
    %13 = sbr.rel (%p11) target = $region8
  $region5: #{resnet_tsa_forward.12} parent=0 // loop_body
    %s15 = ssub.s32 %s10, 1
    %s16 = ssub.s32 %s10, 2
    %s17 = sadd.s32 %s10, 1
    %s18 = ssub.s32 %s10, %s17
    %p19 = scmp.eq.s32.totalorder %s18, 0
    %s21 = sadd.s32 %s20, 1
    %s22 = scalar_select %p19, %s20, %s21
    %p25 = pneg %p19
    %p26 = scmp.eq.s32.totalorder %s10, 1
    %p27 = por %p25, %p26
    %p28 = scmp.ne.s32.totalorder %s20, %s23
    %p29 = scmp.eq.s32.totalorder %s10, 0
    %p30 = por %p28, %p29
    %p31 = scmp.ne.s32.totalorder %s20, %s23
    %p32 = scmp.eq.s32.totalorder %s15, 1
    %p33 = por %p31, %p32
    %p34 = scmp.ne.s32.totalorder %s23, %s24
    %p35 = scmp.eq.s32.totalorder %s15, 0
    %p36 = por %p34, %p35
    %p37 = scmp.ne.s32.totalorder %s23, %s24
    %p38 = scmp.eq.s32.totalorder %s16, 1
    %p39 = por %p37, %p38
    %p41 = scmp.ne.s32.totalorder %s24, %s40
    %p42 = scmp.eq.s32.totalorder %s16, 0
    %p43 = por %p41, %p42
    %s45 = sadd.s32 %s44, 1
    %p48 = scmp.eq.s32.totalorder %s10, 1
    %p49 = scmp.ne.s32.totalorder %s44, %s46
    %p50 = scmp.eq.s32.totalorder %s10, 0
    %p51 = por %p49, %p50
    %p52 = scmp.ne.s32.totalorder %s44, %s46
    %p53 = scmp.eq.s32.totalorder %s15, 1
    %p54 = por %p52, %p53
    %p55 = scmp.ne.s32.totalorder %s46, %s47
    %p56 = scmp.eq.s32.totalorder %s15, 0
    %p57 = por %p55, %p56
    %p58 = scmp.ne.s32.totalorder %s46, %s47
    %p59 = scmp.eq.s32.totalorder %s16, 1
    %p60 = por %p58, %p59
    %p62 = scmp.ne.s32.totalorder %s47, %s61
    %p63 = scmp.eq.s32.totalorder %s16, 0
    %p64 = por %p62, %p63
    %s66 = sadd.s32 %s65, 1
    %p69 = scmp.eq.s32.totalorder %s10, 1
    %p70 = scmp.ne.s32.totalorder %s65, %s67
    %p71 = scmp.eq.s32.totalorder %s10, 0
    %p72 = por %p70, %p71
    %p73 = scmp.ne.s32.totalorder %s65, %s67
    %p74 = scmp.eq.s32.totalorder %s15, 1
    %p75 = por %p73, %p74
    %p76 = scmp.ne.s32.totalorder %s67, %s68
    %p77 = scmp.eq.s32.totalorder %s15, 0
    %p78 = por %p76, %p77
    %p79 = scmp.ne.s32.totalorder %s67, %s68
    %p80 = scmp.eq.s32.totalorder %s16, 1
    %p81 = por %p79, %p80
    %p83 = scmp.ne.s32.totalorder %s68, %s82
    %p84 = scmp.eq.s32.totalorder %s16, 0
    %p85 = por %p83, %p84
    %s86 = ssub.s32 %s10, %s17
    %p87 = scmp.eq.s32.totalorder %s86, 0
    %s89 = sadd.s32 %s88, 1
    %s90 = scalar_select %p87, %s88, %s89
    %p93 = pneg %p87
    %p94 = scmp.eq.s32.totalorder %s10, 1
    %p95 = por %p93, %p94
    %p96 = scmp.ne.s32.totalorder %s88, %s91
    %p97 = scmp.eq.s32.totalorder %s10, 0
    %p98 = por %p96, %p97
    %p99 = scmp.ne.s32.totalorder %s88, %s91
    %p100 = scmp.eq.s32.totalorder %s15, 1
    %p101 = por %p99, %p100
    %p102 = scmp.ne.s32.totalorder %s91, %s92
    %p103 = scmp.eq.s32.totalorder %s15, 0
    %p104 = por %p102, %p103
    %p105 = scmp.ne.s32.totalorder %s91, %s92
    %p106 = scmp.eq.s32.totalorder %s16, 1
    %p107 = por %p105, %p106
    %p109 = scmp.ne.s32.totalorder %s92, %s108
    %p110 = scmp.eq.s32.totalorder %s16, 0
    %p111 = por %p109, %p110
    %s112 = ssub.s32 %s10, %s17
    %p113 = scmp.eq.s32.totalorder %s112, 0
    %s115 = sadd.s32 %s114, 1
    %s116 = scalar_select %p113, %s114, %s115
    %p119 = pneg %p113
    %p120 = scmp.eq.s32.totalorder %s10, 1
    %p121 = por %p119, %p120
    %p122 = scmp.ne.s32.totalorder %s114, %s117
    %p123 = scmp.eq.s32.totalorder %s10, 0
    %p124 = por %p122, %p123
    %p125 = scmp.ne.s32.totalorder %s114, %s117
    %p126 = scmp.eq.s32.totalorder %s15, 1
    %p127 = por %p125, %p126
    %p128 = scmp.ne.s32.totalorder %s117, %s118
    %p129 = scmp.eq.s32.totalorder %s15, 0
    %p130 = por %p128, %p129
    %p131 = scmp.ne.s32.totalorder %s117, %s118
    %p132 = scmp.eq.s32.totalorder %s16, 1
    %p133 = por %p131, %p132
    %p135 = scmp.ne.s32.totalorder %s118, %s134
    %p136 = scmp.eq.s32.totalorder %s16, 0
    %p137 = por %p135, %p136
    %p138 = scmp.le.s32.totalorder 1, %s10
    %p139 = scmp.lt.s32.totalorder %s10, 3
    %p140 = pnand %p138, %p139
    %p141 = pneg %p140
    // Predicated region
    $region9: #{resnet_tsa_forward.12} parent=5 // pred_check
      _
    $region10: #{resnet_tsa_forward.12} parent=5 // pred_check_branch
      %143 = sbr.rel (%p140) target = $region12
    $region11: #{resnet_tsa_forward.12} parent=5 // pred_region
      %s144 = ssub.s32 %s10, 1
      // Predicated region
      $region13: #{resnet_tsa_forward.12} parent=11 // pred_check
        %p145 = pneg %p57
      $region14: #{resnet_tsa_forward.12} parent=11 // pred_check_branch
        %147 = sbr.rel (%p145) target = $region16
      $region15: #{resnet_tsa_forward.12} parent=11 // pred_region
        _
      $region16: #{resnet_tsa_forward.12} parent=11 // pred_fallthru
        _
      // Predicated region
      $region17: #{resnet_tsa_forward.12} parent=11 // pred_check
        %p148 = pneg %p78
      $region18: #{resnet_tsa_forward.12} parent=11 // pred_check_branch
        %150 = sbr.rel (%p148) target = $region20
      $region19: #{resnet_tsa_forward.12} parent=11 // pred_region
        _
      $region20: #{resnet_tsa_forward.12} parent=11 // pred_fallthru
        _
    $region12: #{resnet_tsa_forward.12} parent=5 // pred_fallthru
      _
    %p151 = scmp.lt.s32.totalorder %s10, 2
    // Predicated region
    $region21: #{resnet_tsa_forward.12} parent=5 // pred_check
      %p152 = pneg %p151
    $region22: #{resnet_tsa_forward.12} parent=5 // pred_check_branch
      %154 = sbr.rel (%p152) target = $region24
    $region23: #{resnet_tsa_forward.12} parent=5 // pred_region
      // Predicated region
      $region25: #{resnet_tsa_forward.12} parent=23 // pred_check
        %p155 = pneg %p30
      $region26: #{resnet_tsa_forward.12} parent=23 // pred_check_branch
        %157 = sbr.rel (%p155) target = $region28
      $region27: #{resnet_tsa_forward.12} parent=23 // pred_region
        %s158 = smul.u32 32, %s10
        %p159 = scmp.lt.s32.totalorder %s158, 63
        %s160 = scalar_select %p159, %s158, 63
        %s161 = smul.addr %s160, 9
        %s162 = smul.addr %s161, 4
        %s163 = scalar_lea.vmem %s0, %s162
        %s164 = smul.u32 32, %s10
      $region28: #{resnet_tsa_forward.12} parent=23 // pred_fallthru
        _
      // Predicated region
      $region29: #{resnet_tsa_forward.12} parent=23 // pred_check
        %p165 = pneg %p98
      $region30: #{resnet_tsa_forward.12} parent=23 // pred_check_branch
        %167 = sbr.rel (%p165) target = $region32
      $region31: #{resnet_tsa_forward.12} parent=23 // pred_region
        %s168 = smul.u32 32, %s10
        %p169 = scmp.lt.s32.totalorder %s168, 63
        %s170 = scalar_select %p169, %s168, 63
        %s171 = smul.addr %s170, 4
        %s172 = scalar_lea.vmem %s3, %s171
        %s173 = smul.u32 32, %s10
      $region32: #{resnet_tsa_forward.12} parent=23 // pred_fallthru
        _
    $region24: #{resnet_tsa_forward.12} parent=5 // pred_fallthru
      _
    %p174 = scmp.le.s32.totalorder 1, %s10
    %p175 = scmp.lt.s32.totalorder %s10, 3
    %p176 = pnand %p174, %p175
    %p177 = pneg %p176
    // Predicated region
    $region33: #{resnet_tsa_forward.12} parent=5 // pred_check
      _
    $region34: #{resnet_tsa_forward.12} parent=5 // pred_check_branch
      %179 = sbr.rel (%p176) target = $region36
    $region35: #{resnet_tsa_forward.12} parent=5 // pred_region
      %s180 = ssub.s32 %s10, 1
      %s181 = smul.u32 32, %s15
      %p182 = scmp.lt.s32.totalorder %s181, 63
      %s183 = scalar_select %p182, %s181, 63
      %s184 = smul.addr %s183, 9
      %s185 = smul.addr %s184, 4
      %s186 = scalar_lea.vmem %s0, %s185
      %p187 = pneg %p36
      %p188 = pneg %p33
      %p189 = pneg %p57
      %p190 = pneg %p54
      %p191 = pneg %p78
      %p192 = pneg %p75
      %s193 = smul.u32 32, %s15
      %p194 = scmp.lt.s32.totalorder %s193, 63
      %s195 = scalar_select %p194, %s193, 63
      %s196 = smul.addr %s195, 4
      %s197 = scalar_lea.vmem %s3, %s196
      %p198 = pneg %p104
      %p199 = pneg %p101
      %p200 = pneg %p130
      %p201 = pneg %p127
      %s202 = smul.u32 32, %s15
      %p203 = scmp.lt.s32.totalorder %s202, 63
      %s204 = scalar_select %p203, %s202, 63
      %s205 = smul.addr %s204, 4
      %s206 = scalar_lea.vmem %s4, %s205
      %s207 = smul.u32 32, %s15
      %p208 = scmp.lt.s32.totalorder %s207, 63
      %s209 = scalar_select %p208, %s207, 63
      %s210 = smul.addr %s209, 9
      %s211 = smul.addr %s210, 4
      %s212 = scalar_lea.vmem %s0, %s211
      %s213 = smul.u32 32, %s15
      %s214 = smul.u32 32, %s15
      %p215 = scmp.lt.s32.totalorder %s214, 63
      %s216 = scalar_select %p215, %s214, 63
      %s217 = smul.addr %s216, 4
      %s218 = scalar_lea.vmem %s3, %s217
      %s219 = smul.u32 32, %s15
      %s220 = smul.u32 32, %s15
      %p221 = scmp.lt.s32.totalorder %s220, 63
      %s222 = scalar_select %p221, %s220, 63
      %s223 = smul.addr %s222, 4
      %s224 = scalar_lea.vmem %s4, %s223
      %s225 = smul.u32 32, %s15
      %v227 = vld [vmem:[%s212] sm:$0xff]
      %v228 = vld [vmem:[%s212 + $0x8] sm:$0xff]
      %v229 = vld [vmem:[%s212 + $0x10] sm:$0xff]
      %v230 = vld [vmem:[%s212 + $0x18] sm:$0xff]
      %v231 = vld [vmem:[%s212 + $0x20] sm:$0xf]
      %v232 = vld [vmem:[%s212 + $0x24] sm:$0xff]
      %v233 = vld [vmem:[%s212 + $0x2c] sm:$0xff]
      %v234 = vld [vmem:[%s212 + $0x34] sm:$0xff]
      %v235 = vld [vmem:[%s212 + $0x3c] sm:$0xff]
      %v236 = vld [vmem:[%s212 + $0x44] sm:$0xf]
      %v237 = vld [vmem:[%s212 + $0x48] sm:$0xff]
      %v238 = vld [vmem:[%s212 + $0x50] sm:$0xff]
      %v239 = vld [vmem:[%s212 + $0x58] sm:$0xff]
      %v240 = vld [vmem:[%s212 + $0x60] sm:$0xff]
      %v241 = vld [vmem:[%s212 + $0x68] sm:$0xf]
      %v242 = vld [vmem:[%s212 + $0x6c] sm:$0xff]
      %v243 = vld [vmem:[%s212 + $0x74] sm:$0xff]
      %v244 = vld [vmem:[%s212 + $0x7c] sm:$0xff]
      %v245 = vld [vmem:[%s212 + $0x84] sm:$0xff]
      %v246 = vld [vmem:[%s212 + $0x8c] sm:$0xf]
      %v247 = vld [vmem:[%s212 + $0x90] sm:$0xff]
      %v248 = vld [vmem:[%s212 + $0x98] sm:$0xff]
      %v249 = vld [vmem:[%s212 + $0xa0] sm:$0xff]
      %v250 = vld [vmem:[%s212 + $0xa8] sm:$0xff]
      %v251 = vld [vmem:[%s212 + $0xb0] sm:$0xf]
      %v252 = vld [vmem:[%s212 + $0xb4] sm:$0xff]
      %v253 = vld [vmem:[%s212 + $0xbc] sm:$0xff]
      %v254 = vld [vmem:[%s212 + $0xc4] sm:$0xff]
      %v255 = vld [vmem:[%s212 + $0xcc] sm:$0xff]
      %v256 = vld [vmem:[%s212 + $0xd4] sm:$0xf]
      %v257 = vld [vmem:[%s212 + $0xd8] sm:$0xff]
      %v258 = vld [vmem:[%s212 + $0xe0] sm:$0xff]
      %v259 = vld [vmem:[%s212 + $0xe8] sm:$0xff]
      %v260 = vld [vmem:[%s212 + $0xf0] sm:$0xff]
      %v261 = vld [vmem:[%s212 + $0xf8] sm:$0xf]
      %v262 = vld [vmem:[%s212 + $0xfc] sm:$0xff]
      %v263 = vld [vmem:[%s212 + $0x104] sm:$0xff]
      %v264 = vld [vmem:[%s212 + $0x10c] sm:$0xff]
      %v265 = vld [vmem:[%s212 + $0x114] sm:$0xff]
      %v266 = vld [vmem:[%s212 + $0x11c] sm:$0xf]
      %v267 = vld [vmem:[%s212 + $0x120] sm:$0xff]
      %v268 = vld [vmem:[%s212 + $0x128] sm:$0xff]
      %v269 = vld [vmem:[%s212 + $0x130] sm:$0xff]
      %v270 = vld [vmem:[%s212 + $0x138] sm:$0xff]
      %v271 = vld [vmem:[%s212 + $0x140] sm:$0xf]
      %v272 = vld [vmem:[%s212 + $0x144] sm:$0xff]
      %v273 = vld [vmem:[%s212 + $0x14c] sm:$0xff]
      %v274 = vld [vmem:[%s212 + $0x154] sm:$0xff]
      %v275 = vld [vmem:[%s212 + $0x15c] sm:$0xff]
      %v276 = vld [vmem:[%s212 + $0x164] sm:$0xf]
      %v277 = vld [vmem:[%s212 + $0x168] sm:$0xff]
      %v278 = vld [vmem:[%s212 + $0x170] sm:$0xff]
      %v279 = vld [vmem:[%s212 + $0x178] sm:$0xff]
      %v280 = vld [vmem:[%s212 + $0x180] sm:$0xff]
      %v281 = vld [vmem:[%s212 + $0x188] sm:$0xf]
      %v282 = vld [vmem:[%s212 + $0x18c] sm:$0xff]
      %v283 = vld [vmem:[%s212 + $0x194] sm:$0xff]
      %v284 = vld [vmem:[%s212 + $0x19c] sm:$0xff]
      %v285 = vld [vmem:[%s212 + $0x1a4] sm:$0xff]
      %v286 = vld [vmem:[%s212 + $0x1ac] sm:$0xf]
      %v287 = vld [vmem:[%s212 + $0x1b0] sm:$0xff]
      %v288 = vld [vmem:[%s212 + $0x1b8] sm:$0xff]
      %v289 = vld [vmem:[%s212 + $0x1c0] sm:$0xff]
      %v290 = vld [vmem:[%s212 + $0x1c8] sm:$0xff]
      %v291 = vld [vmem:[%s212 + $0x1d0] sm:$0xf]
      %v292 = vld [vmem:[%s212 + $0x1d4] sm:$0xff]
      %v293 = vld [vmem:[%s212 + $0x1dc] sm:$0xff]
      %v294 = vld [vmem:[%s212 + $0x1e4] sm:$0xff]
      %v295 = vld [vmem:[%s212 + $0x1ec] sm:$0xff]
      %v296 = vld [vmem:[%s212 + $0x1f4] sm:$0xf]
      %v297 = vld [vmem:[%s212 + $0x1f8] sm:$0xff]
      %v298 = vld [vmem:[%s212 + $0x200] sm:$0xff]
      %v299 = vld [vmem:[%s212 + $0x208] sm:$0xff]
      %v300 = vld [vmem:[%s212 + $0x210] sm:$0xff]
      %v301 = vld [vmem:[%s212 + $0x218] sm:$0xf]
      %v302 = vld [vmem:[%s212 + $0x21c] sm:$0xff]
      %v303 = vld [vmem:[%s212 + $0x224] sm:$0xff]
      %v304 = vld [vmem:[%s212 + $0x22c] sm:$0xff]
      %v305 = vld [vmem:[%s212 + $0x234] sm:$0xff]
      %v306 = vld [vmem:[%s212 + $0x23c] sm:$0xf]
      %v307 = vld [vmem:[%s212 + $0x240] sm:$0xff]
      %v308 = vld [vmem:[%s212 + $0x248] sm:$0xff]
      %v309 = vld [vmem:[%s212 + $0x250] sm:$0xff]
      %v310 = vld [vmem:[%s212 + $0x258] sm:$0xff]
      %v311 = vld [vmem:[%s212 + $0x260] sm:$0xf]
      %v312 = vld [vmem:[%s212 + $0x264] sm:$0xff]
      %v313 = vld [vmem:[%s212 + $0x26c] sm:$0xff]
      %v314 = vld [vmem:[%s212 + $0x274] sm:$0xff]
      %v315 = vld [vmem:[%s212 + $0x27c] sm:$0xff]
      %v316 = vld [vmem:[%s212 + $0x284] sm:$0xf]
      %v317 = vld [vmem:[%s212 + $0x288] sm:$0xff]
      %v318 = vld [vmem:[%s212 + $0x290] sm:$0xff]
      %v319 = vld [vmem:[%s212 + $0x298] sm:$0xff]
      %v320 = vld [vmem:[%s212 + $0x2a0] sm:$0xff]
      %v321 = vld [vmem:[%s212 + $0x2a8] sm:$0xf]
      %v322 = vld [vmem:[%s212 + $0x2ac] sm:$0xff]
      %v323 = vld [vmem:[%s212 + $0x2b4] sm:$0xff]
      %v324 = vld [vmem:[%s212 + $0x2bc] sm:$0xff]
      %v325 = vld [vmem:[%s212 + $0x2c4] sm:$0xff]
      %v326 = vld [vmem:[%s212 + $0x2cc] sm:$0xf]
      %v327 = vld [vmem:[%s212 + $0x2d0] sm:$0xff]
      %v328 = vld [vmem:[%s212 + $0x2d8] sm:$0xff]
      %v329 = vld [vmem:[%s212 + $0x2e0] sm:$0xff]
      %v330 = vld [vmem:[%s212 + $0x2e8] sm:$0xff]
      %v331 = vld [vmem:[%s212 + $0x2f0] sm:$0xf]
      %v332 = vld [vmem:[%s212 + $0x2f4] sm:$0xff]
      %v333 = vld [vmem:[%s212 + $0x2fc] sm:$0xff]
      %v334 = vld [vmem:[%s212 + $0x304] sm:$0xff]
      %v335 = vld [vmem:[%s212 + $0x30c] sm:$0xff]
      %v336 = vld [vmem:[%s212 + $0x314] sm:$0xf]
      %v337 = vld [vmem:[%s212 + $0x318] sm:$0xff]
      %v338 = vld [vmem:[%s212 + $0x320] sm:$0xff]
      %v339 = vld [vmem:[%s212 + $0x328] sm:$0xff]
      %v340 = vld [vmem:[%s212 + $0x330] sm:$0xff]
      %v341 = vld [vmem:[%s212 + $0x338] sm:$0xf]
      %v342 = vld [vmem:[%s212 + $0x33c] sm:$0xff]
      %v343 = vld [vmem:[%s212 + $0x344] sm:$0xff]
      %v344 = vld [vmem:[%s212 + $0x34c] sm:$0xff]
      %v345 = vld [vmem:[%s212 + $0x354] sm:$0xff]
      %v346 = vld [vmem:[%s212 + $0x35c] sm:$0xf]
      %v347 = vld [vmem:[%s212 + $0x360] sm:$0xff]
      %v348 = vld [vmem:[%s212 + $0x368] sm:$0xff]
      %v349 = vld [vmem:[%s212 + $0x370] sm:$0xff]
      %v350 = vld [vmem:[%s212 + $0x378] sm:$0xff]
      %v351 = vld [vmem:[%s212 + $0x380] sm:$0xf]
      %v352 = vld [vmem:[%s212 + $0x384] sm:$0xff]
      %v353 = vld [vmem:[%s212 + $0x38c] sm:$0xff]
      %v354 = vld [vmem:[%s212 + $0x394] sm:$0xff]
      %v355 = vld [vmem:[%s212 + $0x39c] sm:$0xff]
      %v356 = vld [vmem:[%s212 + $0x3a4] sm:$0xf]
      %v357 = vld [vmem:[%s212 + $0x3a8] sm:$0xff]
      %v358 = vld [vmem:[%s212 + $0x3b0] sm:$0xff]
      %v359 = vld [vmem:[%s212 + $0x3b8] sm:$0xff]
      %v360 = vld [vmem:[%s212 + $0x3c0] sm:$0xff]
      %v361 = vld [vmem:[%s212 + $0x3c8] sm:$0xf]
      %v362 = vld [vmem:[%s212 + $0x3cc] sm:$0xff]
      %v363 = vld [vmem:[%s212 + $0x3d4] sm:$0xff]
      %v364 = vld [vmem:[%s212 + $0x3dc] sm:$0xff]
      %v365 = vld [vmem:[%s212 + $0x3e4] sm:$0xff]
      %v366 = vld [vmem:[%s212 + $0x3ec] sm:$0xf]
      %v367 = vld [vmem:[%s212 + $0x3f0] sm:$0xff]
      %v368 = vld [vmem:[%s212 + $0x3f8] sm:$0xff]
      %v369 = vld [vmem:[%s212 + $0x400] sm:$0xff]
      %v370 = vld [vmem:[%s212 + $0x408] sm:$0xff]
      %v371 = vld [vmem:[%s212 + $0x410] sm:$0xf]
      %v372 = vld [vmem:[%s212 + $0x414] sm:$0xff]
      %v373 = vld [vmem:[%s212 + $0x41c] sm:$0xff]
      %v374 = vld [vmem:[%s212 + $0x424] sm:$0xff]
      %v375 = vld [vmem:[%s212 + $0x42c] sm:$0xff]
      %v376 = vld [vmem:[%s212 + $0x434] sm:$0xf]
      %v377 = vld [vmem:[%s212 + $0x438] sm:$0xff]
      %v378 = vld [vmem:[%s212 + $0x440] sm:$0xff]
      %v379 = vld [vmem:[%s212 + $0x448] sm:$0xff]
      %v380 = vld [vmem:[%s212 + $0x450] sm:$0xff]
      %v381 = vld [vmem:[%s212 + $0x458] sm:$0xf]
      %v382 = vld [vmem:[%s212 + $0x45c] sm:$0xff]
      %v383 = vld [vmem:[%s212 + $0x464] sm:$0xff]
      %v384 = vld [vmem:[%s212 + $0x46c] sm:$0xff]
      %v385 = vld [vmem:[%s212 + $0x474] sm:$0xff]
      %v386 = vld [vmem:[%s212 + $0x47c] sm:$0xf]
      %v387 = vld [vmem:[%s1] sm:$0xf]
      %v388 = vld [vmem:[%s1 + $0x4] sm:$0xf]
      %v389 = vld [vmem:[%s1 + $0x8] sm:$0xf]
      %v390 = vld [vmem:[%s1 + $0xc] sm:$0xf]
      %v391 = vld [vmem:[%s1 + $0x10] sm:$0xf]
      %v392 = vld [vmem:[%s1 + $0x14] sm:$0xf]
      %v393 = vld [vmem:[%s1 + $0x18] sm:$0xf]
      %v394 = vld [vmem:[%s1 + $0x1c] sm:$0xf]
      %v395 = vld [vmem:[%s1 + $0x20] sm:$0xf]
      %v396 = vld [vmem:[%s1 + $0x24] sm:$0xf]
      %v397 = vld [vmem:[%s1 + $0x28] sm:$0xf]
      %v398 = vld [vmem:[%s1 + $0x2c] sm:$0xf]
      %v399 = vld [vmem:[%s1 + $0x30] sm:$0xf]
      %v400 = vld [vmem:[%s1 + $0x34] sm:$0xf]
      %v401 = vld [vmem:[%s1 + $0x38] sm:$0xf]
      %v402 = vld [vmem:[%s1 + $0x3c] sm:$0xf]
      %v403 = vld [vmem:[%s1 + $0x40] sm:$0xf]
      %v404 = vld [vmem:[%s1 + $0x44] sm:$0xf]
      %v405 = vld [vmem:[%s1 + $0x48] sm:$0xf]
      %v406 = vld [vmem:[%s1 + $0x4c] sm:$0xf]
      %v407 = vld [vmem:[%s1 + $0x50] sm:$0xf]
      %v408 = vld [vmem:[%s1 + $0x54] sm:$0xf]
      %v409 = vld [vmem:[%s1 + $0x58] sm:$0xf]
      %v410 = vld [vmem:[%s1 + $0x5c] sm:$0xf]
      %v411 = vld [vmem:[%s1 + $0x60] sm:$0xf]
      %v412 = vld [vmem:[%s1 + $0x64] sm:$0xf]
      %v413 = vld [vmem:[%s1 + $0x68] sm:$0xf]
      %v414 = vld [vmem:[%s1 + $0x6c] sm:$0xf]
      %v415 = vld [vmem:[%s1 + $0x70] sm:$0xf]
      %v416 = vld [vmem:[%s1 + $0x74] sm:$0xf]
      %v417 = vld [vmem:[%s1 + $0x78] sm:$0xf]
      %v418 = vld [vmem:[%s1 + $0x7c] sm:$0xf]
      %v419 = vld [vmem:[%s1 + $0x80] sm:$0xf]
      %v420 = vld [vmem:[%s1 + $0x84] sm:$0xf]
      %v421 = vld [vmem:[%s1 + $0x88] sm:$0xf]
      %v422 = vld [vmem:[%s1 + $0x8c] sm:$0xf]
      %v423 = vld [vmem:[%s1 + $0x90] sm:$0xf]
      %v424 = vld [vmem:[%s1 + $0x94] sm:$0xf]
      %v425 = vld [vmem:[%s1 + $0x98] sm:$0xf]
      %v426 = vld [vmem:[%s1 + $0x9c] sm:$0xf]
      %v427 = vld [vmem:[%s1 + $0xa0] sm:$0xf]
      %v428 = vld [vmem:[%s1 + $0xa4] sm:$0xf]
      %v429 = vld [vmem:[%s1 + $0xa8] sm:$0xf]
      %v430 = vld [vmem:[%s1 + $0xac] sm:$0xf]
      %v431 = vld [vmem:[%s1 + $0xb0] sm:$0xf]
      %v432 = vld [vmem:[%s1 + $0xb4] sm:$0xf]
      %v433 = vld [vmem:[%s1 + $0xb8] sm:$0xf]
      %v434 = vld [vmem:[%s1 + $0xbc] sm:$0xf]
      %v435 = vld [vmem:[%s1 + $0xc0] sm:$0xf]
      %v436 = vld [vmem:[%s1 + $0xc4] sm:$0xf]
      %v437 = vld [vmem:[%s1 + $0xc8] sm:$0xf]
      %v438 = vld [vmem:[%s1 + $0xcc] sm:$0xf]
      %v439 = vld [vmem:[%s1 + $0xd0] sm:$0xf]
      %v440 = vld [vmem:[%s1 + $0xd4] sm:$0xf]
      %v441 = vld [vmem:[%s1 + $0xd8] sm:$0xf]
      %v442 = vld [vmem:[%s1 + $0xdc] sm:$0xf]
      %v443 = vld [vmem:[%s1 + $0xe0] sm:$0xf]
      %v444 = vld [vmem:[%s1 + $0xe4] sm:$0xf]
      %v445 = vld [vmem:[%s1 + $0xe8] sm:$0xf]
      %v446 = vld [vmem:[%s1 + $0xec] sm:$0xf]
      %v447 = vld [vmem:[%s1 + $0xf0] sm:$0xf]
      %v448 = vld [vmem:[%s1 + $0xf4] sm:$0xf]
      %v449 = vld [vmem:[%s1 + $0xf8] sm:$0xf]
      %v450 = vld [vmem:[%s1 + $0xfc] sm:$0xf]
      %v451 = vld [vmem:[%s1 + $0x100] sm:$0xf]
      %v452 = vld [vmem:[%s1 + $0x104] sm:$0xf]
      %v453 = vld [vmem:[%s1 + $0x108] sm:$0xf]
      %v454 = vld [vmem:[%s1 + $0x10c] sm:$0xf]
      %v455 = vld [vmem:[%s1 + $0x110] sm:$0xf]
      %v456 = vld [vmem:[%s1 + $0x114] sm:$0xf]
      %v457 = vld [vmem:[%s1 + $0x118] sm:$0xf]
      %v458 = vld [vmem:[%s1 + $0x11c] sm:$0xf]
      %v459 = vld [vmem:[%s1 + $0x120] sm:$0xf]
      %v460 = vld [vmem:[%s1 + $0x124] sm:$0xf]
      %v461 = vld [vmem:[%s1 + $0x128] sm:$0xf]
      %v462 = vld [vmem:[%s1 + $0x12c] sm:$0xf]
      %v463 = vld [vmem:[%s1 + $0x130] sm:$0xf]
      %v464 = vld [vmem:[%s1 + $0x134] sm:$0xf]
      %v465 = vld [vmem:[%s1 + $0x138] sm:$0xf]
      %v466 = vld [vmem:[%s1 + $0x13c] sm:$0xf]
      %v467 = vld [vmem:[%s1 + $0x140] sm:$0xf]
      %v468 = vld [vmem:[%s1 + $0x144] sm:$0xf]
      %v469 = vld [vmem:[%s1 + $0x148] sm:$0xf]
      %v470 = vld [vmem:[%s1 + $0x14c] sm:$0xf]
      %v471 = vld [vmem:[%s1 + $0x150] sm:$0xf]
      %v472 = vld [vmem:[%s1 + $0x154] sm:$0xf]
      %v473 = vld [vmem:[%s1 + $0x158] sm:$0xf]
      %v474 = vld [vmem:[%s1 + $0x15c] sm:$0xf]
      %v475 = vld [vmem:[%s1 + $0x160] sm:$0xf]
      %v476 = vld [vmem:[%s1 + $0x164] sm:$0xf]
      %v477 = vld [vmem:[%s1 + $0x168] sm:$0xf]
      %v478 = vld [vmem:[%s1 + $0x16c] sm:$0xf]
      %v479 = vld [vmem:[%s1 + $0x170] sm:$0xf]
      %v480 = vld [vmem:[%s1 + $0x174] sm:$0xf]
      %v481 = vld [vmem:[%s1 + $0x178] sm:$0xf]
      %v482 = vld [vmem:[%s1 + $0x17c] sm:$0xf]
      %v483 = vld [vmem:[%s1 + $0x180] sm:$0xf]
      %v484 = vld [vmem:[%s1 + $0x184] sm:$0xf]
      %v485 = vld [vmem:[%s1 + $0x188] sm:$0xf]
      %v486 = vld [vmem:[%s1 + $0x18c] sm:$0xf]
      %v487 = vld [vmem:[%s1 + $0x190] sm:$0xf]
      %v488 = vld [vmem:[%s1 + $0x194] sm:$0xf]
      %v489 = vld [vmem:[%s1 + $0x198] sm:$0xf]
      %v490 = vld [vmem:[%s1 + $0x19c] sm:$0xf]
      %v491 = vld [vmem:[%s1 + $0x1a0] sm:$0xf]
      %v492 = vld [vmem:[%s1 + $0x1a4] sm:$0xf]
      %v493 = vld [vmem:[%s1 + $0x1a8] sm:$0xf]
      %v494 = vld [vmem:[%s1 + $0x1ac] sm:$0xf]
      %v495 = vld [vmem:[%s1 + $0x1b0] sm:$0xf]
      %v496 = vld [vmem:[%s1 + $0x1b4] sm:$0xf]
      %v497 = vld [vmem:[%s1 + $0x1b8] sm:$0xf]
      %v498 = vld [vmem:[%s1 + $0x1bc] sm:$0xf]
      %v499 = vld [vmem:[%s1 + $0x1c0] sm:$0xf]
      %v500 = vld [vmem:[%s1 + $0x1c4] sm:$0xf]
      %v501 = vld [vmem:[%s1 + $0x1c8] sm:$0xf]
      %v502 = vld [vmem:[%s1 + $0x1cc] sm:$0xf]
      %v503 = vld [vmem:[%s1 + $0x1d0] sm:$0xf]
      %v504 = vld [vmem:[%s1 + $0x1d4] sm:$0xf]
      %v505 = vld [vmem:[%s1 + $0x1d8] sm:$0xf]
      %v506 = vld [vmem:[%s1 + $0x1dc] sm:$0xf]
      %v507 = vld [vmem:[%s1 + $0x1e0] sm:$0xf]
      %v508 = vld [vmem:[%s1 + $0x1e4] sm:$0xf]
      %v509 = vld [vmem:[%s1 + $0x1e8] sm:$0xf]
      %v510 = vld [vmem:[%s1 + $0x1ec] sm:$0xf]
      %v511 = vld [vmem:[%s1 + $0x1f0] sm:$0xf]
      %v512 = vld [vmem:[%s1 + $0x1f4] sm:$0xf]
      %v513 = vld [vmem:[%s1 + $0x1f8] sm:$0xf]
      %v514 = vld [vmem:[%s1 + $0x1fc] sm:$0xf]
      %v515 = vld [vmem:[%s1 + $0x200] sm:$0xf]
      %v516 = vld [vmem:[%s1 + $0x204] sm:$0xf]
      %v517 = vld [vmem:[%s1 + $0x208] sm:$0xf]
      %v518 = vld [vmem:[%s1 + $0x20c] sm:$0xf]
      %v519 = vld [vmem:[%s1 + $0x210] sm:$0xf]
      %v520 = vld [vmem:[%s1 + $0x214] sm:$0xf]
      %v521 = vld [vmem:[%s1 + $0x218] sm:$0xf]
      %v522 = vld [vmem:[%s1 + $0x21c] sm:$0xf]
      %v523 = vld [vmem:[%s1 + $0x220] sm:$0xf]
      %v524 = vld [vmem:[%s1 + $0x224] sm:$0xf]
      %v525 = vld [vmem:[%s1 + $0x228] sm:$0xf]
      %v526 = vld [vmem:[%s1 + $0x22c] sm:$0xf]
      %v527 = vld [vmem:[%s1 + $0x230] sm:$0xf]
      %v528 = vld [vmem:[%s1 + $0x234] sm:$0xf]
      %v529 = vld [vmem:[%s1 + $0x238] sm:$0xf]
      %v530 = vld [vmem:[%s1 + $0x23c] sm:$0xf]
      %v531 = vld [vmem:[%s2] sm:$0x1]
      %v533 = vlaneseq
      %v534 = vshrl.u32 %v533, 7
      %v535 = vsub.s32 0, %v534
      %v536 = vrot.slane %v531, %v535
      %v698 = vunpack.c.l.b16 %v227
      %v699 = vunpack.c.h.b16 %v227
      %v700 = vunpack.c.l.b16 %v228
      %v701 = vunpack.c.h.b16 %v228
      %v702 = vunpack.c.l.b16 %v229
      %v703 = vunpack.c.h.b16 %v229
      %v704 = vunpack.c.l.b16 %v230
      %v705 = vunpack.c.h.b16 %v230
      %v706 = vunpack.c.l.b16 %v231
      %v707 = vunpack.c.l.b16 %v232
      %v708 = vunpack.c.h.b16 %v232
      %v709 = vunpack.c.l.b16 %v233
      %v710 = vunpack.c.h.b16 %v233
      %v711 = vunpack.c.l.b16 %v234
      %v712 = vunpack.c.h.b16 %v234
      %v713 = vunpack.c.l.b16 %v235
      %v714 = vunpack.c.h.b16 %v235
      %v715 = vunpack.c.l.b16 %v236
      %v716 = vunpack.c.l.b16 %v237
      %v717 = vunpack.c.h.b16 %v237
      %v718 = vunpack.c.l.b16 %v238
      %v719 = vunpack.c.h.b16 %v238
      %v720 = vunpack.c.l.b16 %v239
      %v721 = vunpack.c.h.b16 %v239
      %v722 = vunpack.c.l.b16 %v240
      %v723 = vunpack.c.h.b16 %v240
      %v724 = vunpack.c.l.b16 %v241
      %v725 = vunpack.c.l.b16 %v242
      %v726 = vunpack.c.h.b16 %v242
      %v727 = vunpack.c.l.b16 %v243
      %v728 = vunpack.c.h.b16 %v243
      %v729 = vunpack.c.l.b16 %v244
      %v730 = vunpack.c.h.b16 %v244
      %v731 = vunpack.c.l.b16 %v245
      %v732 = vunpack.c.h.b16 %v245
      %v733 = vunpack.c.l.b16 %v246
      %v734 = vunpack.c.l.b16 %v247
      %v735 = vunpack.c.h.b16 %v247
      %v736 = vunpack.c.l.b16 %v248
      %v737 = vunpack.c.h.b16 %v248
      %v738 = vunpack.c.l.b16 %v249
      %v739 = vunpack.c.h.b16 %v249
      %v740 = vunpack.c.l.b16 %v250
      %v741 = vunpack.c.h.b16 %v250
      %v742 = vunpack.c.l.b16 %v251
      %v743 = vunpack.c.l.b16 %v252
      %v744 = vunpack.c.h.b16 %v252
      %v745 = vunpack.c.l.b16 %v253
      %v746 = vunpack.c.h.b16 %v253
      %v747 = vunpack.c.l.b16 %v254
      %v748 = vunpack.c.h.b16 %v254
      %v749 = vunpack.c.l.b16 %v255
      %v750 = vunpack.c.h.b16 %v255
      %v751 = vunpack.c.l.b16 %v256
      %v752 = vunpack.c.l.b16 %v257
      %v753 = vunpack.c.h.b16 %v257
      %v754 = vunpack.c.l.b16 %v258
      %v755 = vunpack.c.h.b16 %v258
      %v756 = vunpack.c.l.b16 %v259
      %v757 = vunpack.c.h.b16 %v259
      %v758 = vunpack.c.l.b16 %v260
      %v759 = vunpack.c.h.b16 %v260
      %v760 = vunpack.c.l.b16 %v261
      %v761 = vunpack.c.l.b16 %v262
      %v762 = vunpack.c.h.b16 %v262
      %v763 = vunpack.c.l.b16 %v263
      %v764 = vunpack.c.h.b16 %v263
      %v765 = vunpack.c.l.b16 %v264
      %v766 = vunpack.c.h.b16 %v264
      %v767 = vunpack.c.l.b16 %v265
      %v768 = vunpack.c.h.b16 %v265
      %v769 = vunpack.c.l.b16 %v266
      %v770 = vunpack.c.l.b16 %v267
      %v771 = vunpack.c.h.b16 %v267
      %v772 = vunpack.c.l.b16 %v268
      %v773 = vunpack.c.h.b16 %v268
      %v774 = vunpack.c.l.b16 %v269
      %v775 = vunpack.c.h.b16 %v269
      %v776 = vunpack.c.l.b16 %v270
      %v777 = vunpack.c.h.b16 %v270
      %v778 = vunpack.c.l.b16 %v271
      %v779 = vunpack.c.l.b16 %v272
      %v780 = vunpack.c.h.b16 %v272
      %v781 = vunpack.c.l.b16 %v273
      %v782 = vunpack.c.h.b16 %v273
      %v783 = vunpack.c.l.b16 %v274
      %v784 = vunpack.c.h.b16 %v274
      %v785 = vunpack.c.l.b16 %v275
      %v786 = vunpack.c.h.b16 %v275
      %v787 = vunpack.c.l.b16 %v276
      %v788 = vunpack.c.l.b16 %v277
      %v789 = vunpack.c.h.b16 %v277
      %v790 = vunpack.c.l.b16 %v278
      %v791 = vunpack.c.h.b16 %v278
      %v792 = vunpack.c.l.b16 %v279
      %v793 = vunpack.c.h.b16 %v279
      %v794 = vunpack.c.l.b16 %v280
      %v795 = vunpack.c.h.b16 %v280
      %v796 = vunpack.c.l.b16 %v281
      %v797 = vunpack.c.l.b16 %v282
      %v798 = vunpack.c.h.b16 %v282
      %v799 = vunpack.c.l.b16 %v283
      %v800 = vunpack.c.h.b16 %v283
      %v801 = vunpack.c.l.b16 %v284
      %v802 = vunpack.c.h.b16 %v284
      %v803 = vunpack.c.l.b16 %v285
      %v804 = vunpack.c.h.b16 %v285
      %v805 = vunpack.c.l.b16 %v286
      %v806 = vunpack.c.l.b16 %v287
      %v807 = vunpack.c.h.b16 %v287
      %v808 = vunpack.c.l.b16 %v288
      %v809 = vunpack.c.h.b16 %v288
      %v810 = vunpack.c.l.b16 %v289
      %v811 = vunpack.c.h.b16 %v289
      %v812 = vunpack.c.l.b16 %v290
      %v813 = vunpack.c.h.b16 %v290
      %v814 = vunpack.c.l.b16 %v291
      %v815 = vunpack.c.l.b16 %v292
      %v816 = vunpack.c.h.b16 %v292
      %v817 = vunpack.c.l.b16 %v293
      %v818 = vunpack.c.h.b16 %v293
      %v819 = vunpack.c.l.b16 %v294
      %v820 = vunpack.c.h.b16 %v294
      %v821 = vunpack.c.l.b16 %v295
      %v822 = vunpack.c.h.b16 %v295
      %v823 = vunpack.c.l.b16 %v296
      %v824 = vunpack.c.l.b16 %v297
      %v825 = vunpack.c.h.b16 %v297
      %v826 = vunpack.c.l.b16 %v298
      %v827 = vunpack.c.h.b16 %v298
      %v828 = vunpack.c.l.b16 %v299
      %v829 = vunpack.c.h.b16 %v299
      %v830 = vunpack.c.l.b16 %v300
      %v831 = vunpack.c.h.b16 %v300
      %v832 = vunpack.c.l.b16 %v301
      %v833 = vunpack.c.l.b16 %v302
      %v834 = vunpack.c.h.b16 %v302
      %v835 = vunpack.c.l.b16 %v303
      %v836 = vunpack.c.h.b16 %v303
      %v837 = vunpack.c.l.b16 %v304
      %v838 = vunpack.c.h.b16 %v304
      %v839 = vunpack.c.l.b16 %v305
      %v840 = vunpack.c.h.b16 %v305
      %v841 = vunpack.c.l.b16 %v306
      %v842 = vunpack.c.l.b16 %v307
      %v843 = vunpack.c.h.b16 %v307
      %v844 = vunpack.c.l.b16 %v308
      %v845 = vunpack.c.h.b16 %v308
      %v846 = vunpack.c.l.b16 %v309
      %v847 = vunpack.c.h.b16 %v309
      %v848 = vunpack.c.l.b16 %v310
      %v849 = vunpack.c.h.b16 %v310
      %v850 = vunpack.c.l.b16 %v311
      %v851 = vunpack.c.l.b16 %v312
      %v852 = vunpack.c.h.b16 %v312
      %v853 = vunpack.c.l.b16 %v313
      %v854 = vunpack.c.h.b16 %v313
      %v855 = vunpack.c.l.b16 %v314
      %v856 = vunpack.c.h.b16 %v314
      %v857 = vunpack.c.l.b16 %v315
      %v858 = vunpack.c.h.b16 %v315
      %v859 = vunpack.c.l.b16 %v316
      %v860 = vunpack.c.l.b16 %v317
      %v861 = vunpack.c.h.b16 %v317
      %v862 = vunpack.c.l.b16 %v318
      %v863 = vunpack.c.h.b16 %v318
      %v864 = vunpack.c.l.b16 %v319
      %v865 = vunpack.c.h.b16 %v319
      %v866 = vunpack.c.l.b16 %v320
      %v867 = vunpack.c.h.b16 %v320
      %v868 = vunpack.c.l.b16 %v321
      %v869 = vunpack.c.l.b16 %v322
      %v870 = vunpack.c.h.b16 %v322
      %v871 = vunpack.c.l.b16 %v323
      %v872 = vunpack.c.h.b16 %v323
      %v873 = vunpack.c.l.b16 %v324
      %v874 = vunpack.c.h.b16 %v324
      %v875 = vunpack.c.l.b16 %v325
      %v876 = vunpack.c.h.b16 %v325
      %v877 = vunpack.c.l.b16 %v326
      %v878 = vunpack.c.l.b16 %v327
      %v879 = vunpack.c.h.b16 %v327
      %v880 = vunpack.c.l.b16 %v328
      %v881 = vunpack.c.h.b16 %v328
      %v882 = vunpack.c.l.b16 %v329
      %v883 = vunpack.c.h.b16 %v329
      %v884 = vunpack.c.l.b16 %v330
      %v885 = vunpack.c.h.b16 %v330
      %v886 = vunpack.c.l.b16 %v331
      %v887 = vunpack.c.l.b16 %v332
      %v888 = vunpack.c.h.b16 %v332
      %v889 = vunpack.c.l.b16 %v333
      %v890 = vunpack.c.h.b16 %v333
      %v891 = vunpack.c.l.b16 %v334
      %v892 = vunpack.c.h.b16 %v334
      %v893 = vunpack.c.l.b16 %v335
      %v894 = vunpack.c.h.b16 %v335
      %v895 = vunpack.c.l.b16 %v336
      %v896 = vunpack.c.l.b16 %v337
      %v897 = vunpack.c.h.b16 %v337
      %v898 = vunpack.c.l.b16 %v338
      %v899 = vunpack.c.h.b16 %v338
      %v900 = vunpack.c.l.b16 %v339
      %v901 = vunpack.c.h.b16 %v339
      %v902 = vunpack.c.l.b16 %v340
      %v903 = vunpack.c.h.b16 %v340
      %v904 = vunpack.c.l.b16 %v341
      %v905 = vunpack.c.l.b16 %v342
      %v906 = vunpack.c.h.b16 %v342
      %v907 = vunpack.c.l.b16 %v343
      %v908 = vunpack.c.h.b16 %v343
      %v909 = vunpack.c.l.b16 %v344
      %v910 = vunpack.c.h.b16 %v344
      %v911 = vunpack.c.l.b16 %v345
      %v912 = vunpack.c.h.b16 %v345
      %v913 = vunpack.c.l.b16 %v346
      %v914 = vunpack.c.l.b16 %v347
      %v915 = vunpack.c.h.b16 %v347
      %v916 = vunpack.c.l.b16 %v348
      %v917 = vunpack.c.h.b16 %v348
      %v918 = vunpack.c.l.b16 %v349
      %v919 = vunpack.c.h.b16 %v349
      %v920 = vunpack.c.l.b16 %v350
      %v921 = vunpack.c.h.b16 %v350
      %v922 = vunpack.c.l.b16 %v351
      %v923 = vunpack.c.l.b16 %v352
      %v924 = vunpack.c.h.b16 %v352
      %v925 = vunpack.c.l.b16 %v353
      %v926 = vunpack.c.h.b16 %v353
      %v927 = vunpack.c.l.b16 %v354
      %v928 = vunpack.c.h.b16 %v354
      %v929 = vunpack.c.l.b16 %v355
      %v930 = vunpack.c.h.b16 %v355
      %v931 = vunpack.c.l.b16 %v356
      %v932 = vunpack.c.l.b16 %v357
      %v933 = vunpack.c.h.b16 %v357
      %v934 = vunpack.c.l.b16 %v358
      %v935 = vunpack.c.h.b16 %v358
      %v936 = vunpack.c.l.b16 %v359
      %v937 = vunpack.c.h.b16 %v359
      %v938 = vunpack.c.l.b16 %v360
      %v939 = vunpack.c.h.b16 %v360
      %v940 = vunpack.c.l.b16 %v361
      %v941 = vunpack.c.l.b16 %v362
      %v942 = vunpack.c.h.b16 %v362
      %v943 = vunpack.c.l.b16 %v363
      %v944 = vunpack.c.h.b16 %v363
      %v945 = vunpack.c.l.b16 %v364
      %v946 = vunpack.c.h.b16 %v364
      %v947 = vunpack.c.l.b16 %v365
      %v948 = vunpack.c.h.b16 %v365
      %v949 = vunpack.c.l.b16 %v366
      %v950 = vunpack.c.l.b16 %v367
      %v951 = vunpack.c.h.b16 %v367
      %v952 = vunpack.c.l.b16 %v368
      %v953 = vunpack.c.h.b16 %v368
      %v954 = vunpack.c.l.b16 %v369
      %v955 = vunpack.c.h.b16 %v369
      %v956 = vunpack.c.l.b16 %v370
      %v957 = vunpack.c.h.b16 %v370
      %v958 = vunpack.c.l.b16 %v371
      %v959 = vunpack.c.l.b16 %v372
      %v960 = vunpack.c.h.b16 %v372
      %v961 = vunpack.c.l.b16 %v373
      %v962 = vunpack.c.h.b16 %v373
      %v963 = vunpack.c.l.b16 %v374
      %v964 = vunpack.c.h.b16 %v374
      %v965 = vunpack.c.l.b16 %v375
      %v966 = vunpack.c.h.b16 %v375
      %v967 = vunpack.c.l.b16 %v376
      %v968 = vunpack.c.l.b16 %v377
      %v969 = vunpack.c.h.b16 %v377
      %v970 = vunpack.c.l.b16 %v378
      %v971 = vunpack.c.h.b16 %v378
      %v972 = vunpack.c.l.b16 %v379
      %v973 = vunpack.c.h.b16 %v379
      %v974 = vunpack.c.l.b16 %v380
      %v975 = vunpack.c.h.b16 %v380
      %v976 = vunpack.c.l.b16 %v381
      %v977 = vunpack.c.l.b16 %v382
      %v978 = vunpack.c.h.b16 %v382
      %v979 = vunpack.c.l.b16 %v383
      %v980 = vunpack.c.h.b16 %v383
      %v981 = vunpack.c.l.b16 %v384
      %v982 = vunpack.c.h.b16 %v384
      %v983 = vunpack.c.l.b16 %v385
      %v984 = vunpack.c.h.b16 %v385
      %v985 = vunpack.c.l.b16 %v386
      %v986 = vpack.c.b16 %v707, %v698
      %v987 = vpack.c.b16 %v708, %v699
      %v988 = vpack.c.b16 %v709, %v700
      %v989 = vpack.c.b16 %v710, %v701
      %v990 = vpack.c.b16 %v711, %v702
      %v991 = vpack.c.b16 %v712, %v703
      %v992 = vpack.c.b16 %v713, %v704
      %v993 = vpack.c.b16 %v714, %v705
      %v994 = vpack.c.b16 %v715, %v706
      %v995 = vpack.c.b16 %v725, %v716
      %v996 = vpack.c.b16 %v726, %v717
      %v997 = vpack.c.b16 %v727, %v718
      %v998 = vpack.c.b16 %v728, %v719
      %v999 = vpack.c.b16 %v729, %v720
      %v1000 = vpack.c.b16 %v730, %v721
      %v1001 = vpack.c.b16 %v731, %v722
      %v1002 = vpack.c.b16 %v732, %v723
      %v1003 = vpack.c.b16 %v733, %v724
      %v1004 = vpack.c.b16 %v743, %v734
      %v1005 = vpack.c.b16 %v744, %v735
      %v1006 = vpack.c.b16 %v745, %v736
      %v1007 = vpack.c.b16 %v746, %v737
      %v1008 = vpack.c.b16 %v747, %v738
      %v1009 = vpack.c.b16 %v748, %v739
      %v1010 = vpack.c.b16 %v749, %v740
      %v1011 = vpack.c.b16 %v750, %v741
      %v1012 = vpack.c.b16 %v751, %v742
      %v1013 = vpack.c.b16 %v761, %v752
      %v1014 = vpack.c.b16 %v762, %v753
      %v1015 = vpack.c.b16 %v763, %v754
      %v1016 = vpack.c.b16 %v764, %v755
      %v1017 = vpack.c.b16 %v765, %v756
      %v1018 = vpack.c.b16 %v766, %v757
      %v1019 = vpack.c.b16 %v767, %v758
      %v1020 = vpack.c.b16 %v768, %v759
      %v1021 = vpack.c.b16 %v769, %v760
      %v1022 = vpack.c.b16 %v779, %v770
      %v1023 = vpack.c.b16 %v780, %v771
      %v1024 = vpack.c.b16 %v781, %v772
      %v1025 = vpack.c.b16 %v782, %v773
      %v1026 = vpack.c.b16 %v783, %v774
      %v1027 = vpack.c.b16 %v784, %v775
      %v1028 = vpack.c.b16 %v785, %v776
      %v1029 = vpack.c.b16 %v786, %v777
      %v1030 = vpack.c.b16 %v787, %v778
      %v1031 = vpack.c.b16 %v797, %v788
      %v1032 = vpack.c.b16 %v798, %v789
      %v1033 = vpack.c.b16 %v799, %v790
      %v1034 = vpack.c.b16 %v800, %v791
      %v1035 = vpack.c.b16 %v801, %v792
      %v1036 = vpack.c.b16 %v802, %v793
      %v1037 = vpack.c.b16 %v803, %v794
      %v1038 = vpack.c.b16 %v804, %v795
      %v1039 = vpack.c.b16 %v805, %v796
      %v1040 = vpack.c.b16 %v815, %v806
      %v1041 = vpack.c.b16 %v816, %v807
      %v1042 = vpack.c.b16 %v817, %v808
      %v1043 = vpack.c.b16 %v818, %v809
      %v1044 = vpack.c.b16 %v819, %v810
      %v1045 = vpack.c.b16 %v820, %v811
      %v1046 = vpack.c.b16 %v821, %v812
      %v1047 = vpack.c.b16 %v822, %v813
      %v1048 = vpack.c.b16 %v823, %v814
      %v1049 = vpack.c.b16 %v833, %v824
      %v1050 = vpack.c.b16 %v834, %v825
      %v1051 = vpack.c.b16 %v835, %v826
      %v1052 = vpack.c.b16 %v836, %v827
      %v1053 = vpack.c.b16 %v837, %v828
      %v1054 = vpack.c.b16 %v838, %v829
      %v1055 = vpack.c.b16 %v839, %v830
      %v1056 = vpack.c.b16 %v840, %v831
      %v1057 = vpack.c.b16 %v841, %v832
      %v1058 = vpack.c.b16 %v851, %v842
      %v1059 = vpack.c.b16 %v852, %v843
      %v1060 = vpack.c.b16 %v853, %v844
      %v1061 = vpack.c.b16 %v854, %v845
      %v1062 = vpack.c.b16 %v855, %v846
      %v1063 = vpack.c.b16 %v856, %v847
      %v1064 = vpack.c.b16 %v857, %v848
      %v1065 = vpack.c.b16 %v858, %v849
      %v1066 = vpack.c.b16 %v859, %v850
      %v1067 = vpack.c.b16 %v869, %v860
      %v1068 = vpack.c.b16 %v870, %v861
      %v1069 = vpack.c.b16 %v871, %v862
      %v1070 = vpack.c.b16 %v872, %v863
      %v1071 = vpack.c.b16 %v873, %v864
      %v1072 = vpack.c.b16 %v874, %v865
      %v1073 = vpack.c.b16 %v875, %v866
      %v1074 = vpack.c.b16 %v876, %v867
      %v1075 = vpack.c.b16 %v877, %v868
      %v1076 = vpack.c.b16 %v887, %v878
      %v1077 = vpack.c.b16 %v888, %v879
      %v1078 = vpack.c.b16 %v889, %v880
      %v1079 = vpack.c.b16 %v890, %v881
      %v1080 = vpack.c.b16 %v891, %v882
      %v1081 = vpack.c.b16 %v892, %v883
      %v1082 = vpack.c.b16 %v893, %v884
      %v1083 = vpack.c.b16 %v894, %v885
      %v1084 = vpack.c.b16 %v895, %v886
      %v1085 = vpack.c.b16 %v905, %v896
      %v1086 = vpack.c.b16 %v906, %v897
      %v1087 = vpack.c.b16 %v907, %v898
      %v1088 = vpack.c.b16 %v908, %v899
      %v1089 = vpack.c.b16 %v909, %v900
      %v1090 = vpack.c.b16 %v910, %v901
      %v1091 = vpack.c.b16 %v911, %v902
      %v1092 = vpack.c.b16 %v912, %v903
      %v1093 = vpack.c.b16 %v913, %v904
      %v1094 = vpack.c.b16 %v923, %v914
      %v1095 = vpack.c.b16 %v924, %v915
      %v1096 = vpack.c.b16 %v925, %v916
      %v1097 = vpack.c.b16 %v926, %v917
      %v1098 = vpack.c.b16 %v927, %v918
      %v1099 = vpack.c.b16 %v928, %v919
      %v1100 = vpack.c.b16 %v929, %v920
      %v1101 = vpack.c.b16 %v930, %v921
      %v1102 = vpack.c.b16 %v931, %v922
      %v1103 = vpack.c.b16 %v941, %v932
      %v1104 = vpack.c.b16 %v942, %v933
      %v1105 = vpack.c.b16 %v943, %v934
      %v1106 = vpack.c.b16 %v944, %v935
      %v1107 = vpack.c.b16 %v945, %v936
      %v1108 = vpack.c.b16 %v946, %v937
      %v1109 = vpack.c.b16 %v947, %v938
      %v1110 = vpack.c.b16 %v948, %v939
      %v1111 = vpack.c.b16 %v949, %v940
      %v1112 = vpack.c.b16 %v959, %v950
      %v1113 = vpack.c.b16 %v960, %v951
      %v1114 = vpack.c.b16 %v961, %v952
      %v1115 = vpack.c.b16 %v962, %v953
      %v1116 = vpack.c.b16 %v963, %v954
      %v1117 = vpack.c.b16 %v964, %v955
      %v1118 = vpack.c.b16 %v965, %v956
      %v1119 = vpack.c.b16 %v966, %v957
      %v1120 = vpack.c.b16 %v967, %v958
      %v1121 = vpack.c.b16 %v977, %v968
      %v1122 = vpack.c.b16 %v978, %v969
      %v1123 = vpack.c.b16 %v979, %v970
      %v1124 = vpack.c.b16 %v980, %v971
      %v1125 = vpack.c.b16 %v981, %v972
      %v1126 = vpack.c.b16 %v982, %v973
      %v1127 = vpack.c.b16 %v983, %v974
      %v1128 = vpack.c.b16 %v984, %v975
      %v1129 = vpack.c.b16 %v985, %v976
      %v1418 = vunpack.c.l.b16 %v387
      %v1419 = vunpack.c.l.b16 %v388
      %v1420 = vunpack.c.l.b16 %v389
      %v1421 = vunpack.c.l.b16 %v390
      %v1422 = vunpack.c.l.b16 %v391
      %v1423 = vunpack.c.l.b16 %v392
      %v1424 = vunpack.c.l.b16 %v393
      %v1425 = vunpack.c.l.b16 %v394
      %v1426 = vunpack.c.l.b16 %v395
      %v1427 = vunpack.c.l.b16 %v396
      %v1428 = vunpack.c.l.b16 %v397
      %v1429 = vunpack.c.l.b16 %v398
      %v1430 = vunpack.c.l.b16 %v399
      %v1431 = vunpack.c.l.b16 %v400
      %v1432 = vunpack.c.l.b16 %v401
      %v1433 = vunpack.c.l.b16 %v402
      %v1434 = vunpack.c.l.b16 %v403
      %v1435 = vunpack.c.l.b16 %v404
      %v1436 = vunpack.c.l.b16 %v405
      %v1437 = vunpack.c.l.b16 %v406
      %v1438 = vunpack.c.l.b16 %v407
      %v1439 = vunpack.c.l.b16 %v408
      %v1440 = vunpack.c.l.b16 %v409
      %v1441 = vunpack.c.l.b16 %v410
      %v1442 = vunpack.c.l.b16 %v411
      %v1443 = vunpack.c.l.b16 %v412
      %v1444 = vunpack.c.l.b16 %v413
      %v1445 = vunpack.c.l.b16 %v414
      %v1446 = vunpack.c.l.b16 %v415
      %v1447 = vunpack.c.l.b16 %v416
      %v1448 = vunpack.c.l.b16 %v417
      %v1449 = vunpack.c.l.b16 %v418
      %v1450 = vunpack.c.l.b16 %v419
      %v1451 = vunpack.c.l.b16 %v420
      %v1452 = vunpack.c.l.b16 %v421
      %v1453 = vunpack.c.l.b16 %v422
      %v1454 = vunpack.c.l.b16 %v423
      %v1455 = vunpack.c.l.b16 %v424
      %v1456 = vunpack.c.l.b16 %v425
      %v1457 = vunpack.c.l.b16 %v426
      %v1458 = vunpack.c.l.b16 %v427
      %v1459 = vunpack.c.l.b16 %v428
      %v1460 = vunpack.c.l.b16 %v429
      %v1461 = vunpack.c.l.b16 %v430
      %v1462 = vunpack.c.l.b16 %v431
      %v1463 = vunpack.c.l.b16 %v432
      %v1464 = vunpack.c.l.b16 %v433
      %v1465 = vunpack.c.l.b16 %v434
      %v1466 = vunpack.c.l.b16 %v435
      %v1467 = vunpack.c.l.b16 %v436
      %v1468 = vunpack.c.l.b16 %v437
      %v1469 = vunpack.c.l.b16 %v438
      %v1470 = vunpack.c.l.b16 %v439
      %v1471 = vunpack.c.l.b16 %v440
      %v1472 = vunpack.c.l.b16 %v441
      %v1473 = vunpack.c.l.b16 %v442
      %v1474 = vunpack.c.l.b16 %v443
      %v1475 = vunpack.c.l.b16 %v444
      %v1476 = vunpack.c.l.b16 %v445
      %v1477 = vunpack.c.l.b16 %v446
      %v1478 = vunpack.c.l.b16 %v447
      %v1479 = vunpack.c.l.b16 %v448
      %v1480 = vunpack.c.l.b16 %v449
      %v1481 = vunpack.c.l.b16 %v450
      %v1482 = vunpack.c.l.b16 %v451
      %v1483 = vunpack.c.l.b16 %v452
      %v1484 = vunpack.c.l.b16 %v453
      %v1485 = vunpack.c.l.b16 %v454
      %v1486 = vunpack.c.l.b16 %v455
      %v1487 = vunpack.c.l.b16 %v456
      %v1488 = vunpack.c.l.b16 %v457
      %v1489 = vunpack.c.l.b16 %v458
      %v1490 = vunpack.c.l.b16 %v459
      %v1491 = vunpack.c.l.b16 %v460
      %v1492 = vunpack.c.l.b16 %v461
      %v1493 = vunpack.c.l.b16 %v462
      %v1494 = vunpack.c.l.b16 %v463
      %v1495 = vunpack.c.l.b16 %v464
      %v1496 = vunpack.c.l.b16 %v465
      %v1497 = vunpack.c.l.b16 %v466
      %v1498 = vunpack.c.l.b16 %v467
      %v1499 = vunpack.c.l.b16 %v468
      %v1500 = vunpack.c.l.b16 %v469
      %v1501 = vunpack.c.l.b16 %v470
      %v1502 = vunpack.c.l.b16 %v471
      %v1503 = vunpack.c.l.b16 %v472
      %v1504 = vunpack.c.l.b16 %v473
      %v1505 = vunpack.c.l.b16 %v474
      %v1506 = vunpack.c.l.b16 %v475
      %v1507 = vunpack.c.l.b16 %v476
      %v1508 = vunpack.c.l.b16 %v477
      %v1509 = vunpack.c.l.b16 %v478
      %v1510 = vunpack.c.l.b16 %v479
      %v1511 = vunpack.c.l.b16 %v480
      %v1512 = vunpack.c.l.b16 %v481
      %v1513 = vunpack.c.l.b16 %v482
      %v1514 = vunpack.c.l.b16 %v483
      %v1515 = vunpack.c.l.b16 %v484
      %v1516 = vunpack.c.l.b16 %v485
      %v1517 = vunpack.c.l.b16 %v486
      %v1518 = vunpack.c.l.b16 %v487
      %v1519 = vunpack.c.l.b16 %v488
      %v1520 = vunpack.c.l.b16 %v489
      %v1521 = vunpack.c.l.b16 %v490
      %v1522 = vunpack.c.l.b16 %v491
      %v1523 = vunpack.c.l.b16 %v492
      %v1524 = vunpack.c.l.b16 %v493
      %v1525 = vunpack.c.l.b16 %v494
      %v1526 = vunpack.c.l.b16 %v495
      %v1527 = vunpack.c.l.b16 %v496
      %v1528 = vunpack.c.l.b16 %v497
      %v1529 = vunpack.c.l.b16 %v498
      %v1530 = vunpack.c.l.b16 %v499
      %v1531 = vunpack.c.l.b16 %v500
      %v1532 = vunpack.c.l.b16 %v501
      %v1533 = vunpack.c.l.b16 %v502
      %v1534 = vunpack.c.l.b16 %v503
      %v1535 = vunpack.c.l.b16 %v504
      %v1536 = vunpack.c.l.b16 %v505
      %v1537 = vunpack.c.l.b16 %v506
      %v1538 = vunpack.c.l.b16 %v507
      %v1539 = vunpack.c.l.b16 %v508
      %v1540 = vunpack.c.l.b16 %v509
      %v1541 = vunpack.c.l.b16 %v510
      %v1542 = vunpack.c.l.b16 %v511
      %v1543 = vunpack.c.l.b16 %v512
      %v1544 = vunpack.c.l.b16 %v513
      %v1545 = vunpack.c.l.b16 %v514
      %v1546 = vunpack.c.l.b16 %v515
      %v1547 = vunpack.c.l.b16 %v516
      %v1548 = vunpack.c.l.b16 %v517
      %v1549 = vunpack.c.l.b16 %v518
      %v1550 = vunpack.c.l.b16 %v519
      %v1551 = vunpack.c.l.b16 %v520
      %v1552 = vunpack.c.l.b16 %v521
      %v1553 = vunpack.c.l.b16 %v522
      %v1554 = vunpack.c.l.b16 %v523
      %v1555 = vunpack.c.l.b16 %v524
      %v1556 = vunpack.c.l.b16 %v525
      %v1557 = vunpack.c.l.b16 %v526
      %v1558 = vunpack.c.l.b16 %v527
      %v1559 = vunpack.c.l.b16 %v528
      %v1560 = vunpack.c.l.b16 %v529
      %v1561 = vunpack.c.l.b16 %v530
      %v1562 = vpack.c.b16 %v1419, %v1418
      %v1563 = vpack.c.b16 %v1421, %v1420
      %v1564 = vpack.c.b16 %v1423, %v1422
      %v1565 = vpack.c.b16 %v1425, %v1424
      %v1566 = vpack.c.b16 %v1427, %v1426
      %v1567 = vpack.c.b16 %v1429, %v1428
      %v1568 = vpack.c.b16 %v1431, %v1430
      %v1569 = vpack.c.b16 %v1433, %v1432
      %v1570 = vpack.c.b16 %v1435, %v1434
      %v1571 = vpack.c.b16 %v1437, %v1436
      %v1572 = vpack.c.b16 %v1439, %v1438
      %v1573 = vpack.c.b16 %v1441, %v1440
      %v1574 = vpack.c.b16 %v1443, %v1442
      %v1575 = vpack.c.b16 %v1445, %v1444
      %v1576 = vpack.c.b16 %v1447, %v1446
      %v1577 = vpack.c.b16 %v1449, %v1448
      %v1578 = vpack.c.b16 %v1451, %v1450
      %v1579 = vpack.c.b16 %v1453, %v1452
      %v1580 = vpack.c.b16 %v1455, %v1454
      %v1581 = vpack.c.b16 %v1457, %v1456
      %v1582 = vpack.c.b16 %v1459, %v1458
      %v1583 = vpack.c.b16 %v1461, %v1460
      %v1584 = vpack.c.b16 %v1463, %v1462
      %v1585 = vpack.c.b16 %v1465, %v1464
      %v1586 = vpack.c.b16 %v1467, %v1466
      %v1587 = vpack.c.b16 %v1469, %v1468
      %v1588 = vpack.c.b16 %v1471, %v1470
      %v1589 = vpack.c.b16 %v1473, %v1472
      %v1590 = vpack.c.b16 %v1475, %v1474
      %v1591 = vpack.c.b16 %v1477, %v1476
      %v1592 = vpack.c.b16 %v1479, %v1478
      %v1593 = vpack.c.b16 %v1481, %v1480
      %v1594 = vpack.c.b16 %v1483, %v1482
      %v1595 = vpack.c.b16 %v1485, %v1484
      %v1596 = vpack.c.b16 %v1487, %v1486
      %v1597 = vpack.c.b16 %v1489, %v1488
      %v1598 = vpack.c.b16 %v1491, %v1490
      %v1599 = vpack.c.b16 %v1493, %v1492
      %v1600 = vpack.c.b16 %v1495, %v1494
      %v1601 = vpack.c.b16 %v1497, %v1496
      %v1602 = vpack.c.b16 %v1499, %v1498
      %v1603 = vpack.c.b16 %v1501, %v1500
      %v1604 = vpack.c.b16 %v1503, %v1502
      %v1605 = vpack.c.b16 %v1505, %v1504
      %v1606 = vpack.c.b16 %v1507, %v1506
      %v1607 = vpack.c.b16 %v1509, %v1508
      %v1608 = vpack.c.b16 %v1511, %v1510
      %v1609 = vpack.c.b16 %v1513, %v1512
      %v1610 = vpack.c.b16 %v1515, %v1514
      %v1611 = vpack.c.b16 %v1517, %v1516
      %v1612 = vpack.c.b16 %v1519, %v1518
      %v1613 = vpack.c.b16 %v1521, %v1520
      %v1614 = vpack.c.b16 %v1523, %v1522
      %v1615 = vpack.c.b16 %v1525, %v1524
      %v1616 = vpack.c.b16 %v1527, %v1526
      %v1617 = vpack.c.b16 %v1529, %v1528
      %v1618 = vpack.c.b16 %v1531, %v1530
      %v1619 = vpack.c.b16 %v1533, %v1532
      %v1620 = vpack.c.b16 %v1535, %v1534
      %v1621 = vpack.c.b16 %v1537, %v1536
      %v1622 = vpack.c.b16 %v1539, %v1538
      %v1623 = vpack.c.b16 %v1541, %v1540
      %v1624 = vpack.c.b16 %v1543, %v1542
      %v1625 = vpack.c.b16 %v1545, %v1544
      %v1626 = vpack.c.b16 %v1547, %v1546
      %v1627 = vpack.c.b16 %v1549, %v1548
      %v1628 = vpack.c.b16 %v1551, %v1550
      %v1629 = vpack.c.b16 %v1553, %v1552
      %v1630 = vpack.c.b16 %v1555, %v1554
      %v1631 = vpack.c.b16 %v1557, %v1556
      %v1632 = vpack.c.b16 %v1559, %v1558
      %v1633 = vpack.c.b16 %v1561, %v1560
      %1706 = vmatprep.subr.bf16.mxu0 0
      %1707 = vmatpush1.bf16.msra.mxu0 %v1562
      %1708 = vmatprep.subr.bf16.mxu0 0
      %1709 = vmatpush1.bf16.msra.mxu0 %v1563
      %1710 = vmatprep.subr.bf16.mxu0 0
      %1711 = vmatpush1.bf16.msra.mxu0 %v1564
      %1712 = vmatprep.subr.bf16.mxu0 0
      %1713 = vmatpush1.bf16.msra.mxu0 %v1565
      %1714 = vmatprep.subr.bf16.mxu0 0
      %1715 = vmatpush1.bf16.msra.mxu0 %v1566
      %1716 = vmatprep.subr.bf16.mxu0 0
      %1717 = vmatpush1.bf16.msra.mxu0 %v1567
      %1718 = vmatprep.subr.bf16.mxu0 0
      %1719 = vmatpush1.bf16.msra.mxu0 %v1568
      %1720 = vmatprep.subr.bf16.mxu0 0
      %1721 = vmatpush1.bf16.msra.mxu0 %v1569
      %1722 = vmatprep.subr.bf16.mxu0 0
      %1723 = vmatpush1.bf16.msra.mxu0 %v1570
      %1724 = vmatprep.subr.bf16.mxu0 0
      %1725 = vmatpush1.bf16.msra.mxu0 %v1571
      %1726 = vmatprep.subr.bf16.mxu0 0
      %1727 = vmatpush1.bf16.msra.mxu0 %v1572
      %1728 = vmatprep.subr.bf16.mxu0 0
      %1729 = vmatpush1.bf16.msra.mxu0 %v1573
      %1730 = vmatprep.subr.bf16.mxu0 0
      %1731 = vmatpush1.bf16.msra.mxu0 %v1574
      %1732 = vmatprep.subr.bf16.mxu0 0
      %1733 = vmatpush1.bf16.msra.mxu0 %v1575
      %1734 = vmatprep.subr.bf16.mxu0 0
      %1735 = vmatpush1.bf16.msra.mxu0 %v1576
      %1736 = vmatprep.subr.bf16.mxu0 0
      %1737 = vmatpush1.bf16.msra.mxu0 %v1577
      %1738 = vmatprep.mubr.bf16.mxu0 %v987
      %1739 = vmatmul.mubr.bf16.gmra.mrb[0].mxu0 %v986
      %v1740 = vpop.f32.mrb[0].mxu0
      %v1741 = vadd.f32 %v536, %v1740
      %v1742 = vpop.f32.mrb[0].mxu0
      %v1743 = vpop.f32.mrb[0].mxu0
      %v1744 = vadd.f32 %v536, %v1743
      %v1745 = vpop.f32.mrb[0].mxu0
      %1746 = vmatprep.mubr.bf16.mxu0 %v996
      %1747 = vmatmul.mubr.bf16.gmra.mrb[0].mxu0 %v995
      %v1748 = vpop.f32.mrb[0].mxu0
      %v1749 = vadd.f32 %v536, %v1748
      %v1750 = vpop.f32.mrb[0].mxu0
      %v1751 = vpop.f32.mrb[0].mxu0
      %v1752 = vadd.f32 %v536, %v1751
      %v1753 = vpop.f32.mrb[0].mxu0
      %1754 = vmatprep.mubr.bf16.mxu0 %v1005
      %1755 = vmatmul.mubr.bf16.gmra.mrb[0].mxu0 %v1004
      %v1756 = vpop.f32.mrb[0].mxu0
      %v1757 = vadd.f32 %v536, %v1756
      %v1758 = vpop.f32.mrb[0].mxu0
      %v1759 = vpop.f32.mrb[0].mxu0
      %v1760 = vadd.f32 %v536, %v1759
      %v1761 = vpop.f32.mrb[0].mxu0
      %1762 = vmatprep.mubr.bf16.mxu0 %v1014
      %1763 = vmatmul.mubr.bf16.gmra.mrb[0].mxu0 %v1013
      %v1764 = vpop.f32.mrb[0].mxu0
      %v1765 = vadd.f32 %v536, %v1764
      %v1766 = vpop.f32.mrb[0].mxu0
      %v1767 = vpop.f32.mrb[0].mxu0
      %v1768 = vadd.f32 %v536, %v1767
      %v1769 = vpop.f32.mrb[0].mxu0
      %1770 = vmatprep.mubr.bf16.mxu0 %v1023
      %1771 = vmatmul.mubr.bf16.gmra.mrb[0].mxu0 %v1022
      %v1772 = vpop.f32.mrb[0].mxu0
      %v1773 = vadd.f32 %v536, %v1772
      %v1774 = vpop.f32.mrb[0].mxu0
      %v1775 = vpop.f32.mrb[0].mxu0
      %v1776 = vadd.f32 %v536, %v1775
      %v1777 = vpop.f32.mrb[0].mxu0
      %1778 = vmatprep.mubr.bf16.mxu0 %v1032
      %1779 = vmatmul.mubr.bf16.gmra.mrb[0].mxu0 %v1031
      %v1780 = vpop.f32.mrb[0].mxu0
      %v1781 = vadd.f32 %v536, %v1780
      %v1782 = vpop.f32.mrb[0].mxu0
      %v1783 = vpop.f32.mrb[0].mxu0
      %v1784 = vadd.f32 %v536, %v1783
      %v1785 = vpop.f32.mrb[0].mxu0
      %1786 = vmatprep.mubr.bf16.mxu0 %v1041
      %1787 = vmatmul.mubr.bf16.gmra.mrb[0].mxu0 %v1040
      %v1788 = vpop.f32.mrb[0].mxu0
      %v1789 = vadd.f32 %v536, %v1788
      %v1790 = vpop.f32.mrb[0].mxu0
      %v1791 = vpop.f32.mrb[0].mxu0
      %v1792 = vadd.f32 %v536, %v1791
      %v1793 = vpop.f32.mrb[0].mxu0
      %1794 = vmatprep.mubr.bf16.mxu0 %v1050
      %1795 = vmatmul.mubr.bf16.gmra.mrb[0].mxu0 %v1049
      %v1796 = vpop.f32.mrb[0].mxu0
      %v1797 = vadd.f32 %v536, %v1796
      %v1798 = vpop.f32.mrb[0].mxu0
      %v1799 = vpop.f32.mrb[0].mxu0
      %v1800 = vadd.f32 %v536, %v1799
      %v1801 = vpop.f32.mrb[0].mxu0
      %1802 = vmatprep.mubr.bf16.mxu0 %v1059
      %1803 = vmatmul.mubr.bf16.gmra.mrb[0].mxu0 %v1058
      %v1804 = vpop.f32.mrb[0].mxu0
      %v1805 = vadd.f32 %v536, %v1804
      %v1806 = vpop.f32.mrb[0].mxu0
      %v1807 = vpop.f32.mrb[0].mxu0
      %v1808 = vadd.f32 %v536, %v1807
      %v1809 = vpop.f32.mrb[0].mxu0
      %1810 = vmatprep.mubr.bf16.mxu0 %v1068
      %1811 = vmatmul.mubr.bf16.gmra.mrb[0].mxu0 %v1067
      %v1812 = vpop.f32.mrb[0].mxu0
      %v1813 = vadd.f32 %v536, %v1812
      %v1814 = vpop.f32.mrb[0].mxu0
      %v1815 = vpop.f32.mrb[0].mxu0
      %v1816 = vadd.f32 %v536, %v1815
      %v1817 = vpop.f32.mrb[0].mxu0
      %1818 = vmatprep.mubr.bf16.mxu0 %v1077
      %1819 = vmatmul.mubr.bf16.gmra.mrb[0].mxu0 %v1076
      %v1820 = vpop.f32.mrb[0].mxu0
      %v1821 = vadd.f32 %v536, %v1820
      %v1822 = vpop.f32.mrb[0].mxu0
      %v1823 = vpop.f32.mrb[0].mxu0
      %v1824 = vadd.f32 %v536, %v1823
      %v1825 = vpop.f32.mrb[0].mxu0
      %1826 = vmatprep.mubr.bf16.mxu0 %v1086
      %1827 = vmatmul.mubr.bf16.gmra.mrb[0].mxu0 %v1085
      %v1828 = vpop.f32.mrb[0].mxu0
      %v1829 = vadd.f32 %v536, %v1828
      %v1830 = vpop.f32.mrb[0].mxu0
      %v1831 = vpop.f32.mrb[0].mxu0
      %v1832 = vadd.f32 %v536, %v1831
      %v1833 = vpop.f32.mrb[0].mxu0
      %1834 = vmatprep.mubr.bf16.mxu0 %v1095
      %1835 = vmatmul.mubr.bf16.gmra.mrb[0].mxu0 %v1094
      %v1836 = vpop.f32.mrb[0].mxu0
      %v1837 = vadd.f32 %v536, %v1836
      %v1838 = vpop.f32.mrb[0].mxu0
      %v1839 = vpop.f32.mrb[0].mxu0
      %v1840 = vadd.f32 %v536, %v1839
      %v1841 = vpop.f32.mrb[0].mxu0
      %1842 = vmatprep.mubr.bf16.mxu0 %v1104
      %1843 = vmatmul.mubr.bf16.gmra.mrb[0].mxu0 %v1103
      %v1844 = vpop.f32.mrb[0].mxu0
      %v1845 = vadd.f32 %v536, %v1844
      %v1846 = vpop.f32.mrb[0].mxu0
      %v1847 = vpop.f32.mrb[0].mxu0
      %v1848 = vadd.f32 %v536, %v1847
      %v1849 = vpop.f32.mrb[0].mxu0
      %1850 = vmatprep.mubr.bf16.mxu0 %v1113
      %1851 = vmatmul.mubr.bf16.gmra.mrb[0].mxu0 %v1112
      %v1852 = vpop.f32.mrb[0].mxu0
      %v1853 = vadd.f32 %v536, %v1852
      %v1854 = vpop.f32.mrb[0].mxu0
      %v1855 = vpop.f32.mrb[0].mxu0
      %v1856 = vadd.f32 %v536, %v1855
      %v1857 = vpop.f32.mrb[0].mxu0
      %1858 = vmatprep.mubr.bf16.mxu0 %v1122
      %1859 = vmatmul.mubr.bf16.gmra.mrb[0].mxu0 %v1121
      %v1860 = vpop.f32.mrb[0].mxu0
      %v1861 = vadd.f32 %v536, %v1860
      %v1862 = vpop.f32.mrb[0].mxu0
      %v1863 = vpop.f32.mrb[0].mxu0
      %v1864 = vadd.f32 %v536, %v1863
      %v1865 = vpop.f32.mrb[0].mxu0
      %1866 = vdwg.mxu0
      %1867 = vmatprep.subr.bf16.mxu0 0
      %1868 = vmatpush1.bf16.msra.mxu0 %v1578
      %1869 = vmatprep.subr.bf16.mxu0 0
      %1870 = vmatpush1.bf16.msra.mxu0 %v1579
      %1871 = vmatprep.subr.bf16.mxu0 0
      %1872 = vmatpush1.bf16.msra.mxu0 %v1580
      %1873 = vmatprep.subr.bf16.mxu0 0
      %1874 = vmatpush1.bf16.msra.mxu0 %v1581
      %1875 = vmatprep.subr.bf16.mxu0 0
      %1876 = vmatpush1.bf16.msra.mxu0 %v1582
      %1877 = vmatprep.subr.bf16.mxu0 0
      %1878 = vmatpush1.bf16.msra.mxu0 %v1583
      %1879 = vmatprep.subr.bf16.mxu0 0
      %1880 = vmatpush1.bf16.msra.mxu0 %v1584
      %1881 = vmatprep.subr.bf16.mxu0 0
      %1882 = vmatpush1.bf16.msra.mxu0 %v1585
      %1883 = vmatprep.subr.bf16.mxu0 0
      %1884 = vmatpush1.bf16.msra.mxu0 %v1586
      %1885 = vmatprep.subr.bf16.mxu0 0
      %1886 = vmatpush1.bf16.msra.mxu0 %v1587
      %1887 = vmatprep.subr.bf16.mxu0 0
      %1888 = vmatpush1.bf16.msra.mxu0 %v1588
      %1889 = vmatprep.subr.bf16.mxu0 0
      %1890 = vmatpush1.bf16.msra.mxu0 %v1589
      %1891 = vmatprep.subr.bf16.mxu0 0
      %1892 = vmatpush1.bf16.msra.mxu0 %v1590
      %1893 = vmatprep.subr.bf16.mxu0 0
      %1894 = vmatpush1.bf16.msra.mxu0 %v1591
      %1895 = vmatprep.subr.bf16.mxu0 0
      %1896 = vmatpush1.bf16.msra.mxu0 %v1592
      %1897 = vmatprep.subr.bf16.mxu0 0
      %1898 = vmatpush1.bf16.msra.mxu0 %v1593
      %1899 = vmatprep.mubr.bf16.mxu0 %v989
      %1900 = vmatmul.mubr.bf16.gmra.mrb[0].mxu0 %v988
      %v1901 = vpop.f32.mrb[0].mxu0
      %v1902 = vadd.f32 %v1741, %v1901
      %v1903 = vpop.f32.mrb[0].mxu0
      %v1904 = vpop.f32.mrb[0].mxu0
      %v1905 = vadd.f32 %v1744, %v1904
      %v1906 = vpop.f32.mrb[0].mxu0
      %1907 = vmatprep.mubr.bf16.mxu0 %v998
      %1908 = vmatmul.mubr.bf16.gmra.mrb[0].mxu0 %v997
      %v1909 = vpop.f32.mrb[0].mxu0
      %v1910 = vadd.f32 %v1749, %v1909
      %v1911 = vpop.f32.mrb[0].mxu0
      %v1912 = vpop.f32.mrb[0].mxu0
      %v1913 = vadd.f32 %v1752, %v1912
      %v1914 = vpop.f32.mrb[0].mxu0
      %1915 = vmatprep.mubr.bf16.mxu0 %v1007
      %1916 = vmatmul.mubr.bf16.gmra.mrb[0].mxu0 %v1006
      %v1917 = vpop.f32.mrb[0].mxu0
      %v1918 = vadd.f32 %v1757, %v1917
      %v1919 = vpop.f32.mrb[0].mxu0
      %v1920 = vpop.f32.mrb[0].mxu0
      %v1921 = vadd.f32 %v1760, %v1920
      %v1922 = vpop.f32.mrb[0].mxu0
      %1923 = vmatprep.mubr.bf16.mxu0 %v1016
      %1924 = vmatmul.mubr.bf16.gmra.mrb[0].mxu0 %v1015
      %v1925 = vpop.f32.mrb[0].mxu0
      %v1926 = vadd.f32 %v1765, %v1925
      %v1927 = vpop.f32.mrb[0].mxu0
      %v1928 = vpop.f32.mrb[0].mxu0
      %v1929 = vadd.f32 %v1768, %v1928
      %v1930 = vpop.f32.mrb[0].mxu0
      %1931 = vmatprep.mubr.bf16.mxu0 %v1025
      %1932 = vmatmul.mubr.bf16.gmra.mrb[0].mxu0 %v1024
      %v1933 = vpop.f32.mrb[0].mxu0
      %v1934 = vadd.f32 %v1773, %v1933
      %v1935 = vpop.f32.mrb[0].mxu0
      %v1936 = vpop.f32.mrb[0].mxu0
      %v1937 = vadd.f32 %v1776, %v1936
      %v1938 = vpop.f32.mrb[0].mxu0
      %1939 = vmatprep.mubr.bf16.mxu0 %v1034
      %1940 = vmatmul.mubr.bf16.gmra.mrb[0].mxu0 %v1033
      %v1941 = vpop.f32.mrb[0].mxu0
      %v1942 = vadd.f32 %v1781, %v1941
      %v1943 = vpop.f32.mrb[0].mxu0
      %v1944 = vpop.f32.mrb[0].mxu0
      %v1945 = vadd.f32 %v1784, %v1944
      %v1946 = vpop.f32.mrb[0].mxu0
      %1947 = vmatprep.mubr.bf16.mxu0 %v1043
      %1948 = vmatmul.mubr.bf16.gmra.mrb[0].mxu0 %v1042
      %v1949 = vpop.f32.mrb[0].mxu0
      %v1950 = vadd.f32 %v1789, %v1949
      %v1951 = vpop.f32.mrb[0].mxu0
      %v1952 = vpop.f32.mrb[0].mxu0
      %v1953 = vadd.f32 %v1792, %v1952
      %v1954 = vpop.f32.mrb[0].mxu0
      %1955 = vmatprep.mubr.bf16.mxu0 %v1052
      %1956 = vmatmul.mubr.bf16.gmra.mrb[0].mxu0 %v1051
      %v1957 = vpop.f32.mrb[0].mxu0
      %v1958 = vadd.f32 %v1797, %v1957
      %v1959 = vpop.f32.mrb[0].mxu0
      %v1960 = vpop.f32.mrb[0].mxu0
      %v1961 = vadd.f32 %v1800, %v1960
      %v1962 = vpop.f32.mrb[0].mxu0
      %1963 = vmatprep.mubr.bf16.mxu0 %v1061
      %1964 = vmatmul.mubr.bf16.gmra.mrb[0].mxu0 %v1060
      %v1965 = vpop.f32.mrb[0].mxu0
      %v1966 = vadd.f32 %v1805, %v1965
      %v1967 = vpop.f32.mrb[0].mxu0
      %v1968 = vpop.f32.mrb[0].mxu0
      %v1969 = vadd.f32 %v1808, %v1968
      %v1970 = vpop.f32.mrb[0].mxu0
      %1971 = vmatprep.mubr.bf16.mxu0 %v1070
      %1972 = vmatmul.mubr.bf16.gmra.mrb[0].mxu0 %v1069
      %v1973 = vpop.f32.mrb[0].mxu0
      %v1974 = vadd.f32 %v1813, %v1973
      %v1975 = vpop.f32.mrb[0].mxu0
      %v1976 = vpop.f32.mrb[0].mxu0
      %v1977 = vadd.f32 %v1816, %v1976
      %v1978 = vpop.f32.mrb[0].mxu0
      %1979 = vmatprep.mubr.bf16.mxu0 %v1079
      %1980 = vmatmul.mubr.bf16.gmra.mrb[0].mxu0 %v1078
      %v1981 = vpop.f32.mrb[0].mxu0
      %v1982 = vadd.f32 %v1821, %v1981
      %v1983 = vpop.f32.mrb[0].mxu0
      %v1984 = vpop.f32.mrb[0].mxu0
      %v1985 = vadd.f32 %v1824, %v1984
      %v1986 = vpop.f32.mrb[0].mxu0
      %1987 = vmatprep.mubr.bf16.mxu0 %v1088
      %1988 = vmatmul.mubr.bf16.gmra.mrb[0].mxu0 %v1087
      %v1989 = vpop.f32.mrb[0].mxu0
      %v1990 = vadd.f32 %v1829, %v1989
      %v1991 = vpop.f32.mrb[0].mxu0
      %v1992 = vpop.f32.mrb[0].mxu0
      %v1993 = vadd.f32 %v1832, %v1992
      %v1994 = vpop.f32.mrb[0].mxu0
      %1995 = vmatprep.mubr.bf16.mxu0 %v1097
      %1996 = vmatmul.mubr.bf16.gmra.mrb[0].mxu0 %v1096
      %v1997 = vpop.f32.mrb[0].mxu0
      %v1998 = vadd.f32 %v1837, %v1997
      %v1999 = vpop.f32.mrb[0].mxu0
      %v2000 = vpop.f32.mrb[0].mxu0
      %v2001 = vadd.f32 %v1840, %v2000
      %v2002 = vpop.f32.mrb[0].mxu0
      %2003 = vmatprep.mubr.bf16.mxu0 %v1106
      %2004 = vmatmul.mubr.bf16.gmra.mrb[0].mxu0 %v1105
      %v2005 = vpop.f32.mrb[0].mxu0
      %v2006 = vadd.f32 %v1845, %v2005
      %v2007 = vpop.f32.mrb[0].mxu0
      %v2008 = vpop.f32.mrb[0].mxu0
      %v2009 = vadd.f32 %v1848, %v2008
      %v2010 = vpop.f32.mrb[0].mxu0
      %2011 = vmatprep.mubr.bf16.mxu0 %v1115
      %2012 = vmatmul.mubr.bf16.gmra.mrb[0].mxu0 %v1114
      %v2013 = vpop.f32.mrb[0].mxu0
      %v2014 = vadd.f32 %v1853, %v2013
      %v2015 = vpop.f32.mrb[0].mxu0
      %v2016 = vpop.f32.mrb[0].mxu0
      %v2017 = vadd.f32 %v1856, %v2016
      %v2018 = vpop.f32.mrb[0].mxu0
      %2019 = vmatprep.mubr.bf16.mxu0 %v1124
      %2020 = vmatmul.mubr.bf16.gmra.mrb[0].mxu0 %v1123
      %v2021 = vpop.f32.mrb[0].mxu0
      %v2022 = vadd.f32 %v1861, %v2021
      %v2023 = vpop.f32.mrb[0].mxu0
      %v2024 = vpop.f32.mrb[0].mxu0
      %v2025 = vadd.f32 %v1864, %v2024
      %v2026 = vpop.f32.mrb[0].mxu0
      %2027 = vdwg.mxu0
      %2028 = vmatprep.subr.bf16.mxu0 0
      %2029 = vmatpush1.bf16.msra.mxu0 %v1594
      %2030 = vmatprep.subr.bf16.mxu0 0
      %2031 = vmatpush1.bf16.msra.mxu0 %v1595
      %2032 = vmatprep.subr.bf16.mxu0 0
      %2033 = vmatpush1.bf16.msra.mxu0 %v1596
      %2034 = vmatprep.subr.bf16.mxu0 0
      %2035 = vmatpush1.bf16.msra.mxu0 %v1597
      %2036 = vmatprep.subr.bf16.mxu0 0
      %2037 = vmatpush1.bf16.msra.mxu0 %v1598
      %2038 = vmatprep.subr.bf16.mxu0 0
      %2039 = vmatpush1.bf16.msra.mxu0 %v1599
      %2040 = vmatprep.subr.bf16.mxu0 0
      %2041 = vmatpush1.bf16.msra.mxu0 %v1600
      %2042 = vmatprep.subr.bf16.mxu0 0
      %2043 = vmatpush1.bf16.msra.mxu0 %v1601
      %2044 = vmatprep.subr.bf16.mxu0 0
      %2045 = vmatpush1.bf16.msra.mxu0 %v1602
      %2046 = vmatprep.subr.bf16.mxu0 0
      %2047 = vmatpush1.bf16.msra.mxu0 %v1603
      %2048 = vmatprep.subr.bf16.mxu0 0
      %2049 = vmatpush1.bf16.msra.mxu0 %v1604
      %2050 = vmatprep.subr.bf16.mxu0 0
      %2051 = vmatpush1.bf16.msra.mxu0 %v1605
      %2052 = vmatprep.subr.bf16.mxu0 0
      %2053 = vmatpush1.bf16.msra.mxu0 %v1606
      %2054 = vmatprep.subr.bf16.mxu0 0
      %2055 = vmatpush1.bf16.msra.mxu0 %v1607
      %2056 = vmatprep.subr.bf16.mxu0 0
      %2057 = vmatpush1.bf16.msra.mxu0 %v1608
      %2058 = vmatprep.subr.bf16.mxu0 0
      %2059 = vmatpush1.bf16.msra.mxu0 %v1609
      %2060 = vmatprep.mubr.bf16.mxu0 %v991
      %2061 = vmatmul.mubr.bf16.gmra.mrb[0].mxu0 %v990
      %v2062 = vpop.f32.mrb[0].mxu0
      %v2063 = vadd.f32 %v1902, %v2062
      %v2064 = vpop.f32.mrb[0].mxu0
      %v2065 = vpop.f32.mrb[0].mxu0
      %v2066 = vadd.f32 %v1905, %v2065
      %v2067 = vpop.f32.mrb[0].mxu0
      %2068 = vmatprep.mubr.bf16.mxu0 %v1000
      %2069 = vmatmul.mubr.bf16.gmra.mrb[0].mxu0 %v999
      %v2070 = vpop.f32.mrb[0].mxu0
      %v2071 = vadd.f32 %v1910, %v2070
      %v2072 = vpop.f32.mrb[0].mxu0
      %v2073 = vpop.f32.mrb[0].mxu0
      %v2074 = vadd.f32 %v1913, %v2073
      %v2075 = vpop.f32.mrb[0].mxu0
      %2076 = vmatprep.mubr.bf16.mxu0 %v1009
      %2077 = vmatmul.mubr.bf16.gmra.mrb[0].mxu0 %v1008
      %v2078 = vpop.f32.mrb[0].mxu0
      %v2079 = vadd.f32 %v1918, %v2078
      %v2080 = vpop.f32.mrb[0].mxu0
      %v2081 = vpop.f32.mrb[0].mxu0
      %v2082 = vadd.f32 %v1921, %v2081
      %v2083 = vpop.f32.mrb[0].mxu0
      %2084 = vmatprep.mubr.bf16.mxu0 %v1018
      %2085 = vmatmul.mubr.bf16.gmra.mrb[0].mxu0 %v1017
      %v2086 = vpop.f32.mrb[0].mxu0
      %v2087 = vadd.f32 %v1926, %v2086
      %v2088 = vpop.f32.mrb[0].mxu0
      %v2089 = vpop.f32.mrb[0].mxu0
      %v2090 = vadd.f32 %v1929, %v2089
      %v2091 = vpop.f32.mrb[0].mxu0
      %2092 = vmatprep.mubr.bf16.mxu0 %v1027
      %2093 = vmatmul.mubr.bf16.gmra.mrb[0].mxu0 %v1026
      %v2094 = vpop.f32.mrb[0].mxu0
      %v2095 = vadd.f32 %v1934, %v2094
      %v2096 = vpop.f32.mrb[0].mxu0
      %v2097 = vpop.f32.mrb[0].mxu0
      %v2098 = vadd.f32 %v1937, %v2097
      %v2099 = vpop.f32.mrb[0].mxu0
      %2100 = vmatprep.mubr.bf16.mxu0 %v1036
      %2101 = vmatmul.mubr.bf16.gmra.mrb[0].mxu0 %v1035
      %v2102 = vpop.f32.mrb[0].mxu0
      %v2103 = vadd.f32 %v1942, %v2102
      %v2104 = vpop.f32.mrb[0].mxu0
      %v2105 = vpop.f32.mrb[0].mxu0
      %v2106 = vadd.f32 %v1945, %v2105
      %v2107 = vpop.f32.mrb[0].mxu0
      %2108 = vmatprep.mubr.bf16.mxu0 %v1045
      %2109 = vmatmul.mubr.bf16.gmra.mrb[0].mxu0 %v1044
      %v2110 = vpop.f32.mrb[0].mxu0
      %v2111 = vadd.f32 %v1950, %v2110
      %v2112 = vpop.f32.mrb[0].mxu0
      %v2113 = vpop.f32.mrb[0].mxu0
      %v2114 = vadd.f32 %v1953, %v2113
      %v2115 = vpop.f32.mrb[0].mxu0
      %2116 = vmatprep.mubr.bf16.mxu0 %v1054
      %2117 = vmatmul.mubr.bf16.gmra.mrb[0].mxu0 %v1053
      %v2118 = vpop.f32.mrb[0].mxu0
      %v2119 = vadd.f32 %v1958, %v2118
      %v2120 = vpop.f32.mrb[0].mxu0
      %v2121 = vpop.f32.mrb[0].mxu0
      %v2122 = vadd.f32 %v1961, %v2121
      %v2123 = vpop.f32.mrb[0].mxu0
      %2124 = vmatprep.mubr.bf16.mxu0 %v1063
      %2125 = vmatmul.mubr.bf16.gmra.mrb[0].mxu0 %v1062
      %v2126 = vpop.f32.mrb[0].mxu0
      %v2127 = vadd.f32 %v1966, %v2126
      %v2128 = vpop.f32.mrb[0].mxu0
      %v2129 = vpop.f32.mrb[0].mxu0
      %v2130 = vadd.f32 %v1969, %v2129
      %v2131 = vpop.f32.mrb[0].mxu0
      %2132 = vmatprep.mubr.bf16.mxu0 %v1072
      %2133 = vmatmul.mubr.bf16.gmra.mrb[0].mxu0 %v1071
      %v2134 = vpop.f32.mrb[0].mxu0
      %v2135 = vadd.f32 %v1974, %v2134
      %v2136 = vpop.f32.mrb[0].mxu0
      %v2137 = vpop.f32.mrb[0].mxu0
      %v2138 = vadd.f32 %v1977, %v2137
      %v2139 = vpop.f32.mrb[0].mxu0
      %2140 = vmatprep.mubr.bf16.mxu0 %v1081
      %2141 = vmatmul.mubr.bf16.gmra.mrb[0].mxu0 %v1080
      %v2142 = vpop.f32.mrb[0].mxu0
      %v2143 = vadd.f32 %v1982, %v2142
      %v2144 = vpop.f32.mrb[0].mxu0
      %v2145 = vpop.f32.mrb[0].mxu0
      %v2146 = vadd.f32 %v1985, %v2145
      %v2147 = vpop.f32.mrb[0].mxu0
      %2148 = vmatprep.mubr.bf16.mxu0 %v1090
      %2149 = vmatmul.mubr.bf16.gmra.mrb[0].mxu0 %v1089
      %v2150 = vpop.f32.mrb[0].mxu0
      %v2151 = vadd.f32 %v1990, %v2150
      %v2152 = vpop.f32.mrb[0].mxu0
      %v2153 = vpop.f32.mrb[0].mxu0
      %v2154 = vadd.f32 %v1993, %v2153
      %v2155 = vpop.f32.mrb[0].mxu0
      %2156 = vmatprep.mubr.bf16.mxu0 %v1099
      %2157 = vmatmul.mubr.bf16.gmra.mrb[0].mxu0 %v1098
      %v2158 = vpop.f32.mrb[0].mxu0
      %v2159 = vadd.f32 %v1998, %v2158
      %v2160 = vpop.f32.mrb[0].mxu0
      %v2161 = vpop.f32.mrb[0].mxu0
      %v2162 = vadd.f32 %v2001, %v2161
      %v2163 = vpop.f32.mrb[0].mxu0
      %2164 = vmatprep.mubr.bf16.mxu0 %v1108
      %2165 = vmatmul.mubr.bf16.gmra.mrb[0].mxu0 %v1107
      %v2166 = vpop.f32.mrb[0].mxu0
      %v2167 = vadd.f32 %v2006, %v2166
      %v2168 = vpop.f32.mrb[0].mxu0
      %v2169 = vpop.f32.mrb[0].mxu0
      %v2170 = vadd.f32 %v2009, %v2169
      %v2171 = vpop.f32.mrb[0].mxu0
      %2172 = vmatprep.mubr.bf16.mxu0 %v1117
      %2173 = vmatmul.mubr.bf16.gmra.mrb[0].mxu0 %v1116
      %v2174 = vpop.f32.mrb[0].mxu0
      %v2175 = vadd.f32 %v2014, %v2174
      %v2176 = vpop.f32.mrb[0].mxu0
      %v2177 = vpop.f32.mrb[0].mxu0
      %v2178 = vadd.f32 %v2017, %v2177
      %v2179 = vpop.f32.mrb[0].mxu0
      %2180 = vmatprep.mubr.bf16.mxu0 %v1126
      %2181 = vmatmul.mubr.bf16.gmra.mrb[0].mxu0 %v1125
      %v2182 = vpop.f32.mrb[0].mxu0
      %v2183 = vadd.f32 %v2022, %v2182
      %v2184 = vpop.f32.mrb[0].mxu0
      %v2185 = vpop.f32.mrb[0].mxu0
      %v2186 = vadd.f32 %v2025, %v2185
      %v2187 = vpop.f32.mrb[0].mxu0
      %2188 = vdwg.mxu0
      %2189 = vmatprep.subr.bf16.mxu0 0
      %2190 = vmatpush1.bf16.msra.mxu0 %v1610
      %2191 = vmatprep.subr.bf16.mxu0 0
      %2192 = vmatpush1.bf16.msra.mxu0 %v1611
      %2193 = vmatprep.subr.bf16.mxu0 0
      %2194 = vmatpush1.bf16.msra.mxu0 %v1612
      %2195 = vmatprep.subr.bf16.mxu0 0
      %2196 = vmatpush1.bf16.msra.mxu0 %v1613
      %2197 = vmatprep.subr.bf16.mxu0 0
      %2198 = vmatpush1.bf16.msra.mxu0 %v1614
      %2199 = vmatprep.subr.bf16.mxu0 0
      %2200 = vmatpush1.bf16.msra.mxu0 %v1615
      %2201 = vmatprep.subr.bf16.mxu0 0
      %2202 = vmatpush1.bf16.msra.mxu0 %v1616
      %2203 = vmatprep.subr.bf16.mxu0 0
      %2204 = vmatpush1.bf16.msra.mxu0 %v1617
      %2205 = vmatprep.subr.bf16.mxu0 0
      %2206 = vmatpush1.bf16.msra.mxu0 %v1618
      %2207 = vmatprep.subr.bf16.mxu0 0
      %2208 = vmatpush1.bf16.msra.mxu0 %v1619
      %2209 = vmatprep.subr.bf16.mxu0 0
      %2210 = vmatpush1.bf16.msra.mxu0 %v1620
      %2211 = vmatprep.subr.bf16.mxu0 0
      %2212 = vmatpush1.bf16.msra.mxu0 %v1621
      %2213 = vmatprep.subr.bf16.mxu0 0
      %2214 = vmatpush1.bf16.msra.mxu0 %v1622
      %2215 = vmatprep.subr.bf16.mxu0 0
      %2216 = vmatpush1.bf16.msra.mxu0 %v1623
      %2217 = vmatprep.subr.bf16.mxu0 0
      %2218 = vmatpush1.bf16.msra.mxu0 %v1624
      %2219 = vmatprep.subr.bf16.mxu0 0
      %2220 = vmatpush1.bf16.msra.mxu0 %v1625
      %2221 = vmatprep.mubr.bf16.mxu0 %v993
      %2222 = vmatmul.mubr.bf16.gmra.mrb[0].mxu0 %v992
      %v2223 = vpop.f32.mrb[0].mxu0
      %v2224 = vadd.f32 %v2063, %v2223
      %v2225 = vpop.f32.mrb[0].mxu0
      %v2226 = vpop.f32.mrb[0].mxu0
      %v2227 = vadd.f32 %v2066, %v2226
      %v2228 = vpop.f32.mrb[0].mxu0
      %2229 = vmatprep.mubr.bf16.mxu0 %v1002
      %2230 = vmatmul.mubr.bf16.gmra.mrb[0].mxu0 %v1001
      %v2231 = vpop.f32.mrb[0].mxu0
      %v2232 = vadd.f32 %v2071, %v2231
      %v2233 = vpop.f32.mrb[0].mxu0
      %v2234 = vpop.f32.mrb[0].mxu0
      %v2235 = vadd.f32 %v2074, %v2234
      %v2236 = vpop.f32.mrb[0].mxu0
      %2237 = vmatprep.mubr.bf16.mxu0 %v1011
      %2238 = vmatmul.mubr.bf16.gmra.mrb[0].mxu0 %v1010
      %v2239 = vpop.f32.mrb[0].mxu0
      %v2240 = vadd.f32 %v2079, %v2239
      %v2241 = vpop.f32.mrb[0].mxu0
      %v2242 = vpop.f32.mrb[0].mxu0
      %v2243 = vadd.f32 %v2082, %v2242
      %v2244 = vpop.f32.mrb[0].mxu0
      %2245 = vmatprep.mubr.bf16.mxu0 %v1020
      %2246 = vmatmul.mubr.bf16.gmra.mrb[0].mxu0 %v1019
      %v2247 = vpop.f32.mrb[0].mxu0
      %v2248 = vadd.f32 %v2087, %v2247
      %v2249 = vpop.f32.mrb[0].mxu0
      %v2250 = vpop.f32.mrb[0].mxu0
      %v2251 = vadd.f32 %v2090, %v2250
      %v2252 = vpop.f32.mrb[0].mxu0
      %2253 = vmatprep.mubr.bf16.mxu0 %v1029
      %2254 = vmatmul.mubr.bf16.gmra.mrb[0].mxu0 %v1028
      %v2255 = vpop.f32.mrb[0].mxu0
      %v2256 = vadd.f32 %v2095, %v2255
      %v2257 = vpop.f32.mrb[0].mxu0
      %v2258 = vpop.f32.mrb[0].mxu0
      %v2259 = vadd.f32 %v2098, %v2258
      %v2260 = vpop.f32.mrb[0].mxu0
      %2261 = vmatprep.mubr.bf16.mxu0 %v1038
      %2262 = vmatmul.mubr.bf16.gmra.mrb[0].mxu0 %v1037
      %v2263 = vpop.f32.mrb[0].mxu0
      %v2264 = vadd.f32 %v2103, %v2263
      %v2265 = vpop.f32.mrb[0].mxu0
      %v2266 = vpop.f32.mrb[0].mxu0
      %v2267 = vadd.f32 %v2106, %v2266
      %v2268 = vpop.f32.mrb[0].mxu0
      %2269 = vmatprep.mubr.bf16.mxu0 %v1047
      %2270 = vmatmul.mubr.bf16.gmra.mrb[0].mxu0 %v1046
      %v2271 = vpop.f32.mrb[0].mxu0
      %v2272 = vadd.f32 %v2111, %v2271
      %v2273 = vpop.f32.mrb[0].mxu0
      %v2274 = vpop.f32.mrb[0].mxu0
      %v2275 = vadd.f32 %v2114, %v2274
      %v2276 = vpop.f32.mrb[0].mxu0
      %2277 = vmatprep.mubr.bf16.mxu0 %v1056
      %2278 = vmatmul.mubr.bf16.gmra.mrb[0].mxu0 %v1055
      %v2279 = vpop.f32.mrb[0].mxu0
      %v2280 = vadd.f32 %v2119, %v2279
      %v2281 = vpop.f32.mrb[0].mxu0
      %v2282 = vpop.f32.mrb[0].mxu0
      %v2283 = vadd.f32 %v2122, %v2282
      %v2284 = vpop.f32.mrb[0].mxu0
      %2285 = vmatprep.mubr.bf16.mxu0 %v1065
      %2286 = vmatmul.mubr.bf16.gmra.mrb[0].mxu0 %v1064
      %v2287 = vpop.f32.mrb[0].mxu0
      %v2288 = vadd.f32 %v2127, %v2287
      %v2289 = vpop.f32.mrb[0].mxu0
      %v2290 = vpop.f32.mrb[0].mxu0
      %v2291 = vadd.f32 %v2130, %v2290
      %v2292 = vpop.f32.mrb[0].mxu0
      %2293 = vmatprep.mubr.bf16.mxu0 %v1074
      %2294 = vmatmul.mubr.bf16.gmra.mrb[0].mxu0 %v1073
      %v2295 = vpop.f32.mrb[0].mxu0
      %v2296 = vadd.f32 %v2135, %v2295
      %v2297 = vpop.f32.mrb[0].mxu0
      %v2298 = vpop.f32.mrb[0].mxu0
      %v2299 = vadd.f32 %v2138, %v2298
      %v2300 = vpop.f32.mrb[0].mxu0
      %2301 = vmatprep.mubr.bf16.mxu0 %v1083
      %2302 = vmatmul.mubr.bf16.gmra.mrb[0].mxu0 %v1082
      %v2303 = vpop.f32.mrb[0].mxu0
      %v2304 = vadd.f32 %v2143, %v2303
      %v2305 = vpop.f32.mrb[0].mxu0
      %v2306 = vpop.f32.mrb[0].mxu0
      %v2307 = vadd.f32 %v2146, %v2306
      %v2308 = vpop.f32.mrb[0].mxu0
      %2309 = vmatprep.mubr.bf16.mxu0 %v1092
      %2310 = vmatmul.mubr.bf16.gmra.mrb[0].mxu0 %v1091
      %v2311 = vpop.f32.mrb[0].mxu0
      %v2312 = vadd.f32 %v2151, %v2311
      %v2313 = vpop.f32.mrb[0].mxu0
      %v2314 = vpop.f32.mrb[0].mxu0
      %v2315 = vadd.f32 %v2154, %v2314
      %v2316 = vpop.f32.mrb[0].mxu0
      %2317 = vmatprep.mubr.bf16.mxu0 %v1101
      %2318 = vmatmul.mubr.bf16.gmra.mrb[0].mxu0 %v1100
      %v2319 = vpop.f32.mrb[0].mxu0
      %v2320 = vadd.f32 %v2159, %v2319
      %v2321 = vpop.f32.mrb[0].mxu0
      %v2322 = vpop.f32.mrb[0].mxu0
      %v2323 = vadd.f32 %v2162, %v2322
      %v2324 = vpop.f32.mrb[0].mxu0
      %2325 = vmatprep.mubr.bf16.mxu0 %v1110
      %2326 = vmatmul.mubr.bf16.gmra.mrb[0].mxu0 %v1109
      %v2327 = vpop.f32.mrb[0].mxu0
      %v2328 = vadd.f32 %v2167, %v2327
      %v2329 = vpop.f32.mrb[0].mxu0
      %v2330 = vpop.f32.mrb[0].mxu0
      %v2331 = vadd.f32 %v2170, %v2330
      %v2332 = vpop.f32.mrb[0].mxu0
      %2333 = vmatprep.mubr.bf16.mxu0 %v1119
      %2334 = vmatmul.mubr.bf16.gmra.mrb[0].mxu0 %v1118
      %v2335 = vpop.f32.mrb[0].mxu0
      %v2336 = vadd.f32 %v2175, %v2335
      %v2337 = vpop.f32.mrb[0].mxu0
      %v2338 = vpop.f32.mrb[0].mxu0
      %v2339 = vadd.f32 %v2178, %v2338
      %v2340 = vpop.f32.mrb[0].mxu0
      %2341 = vmatprep.mubr.bf16.mxu0 %v1128
      %2342 = vmatmul.mubr.bf16.gmra.mrb[0].mxu0 %v1127
      %v2343 = vpop.f32.mrb[0].mxu0
      %v2344 = vadd.f32 %v2183, %v2343
      %v2345 = vpop.f32.mrb[0].mxu0
      %v2346 = vpop.f32.mrb[0].mxu0
      %v2347 = vadd.f32 %v2186, %v2346
      %v2348 = vpop.f32.mrb[0].mxu0
      %2349 = vdwg.mxu0
      %2350 = vmatprep.subr.bf16.mxu0 0
      %2351 = vmatpush1.bf16.msra.mxu0 %v1626
      %2352 = vmatprep.subr.bf16.mxu0 0
      %2353 = vmatpush1.bf16.msra.mxu0 %v1627
      %2354 = vmatprep.subr.bf16.mxu0 0
      %2355 = vmatpush1.bf16.msra.mxu0 %v1628
      %2356 = vmatprep.subr.bf16.mxu0 0
      %2357 = vmatpush1.bf16.msra.mxu0 %v1629
      %2358 = vmatprep.subr.bf16.mxu0 0
      %2359 = vmatpush1.bf16.msra.mxu0 %v1630
      %2360 = vmatprep.subr.bf16.mxu0 0
      %2361 = vmatpush1.bf16.msra.mxu0 %v1631
      %2362 = vmatprep.subr.bf16.mxu0 0
      %2363 = vmatpush1.bf16.msra.mxu0 %v1632
      %2364 = vmatprep.subr.bf16.mxu0 0
      %2365 = vmatpush1.bf16.msra.mxu0 %v1633
      %2366 = vmatprep.subr.bf16.mxu0 0
      %2367 = vmatpush1.bf16.msra.mxu0 0
      %2368 = vmatprep.subr.bf16.mxu0 0
      %2369 = vmatpush1.bf16.msra.mxu0 0
      %2370 = vmatprep.subr.bf16.mxu0 0
      %2371 = vmatpush1.bf16.msra.mxu0 0
      %2372 = vmatprep.subr.bf16.mxu0 0
      %2373 = vmatpush1.bf16.msra.mxu0 0
      %2374 = vmatprep.subr.bf16.mxu0 0
      %2375 = vmatpush1.bf16.msra.mxu0 0
      %2376 = vmatprep.subr.bf16.mxu0 0
      %2377 = vmatpush1.bf16.msra.mxu0 0
      %2378 = vmatprep.subr.bf16.mxu0 0
      %2379 = vmatpush1.bf16.msra.mxu0 0
      %2380 = vmatprep.subr.bf16.mxu0 0
      %2381 = vmatpush1.bf16.msra.mxu0 0
      %2382 = vmatprep.mubr.bf16.mxu0 0
      %2383 = vmatmul.mubr.bf16.gmra.mrb[0].mxu0 %v994
      %v2384 = vpop.f32.mrb[0].mxu0
      %v2385 = vadd.f32 %v2224, %v2384
      %v2386 = vpop.f32.mrb[0].mxu0
      %v2387 = vpop.f32.mrb[0].mxu0
      %v2388 = vadd.f32 %v2227, %v2387
      %v2389 = vpop.f32.mrb[0].mxu0
      %2390 = vmatprep.mubr.bf16.mxu0 0
      %2391 = vmatmul.mubr.bf16.gmra.mrb[0].mxu0 %v1003
      %v2392 = vpop.f32.mrb[0].mxu0
      %v2393 = vadd.f32 %v2232, %v2392
      %v2394 = vpop.f32.mrb[0].mxu0
      %v2395 = vpop.f32.mrb[0].mxu0
      %v2396 = vadd.f32 %v2235, %v2395
      %v2397 = vpop.f32.mrb[0].mxu0
      %2398 = vmatprep.mubr.bf16.mxu0 0
      %2399 = vmatmul.mubr.bf16.gmra.mrb[0].mxu0 %v1012
      %v2400 = vpop.f32.mrb[0].mxu0
      %v2401 = vadd.f32 %v2240, %v2400
      %v2402 = vpop.f32.mrb[0].mxu0
      %v2403 = vpop.f32.mrb[0].mxu0
      %v2404 = vadd.f32 %v2243, %v2403
      %v2405 = vpop.f32.mrb[0].mxu0
      %2406 = vmatprep.mubr.bf16.mxu0 0
      %2407 = vmatmul.mubr.bf16.gmra.mrb[0].mxu0 %v1021
      %v2408 = vpop.f32.mrb[0].mxu0
      %v2409 = vadd.f32 %v2248, %v2408
      %v2410 = vpop.f32.mrb[0].mxu0
      %v2411 = vpop.f32.mrb[0].mxu0
      %v2412 = vadd.f32 %v2251, %v2411
      %v2413 = vpop.f32.mrb[0].mxu0
      %2414 = vmatprep.mubr.bf16.mxu0 0
      %2415 = vmatmul.mubr.bf16.gmra.mrb[0].mxu0 %v1030
      %v2416 = vpop.f32.mrb[0].mxu0
      %v2417 = vadd.f32 %v2256, %v2416
      %v2418 = vpop.f32.mrb[0].mxu0
      %v2419 = vpop.f32.mrb[0].mxu0
      %v2420 = vadd.f32 %v2259, %v2419
      %v2421 = vpop.f32.mrb[0].mxu0
      %2422 = vmatprep.mubr.bf16.mxu0 0
      %2423 = vmatmul.mubr.bf16.gmra.mrb[0].mxu0 %v1039
      %v2424 = vpop.f32.mrb[0].mxu0
      %v2425 = vadd.f32 %v2264, %v2424
      %v2426 = vpop.f32.mrb[0].mxu0
      %v2427 = vpop.f32.mrb[0].mxu0
      %v2428 = vadd.f32 %v2267, %v2427
      %v2429 = vpop.f32.mrb[0].mxu0
      %2430 = vmatprep.mubr.bf16.mxu0 0
      %2431 = vmatmul.mubr.bf16.gmra.mrb[0].mxu0 %v1048
      %v2432 = vpop.f32.mrb[0].mxu0
      %v2433 = vadd.f32 %v2272, %v2432
      %v2434 = vpop.f32.mrb[0].mxu0
      %v2435 = vpop.f32.mrb[0].mxu0
      %v2436 = vadd.f32 %v2275, %v2435
      %v2437 = vpop.f32.mrb[0].mxu0
      %2438 = vmatprep.mubr.bf16.mxu0 0
      %2439 = vmatmul.mubr.bf16.gmra.mrb[0].mxu0 %v1057
      %v2440 = vpop.f32.mrb[0].mxu0
      %v2441 = vadd.f32 %v2280, %v2440
      %v2442 = vpop.f32.mrb[0].mxu0
      %v2443 = vpop.f32.mrb[0].mxu0
      %v2444 = vadd.f32 %v2283, %v2443
      %v2445 = vpop.f32.mrb[0].mxu0
      %2446 = vmatprep.mubr.bf16.mxu0 0
      %2447 = vmatmul.mubr.bf16.gmra.mrb[0].mxu0 %v1066
      %v2448 = vpop.f32.mrb[0].mxu0
      %v2449 = vadd.f32 %v2288, %v2448
      %v2450 = vpop.f32.mrb[0].mxu0
      %v2451 = vpop.f32.mrb[0].mxu0
      %v2452 = vadd.f32 %v2291, %v2451
      %v2453 = vpop.f32.mrb[0].mxu0
      %2454 = vmatprep.mubr.bf16.mxu0 0
      %2455 = vmatmul.mubr.bf16.gmra.mrb[0].mxu0 %v1075
      %v2456 = vpop.f32.mrb[0].mxu0
      %v2457 = vadd.f32 %v2296, %v2456
      %v2458 = vpop.f32.mrb[0].mxu0
      %v2459 = vpop.f32.mrb[0].mxu0
      %v2460 = vadd.f32 %v2299, %v2459
      %v2461 = vpop.f32.mrb[0].mxu0
      %2462 = vmatprep.mubr.bf16.mxu0 0
      %2463 = vmatmul.mubr.bf16.gmra.mrb[0].mxu0 %v1084
      %v2464 = vpop.f32.mrb[0].mxu0
      %v2465 = vadd.f32 %v2304, %v2464
      %v2466 = vpop.f32.mrb[0].mxu0
      %v2467 = vpop.f32.mrb[0].mxu0
      %v2468 = vadd.f32 %v2307, %v2467
      %v2469 = vpop.f32.mrb[0].mxu0
      %2470 = vmatprep.mubr.bf16.mxu0 0
      %2471 = vmatmul.mubr.bf16.gmra.mrb[0].mxu0 %v1093
      %v2472 = vpop.f32.mrb[0].mxu0
      %v2473 = vadd.f32 %v2312, %v2472
      %v2474 = vpop.f32.mrb[0].mxu0
      %v2475 = vpop.f32.mrb[0].mxu0
      %v2476 = vadd.f32 %v2315, %v2475
      %v2477 = vpop.f32.mrb[0].mxu0
      %2478 = vmatprep.mubr.bf16.mxu0 0
      %2479 = vmatmul.mubr.bf16.gmra.mrb[0].mxu0 %v1102
      %v2480 = vpop.f32.mrb[0].mxu0
      %v2481 = vadd.f32 %v2320, %v2480
      %v2482 = vpop.f32.mrb[0].mxu0
      %v2483 = vpop.f32.mrb[0].mxu0
      %v2484 = vadd.f32 %v2323, %v2483
      %v2485 = vpop.f32.mrb[0].mxu0
      %2486 = vmatprep.mubr.bf16.mxu0 0
      %2487 = vmatmul.mubr.bf16.gmra.mrb[0].mxu0 %v1111
      %v2488 = vpop.f32.mrb[0].mxu0
      %v2489 = vadd.f32 %v2328, %v2488
      %v2490 = vpop.f32.mrb[0].mxu0
      %v2491 = vpop.f32.mrb[0].mxu0
      %v2492 = vadd.f32 %v2331, %v2491
      %v2493 = vpop.f32.mrb[0].mxu0
      %2494 = vmatprep.mubr.bf16.mxu0 0
      %2495 = vmatmul.mubr.bf16.gmra.mrb[0].mxu0 %v1120
      %v2496 = vpop.f32.mrb[0].mxu0
      %v2497 = vadd.f32 %v2336, %v2496
      %v2498 = vpop.f32.mrb[0].mxu0
      %v2499 = vpop.f32.mrb[0].mxu0
      %v2500 = vadd.f32 %v2339, %v2499
      %v2501 = vpop.f32.mrb[0].mxu0
      %2502 = vmatprep.mubr.bf16.mxu0 0
      %2503 = vmatmul.mubr.bf16.gmra.mrb[0].mxu0 %v1129
      %v2504 = vpop.f32.mrb[0].mxu0
      %v2505 = vadd.f32 %v2344, %v2504
      %v2506 = vpop.f32.mrb[0].mxu0
      %v2507 = vpop.f32.mrb[0].mxu0
      %v2508 = vadd.f32 %v2347, %v2507
      %v2509 = vpop.f32.mrb[0].mxu0
      %2510 = vdwg.mxu0
      %v2511 = vld [vmem:[%s218] sm:$0xf]
      %v2512 = vld [vmem:[%s218 + $0x4] sm:$0xf]
      %v2513 = vld [vmem:[%s218 + $0x8] sm:$0xf]
      %v2514 = vld [vmem:[%s218 + $0xc] sm:$0xf]
      %v2515 = vld [vmem:[%s218 + $0x10] sm:$0xf]
      %v2516 = vld [vmem:[%s218 + $0x14] sm:$0xf]
      %v2517 = vld [vmem:[%s218 + $0x18] sm:$0xf]
      %v2518 = vld [vmem:[%s218 + $0x1c] sm:$0xf]
      %v2519 = vld [vmem:[%s218 + $0x20] sm:$0xf]
      %v2520 = vld [vmem:[%s218 + $0x24] sm:$0xf]
      %v2521 = vld [vmem:[%s218 + $0x28] sm:$0xf]
      %v2522 = vld [vmem:[%s218 + $0x2c] sm:$0xf]
      %v2523 = vld [vmem:[%s218 + $0x30] sm:$0xf]
      %v2524 = vld [vmem:[%s218 + $0x34] sm:$0xf]
      %v2525 = vld [vmem:[%s218 + $0x38] sm:$0xf]
      %v2526 = vld [vmem:[%s218 + $0x3c] sm:$0xf]
      %v2527 = vld [vmem:[%s218 + $0x40] sm:$0xf]
      %v2528 = vld [vmem:[%s218 + $0x44] sm:$0xf]
      %v2529 = vld [vmem:[%s218 + $0x48] sm:$0xf]
      %v2530 = vld [vmem:[%s218 + $0x4c] sm:$0xf]
      %v2531 = vld [vmem:[%s218 + $0x50] sm:$0xf]
      %v2532 = vld [vmem:[%s218 + $0x54] sm:$0xf]
      %v2533 = vld [vmem:[%s218 + $0x58] sm:$0xf]
      %v2534 = vld [vmem:[%s218 + $0x5c] sm:$0xf]
      %v2535 = vld [vmem:[%s218 + $0x60] sm:$0xf]
      %v2536 = vld [vmem:[%s218 + $0x64] sm:$0xf]
      %v2537 = vld [vmem:[%s218 + $0x68] sm:$0xf]
      %v2538 = vld [vmem:[%s218 + $0x6c] sm:$0xf]
      %v2539 = vld [vmem:[%s218 + $0x70] sm:$0xf]
      %v2540 = vld [vmem:[%s218 + $0x74] sm:$0xf]
      %v2541 = vld [vmem:[%s218 + $0x78] sm:$0xf]
      %v2542 = vld [vmem:[%s218 + $0x7c] sm:$0xf]
      %v2543 = vunpack.c.l.bf16 %v2511
      %v2544 = vunpack.c.l.bf16 %v2512
      %v2545 = vunpack.c.l.bf16 %v2513
      %v2546 = vunpack.c.l.bf16 %v2514
      %v2547 = vunpack.c.l.bf16 %v2515
      %v2548 = vunpack.c.l.bf16 %v2516
      %v2549 = vunpack.c.l.bf16 %v2517
      %v2550 = vunpack.c.l.bf16 %v2518
      %v2551 = vunpack.c.l.bf16 %v2519
      %v2552 = vunpack.c.l.bf16 %v2520
      %v2553 = vunpack.c.l.bf16 %v2521
      %v2554 = vunpack.c.l.bf16 %v2522
      %v2555 = vunpack.c.l.bf16 %v2523
      %v2556 = vunpack.c.l.bf16 %v2524
      %v2557 = vunpack.c.l.bf16 %v2525
      %v2558 = vunpack.c.l.bf16 %v2526
      %v2559 = vunpack.c.l.bf16 %v2527
      %v2560 = vunpack.c.l.bf16 %v2528
      %v2561 = vunpack.c.l.bf16 %v2529
      %v2562 = vunpack.c.l.bf16 %v2530
      %v2563 = vunpack.c.l.bf16 %v2531
      %v2564 = vunpack.c.l.bf16 %v2532
      %v2565 = vunpack.c.l.bf16 %v2533
      %v2566 = vunpack.c.l.bf16 %v2534
      %v2567 = vunpack.c.l.bf16 %v2535
      %v2568 = vunpack.c.l.bf16 %v2536
      %v2569 = vunpack.c.l.bf16 %v2537
      %v2570 = vunpack.c.l.bf16 %v2538
      %v2571 = vunpack.c.l.bf16 %v2539
      %v2572 = vunpack.c.l.bf16 %v2540
      %v2573 = vunpack.c.l.bf16 %v2541
      %v2574 = vunpack.c.l.bf16 %v2542
      %v2575 = vadd.f32 %v2385, %v2543
      %v2576 = vadd.f32 %v2388, %v2544
      %v2577 = vadd.f32 %v2393, %v2545
      %v2578 = vadd.f32 %v2396, %v2546
      %v2579 = vadd.f32 %v2401, %v2547
      %v2580 = vadd.f32 %v2404, %v2548
      %v2581 = vadd.f32 %v2409, %v2549
      %v2582 = vadd.f32 %v2412, %v2550
      %v2583 = vadd.f32 %v2417, %v2551
      %v2584 = vadd.f32 %v2420, %v2552
      %v2585 = vadd.f32 %v2425, %v2553
      %v2586 = vadd.f32 %v2428, %v2554
      %v2587 = vadd.f32 %v2433, %v2555
      %v2588 = vadd.f32 %v2436, %v2556
      %v2589 = vadd.f32 %v2441, %v2557
      %v2590 = vadd.f32 %v2444, %v2558
      %v2591 = vadd.f32 %v2449, %v2559
      %v2592 = vadd.f32 %v2452, %v2560
      %v2593 = vadd.f32 %v2457, %v2561
      %v2594 = vadd.f32 %v2460, %v2562
      %v2595 = vadd.f32 %v2465, %v2563
      %v2596 = vadd.f32 %v2468, %v2564
      %v2597 = vadd.f32 %v2473, %v2565
      %v2598 = vadd.f32 %v2476, %v2566
      %v2599 = vadd.f32 %v2481, %v2567
      %v2600 = vadd.f32 %v2484, %v2568
      %v2601 = vadd.f32 %v2489, %v2569
      %v2602 = vadd.f32 %v2492, %v2570
      %v2603 = vadd.f32 %v2497, %v2571
      %v2604 = vadd.f32 %v2500, %v2572
      %v2605 = vadd.f32 %v2505, %v2573
      %v2606 = vadd.f32 %v2508, %v2574
      %v2607 = vmax.f32 %v2575, 0.0
      %v2608 = vmax.f32 %v2576, 0.0
      %v2609 = vmax.f32 %v2577, 0.0
      %v2610 = vmax.f32 %v2578, 0.0
      %v2611 = vmax.f32 %v2579, 0.0
      %v2612 = vmax.f32 %v2580, 0.0
      %v2613 = vmax.f32 %v2581, 0.0
      %v2614 = vmax.f32 %v2582, 0.0
      %v2615 = vmax.f32 %v2583, 0.0
      %v2616 = vmax.f32 %v2584, 0.0
      %v2617 = vmax.f32 %v2585, 0.0
      %v2618 = vmax.f32 %v2586, 0.0
      %v2619 = vmax.f32 %v2587, 0.0
      %v2620 = vmax.f32 %v2588, 0.0
      %v2621 = vmax.f32 %v2589, 0.0
      %v2622 = vmax.f32 %v2590, 0.0
      %v2623 = vmax.f32 %v2591, 0.0
      %v2624 = vmax.f32 %v2592, 0.0
      %v2625 = vmax.f32 %v2593, 0.0
      %v2626 = vmax.f32 %v2594, 0.0
      %v2627 = vmax.f32 %v2595, 0.0
      %v2628 = vmax.f32 %v2596, 0.0
      %v2629 = vmax.f32 %v2597, 0.0
      %v2630 = vmax.f32 %v2598, 0.0
      %v2631 = vmax.f32 %v2599, 0.0
      %v2632 = vmax.f32 %v2600, 0.0
      %v2633 = vmax.f32 %v2601, 0.0
      %v2634 = vmax.f32 %v2602, 0.0
      %v2635 = vmax.f32 %v2603, 0.0
      %v2636 = vmax.f32 %v2604, 0.0
      %v2637 = vmax.f32 %v2605, 0.0
      %v2638 = vmax.f32 %v2606, 0.0
      %v2639 = vpack.c.bf16 %v2608, %v2607
      %v2640 = vpack.c.bf16 %v2610, %v2609
      %v2641 = vpack.c.bf16 %v2612, %v2611
      %v2642 = vpack.c.bf16 %v2614, %v2613
      %v2643 = vpack.c.bf16 %v2616, %v2615
      %v2644 = vpack.c.bf16 %v2618, %v2617
      %v2645 = vpack.c.bf16 %v2620, %v2619
      %v2646 = vpack.c.bf16 %v2622, %v2621
      %v2647 = vpack.c.bf16 %v2624, %v2623
      %v2648 = vpack.c.bf16 %v2626, %v2625
      %v2649 = vpack.c.bf16 %v2628, %v2627
      %v2650 = vpack.c.bf16 %v2630, %v2629
      %v2651 = vpack.c.bf16 %v2632, %v2631
      %v2652 = vpack.c.bf16 %v2634, %v2633
      %v2653 = vpack.c.bf16 %v2636, %v2635
      %v2654 = vpack.c.bf16 %v2638, %v2637
      %v2671 = vunpack.c.l.b16 %v2639
      %v2672 = vunpack.c.h.b16 %v2639
      %v2673 = vunpack.c.l.b16 %v2640
      %v2674 = vunpack.c.h.b16 %v2640
      %v2675 = vunpack.c.l.b16 %v2641
      %v2676 = vunpack.c.h.b16 %v2641
      %v2677 = vunpack.c.l.b16 %v2642
      %v2678 = vunpack.c.h.b16 %v2642
      %v2679 = vunpack.c.l.b16 %v2643
      %v2680 = vunpack.c.h.b16 %v2643
      %v2681 = vunpack.c.l.b16 %v2644
      %v2682 = vunpack.c.h.b16 %v2644
      %v2683 = vunpack.c.l.b16 %v2645
      %v2684 = vunpack.c.h.b16 %v2645
      %v2685 = vunpack.c.l.b16 %v2646
      %v2686 = vunpack.c.h.b16 %v2646
      %v2687 = vunpack.c.l.b16 %v2647
      %v2688 = vunpack.c.h.b16 %v2647
      %v2689 = vunpack.c.l.b16 %v2648
      %v2690 = vunpack.c.h.b16 %v2648
      %v2691 = vunpack.c.l.b16 %v2649
      %v2692 = vunpack.c.h.b16 %v2649
      %v2693 = vunpack.c.l.b16 %v2650
      %v2694 = vunpack.c.h.b16 %v2650
      %v2695 = vunpack.c.l.b16 %v2651
      %v2696 = vunpack.c.h.b16 %v2651
      %v2697 = vunpack.c.l.b16 %v2652
      %v2698 = vunpack.c.h.b16 %v2652
      %v2699 = vunpack.c.l.b16 %v2653
      %v2700 = vunpack.c.h.b16 %v2653
      %v2701 = vunpack.c.l.b16 %v2654
      %v2702 = vunpack.c.h.b16 %v2654
      %v2703 = vpack.c.b16 %v2671, %v2671
      %v2704 = vpack.c.b16 %v2672, %v2672
      %v2705 = vpack.c.b16 %v2673, %v2673
      %v2706 = vpack.c.b16 %v2674, %v2674
      %v2707 = vpack.c.b16 %v2675, %v2675
      %v2708 = vpack.c.b16 %v2676, %v2676
      %v2709 = vpack.c.b16 %v2677, %v2677
      %v2710 = vpack.c.b16 %v2678, %v2678
      %v2711 = vpack.c.b16 %v2679, %v2679
      %v2712 = vpack.c.b16 %v2680, %v2680
      %v2713 = vpack.c.b16 %v2681, %v2681
      %v2714 = vpack.c.b16 %v2682, %v2682
      %v2715 = vpack.c.b16 %v2683, %v2683
      %v2716 = vpack.c.b16 %v2684, %v2684
      %v2717 = vpack.c.b16 %v2685, %v2685
      %v2718 = vpack.c.b16 %v2686, %v2686
      %v2719 = vpack.c.b16 %v2687, %v2687
      %v2720 = vpack.c.b16 %v2688, %v2688
      %v2721 = vpack.c.b16 %v2689, %v2689
      %v2722 = vpack.c.b16 %v2690, %v2690
      %v2723 = vpack.c.b16 %v2691, %v2691
      %v2724 = vpack.c.b16 %v2692, %v2692
      %v2725 = vpack.c.b16 %v2693, %v2693
      %v2726 = vpack.c.b16 %v2694, %v2694
      %v2727 = vpack.c.b16 %v2695, %v2695
      %v2728 = vpack.c.b16 %v2696, %v2696
      %v2729 = vpack.c.b16 %v2697, %v2697
      %v2730 = vpack.c.b16 %v2698, %v2698
      %v2731 = vpack.c.b16 %v2699, %v2699
      %v2732 = vpack.c.b16 %v2700, %v2700
      %v2733 = vpack.c.b16 %v2701, %v2701
      %v2734 = vpack.c.b16 %v2702, %v2702
      %2767 = vst [vmem:[%s224] sm:$0xf] %v2703
      %2768 = vst [vmem:[%s224 + $0x4] sm:$0xf] %v2704
      %2769 = vst [vmem:[%s224 + $0x8] sm:$0xf] %v2705
      %2770 = vst [vmem:[%s224 + $0xc] sm:$0xf] %v2706
      %2771 = vst [vmem:[%s224 + $0x10] sm:$0xf] %v2707
      %2772 = vst [vmem:[%s224 + $0x14] sm:$0xf] %v2708
      %2773 = vst [vmem:[%s224 + $0x18] sm:$0xf] %v2709
      %2774 = vst [vmem:[%s224 + $0x1c] sm:$0xf] %v2710
      %2775 = vst [vmem:[%s224 + $0x20] sm:$0xf] %v2711
      %2776 = vst [vmem:[%s224 + $0x24] sm:$0xf] %v2712
      %2777 = vst [vmem:[%s224 + $0x28] sm:$0xf] %v2713
      %2778 = vst [vmem:[%s224 + $0x2c] sm:$0xf] %v2714
      %2779 = vst [vmem:[%s224 + $0x30] sm:$0xf] %v2715
      %2780 = vst [vmem:[%s224 + $0x34] sm:$0xf] %v2716
      %2781 = vst [vmem:[%s224 + $0x38] sm:$0xf] %v2717
      %2782 = vst [vmem:[%s224 + $0x3c] sm:$0xf] %v2718
      %2783 = vst [vmem:[%s224 + $0x40] sm:$0xf] %v2719
      %2784 = vst [vmem:[%s224 + $0x44] sm:$0xf] %v2720
      %2785 = vst [vmem:[%s224 + $0x48] sm:$0xf] %v2721
      %2786 = vst [vmem:[%s224 + $0x4c] sm:$0xf] %v2722
      %2787 = vst [vmem:[%s224 + $0x50] sm:$0xf] %v2723
      %2788 = vst [vmem:[%s224 + $0x54] sm:$0xf] %v2724
      %2789 = vst [vmem:[%s224 + $0x58] sm:$0xf] %v2725
      %2790 = vst [vmem:[%s224 + $0x5c] sm:$0xf] %v2726
      %2791 = vst [vmem:[%s224 + $0x60] sm:$0xf] %v2727
      %2792 = vst [vmem:[%s224 + $0x64] sm:$0xf] %v2728
      %2793 = vst [vmem:[%s224 + $0x68] sm:$0xf] %v2729
      %2794 = vst [vmem:[%s224 + $0x6c] sm:$0xf] %v2730
      %2795 = vst [vmem:[%s224 + $0x70] sm:$0xf] %v2731
      %2796 = vst [vmem:[%s224 + $0x74] sm:$0xf] %v2732
      %2797 = vst [vmem:[%s224 + $0x78] sm:$0xf] %v2733
      %2798 = vst [vmem:[%s224 + $0x7c] sm:$0xf] %v2734
      %s2799 = smul.u32 32, %s15
      %p2800 = scmp.lt.s32.totalorder %s2799, 63
      %s2801 = scalar_select %p2800, %s2799, 63
      %s2802 = smul.addr %s2801, 4
      %s2803 = scalar_lea.vmem %s4, %s2802
      // Predicated region
      $region37: #{resnet_tsa_forward.12} parent=35 // pred_check
        %p2804 = pneg %p127
      $region38: #{resnet_tsa_forward.12} parent=35 // pred_check_branch
        %2806 = sbr.rel (%p2804) target = $region40
      $region39: #{resnet_tsa_forward.12} parent=35 // pred_region
        %s2807 = smul.u32 32, %s15
      $region40: #{resnet_tsa_forward.12} parent=35 // pred_fallthru
        _
    $region36: #{resnet_tsa_forward.12} parent=5 // pred_fallthru
      _
    %p2808 = scmp.le.s32.totalorder 2, %s10
    // Predicated region
    $region41: #{resnet_tsa_forward.12} parent=5 // pred_check
      %p2809 = pneg %p2808
    $region42: #{resnet_tsa_forward.12} parent=5 // pred_check_branch
      %2811 = sbr.rel (%p2809) target = $region44
    $region43: #{resnet_tsa_forward.12} parent=5 // pred_region
      %s2812 = ssub.s32 %s10, 2
      // Predicated region
      $region45: #{resnet_tsa_forward.12} parent=43 // pred_check
        %p2813 = pneg %p133
      $region46: #{resnet_tsa_forward.12} parent=43 // pred_check_branch
        %2815 = sbr.rel (%p2813) target = $region48
      $region47: #{resnet_tsa_forward.12} parent=43 // pred_region
        %s2816 = smul.u32 32, %s16
        %p2817 = scmp.lt.s32.totalorder %s2816, 63
        %s2818 = scalar_select %p2817, %s2816, 63
        %s2819 = smul.addr %s2818, 4
        %s2820 = scalar_lea.vmem %s4, %s2819
      $region48: #{resnet_tsa_forward.12} parent=43 // pred_fallthru
        _
    $region44: #{resnet_tsa_forward.12} parent=5 // pred_fallthru
      _
  $region6: #{resnet_tsa_forward.12} parent=0 // loop_footer
    %s14 = sadd.s32 1, %s10
  $region7: #{resnet_tsa_forward.12} parent=0 // loop_footer_branch
    %9 = sbr.rel target = $region3
  $region8: #{resnet_tsa_forward.12} parent=0 // loop_exit
    _

// kernel: resnet_tsa_forward.13
$region0: #{resnet_tsa_forward.13}
  #allocation0 [shape = 'u32[]', space=smem, size = 0x4, offset = 0x4, fixed_abs, tag = 'smem constant byte address 0x4 - core index']
  #allocation1 [shape = 'u32[144,128]{1,0:T(1,128)}', space=vmem, size = 0x12000, scoped, tag = 'internal scratch']
  %s0 = inlined_call_operand.vmem [shape: bf16[128,1152], index: 0, kind: input, shape index: {}]
  %s1 = inlined_call_operand.vmem [shape: bf16[1152,128], index: 1, kind: input, shape index: {}]
  %s2 = inlined_call_operand.vmem [shape: f32[1,128], index: 2, kind: input, shape index: {}]
  %s3 = inlined_call_operand.vmem [shape: bf16[128,128], index: 3, kind: output, shape index: {}]
  %s4 = sld [smem:[#allocation0]]
  $region22: #{resnet_tsa_forward.13} parent=0
    _
  %s6 = ssub.s32 1, %s4
  %s7 = scalar_select 0, %s6, %s4
  // Predicated region
  $region2: #{resnet_tsa_forward.13} parent=0 // pred_check
    _
  $region3: #{resnet_tsa_forward.13} parent=0 // pred_check_branch
    %9 = sbr.rel (0) target = $region5
  $region4: #{resnet_tsa_forward.13} parent=0 // pred_region
    _
  $region5: #{resnet_tsa_forward.13} parent=0 // pred_fallthru
    _
  // Predicated region
  $region6: #{resnet_tsa_forward.13} parent=0 // pred_check
    _
  $region7: #{resnet_tsa_forward.13} parent=0 // pred_check_branch
    %11 = sbr.rel (0) target = $region9
  $region8: #{resnet_tsa_forward.13} parent=0 // pred_region
    _
  $region9: #{resnet_tsa_forward.13} parent=0 // pred_fallthru
    _
  // Predicated region
  $region10: #{resnet_tsa_forward.13} parent=0 // pred_check
    _
  $region11: #{resnet_tsa_forward.13} parent=0 // pred_check_branch
    %13 = sbr.rel (0) target = $region13
  $region12: #{resnet_tsa_forward.13} parent=0 // pred_region
    _
  $region13: #{resnet_tsa_forward.13} parent=0 // pred_fallthru
    _
  %v15 = vld [vmem:[%s0] sm:$0xff]
  %v16 = vld [vmem:[%s0 + $0x8] sm:$0xff]
  %v17 = vld [vmem:[%s0 + $0x10] sm:$0xff]
  %v18 = vld [vmem:[%s0 + $0x18] sm:$0xff]
  %v19 = vld [vmem:[%s0 + $0x20] sm:$0xf]
  %v20 = vld [vmem:[%s0 + $0x24] sm:$0xff]
  %v21 = vld [vmem:[%s0 + $0x2c] sm:$0xff]
  %v22 = vld [vmem:[%s0 + $0x34] sm:$0xff]
  %v23 = vld [vmem:[%s0 + $0x3c] sm:$0xff]
  %v24 = vld [vmem:[%s0 + $0x44] sm:$0xf]
  %v25 = vld [vmem:[%s0 + $0x48] sm:$0xff]
  %v26 = vld [vmem:[%s0 + $0x50] sm:$0xff]
  %v27 = vld [vmem:[%s0 + $0x58] sm:$0xff]
  %v28 = vld [vmem:[%s0 + $0x60] sm:$0xff]
  %v29 = vld [vmem:[%s0 + $0x68] sm:$0xf]
  %v30 = vld [vmem:[%s0 + $0x6c] sm:$0xff]
  %v31 = vld [vmem:[%s0 + $0x74] sm:$0xff]
  %v32 = vld [vmem:[%s0 + $0x7c] sm:$0xff]
  %v33 = vld [vmem:[%s0 + $0x84] sm:$0xff]
  %v34 = vld [vmem:[%s0 + $0x8c] sm:$0xf]
  %v35 = vld [vmem:[%s0 + $0x90] sm:$0xff]
  %v36 = vld [vmem:[%s0 + $0x98] sm:$0xff]
  %v37 = vld [vmem:[%s0 + $0xa0] sm:$0xff]
  %v38 = vld [vmem:[%s0 + $0xa8] sm:$0xff]
  %v39 = vld [vmem:[%s0 + $0xb0] sm:$0xf]
  %v40 = vld [vmem:[%s0 + $0xb4] sm:$0xff]
  %v41 = vld [vmem:[%s0 + $0xbc] sm:$0xff]
  %v42 = vld [vmem:[%s0 + $0xc4] sm:$0xff]
  %v43 = vld [vmem:[%s0 + $0xcc] sm:$0xff]
  %v44 = vld [vmem:[%s0 + $0xd4] sm:$0xf]
  %v45 = vld [vmem:[%s0 + $0xd8] sm:$0xff]
  %v46 = vld [vmem:[%s0 + $0xe0] sm:$0xff]
  %v47 = vld [vmem:[%s0 + $0xe8] sm:$0xff]
  %v48 = vld [vmem:[%s0 + $0xf0] sm:$0xff]
  %v49 = vld [vmem:[%s0 + $0xf8] sm:$0xf]
  %v50 = vld [vmem:[%s0 + $0xfc] sm:$0xff]
  %v51 = vld [vmem:[%s0 + $0x104] sm:$0xff]
  %v52 = vld [vmem:[%s0 + $0x10c] sm:$0xff]
  %v53 = vld [vmem:[%s0 + $0x114] sm:$0xff]
  %v54 = vld [vmem:[%s0 + $0x11c] sm:$0xf]
  %v55 = vld [vmem:[%s0 + $0x120] sm:$0xff]
  %v56 = vld [vmem:[%s0 + $0x128] sm:$0xff]
  %v57 = vld [vmem:[%s0 + $0x130] sm:$0xff]
  %v58 = vld [vmem:[%s0 + $0x138] sm:$0xff]
  %v59 = vld [vmem:[%s0 + $0x140] sm:$0xf]
  %v60 = vld [vmem:[%s0 + $0x144] sm:$0xff]
  %v61 = vld [vmem:[%s0 + $0x14c] sm:$0xff]
  %v62 = vld [vmem:[%s0 + $0x154] sm:$0xff]
  %v63 = vld [vmem:[%s0 + $0x15c] sm:$0xff]
  %v64 = vld [vmem:[%s0 + $0x164] sm:$0xf]
  %v65 = vld [vmem:[%s0 + $0x168] sm:$0xff]
  %v66 = vld [vmem:[%s0 + $0x170] sm:$0xff]
  %v67 = vld [vmem:[%s0 + $0x178] sm:$0xff]
  %v68 = vld [vmem:[%s0 + $0x180] sm:$0xff]
  %v69 = vld [vmem:[%s0 + $0x188] sm:$0xf]
  %v70 = vld [vmem:[%s0 + $0x18c] sm:$0xff]
  %v71 = vld [vmem:[%s0 + $0x194] sm:$0xff]
  %v72 = vld [vmem:[%s0 + $0x19c] sm:$0xff]
  %v73 = vld [vmem:[%s0 + $0x1a4] sm:$0xff]
  %v74 = vld [vmem:[%s0 + $0x1ac] sm:$0xf]
  %v75 = vld [vmem:[%s0 + $0x1b0] sm:$0xff]
  %v76 = vld [vmem:[%s0 + $0x1b8] sm:$0xff]
  %v77 = vld [vmem:[%s0 + $0x1c0] sm:$0xff]
  %v78 = vld [vmem:[%s0 + $0x1c8] sm:$0xff]
  %v79 = vld [vmem:[%s0 + $0x1d0] sm:$0xf]
  %v80 = vld [vmem:[%s0 + $0x1d4] sm:$0xff]
  %v81 = vld [vmem:[%s0 + $0x1dc] sm:$0xff]
  %v82 = vld [vmem:[%s0 + $0x1e4] sm:$0xff]
  %v83 = vld [vmem:[%s0 + $0x1ec] sm:$0xff]
  %v84 = vld [vmem:[%s0 + $0x1f4] sm:$0xf]
  %v85 = vld [vmem:[%s0 + $0x1f8] sm:$0xff]
  %v86 = vld [vmem:[%s0 + $0x200] sm:$0xff]
  %v87 = vld [vmem:[%s0 + $0x208] sm:$0xff]
  %v88 = vld [vmem:[%s0 + $0x210] sm:$0xff]
  %v89 = vld [vmem:[%s0 + $0x218] sm:$0xf]
  %v90 = vld [vmem:[%s0 + $0x21c] sm:$0xff]
  %v91 = vld [vmem:[%s0 + $0x224] sm:$0xff]
  %v92 = vld [vmem:[%s0 + $0x22c] sm:$0xff]
  %v93 = vld [vmem:[%s0 + $0x234] sm:$0xff]
  %v94 = vld [vmem:[%s0 + $0x23c] sm:$0xf]
  %v95 = vld [vmem:[%s1] sm:$0xf]
  %v96 = vld [vmem:[%s1 + $0x4] sm:$0xf]
  %v97 = vld [vmem:[%s1 + $0x8] sm:$0xf]
  %v98 = vld [vmem:[%s1 + $0xc] sm:$0xf]
  %v99 = vld [vmem:[%s1 + $0x10] sm:$0xf]
  %v100 = vld [vmem:[%s1 + $0x14] sm:$0xf]
  %v101 = vld [vmem:[%s1 + $0x18] sm:$0xf]
  %v102 = vld [vmem:[%s1 + $0x1c] sm:$0xf]
  %v103 = vld [vmem:[%s1 + $0x20] sm:$0xf]
  %v104 = vld [vmem:[%s1 + $0x24] sm:$0xf]
  %v105 = vld [vmem:[%s1 + $0x28] sm:$0xf]
  %v106 = vld [vmem:[%s1 + $0x2c] sm:$0xf]
  %v107 = vld [vmem:[%s1 + $0x30] sm:$0xf]
  %v108 = vld [vmem:[%s1 + $0x34] sm:$0xf]
  %v109 = vld [vmem:[%s1 + $0x38] sm:$0xf]
  %v110 = vld [vmem:[%s1 + $0x3c] sm:$0xf]
  %v111 = vld [vmem:[%s1 + $0x40] sm:$0xf]
  %v112 = vld [vmem:[%s1 + $0x44] sm:$0xf]
  %v113 = vld [vmem:[%s1 + $0x48] sm:$0xf]
  %v114 = vld [vmem:[%s1 + $0x4c] sm:$0xf]
  %v115 = vld [vmem:[%s1 + $0x50] sm:$0xf]
  %v116 = vld [vmem:[%s1 + $0x54] sm:$0xf]
  %v117 = vld [vmem:[%s1 + $0x58] sm:$0xf]
  %v118 = vld [vmem:[%s1 + $0x5c] sm:$0xf]
  %v119 = vld [vmem:[%s1 + $0x60] sm:$0xf]
  %v120 = vld [vmem:[%s1 + $0x64] sm:$0xf]
  %v121 = vld [vmem:[%s1 + $0x68] sm:$0xf]
  %v122 = vld [vmem:[%s1 + $0x6c] sm:$0xf]
  %v123 = vld [vmem:[%s1 + $0x70] sm:$0xf]
  %v124 = vld [vmem:[%s1 + $0x74] sm:$0xf]
  %v125 = vld [vmem:[%s1 + $0x78] sm:$0xf]
  %v126 = vld [vmem:[%s1 + $0x7c] sm:$0xf]
  %v127 = vld [vmem:[%s1 + $0x80] sm:$0xf]
  %v128 = vld [vmem:[%s1 + $0x84] sm:$0xf]
  %v129 = vld [vmem:[%s1 + $0x88] sm:$0xf]
  %v130 = vld [vmem:[%s1 + $0x8c] sm:$0xf]
  %v131 = vld [vmem:[%s1 + $0x90] sm:$0xf]
  %v132 = vld [vmem:[%s1 + $0x94] sm:$0xf]
  %v133 = vld [vmem:[%s1 + $0x98] sm:$0xf]
  %v134 = vld [vmem:[%s1 + $0x9c] sm:$0xf]
  %v135 = vld [vmem:[%s1 + $0xa0] sm:$0xf]
  %v136 = vld [vmem:[%s1 + $0xa4] sm:$0xf]
  %v137 = vld [vmem:[%s1 + $0xa8] sm:$0xf]
  %v138 = vld [vmem:[%s1 + $0xac] sm:$0xf]
  %v139 = vld [vmem:[%s1 + $0xb0] sm:$0xf]
  %v140 = vld [vmem:[%s1 + $0xb4] sm:$0xf]
  %v141 = vld [vmem:[%s1 + $0xb8] sm:$0xf]
  %v142 = vld [vmem:[%s1 + $0xbc] sm:$0xf]
  %v143 = vld [vmem:[%s1 + $0xc0] sm:$0xf]
  %v144 = vld [vmem:[%s1 + $0xc4] sm:$0xf]
  %v145 = vld [vmem:[%s1 + $0xc8] sm:$0xf]
  %v146 = vld [vmem:[%s1 + $0xcc] sm:$0xf]
  %v147 = vld [vmem:[%s1 + $0xd0] sm:$0xf]
  %v148 = vld [vmem:[%s1 + $0xd4] sm:$0xf]
  %v149 = vld [vmem:[%s1 + $0xd8] sm:$0xf]
  %v150 = vld [vmem:[%s1 + $0xdc] sm:$0xf]
  %v151 = vld [vmem:[%s1 + $0xe0] sm:$0xf]
  %v152 = vld [vmem:[%s1 + $0xe4] sm:$0xf]
  %v153 = vld [vmem:[%s1 + $0xe8] sm:$0xf]
  %v154 = vld [vmem:[%s1 + $0xec] sm:$0xf]
  %v155 = vld [vmem:[%s1 + $0xf0] sm:$0xf]
  %v156 = vld [vmem:[%s1 + $0xf4] sm:$0xf]
  %v157 = vld [vmem:[%s1 + $0xf8] sm:$0xf]
  %v158 = vld [vmem:[%s1 + $0xfc] sm:$0xf]
  %v159 = vld [vmem:[%s1 + $0x100] sm:$0xf]
  %v160 = vld [vmem:[%s1 + $0x104] sm:$0xf]
  %v161 = vld [vmem:[%s1 + $0x108] sm:$0xf]
  %v162 = vld [vmem:[%s1 + $0x10c] sm:$0xf]
  %v163 = vld [vmem:[%s1 + $0x110] sm:$0xf]
  %v164 = vld [vmem:[%s1 + $0x114] sm:$0xf]
  %v165 = vld [vmem:[%s1 + $0x118] sm:$0xf]
  %v166 = vld [vmem:[%s1 + $0x11c] sm:$0xf]
  %v167 = vld [vmem:[%s1 + $0x120] sm:$0xf]
  %v168 = vld [vmem:[%s1 + $0x124] sm:$0xf]
  %v169 = vld [vmem:[%s1 + $0x128] sm:$0xf]
  %v170 = vld [vmem:[%s1 + $0x12c] sm:$0xf]
  %v171 = vld [vmem:[%s1 + $0x130] sm:$0xf]
  %v172 = vld [vmem:[%s1 + $0x134] sm:$0xf]
  %v173 = vld [vmem:[%s1 + $0x138] sm:$0xf]
  %v174 = vld [vmem:[%s1 + $0x13c] sm:$0xf]
  %v175 = vld [vmem:[%s1 + $0x140] sm:$0xf]
  %v176 = vld [vmem:[%s1 + $0x144] sm:$0xf]
  %v177 = vld [vmem:[%s1 + $0x148] sm:$0xf]
  %v178 = vld [vmem:[%s1 + $0x14c] sm:$0xf]
  %v179 = vld [vmem:[%s1 + $0x150] sm:$0xf]
  %v180 = vld [vmem:[%s1 + $0x154] sm:$0xf]
  %v181 = vld [vmem:[%s1 + $0x158] sm:$0xf]
  %v182 = vld [vmem:[%s1 + $0x15c] sm:$0xf]
  %v183 = vld [vmem:[%s1 + $0x160] sm:$0xf]
  %v184 = vld [vmem:[%s1 + $0x164] sm:$0xf]
  %v185 = vld [vmem:[%s1 + $0x168] sm:$0xf]
  %v186 = vld [vmem:[%s1 + $0x16c] sm:$0xf]
  %v187 = vld [vmem:[%s1 + $0x170] sm:$0xf]
  %v188 = vld [vmem:[%s1 + $0x174] sm:$0xf]
  %v189 = vld [vmem:[%s1 + $0x178] sm:$0xf]
  %v190 = vld [vmem:[%s1 + $0x17c] sm:$0xf]
  %v191 = vld [vmem:[%s1 + $0x180] sm:$0xf]
  %v192 = vld [vmem:[%s1 + $0x184] sm:$0xf]
  %v193 = vld [vmem:[%s1 + $0x188] sm:$0xf]
  %v194 = vld [vmem:[%s1 + $0x18c] sm:$0xf]
  %v195 = vld [vmem:[%s1 + $0x190] sm:$0xf]
  %v196 = vld [vmem:[%s1 + $0x194] sm:$0xf]
  %v197 = vld [vmem:[%s1 + $0x198] sm:$0xf]
  %v198 = vld [vmem:[%s1 + $0x19c] sm:$0xf]
  %v199 = vld [vmem:[%s1 + $0x1a0] sm:$0xf]
  %v200 = vld [vmem:[%s1 + $0x1a4] sm:$0xf]
  %v201 = vld [vmem:[%s1 + $0x1a8] sm:$0xf]
  %v202 = vld [vmem:[%s1 + $0x1ac] sm:$0xf]
  %v203 = vld [vmem:[%s1 + $0x1b0] sm:$0xf]
  %v204 = vld [vmem:[%s1 + $0x1b4] sm:$0xf]
  %v205 = vld [vmem:[%s1 + $0x1b8] sm:$0xf]
  %v206 = vld [vmem:[%s1 + $0x1bc] sm:$0xf]
  %v207 = vld [vmem:[%s1 + $0x1c0] sm:$0xf]
  %v208 = vld [vmem:[%s1 + $0x1c4] sm:$0xf]
  %v209 = vld [vmem:[%s1 + $0x1c8] sm:$0xf]
  %v210 = vld [vmem:[%s1 + $0x1cc] sm:$0xf]
  %v211 = vld [vmem:[%s1 + $0x1d0] sm:$0xf]
  %v212 = vld [vmem:[%s1 + $0x1d4] sm:$0xf]
  %v213 = vld [vmem:[%s1 + $0x1d8] sm:$0xf]
  %v214 = vld [vmem:[%s1 + $0x1dc] sm:$0xf]
  %v215 = vld [vmem:[%s1 + $0x1e0] sm:$0xf]
  %v216 = vld [vmem:[%s1 + $0x1e4] sm:$0xf]
  %v217 = vld [vmem:[%s1 + $0x1e8] sm:$0xf]
  %v218 = vld [vmem:[%s1 + $0x1ec] sm:$0xf]
  %v219 = vld [vmem:[%s1 + $0x1f0] sm:$0xf]
  %v220 = vld [vmem:[%s1 + $0x1f4] sm:$0xf]
  %v221 = vld [vmem:[%s1 + $0x1f8] sm:$0xf]
  %v222 = vld [vmem:[%s1 + $0x1fc] sm:$0xf]
  %v223 = vld [vmem:[%s1 + $0x200] sm:$0xf]
  %v224 = vld [vmem:[%s1 + $0x204] sm:$0xf]
  %v225 = vld [vmem:[%s1 + $0x208] sm:$0xf]
  %v226 = vld [vmem:[%s1 + $0x20c] sm:$0xf]
  %v227 = vld [vmem:[%s1 + $0x210] sm:$0xf]
  %v228 = vld [vmem:[%s1 + $0x214] sm:$0xf]
  %v229 = vld [vmem:[%s1 + $0x218] sm:$0xf]
  %v230 = vld [vmem:[%s1 + $0x21c] sm:$0xf]
  %v231 = vld [vmem:[%s1 + $0x220] sm:$0xf]
  %v232 = vld [vmem:[%s1 + $0x224] sm:$0xf]
  %v233 = vld [vmem:[%s1 + $0x228] sm:$0xf]
  %v234 = vld [vmem:[%s1 + $0x22c] sm:$0xf]
  %v235 = vld [vmem:[%s1 + $0x230] sm:$0xf]
  %v236 = vld [vmem:[%s1 + $0x234] sm:$0xf]
  %v237 = vld [vmem:[%s1 + $0x238] sm:$0xf]
  %v238 = vld [vmem:[%s1 + $0x23c] sm:$0xf]
  %v239 = vld [vmem:[%s2] sm:$0x1]
  %v241 = vlaneseq
  %v242 = vshrl.u32 %v241, 7
  %v243 = vsub.s32 0, %v242
  %v244 = vrot.slane %v239, %v243
  %v326 = vunpack.c.l.b16 %v15
  %v327 = vunpack.c.h.b16 %v15
  %v328 = vunpack.c.l.b16 %v16
  %v329 = vunpack.c.h.b16 %v16
  %v330 = vunpack.c.l.b16 %v17
  %v331 = vunpack.c.h.b16 %v17
  %v332 = vunpack.c.l.b16 %v18
  %v333 = vunpack.c.h.b16 %v18
  %v334 = vunpack.c.l.b16 %v19
  %v335 = vunpack.c.l.b16 %v20
  %v336 = vunpack.c.h.b16 %v20
  %v337 = vunpack.c.l.b16 %v21
  %v338 = vunpack.c.h.b16 %v21
  %v339 = vunpack.c.l.b16 %v22
  %v340 = vunpack.c.h.b16 %v22
  %v341 = vunpack.c.l.b16 %v23
  %v342 = vunpack.c.h.b16 %v23
  %v343 = vunpack.c.l.b16 %v24
  %v344 = vunpack.c.l.b16 %v25
  %v345 = vunpack.c.h.b16 %v25
  %v346 = vunpack.c.l.b16 %v26
  %v347 = vunpack.c.h.b16 %v26
  %v348 = vunpack.c.l.b16 %v27
  %v349 = vunpack.c.h.b16 %v27
  %v350 = vunpack.c.l.b16 %v28
  %v351 = vunpack.c.h.b16 %v28
  %v352 = vunpack.c.l.b16 %v29
  %v353 = vunpack.c.l.b16 %v30
  %v354 = vunpack.c.h.b16 %v30
  %v355 = vunpack.c.l.b16 %v31
  %v356 = vunpack.c.h.b16 %v31
  %v357 = vunpack.c.l.b16 %v32
  %v358 = vunpack.c.h.b16 %v32
  %v359 = vunpack.c.l.b16 %v33
  %v360 = vunpack.c.h.b16 %v33
  %v361 = vunpack.c.l.b16 %v34
  %v362 = vunpack.c.l.b16 %v35
  %v363 = vunpack.c.h.b16 %v35
  %v364 = vunpack.c.l.b16 %v36
  %v365 = vunpack.c.h.b16 %v36
  %v366 = vunpack.c.l.b16 %v37
  %v367 = vunpack.c.h.b16 %v37
  %v368 = vunpack.c.l.b16 %v38
  %v369 = vunpack.c.h.b16 %v38
  %v370 = vunpack.c.l.b16 %v39
  %v371 = vunpack.c.l.b16 %v40
  %v372 = vunpack.c.h.b16 %v40
  %v373 = vunpack.c.l.b16 %v41
  %v374 = vunpack.c.h.b16 %v41
  %v375 = vunpack.c.l.b16 %v42
  %v376 = vunpack.c.h.b16 %v42
  %v377 = vunpack.c.l.b16 %v43
  %v378 = vunpack.c.h.b16 %v43
  %v379 = vunpack.c.l.b16 %v44
  %v380 = vunpack.c.l.b16 %v45
  %v381 = vunpack.c.h.b16 %v45
  %v382 = vunpack.c.l.b16 %v46
  %v383 = vunpack.c.h.b16 %v46
  %v384 = vunpack.c.l.b16 %v47
  %v385 = vunpack.c.h.b16 %v47
  %v386 = vunpack.c.l.b16 %v48
  %v387 = vunpack.c.h.b16 %v48
  %v388 = vunpack.c.l.b16 %v49
  %v389 = vunpack.c.l.b16 %v50
  %v390 = vunpack.c.h.b16 %v50
  %v391 = vunpack.c.l.b16 %v51
  %v392 = vunpack.c.h.b16 %v51
  %v393 = vunpack.c.l.b16 %v52
  %v394 = vunpack.c.h.b16 %v52
  %v395 = vunpack.c.l.b16 %v53
  %v396 = vunpack.c.h.b16 %v53
  %v397 = vunpack.c.l.b16 %v54
  %v398 = vunpack.c.l.b16 %v55
  %v399 = vunpack.c.h.b16 %v55
  %v400 = vunpack.c.l.b16 %v56
  %v401 = vunpack.c.h.b16 %v56
  %v402 = vunpack.c.l.b16 %v57
  %v403 = vunpack.c.h.b16 %v57
  %v404 = vunpack.c.l.b16 %v58
  %v405 = vunpack.c.h.b16 %v58
  %v406 = vunpack.c.l.b16 %v59
  %v407 = vunpack.c.l.b16 %v60
  %v408 = vunpack.c.h.b16 %v60
  %v409 = vunpack.c.l.b16 %v61
  %v410 = vunpack.c.h.b16 %v61
  %v411 = vunpack.c.l.b16 %v62
  %v412 = vunpack.c.h.b16 %v62
  %v413 = vunpack.c.l.b16 %v63
  %v414 = vunpack.c.h.b16 %v63
  %v415 = vunpack.c.l.b16 %v64
  %v416 = vunpack.c.l.b16 %v65
  %v417 = vunpack.c.h.b16 %v65
  %v418 = vunpack.c.l.b16 %v66
  %v419 = vunpack.c.h.b16 %v66
  %v420 = vunpack.c.l.b16 %v67
  %v421 = vunpack.c.h.b16 %v67
  %v422 = vunpack.c.l.b16 %v68
  %v423 = vunpack.c.h.b16 %v68
  %v424 = vunpack.c.l.b16 %v69
  %v425 = vunpack.c.l.b16 %v70
  %v426 = vunpack.c.h.b16 %v70
  %v427 = vunpack.c.l.b16 %v71
  %v428 = vunpack.c.h.b16 %v71
  %v429 = vunpack.c.l.b16 %v72
  %v430 = vunpack.c.h.b16 %v72
  %v431 = vunpack.c.l.b16 %v73
  %v432 = vunpack.c.h.b16 %v73
  %v433 = vunpack.c.l.b16 %v74
  %v434 = vunpack.c.l.b16 %v75
  %v435 = vunpack.c.h.b16 %v75
  %v436 = vunpack.c.l.b16 %v76
  %v437 = vunpack.c.h.b16 %v76
  %v438 = vunpack.c.l.b16 %v77
  %v439 = vunpack.c.h.b16 %v77
  %v440 = vunpack.c.l.b16 %v78
  %v441 = vunpack.c.h.b16 %v78
  %v442 = vunpack.c.l.b16 %v79
  %v443 = vunpack.c.l.b16 %v80
  %v444 = vunpack.c.h.b16 %v80
  %v445 = vunpack.c.l.b16 %v81
  %v446 = vunpack.c.h.b16 %v81
  %v447 = vunpack.c.l.b16 %v82
  %v448 = vunpack.c.h.b16 %v82
  %v449 = vunpack.c.l.b16 %v83
  %v450 = vunpack.c.h.b16 %v83
  %v451 = vunpack.c.l.b16 %v84
  %v452 = vunpack.c.l.b16 %v85
  %v453 = vunpack.c.h.b16 %v85
  %v454 = vunpack.c.l.b16 %v86
  %v455 = vunpack.c.h.b16 %v86
  %v456 = vunpack.c.l.b16 %v87
  %v457 = vunpack.c.h.b16 %v87
  %v458 = vunpack.c.l.b16 %v88
  %v459 = vunpack.c.h.b16 %v88
  %v460 = vunpack.c.l.b16 %v89
  %v461 = vunpack.c.l.b16 %v90
  %v462 = vunpack.c.h.b16 %v90
  %v463 = vunpack.c.l.b16 %v91
  %v464 = vunpack.c.h.b16 %v91
  %v465 = vunpack.c.l.b16 %v92
  %v466 = vunpack.c.h.b16 %v92
  %v467 = vunpack.c.l.b16 %v93
  %v468 = vunpack.c.h.b16 %v93
  %v469 = vunpack.c.l.b16 %v94
  %v470 = vpack.c.b16 %v335, %v326
  %v471 = vpack.c.b16 %v336, %v327
  %v472 = vpack.c.b16 %v337, %v328
  %v473 = vpack.c.b16 %v338, %v329
  %v474 = vpack.c.b16 %v339, %v330
  %v475 = vpack.c.b16 %v340, %v331
  %v476 = vpack.c.b16 %v341, %v332
  %v477 = vpack.c.b16 %v342, %v333
  %v478 = vpack.c.b16 %v343, %v334
  %v479 = vpack.c.b16 %v353, %v344
  %v480 = vpack.c.b16 %v354, %v345
  %v481 = vpack.c.b16 %v355, %v346
  %v482 = vpack.c.b16 %v356, %v347
  %v483 = vpack.c.b16 %v357, %v348
  %v484 = vpack.c.b16 %v358, %v349
  %v485 = vpack.c.b16 %v359, %v350
  %v486 = vpack.c.b16 %v360, %v351
  %v487 = vpack.c.b16 %v361, %v352
  %v488 = vpack.c.b16 %v371, %v362
  %v489 = vpack.c.b16 %v372, %v363
  %v490 = vpack.c.b16 %v373, %v364
  %v491 = vpack.c.b16 %v374, %v365
  %v492 = vpack.c.b16 %v375, %v366
  %v493 = vpack.c.b16 %v376, %v367
  %v494 = vpack.c.b16 %v377, %v368
  %v495 = vpack.c.b16 %v378, %v369
  %v496 = vpack.c.b16 %v379, %v370
  %v497 = vpack.c.b16 %v389, %v380
  %v498 = vpack.c.b16 %v390, %v381
  %v499 = vpack.c.b16 %v391, %v382
  %v500 = vpack.c.b16 %v392, %v383
  %v501 = vpack.c.b16 %v393, %v384
  %v502 = vpack.c.b16 %v394, %v385
  %v503 = vpack.c.b16 %v395, %v386
  %v504 = vpack.c.b16 %v396, %v387
  %v505 = vpack.c.b16 %v397, %v388
  %v506 = vpack.c.b16 %v407, %v398
  %v507 = vpack.c.b16 %v408, %v399
  %v508 = vpack.c.b16 %v409, %v400
  %v509 = vpack.c.b16 %v410, %v401
  %v510 = vpack.c.b16 %v411, %v402
  %v511 = vpack.c.b16 %v412, %v403
  %v512 = vpack.c.b16 %v413, %v404
  %v513 = vpack.c.b16 %v414, %v405
  %v514 = vpack.c.b16 %v415, %v406
  %v515 = vpack.c.b16 %v425, %v416
  %v516 = vpack.c.b16 %v426, %v417
  %v517 = vpack.c.b16 %v427, %v418
  %v518 = vpack.c.b16 %v428, %v419
  %v519 = vpack.c.b16 %v429, %v420
  %v520 = vpack.c.b16 %v430, %v421
  %v521 = vpack.c.b16 %v431, %v422
  %v522 = vpack.c.b16 %v432, %v423
  %v523 = vpack.c.b16 %v433, %v424
  %v524 = vpack.c.b16 %v443, %v434
  %v525 = vpack.c.b16 %v444, %v435
  %v526 = vpack.c.b16 %v445, %v436
  %v527 = vpack.c.b16 %v446, %v437
  %v528 = vpack.c.b16 %v447, %v438
  %v529 = vpack.c.b16 %v448, %v439
  %v530 = vpack.c.b16 %v449, %v440
  %v531 = vpack.c.b16 %v450, %v441
  %v532 = vpack.c.b16 %v451, %v442
  %v533 = vpack.c.b16 %v461, %v452
  %v534 = vpack.c.b16 %v462, %v453
  %v535 = vpack.c.b16 %v463, %v454
  %v536 = vpack.c.b16 %v464, %v455
  %v537 = vpack.c.b16 %v465, %v456
  %v538 = vpack.c.b16 %v466, %v457
  %v539 = vpack.c.b16 %v467, %v458
  %v540 = vpack.c.b16 %v468, %v459
  %v541 = vpack.c.b16 %v469, %v460
  %v758 = vunpack.c.l.b16 %v95
  %v759 = vunpack.c.l.b16 %v96
  %v760 = vunpack.c.l.b16 %v97
  %v761 = vunpack.c.l.b16 %v98
  %v762 = vunpack.c.l.b16 %v99
  %v763 = vunpack.c.l.b16 %v100
  %v764 = vunpack.c.l.b16 %v101
  %v765 = vunpack.c.l.b16 %v102
  %v766 = vunpack.c.l.b16 %v103
  %v767 = vunpack.c.l.b16 %v104
  %v768 = vunpack.c.l.b16 %v105
  %v769 = vunpack.c.l.b16 %v106
  %v770 = vunpack.c.l.b16 %v107
  %v771 = vunpack.c.l.b16 %v108
  %v772 = vunpack.c.l.b16 %v109
  %v773 = vunpack.c.l.b16 %v110
  %v774 = vunpack.c.l.b16 %v111
  %v775 = vunpack.c.l.b16 %v112
  %v776 = vunpack.c.l.b16 %v113
  %v777 = vunpack.c.l.b16 %v114
  %v778 = vunpack.c.l.b16 %v115
  %v779 = vunpack.c.l.b16 %v116
  %v780 = vunpack.c.l.b16 %v117
  %v781 = vunpack.c.l.b16 %v118
  %v782 = vunpack.c.l.b16 %v119
  %v783 = vunpack.c.l.b16 %v120
  %v784 = vunpack.c.l.b16 %v121
  %v785 = vunpack.c.l.b16 %v122
  %v786 = vunpack.c.l.b16 %v123
  %v787 = vunpack.c.l.b16 %v124
  %v788 = vunpack.c.l.b16 %v125
  %v789 = vunpack.c.l.b16 %v126
  %v790 = vunpack.c.l.b16 %v127
  %v791 = vunpack.c.l.b16 %v128
  %v792 = vunpack.c.l.b16 %v129
  %v793 = vunpack.c.l.b16 %v130
  %v794 = vunpack.c.l.b16 %v131
  %v795 = vunpack.c.l.b16 %v132
  %v796 = vunpack.c.l.b16 %v133
  %v797 = vunpack.c.l.b16 %v134
  %v798 = vunpack.c.l.b16 %v135
  %v799 = vunpack.c.l.b16 %v136
  %v800 = vunpack.c.l.b16 %v137
  %v801 = vunpack.c.l.b16 %v138
  %v802 = vunpack.c.l.b16 %v139
  %v803 = vunpack.c.l.b16 %v140
  %v804 = vunpack.c.l.b16 %v141
  %v805 = vunpack.c.l.b16 %v142
  %v806 = vunpack.c.l.b16 %v143
  %v807 = vunpack.c.l.b16 %v144
  %v808 = vunpack.c.l.b16 %v145
  %v809 = vunpack.c.l.b16 %v146
  %v810 = vunpack.c.l.b16 %v147
  %v811 = vunpack.c.l.b16 %v148
  %v812 = vunpack.c.l.b16 %v149
  %v813 = vunpack.c.l.b16 %v150
  %v814 = vunpack.c.l.b16 %v151
  %v815 = vunpack.c.l.b16 %v152
  %v816 = vunpack.c.l.b16 %v153
  %v817 = vunpack.c.l.b16 %v154
  %v818 = vunpack.c.l.b16 %v155
  %v819 = vunpack.c.l.b16 %v156
  %v820 = vunpack.c.l.b16 %v157
  %v821 = vunpack.c.l.b16 %v158
  %v822 = vunpack.c.l.b16 %v159
  %v823 = vunpack.c.l.b16 %v160
  %v824 = vunpack.c.l.b16 %v161
  %v825 = vunpack.c.l.b16 %v162
  %v826 = vunpack.c.l.b16 %v163
  %v827 = vunpack.c.l.b16 %v164
  %v828 = vunpack.c.l.b16 %v165
  %v829 = vunpack.c.l.b16 %v166
  %v830 = vunpack.c.l.b16 %v167
  %v831 = vunpack.c.l.b16 %v168
  %v832 = vunpack.c.l.b16 %v169
  %v833 = vunpack.c.l.b16 %v170
  %v834 = vunpack.c.l.b16 %v171
  %v835 = vunpack.c.l.b16 %v172
  %v836 = vunpack.c.l.b16 %v173
  %v837 = vunpack.c.l.b16 %v174
  %v838 = vunpack.c.l.b16 %v175
  %v839 = vunpack.c.l.b16 %v176
  %v840 = vunpack.c.l.b16 %v177
  %v841 = vunpack.c.l.b16 %v178
  %v842 = vunpack.c.l.b16 %v179
  %v843 = vunpack.c.l.b16 %v180
  %v844 = vunpack.c.l.b16 %v181
  %v845 = vunpack.c.l.b16 %v182
  %v846 = vunpack.c.l.b16 %v183
  %v847 = vunpack.c.l.b16 %v184
  %v848 = vunpack.c.l.b16 %v185
  %v849 = vunpack.c.l.b16 %v186
  %v850 = vunpack.c.l.b16 %v187
  %v851 = vunpack.c.l.b16 %v188
  %v852 = vunpack.c.l.b16 %v189
  %v853 = vunpack.c.l.b16 %v190
  %v854 = vunpack.c.l.b16 %v191
  %v855 = vunpack.c.l.b16 %v192
  %v856 = vunpack.c.l.b16 %v193
  %v857 = vunpack.c.l.b16 %v194
  %v858 = vunpack.c.l.b16 %v195
  %v859 = vunpack.c.l.b16 %v196
  %v860 = vunpack.c.l.b16 %v197
  %v861 = vunpack.c.l.b16 %v198
  %v862 = vunpack.c.l.b16 %v199
  %v863 = vunpack.c.l.b16 %v200
  %v864 = vunpack.c.l.b16 %v201
  %v865 = vunpack.c.l.b16 %v202
  %v866 = vunpack.c.l.b16 %v203
  %v867 = vunpack.c.l.b16 %v204
  %v868 = vunpack.c.l.b16 %v205
  %v869 = vunpack.c.l.b16 %v206
  %v870 = vunpack.c.l.b16 %v207
  %v871 = vunpack.c.l.b16 %v208
  %v872 = vunpack.c.l.b16 %v209
  %v873 = vunpack.c.l.b16 %v210
  %v874 = vunpack.c.l.b16 %v211
  %v875 = vunpack.c.l.b16 %v212
  %v876 = vunpack.c.l.b16 %v213
  %v877 = vunpack.c.l.b16 %v214
  %v878 = vunpack.c.l.b16 %v215
  %v879 = vunpack.c.l.b16 %v216
  %v880 = vunpack.c.l.b16 %v217
  %v881 = vunpack.c.l.b16 %v218
  %v882 = vunpack.c.l.b16 %v219
  %v883 = vunpack.c.l.b16 %v220
  %v884 = vunpack.c.l.b16 %v221
  %v885 = vunpack.c.l.b16 %v222
  %v886 = vunpack.c.l.b16 %v223
  %v887 = vunpack.c.l.b16 %v224
  %v888 = vunpack.c.l.b16 %v225
  %v889 = vunpack.c.l.b16 %v226
  %v890 = vunpack.c.l.b16 %v227
  %v891 = vunpack.c.l.b16 %v228
  %v892 = vunpack.c.l.b16 %v229
  %v893 = vunpack.c.l.b16 %v230
  %v894 = vunpack.c.l.b16 %v231
  %v895 = vunpack.c.l.b16 %v232
  %v896 = vunpack.c.l.b16 %v233
  %v897 = vunpack.c.l.b16 %v234
  %v898 = vunpack.c.l.b16 %v235
  %v899 = vunpack.c.l.b16 %v236
  %v900 = vunpack.c.l.b16 %v237
  %v901 = vunpack.c.l.b16 %v238
  %v902 = vpack.c.b16 %v759, %v758
  %v903 = vpack.c.b16 %v761, %v760
  %v904 = vpack.c.b16 %v763, %v762
  %v905 = vpack.c.b16 %v765, %v764
  %v906 = vpack.c.b16 %v767, %v766
  %v907 = vpack.c.b16 %v769, %v768
  %v908 = vpack.c.b16 %v771, %v770
  %v909 = vpack.c.b16 %v773, %v772
  %v910 = vpack.c.b16 %v775, %v774
  %v911 = vpack.c.b16 %v777, %v776
  %v912 = vpack.c.b16 %v779, %v778
  %v913 = vpack.c.b16 %v781, %v780
  %v914 = vpack.c.b16 %v783, %v782
  %v915 = vpack.c.b16 %v785, %v784
  %v916 = vpack.c.b16 %v787, %v786
  %v917 = vpack.c.b16 %v789, %v788
  %v918 = vpack.c.b16 %v791, %v790
  %v919 = vpack.c.b16 %v793, %v792
  %v920 = vpack.c.b16 %v795, %v794
  %v921 = vpack.c.b16 %v797, %v796
  %v922 = vpack.c.b16 %v799, %v798
  %v923 = vpack.c.b16 %v801, %v800
  %v924 = vpack.c.b16 %v803, %v802
  %v925 = vpack.c.b16 %v805, %v804
  %v926 = vpack.c.b16 %v807, %v806
  %v927 = vpack.c.b16 %v809, %v808
  %v928 = vpack.c.b16 %v811, %v810
  %v929 = vpack.c.b16 %v813, %v812
  %v930 = vpack.c.b16 %v815, %v814
  %v931 = vpack.c.b16 %v817, %v816
  %v932 = vpack.c.b16 %v819, %v818
  %v933 = vpack.c.b16 %v821, %v820
  %v934 = vpack.c.b16 %v823, %v822
  %v935 = vpack.c.b16 %v825, %v824
  %v936 = vpack.c.b16 %v827, %v826
  %v937 = vpack.c.b16 %v829, %v828
  %v938 = vpack.c.b16 %v831, %v830
  %v939 = vpack.c.b16 %v833, %v832
  %v940 = vpack.c.b16 %v835, %v834
  %v941 = vpack.c.b16 %v837, %v836
  %v942 = vpack.c.b16 %v839, %v838
  %v943 = vpack.c.b16 %v841, %v840
  %v944 = vpack.c.b16 %v843, %v842
  %v945 = vpack.c.b16 %v845, %v844
  %v946 = vpack.c.b16 %v847, %v846
  %v947 = vpack.c.b16 %v849, %v848
  %v948 = vpack.c.b16 %v851, %v850
  %v949 = vpack.c.b16 %v853, %v852
  %v950 = vpack.c.b16 %v855, %v854
  %v951 = vpack.c.b16 %v857, %v856
  %v952 = vpack.c.b16 %v859, %v858
  %v953 = vpack.c.b16 %v861, %v860
  %v954 = vpack.c.b16 %v863, %v862
  %v955 = vpack.c.b16 %v865, %v864
  %v956 = vpack.c.b16 %v867, %v866
  %v957 = vpack.c.b16 %v869, %v868
  %v958 = vpack.c.b16 %v871, %v870
  %v959 = vpack.c.b16 %v873, %v872
  %v960 = vpack.c.b16 %v875, %v874
  %v961 = vpack.c.b16 %v877, %v876
  %v962 = vpack.c.b16 %v879, %v878
  %v963 = vpack.c.b16 %v881, %v880
  %v964 = vpack.c.b16 %v883, %v882
  %v965 = vpack.c.b16 %v885, %v884
  %v966 = vpack.c.b16 %v887, %v886
  %v967 = vpack.c.b16 %v889, %v888
  %v968 = vpack.c.b16 %v891, %v890
  %v969 = vpack.c.b16 %v893, %v892
  %v970 = vpack.c.b16 %v895, %v894
  %v971 = vpack.c.b16 %v897, %v896
  %v972 = vpack.c.b16 %v899, %v898
  %v973 = vpack.c.b16 %v901, %v900
  %1046 = vmatprep.subr.bf16.mxu0 0
  %1047 = vmatpush1.bf16.msra.mxu0 %v902
  %1048 = vmatprep.subr.bf16.mxu0 0
  %1049 = vmatpush1.bf16.msra.mxu0 %v903
  %1050 = vmatprep.subr.bf16.mxu0 0
  %1051 = vmatpush1.bf16.msra.mxu0 %v904
  %1052 = vmatprep.subr.bf16.mxu0 0
  %1053 = vmatpush1.bf16.msra.mxu0 %v905
  %1054 = vmatprep.subr.bf16.mxu0 0
  %1055 = vmatpush1.bf16.msra.mxu0 %v906
  %1056 = vmatprep.subr.bf16.mxu0 0
  %1057 = vmatpush1.bf16.msra.mxu0 %v907
  %1058 = vmatprep.subr.bf16.mxu0 0
  %1059 = vmatpush1.bf16.msra.mxu0 %v908
  %1060 = vmatprep.subr.bf16.mxu0 0
  %1061 = vmatpush1.bf16.msra.mxu0 %v909
  %1062 = vmatprep.subr.bf16.mxu0 0
  %1063 = vmatpush1.bf16.msra.mxu0 %v910
  %1064 = vmatprep.subr.bf16.mxu0 0
  %1065 = vmatpush1.bf16.msra.mxu0 %v911
  %1066 = vmatprep.subr.bf16.mxu0 0
  %1067 = vmatpush1.bf16.msra.mxu0 %v912
  %1068 = vmatprep.subr.bf16.mxu0 0
  %1069 = vmatpush1.bf16.msra.mxu0 %v913
  %1070 = vmatprep.subr.bf16.mxu0 0
  %1071 = vmatpush1.bf16.msra.mxu0 %v914
  %1072 = vmatprep.subr.bf16.mxu0 0
  %1073 = vmatpush1.bf16.msra.mxu0 %v915
  %1074 = vmatprep.subr.bf16.mxu0 0
  %1075 = vmatpush1.bf16.msra.mxu0 %v916
  %1076 = vmatprep.subr.bf16.mxu0 0
  %1077 = vmatpush1.bf16.msra.mxu0 %v917
  %1078 = vmatprep.mubr.bf16.mxu0 %v471
  %1079 = vmatmul.mubr.bf16.gmra.mrb[0].mxu0 %v470
  %v1080 = vpop.f32.mrb[0].mxu0
  %v1081 = vadd.f32 %v244, %v1080
  %v1082 = vpop.f32.mrb[0].mxu0
  %v1083 = vpop.f32.mrb[0].mxu0
  %v1084 = vadd.f32 %v244, %v1083
  %v1085 = vpop.f32.mrb[0].mxu0
  %1086 = vmatprep.mubr.bf16.mxu0 %v480
  %1087 = vmatmul.mubr.bf16.gmra.mrb[0].mxu0 %v479
  %v1088 = vpop.f32.mrb[0].mxu0
  %v1089 = vadd.f32 %v244, %v1088
  %v1090 = vpop.f32.mrb[0].mxu0
  %v1091 = vpop.f32.mrb[0].mxu0
  %v1092 = vadd.f32 %v244, %v1091
  %v1093 = vpop.f32.mrb[0].mxu0
  %1094 = vmatprep.mubr.bf16.mxu0 %v489
  %1095 = vmatmul.mubr.bf16.gmra.mrb[0].mxu0 %v488
  %v1096 = vpop.f32.mrb[0].mxu0
  %v1097 = vadd.f32 %v244, %v1096
  %v1098 = vpop.f32.mrb[0].mxu0
  %v1099 = vpop.f32.mrb[0].mxu0
  %v1100 = vadd.f32 %v244, %v1099
  %v1101 = vpop.f32.mrb[0].mxu0
  %1102 = vmatprep.mubr.bf16.mxu0 %v498
  %1103 = vmatmul.mubr.bf16.gmra.mrb[0].mxu0 %v497
  %v1104 = vpop.f32.mrb[0].mxu0
  %v1105 = vadd.f32 %v244, %v1104
  %v1106 = vpop.f32.mrb[0].mxu0
  %v1107 = vpop.f32.mrb[0].mxu0
  %v1108 = vadd.f32 %v244, %v1107
  %v1109 = vpop.f32.mrb[0].mxu0
  %1110 = vmatprep.mubr.bf16.mxu0 %v507
  %1111 = vmatmul.mubr.bf16.gmra.mrb[0].mxu0 %v506
  %v1112 = vpop.f32.mrb[0].mxu0
  %v1113 = vadd.f32 %v244, %v1112
  %v1114 = vpop.f32.mrb[0].mxu0
  %v1115 = vpop.f32.mrb[0].mxu0
  %v1116 = vadd.f32 %v244, %v1115
  %v1117 = vpop.f32.mrb[0].mxu0
  %1118 = vmatprep.mubr.bf16.mxu0 %v516
  %1119 = vmatmul.mubr.bf16.gmra.mrb[0].mxu0 %v515
  %v1120 = vpop.f32.mrb[0].mxu0
  %v1121 = vadd.f32 %v244, %v1120
  %v1122 = vpop.f32.mrb[0].mxu0
  %v1123 = vpop.f32.mrb[0].mxu0
  %v1124 = vadd.f32 %v244, %v1123
  %v1125 = vpop.f32.mrb[0].mxu0
  %1126 = vmatprep.mubr.bf16.mxu0 %v525
  %1127 = vmatmul.mubr.bf16.gmra.mrb[0].mxu0 %v524
  %v1128 = vpop.f32.mrb[0].mxu0
  %v1129 = vadd.f32 %v244, %v1128
  %v1130 = vpop.f32.mrb[0].mxu0
  %v1131 = vpop.f32.mrb[0].mxu0
  %v1132 = vadd.f32 %v244, %v1131
  %v1133 = vpop.f32.mrb[0].mxu0
  %1134 = vmatprep.mubr.bf16.mxu0 %v534
  %1135 = vmatmul.mubr.bf16.gmra.mrb[0].mxu0 %v533
  %v1136 = vpop.f32.mrb[0].mxu0
  %v1137 = vadd.f32 %v244, %v1136
  %v1138 = vpop.f32.mrb[0].mxu0
  %v1139 = vpop.f32.mrb[0].mxu0
  %v1140 = vadd.f32 %v244, %v1139
  %v1141 = vpop.f32.mrb[0].mxu0
  %1142 = vdwg.mxu0
  %1143 = vmatprep.subr.bf16.mxu0 0
  %1144 = vmatpush1.bf16.msra.mxu0 %v918
  %1145 = vmatprep.subr.bf16.mxu0 0
  %1146 = vmatpush1.bf16.msra.mxu0 %v919
  %1147 = vmatprep.subr.bf16.mxu0 0
  %1148 = vmatpush1.bf16.msra.mxu0 %v920
  %1149 = vmatprep.subr.bf16.mxu0 0
  %1150 = vmatpush1.bf16.msra.mxu0 %v921
  %1151 = vmatprep.subr.bf16.mxu0 0
  %1152 = vmatpush1.bf16.msra.mxu0 %v922
  %1153 = vmatprep.subr.bf16.mxu0 0
  %1154 = vmatpush1.bf16.msra.mxu0 %v923
  %1155 = vmatprep.subr.bf16.mxu0 0
  %1156 = vmatpush1.bf16.msra.mxu0 %v924
  %1157 = vmatprep.subr.bf16.mxu0 0
  %1158 = vmatpush1.bf16.msra.mxu0 %v925
  %1159 = vmatprep.subr.bf16.mxu0 0
  %1160 = vmatpush1.bf16.msra.mxu0 %v926
  %1161 = vmatprep.subr.bf16.mxu0 0
  %1162 = vmatpush1.bf16.msra.mxu0 %v927
  %1163 = vmatprep.subr.bf16.mxu0 0
  %1164 = vmatpush1.bf16.msra.mxu0 %v928
  %1165 = vmatprep.subr.bf16.mxu0 0
  %1166 = vmatpush1.bf16.msra.mxu0 %v929
  %1167 = vmatprep.subr.bf16.mxu0 0
  %1168 = vmatpush1.bf16.msra.mxu0 %v930
  %1169 = vmatprep.subr.bf16.mxu0 0
  %1170 = vmatpush1.bf16.msra.mxu0 %v931
  %1171 = vmatprep.subr.bf16.mxu0 0
  %1172 = vmatpush1.bf16.msra.mxu0 %v932
  %1173 = vmatprep.subr.bf16.mxu0 0
  %1174 = vmatpush1.bf16.msra.mxu0 %v933
  %1175 = vmatprep.mubr.bf16.mxu0 %v473
  %1176 = vmatmul.mubr.bf16.gmra.mrb[0].mxu0 %v472
  %v1177 = vpop.f32.mrb[0].mxu0
  %v1178 = vadd.f32 %v1081, %v1177
  %v1179 = vpop.f32.mrb[0].mxu0
  %v1180 = vpop.f32.mrb[0].mxu0
  %v1181 = vadd.f32 %v1084, %v1180
  %v1182 = vpop.f32.mrb[0].mxu0
  %1183 = vmatprep.mubr.bf16.mxu0 %v482
  %1184 = vmatmul.mubr.bf16.gmra.mrb[0].mxu0 %v481
  %v1185 = vpop.f32.mrb[0].mxu0
  %v1186 = vadd.f32 %v1089, %v1185
  %v1187 = vpop.f32.mrb[0].mxu0
  %v1188 = vpop.f32.mrb[0].mxu0
  %v1189 = vadd.f32 %v1092, %v1188
  %v1190 = vpop.f32.mrb[0].mxu0
  %1191 = vmatprep.mubr.bf16.mxu0 %v491
  %1192 = vmatmul.mubr.bf16.gmra.mrb[0].mxu0 %v490
  %v1193 = vpop.f32.mrb[0].mxu0
  %v1194 = vadd.f32 %v1097, %v1193
  %v1195 = vpop.f32.mrb[0].mxu0
  %v1196 = vpop.f32.mrb[0].mxu0
  %v1197 = vadd.f32 %v1100, %v1196
  %v1198 = vpop.f32.mrb[0].mxu0
  %1199 = vmatprep.mubr.bf16.mxu0 %v500
  %1200 = vmatmul.mubr.bf16.gmra.mrb[0].mxu0 %v499
  %v1201 = vpop.f32.mrb[0].mxu0
  %v1202 = vadd.f32 %v1105, %v1201
  %v1203 = vpop.f32.mrb[0].mxu0
  %v1204 = vpop.f32.mrb[0].mxu0
  %v1205 = vadd.f32 %v1108, %v1204
  %v1206 = vpop.f32.mrb[0].mxu0
  %1207 = vmatprep.mubr.bf16.mxu0 %v509
  %1208 = vmatmul.mubr.bf16.gmra.mrb[0].mxu0 %v508
  %v1209 = vpop.f32.mrb[0].mxu0
  %v1210 = vadd.f32 %v1113, %v1209
  %v1211 = vpop.f32.mrb[0].mxu0
  %v1212 = vpop.f32.mrb[0].mxu0
  %v1213 = vadd.f32 %v1116, %v1212
  %v1214 = vpop.f32.mrb[0].mxu0
  %1215 = vmatprep.mubr.bf16.mxu0 %v518
  %1216 = vmatmul.mubr.bf16.gmra.mrb[0].mxu0 %v517
  %v1217 = vpop.f32.mrb[0].mxu0
  %v1218 = vadd.f32 %v1121, %v1217
  %v1219 = vpop.f32.mrb[0].mxu0
  %v1220 = vpop.f32.mrb[0].mxu0
  %v1221 = vadd.f32 %v1124, %v1220
  %v1222 = vpop.f32.mrb[0].mxu0
  %1223 = vmatprep.mubr.bf16.mxu0 %v527
  %1224 = vmatmul.mubr.bf16.gmra.mrb[0].mxu0 %v526
  %v1225 = vpop.f32.mrb[0].mxu0
  %v1226 = vadd.f32 %v1129, %v1225
  %v1227 = vpop.f32.mrb[0].mxu0
  %v1228 = vpop.f32.mrb[0].mxu0
  %v1229 = vadd.f32 %v1132, %v1228
  %v1230 = vpop.f32.mrb[0].mxu0
  %1231 = vmatprep.mubr.bf16.mxu0 %v536
  %1232 = vmatmul.mubr.bf16.gmra.mrb[0].mxu0 %v535
  %v1233 = vpop.f32.mrb[0].mxu0
  %v1234 = vadd.f32 %v1137, %v1233
  %v1235 = vpop.f32.mrb[0].mxu0
  %v1236 = vpop.f32.mrb[0].mxu0
  %v1237 = vadd.f32 %v1140, %v1236
  %v1238 = vpop.f32.mrb[0].mxu0
  %1239 = vdwg.mxu0
  %1240 = vmatprep.subr.bf16.mxu0 0
  %1241 = vmatpush1.bf16.msra.mxu0 %v934
  %1242 = vmatprep.subr.bf16.mxu0 0
  %1243 = vmatpush1.bf16.msra.mxu0 %v935
  %1244 = vmatprep.subr.bf16.mxu0 0
  %1245 = vmatpush1.bf16.msra.mxu0 %v936
  %1246 = vmatprep.subr.bf16.mxu0 0
  %1247 = vmatpush1.bf16.msra.mxu0 %v937
  %1248 = vmatprep.subr.bf16.mxu0 0
  %1249 = vmatpush1.bf16.msra.mxu0 %v938
  %1250 = vmatprep.subr.bf16.mxu0 0
  %1251 = vmatpush1.bf16.msra.mxu0 %v939
  %1252 = vmatprep.subr.bf16.mxu0 0
  %1253 = vmatpush1.bf16.msra.mxu0 %v940
  %1254 = vmatprep.subr.bf16.mxu0 0
  %1255 = vmatpush1.bf16.msra.mxu0 %v941
  %1256 = vmatprep.subr.bf16.mxu0 0
  %1257 = vmatpush1.bf16.msra.mxu0 %v942
  %1258 = vmatprep.subr.bf16.mxu0 0
  %1259 = vmatpush1.bf16.msra.mxu0 %v943
  %1260 = vmatprep.subr.bf16.mxu0 0
  %1261 = vmatpush1.bf16.msra.mxu0 %v944
  %1262 = vmatprep.subr.bf16.mxu0 0
  %1263 = vmatpush1.bf16.msra.mxu0 %v945
  %1264 = vmatprep.subr.bf16.mxu0 0
  %1265 = vmatpush1.bf16.msra.mxu0 %v946
  %1266 = vmatprep.subr.bf16.mxu0 0
  %1267 = vmatpush1.bf16.msra.mxu0 %v947
  %1268 = vmatprep.subr.bf16.mxu0 0
  %1269 = vmatpush1.bf16.msra.mxu0 %v948
  %1270 = vmatprep.subr.bf16.mxu0 0
  %1271 = vmatpush1.bf16.msra.mxu0 %v949
  %1272 = vmatprep.mubr.bf16.mxu0 %v475
  %1273 = vmatmul.mubr.bf16.gmra.mrb[0].mxu0 %v474
  %v1274 = vpop.f32.mrb[0].mxu0
  %v1275 = vadd.f32 %v1178, %v1274
  %v1276 = vpop.f32.mrb[0].mxu0
  %v1277 = vpop.f32.mrb[0].mxu0
  %v1278 = vadd.f32 %v1181, %v1277
  %v1279 = vpop.f32.mrb[0].mxu0
  %1280 = vmatprep.mubr.bf16.mxu0 %v484
  %1281 = vmatmul.mubr.bf16.gmra.mrb[0].mxu0 %v483
  %v1282 = vpop.f32.mrb[0].mxu0
  %v1283 = vadd.f32 %v1186, %v1282
  %v1284 = vpop.f32.mrb[0].mxu0
  %v1285 = vpop.f32.mrb[0].mxu0
  %v1286 = vadd.f32 %v1189, %v1285
  %v1287 = vpop.f32.mrb[0].mxu0
  %1288 = vmatprep.mubr.bf16.mxu0 %v493
  %1289 = vmatmul.mubr.bf16.gmra.mrb[0].mxu0 %v492
  %v1290 = vpop.f32.mrb[0].mxu0
  %v1291 = vadd.f32 %v1194, %v1290
  %v1292 = vpop.f32.mrb[0].mxu0
  %v1293 = vpop.f32.mrb[0].mxu0
  %v1294 = vadd.f32 %v1197, %v1293
  %v1295 = vpop.f32.mrb[0].mxu0
  %1296 = vmatprep.mubr.bf16.mxu0 %v502
  %1297 = vmatmul.mubr.bf16.gmra.mrb[0].mxu0 %v501
  %v1298 = vpop.f32.mrb[0].mxu0
  %v1299 = vadd.f32 %v1202, %v1298
  %v1300 = vpop.f32.mrb[0].mxu0
  %v1301 = vpop.f32.mrb[0].mxu0
  %v1302 = vadd.f32 %v1205, %v1301
  %v1303 = vpop.f32.mrb[0].mxu0
  %1304 = vmatprep.mubr.bf16.mxu0 %v511
  %1305 = vmatmul.mubr.bf16.gmra.mrb[0].mxu0 %v510
  %v1306 = vpop.f32.mrb[0].mxu0
  %v1307 = vadd.f32 %v1210, %v1306
  %v1308 = vpop.f32.mrb[0].mxu0
  %v1309 = vpop.f32.mrb[0].mxu0
  %v1310 = vadd.f32 %v1213, %v1309
  %v1311 = vpop.f32.mrb[0].mxu0
  %1312 = vmatprep.mubr.bf16.mxu0 %v520
  %1313 = vmatmul.mubr.bf16.gmra.mrb[0].mxu0 %v519
  %v1314 = vpop.f32.mrb[0].mxu0
  %v1315 = vadd.f32 %v1218, %v1314
  %v1316 = vpop.f32.mrb[0].mxu0
  %v1317 = vpop.f32.mrb[0].mxu0
  %v1318 = vadd.f32 %v1221, %v1317
  %v1319 = vpop.f32.mrb[0].mxu0
  %1320 = vmatprep.mubr.bf16.mxu0 %v529
  %1321 = vmatmul.mubr.bf16.gmra.mrb[0].mxu0 %v528
  %v1322 = vpop.f32.mrb[0].mxu0
  %v1323 = vadd.f32 %v1226, %v1322
  %v1324 = vpop.f32.mrb[0].mxu0
  %v1325 = vpop.f32.mrb[0].mxu0
  %v1326 = vadd.f32 %v1229, %v1325
  %v1327 = vpop.f32.mrb[0].mxu0
  %1328 = vmatprep.mubr.bf16.mxu0 %v538
  %1329 = vmatmul.mubr.bf16.gmra.mrb[0].mxu0 %v537
  %v1330 = vpop.f32.mrb[0].mxu0
  %v1331 = vadd.f32 %v1234, %v1330
  %v1332 = vpop.f32.mrb[0].mxu0
  %v1333 = vpop.f32.mrb[0].mxu0
  %v1334 = vadd.f32 %v1237, %v1333
  %v1335 = vpop.f32.mrb[0].mxu0
  %1336 = vdwg.mxu0
  %1337 = vmatprep.subr.bf16.mxu0 0
  %1338 = vmatpush1.bf16.msra.mxu0 %v950
  %1339 = vmatprep.subr.bf16.mxu0 0
  %1340 = vmatpush1.bf16.msra.mxu0 %v951
  %1341 = vmatprep.subr.bf16.mxu0 0
  %1342 = vmatpush1.bf16.msra.mxu0 %v952
  %1343 = vmatprep.subr.bf16.mxu0 0
  %1344 = vmatpush1.bf16.msra.mxu0 %v953
  %1345 = vmatprep.subr.bf16.mxu0 0
  %1346 = vmatpush1.bf16.msra.mxu0 %v954
  %1347 = vmatprep.subr.bf16.mxu0 0
  %1348 = vmatpush1.bf16.msra.mxu0 %v955
  %1349 = vmatprep.subr.bf16.mxu0 0
  %1350 = vmatpush1.bf16.msra.mxu0 %v956
  %1351 = vmatprep.subr.bf16.mxu0 0
  %1352 = vmatpush1.bf16.msra.mxu0 %v957
  %1353 = vmatprep.subr.bf16.mxu0 0
  %1354 = vmatpush1.bf16.msra.mxu0 %v958
  %1355 = vmatprep.subr.bf16.mxu0 0
  %1356 = vmatpush1.bf16.msra.mxu0 %v959
  %1357 = vmatprep.subr.bf16.mxu0 0
  %1358 = vmatpush1.bf16.msra.mxu0 %v960
  %1359 = vmatprep.subr.bf16.mxu0 0
  %1360 = vmatpush1.bf16.msra.mxu0 %v961
  %1361 = vmatprep.subr.bf16.mxu0 0
  %1362 = vmatpush1.bf16.msra.mxu0 %v962
  %1363 = vmatprep.subr.bf16.mxu0 0
  %1364 = vmatpush1.bf16.msra.mxu0 %v963
  %1365 = vmatprep.subr.bf16.mxu0 0
  %1366 = vmatpush1.bf16.msra.mxu0 %v964
  %1367 = vmatprep.subr.bf16.mxu0 0
  %1368 = vmatpush1.bf16.msra.mxu0 %v965
  %1369 = vmatprep.mubr.bf16.mxu0 %v477
  %1370 = vmatmul.mubr.bf16.gmra.mrb[0].mxu0 %v476
  %v1371 = vpop.f32.mrb[0].mxu0
  %v1372 = vadd.f32 %v1275, %v1371
  %v1373 = vpop.f32.mrb[0].mxu0
  %v1374 = vpop.f32.mrb[0].mxu0
  %v1375 = vadd.f32 %v1278, %v1374
  %v1376 = vpop.f32.mrb[0].mxu0
  %1377 = vmatprep.mubr.bf16.mxu0 %v486
  %1378 = vmatmul.mubr.bf16.gmra.mrb[0].mxu0 %v485
  %v1379 = vpop.f32.mrb[0].mxu0
  %v1380 = vadd.f32 %v1283, %v1379
  %v1381 = vpop.f32.mrb[0].mxu0
  %v1382 = vpop.f32.mrb[0].mxu0
  %v1383 = vadd.f32 %v1286, %v1382
  %v1384 = vpop.f32.mrb[0].mxu0
  %1385 = vmatprep.mubr.bf16.mxu0 %v495
  %1386 = vmatmul.mubr.bf16.gmra.mrb[0].mxu0 %v494
  %v1387 = vpop.f32.mrb[0].mxu0
  %v1388 = vadd.f32 %v1291, %v1387
  %v1389 = vpop.f32.mrb[0].mxu0
  %v1390 = vpop.f32.mrb[0].mxu0
  %v1391 = vadd.f32 %v1294, %v1390
  %v1392 = vpop.f32.mrb[0].mxu0
  %1393 = vmatprep.mubr.bf16.mxu0 %v504
  %1394 = vmatmul.mubr.bf16.gmra.mrb[0].mxu0 %v503
  %v1395 = vpop.f32.mrb[0].mxu0
  %v1396 = vadd.f32 %v1299, %v1395
  %v1397 = vpop.f32.mrb[0].mxu0
  %v1398 = vpop.f32.mrb[0].mxu0
  %v1399 = vadd.f32 %v1302, %v1398
  %v1400 = vpop.f32.mrb[0].mxu0
  %1401 = vmatprep.mubr.bf16.mxu0 %v513
  %1402 = vmatmul.mubr.bf16.gmra.mrb[0].mxu0 %v512
  %v1403 = vpop.f32.mrb[0].mxu0
  %v1404 = vadd.f32 %v1307, %v1403
  %v1405 = vpop.f32.mrb[0].mxu0
  %v1406 = vpop.f32.mrb[0].mxu0
  %v1407 = vadd.f32 %v1310, %v1406
  %v1408 = vpop.f32.mrb[0].mxu0
  %1409 = vmatprep.mubr.bf16.mxu0 %v522
  %1410 = vmatmul.mubr.bf16.gmra.mrb[0].mxu0 %v521
  %v1411 = vpop.f32.mrb[0].mxu0
  %v1412 = vadd.f32 %v1315, %v1411
  %v1413 = vpop.f32.mrb[0].mxu0
  %v1414 = vpop.f32.mrb[0].mxu0
  %v1415 = vadd.f32 %v1318, %v1414
  %v1416 = vpop.f32.mrb[0].mxu0
  %1417 = vmatprep.mubr.bf16.mxu0 %v531
  %1418 = vmatmul.mubr.bf16.gmra.mrb[0].mxu0 %v530
  %v1419 = vpop.f32.mrb[0].mxu0
  %v1420 = vadd.f32 %v1323, %v1419
  %v1421 = vpop.f32.mrb[0].mxu0
  %v1422 = vpop.f32.mrb[0].mxu0
  %v1423 = vadd.f32 %v1326, %v1422
  %v1424 = vpop.f32.mrb[0].mxu0
  %1425 = vmatprep.mubr.bf16.mxu0 %v540
  %1426 = vmatmul.mubr.bf16.gmra.mrb[0].mxu0 %v539
  %v1427 = vpop.f32.mrb[0].mxu0
  %v1428 = vadd.f32 %v1331, %v1427
  %v1429 = vpop.f32.mrb[0].mxu0
  %v1430 = vpop.f32.mrb[0].mxu0
  %v1431 = vadd.f32 %v1334, %v1430
  %v1432 = vpop.f32.mrb[0].mxu0
  %1433 = vdwg.mxu0
  %1434 = vmatprep.subr.bf16.mxu0 0
  %1435 = vmatpush1.bf16.msra.mxu0 %v966
  %1436 = vmatprep.subr.bf16.mxu0 0
  %1437 = vmatpush1.bf16.msra.mxu0 %v967
  %1438 = vmatprep.subr.bf16.mxu0 0
  %1439 = vmatpush1.bf16.msra.mxu0 %v968
  %1440 = vmatprep.subr.bf16.mxu0 0
  %1441 = vmatpush1.bf16.msra.mxu0 %v969
  %1442 = vmatprep.subr.bf16.mxu0 0
  %1443 = vmatpush1.bf16.msra.mxu0 %v970
  %1444 = vmatprep.subr.bf16.mxu0 0
  %1445 = vmatpush1.bf16.msra.mxu0 %v971
  %1446 = vmatprep.subr.bf16.mxu0 0
  %1447 = vmatpush1.bf16.msra.mxu0 %v972
  %1448 = vmatprep.subr.bf16.mxu0 0
  %1449 = vmatpush1.bf16.msra.mxu0 %v973
  %1450 = vmatprep.subr.bf16.mxu0 0
  %1451 = vmatpush1.bf16.msra.mxu0 0
  %1452 = vmatprep.subr.bf16.mxu0 0
  %1453 = vmatpush1.bf16.msra.mxu0 0
  %1454 = vmatprep.subr.bf16.mxu0 0
  %1455 = vmatpush1.bf16.msra.mxu0 0
  %1456 = vmatprep.subr.bf16.mxu0 0
  %1457 = vmatpush1.bf16.msra.mxu0 0
  %1458 = vmatprep.subr.bf16.mxu0 0
  %1459 = vmatpush1.bf16.msra.mxu0 0
  %1460 = vmatprep.subr.bf16.mxu0 0
  %1461 = vmatpush1.bf16.msra.mxu0 0
  %1462 = vmatprep.subr.bf16.mxu0 0
  %1463 = vmatpush1.bf16.msra.mxu0 0
  %1464 = vmatprep.subr.bf16.mxu0 0
  %1465 = vmatpush1.bf16.msra.mxu0 0
  %1466 = vmatprep.mubr.bf16.mxu0 0
  %1467 = vmatmul.mubr.bf16.gmra.mrb[0].mxu0 %v478
  %v1468 = vpop.f32.mrb[0].mxu0
  %v1469 = vadd.f32 %v1372, %v1468
  %v1470 = vpop.f32.mrb[0].mxu0
  %v1471 = vpop.f32.mrb[0].mxu0
  %v1472 = vadd.f32 %v1375, %v1471
  %v1473 = vpop.f32.mrb[0].mxu0
  %1474 = vmatprep.mubr.bf16.mxu0 0
  %1475 = vmatmul.mubr.bf16.gmra.mrb[0].mxu0 %v487
  %v1476 = vpop.f32.mrb[0].mxu0
  %v1477 = vadd.f32 %v1380, %v1476
  %v1478 = vpop.f32.mrb[0].mxu0
  %v1479 = vpop.f32.mrb[0].mxu0
  %v1480 = vadd.f32 %v1383, %v1479
  %v1481 = vpop.f32.mrb[0].mxu0
  %1482 = vmatprep.mubr.bf16.mxu0 0
  %1483 = vmatmul.mubr.bf16.gmra.mrb[0].mxu0 %v496
  %v1484 = vpop.f32.mrb[0].mxu0
  %v1485 = vadd.f32 %v1388, %v1484
  %v1486 = vpop.f32.mrb[0].mxu0
  %v1487 = vpop.f32.mrb[0].mxu0
  %v1488 = vadd.f32 %v1391, %v1487
  %v1489 = vpop.f32.mrb[0].mxu0
  %1490 = vmatprep.mubr.bf16.mxu0 0
  %1491 = vmatmul.mubr.bf16.gmra.mrb[0].mxu0 %v505
  %v1492 = vpop.f32.mrb[0].mxu0
  %v1493 = vadd.f32 %v1396, %v1492
  %v1494 = vpop.f32.mrb[0].mxu0
  %v1495 = vpop.f32.mrb[0].mxu0
  %v1496 = vadd.f32 %v1399, %v1495
  %v1497 = vpop.f32.mrb[0].mxu0
  %1498 = vmatprep.mubr.bf16.mxu0 0
  %1499 = vmatmul.mubr.bf16.gmra.mrb[0].mxu0 %v514
  %v1500 = vpop.f32.mrb[0].mxu0
  %v1501 = vadd.f32 %v1404, %v1500
  %v1502 = vpop.f32.mrb[0].mxu0
  %v1503 = vpop.f32.mrb[0].mxu0
  %v1504 = vadd.f32 %v1407, %v1503
  %v1505 = vpop.f32.mrb[0].mxu0
  %1506 = vmatprep.mubr.bf16.mxu0 0
  %1507 = vmatmul.mubr.bf16.gmra.mrb[0].mxu0 %v523
  %v1508 = vpop.f32.mrb[0].mxu0
  %v1509 = vadd.f32 %v1412, %v1508
  %v1510 = vpop.f32.mrb[0].mxu0
  %v1511 = vpop.f32.mrb[0].mxu0
  %v1512 = vadd.f32 %v1415, %v1511
  %v1513 = vpop.f32.mrb[0].mxu0
  %1514 = vmatprep.mubr.bf16.mxu0 0
  %1515 = vmatmul.mubr.bf16.gmra.mrb[0].mxu0 %v532
  %v1516 = vpop.f32.mrb[0].mxu0
  %v1517 = vadd.f32 %v1420, %v1516
  %v1518 = vpop.f32.mrb[0].mxu0
  %v1519 = vpop.f32.mrb[0].mxu0
  %v1520 = vadd.f32 %v1423, %v1519
  %v1521 = vpop.f32.mrb[0].mxu0
  %1522 = vmatprep.mubr.bf16.mxu0 0
  %1523 = vmatmul.mubr.bf16.gmra.mrb[0].mxu0 %v541
  %v1524 = vpop.f32.mrb[0].mxu0
  %v1525 = vadd.f32 %v1428, %v1524
  %v1526 = vpop.f32.mrb[0].mxu0
  %v1527 = vpop.f32.mrb[0].mxu0
  %v1528 = vadd.f32 %v1431, %v1527
  %v1529 = vpop.f32.mrb[0].mxu0
  %1530 = vdwg.mxu0
  %v1531 = vmax.f32 %v1469, 0.0
  %v1532 = vmax.f32 %v1472, 0.0
  %v1533 = vmax.f32 %v1477, 0.0
  %v1534 = vmax.f32 %v1480, 0.0
  %v1535 = vmax.f32 %v1485, 0.0
  %v1536 = vmax.f32 %v1488, 0.0
  %v1537 = vmax.f32 %v1493, 0.0
  %v1538 = vmax.f32 %v1496, 0.0
  %v1539 = vmax.f32 %v1501, 0.0
  %v1540 = vmax.f32 %v1504, 0.0
  %v1541 = vmax.f32 %v1509, 0.0
  %v1542 = vmax.f32 %v1512, 0.0
  %v1543 = vmax.f32 %v1517, 0.0
  %v1544 = vmax.f32 %v1520, 0.0
  %v1545 = vmax.f32 %v1525, 0.0
  %v1546 = vmax.f32 %v1528, 0.0
  %v1547 = vpack.c.bf16 %v1532, %v1531
  %v1548 = vpack.c.bf16 %v1534, %v1533
  %v1549 = vpack.c.bf16 %v1536, %v1535
  %v1550 = vpack.c.bf16 %v1538, %v1537
  %v1551 = vpack.c.bf16 %v1540, %v1539
  %v1552 = vpack.c.bf16 %v1542, %v1541
  %v1553 = vpack.c.bf16 %v1544, %v1543
  %v1554 = vpack.c.bf16 %v1546, %v1545
  %v1563 = vunpack.c.l.b16 %v1547
  %v1564 = vunpack.c.h.b16 %v1547
  %v1565 = vunpack.c.l.b16 %v1548
  %v1566 = vunpack.c.h.b16 %v1548
  %v1567 = vunpack.c.l.b16 %v1549
  %v1568 = vunpack.c.h.b16 %v1549
  %v1569 = vunpack.c.l.b16 %v1550
  %v1570 = vunpack.c.h.b16 %v1550
  %v1571 = vunpack.c.l.b16 %v1551
  %v1572 = vunpack.c.h.b16 %v1551
  %v1573 = vunpack.c.l.b16 %v1552
  %v1574 = vunpack.c.h.b16 %v1552
  %v1575 = vunpack.c.l.b16 %v1553
  %v1576 = vunpack.c.h.b16 %v1553
  %v1577 = vunpack.c.l.b16 %v1554
  %v1578 = vunpack.c.h.b16 %v1554
  %v1579 = vpack.c.b16 %v1563, %v1563
  %v1580 = vpack.c.b16 %v1564, %v1564
  %v1581 = vpack.c.b16 %v1565, %v1565
  %v1582 = vpack.c.b16 %v1566, %v1566
  %v1583 = vpack.c.b16 %v1567, %v1567
  %v1584 = vpack.c.b16 %v1568, %v1568
  %v1585 = vpack.c.b16 %v1569, %v1569
  %v1586 = vpack.c.b16 %v1570, %v1570
  %v1587 = vpack.c.b16 %v1571, %v1571
  %v1588 = vpack.c.b16 %v1572, %v1572
  %v1589 = vpack.c.b16 %v1573, %v1573
  %v1590 = vpack.c.b16 %v1574, %v1574
  %v1591 = vpack.c.b16 %v1575, %v1575
  %v1592 = vpack.c.b16 %v1576, %v1576
  %v1593 = vpack.c.b16 %v1577, %v1577
  %v1594 = vpack.c.b16 %v1578, %v1578
  %1611 = vst [vmem:[%s3] sm:$0xf] %v1579
  %1612 = vst [vmem:[%s3 + $0x4] sm:$0xf] %v1580
  %1613 = vst [vmem:[%s3 + $0x8] sm:$0xf] %v1581
  %1614 = vst [vmem:[%s3 + $0xc] sm:$0xf] %v1582
  %1615 = vst [vmem:[%s3 + $0x10] sm:$0xf] %v1583
  %1616 = vst [vmem:[%s3 + $0x14] sm:$0xf] %v1584
  %1617 = vst [vmem:[%s3 + $0x18] sm:$0xf] %v1585
  %1618 = vst [vmem:[%s3 + $0x1c] sm:$0xf] %v1586
  %1619 = vst [vmem:[%s3 + $0x20] sm:$0xf] %v1587
  %1620 = vst [vmem:[%s3 + $0x24] sm:$0xf] %v1588
  %1621 = vst [vmem:[%s3 + $0x28] sm:$0xf] %v1589
  %1622 = vst [vmem:[%s3 + $0x2c] sm:$0xf] %v1590
  %1623 = vst [vmem:[%s3 + $0x30] sm:$0xf] %v1591
  %1624 = vst [vmem:[%s3 + $0x34] sm:$0xf] %v1592
  %1625 = vst [vmem:[%s3 + $0x38] sm:$0xf] %v1593
  %1626 = vst [vmem:[%s3 + $0x3c] sm:$0xf] %v1594
  // Predicated region
  $region14: #{resnet_tsa_forward.13} parent=0 // pred_check
    _
  $region15: #{resnet_tsa_forward.13} parent=0 // pred_check_branch
    %1628 = sbr.rel (0) target = $region17
  $region16: #{resnet_tsa_forward.13} parent=0 // pred_region
    _
  $region17: #{resnet_tsa_forward.13} parent=0 // pred_fallthru
    _
  // Predicated region
  $region18: #{resnet_tsa_forward.13} parent=0 // pred_check
    _
  $region19: #{resnet_tsa_forward.13} parent=0 // pred_check_branch
    %1630 = sbr.rel (0) target = $region21
  $region20: #{resnet_tsa_forward.13} parent=0 // pred_region
    _
  $region21: #{resnet_tsa_forward.13} parent=0 // pred_fallthru
    _

// kernel: resnet_tsa_forward.15
$region0: #{resnet_tsa_forward.15}
  #allocation0 [shape = 'u32[]', space=smem, size = 0x4, offset = 0x4, fixed_abs, tag = 'smem constant byte address 0x4 - core index']
  #allocation1 [shape = 'u32[144,128]{1,0:T(1,128)}', space=vmem, size = 0x12000, scoped, tag = 'internal scratch']
  %s0 = inlined_call_operand.vmem [shape: bf16[32,1152], index: 0, kind: input, shape index: {}]
  %s1 = inlined_call_operand.vmem [shape: bf16[1152,128], index: 1, kind: input, shape index: {}]
  %s2 = inlined_call_operand.vmem [shape: f32[1,128], index: 2, kind: input, shape index: {}]
  %s3 = inlined_call_operand.vmem [shape: bf16[32,128], index: 3, kind: output, shape index: {}]
  %s4 = sld [smem:[#allocation0]]
  $region22: #{resnet_tsa_forward.15} parent=0
    _
  %s6 = ssub.s32 1, %s4
  %s7 = scalar_select 0, %s6, %s4
  // Predicated region
  $region2: #{resnet_tsa_forward.15} parent=0 // pred_check
    _
  $region3: #{resnet_tsa_forward.15} parent=0 // pred_check_branch
    %9 = sbr.rel (0) target = $region5
  $region4: #{resnet_tsa_forward.15} parent=0 // pred_region
    _
  $region5: #{resnet_tsa_forward.15} parent=0 // pred_fallthru
    _
  // Predicated region
  $region6: #{resnet_tsa_forward.15} parent=0 // pred_check
    _
  $region7: #{resnet_tsa_forward.15} parent=0 // pred_check_branch
    %11 = sbr.rel (0) target = $region9
  $region8: #{resnet_tsa_forward.15} parent=0 // pred_region
    _
  $region9: #{resnet_tsa_forward.15} parent=0 // pred_fallthru
    _
  // Predicated region
  $region10: #{resnet_tsa_forward.15} parent=0 // pred_check
    _
  $region11: #{resnet_tsa_forward.15} parent=0 // pred_check_branch
    %13 = sbr.rel (0) target = $region13
  $region12: #{resnet_tsa_forward.15} parent=0 // pred_region
    _
  $region13: #{resnet_tsa_forward.15} parent=0 // pred_fallthru
    _
  %v15 = vld [vmem:[%s0] sm:$0xff]
  %v16 = vld [vmem:[%s0 + $0x8] sm:$0xff]
  %v17 = vld [vmem:[%s0 + $0x10] sm:$0xff]
  %v18 = vld [vmem:[%s0 + $0x18] sm:$0xff]
  %v19 = vld [vmem:[%s0 + $0x20] sm:$0xf]
  %v20 = vld [vmem:[%s0 + $0x24] sm:$0xff]
  %v21 = vld [vmem:[%s0 + $0x2c] sm:$0xff]
  %v22 = vld [vmem:[%s0 + $0x34] sm:$0xff]
  %v23 = vld [vmem:[%s0 + $0x3c] sm:$0xff]
  %v24 = vld [vmem:[%s0 + $0x44] sm:$0xf]
  %v25 = vld [vmem:[%s0 + $0x48] sm:$0xff]
  %v26 = vld [vmem:[%s0 + $0x50] sm:$0xff]
  %v27 = vld [vmem:[%s0 + $0x58] sm:$0xff]
  %v28 = vld [vmem:[%s0 + $0x60] sm:$0xff]
  %v29 = vld [vmem:[%s0 + $0x68] sm:$0xf]
  %v30 = vld [vmem:[%s0 + $0x6c] sm:$0xff]
  %v31 = vld [vmem:[%s0 + $0x74] sm:$0xff]
  %v32 = vld [vmem:[%s0 + $0x7c] sm:$0xff]
  %v33 = vld [vmem:[%s0 + $0x84] sm:$0xff]
  %v34 = vld [vmem:[%s0 + $0x8c] sm:$0xf]
  %v35 = vld [vmem:[%s1] sm:$0xf]
  %v36 = vld [vmem:[%s1 + $0x4] sm:$0xf]
  %v37 = vld [vmem:[%s1 + $0x8] sm:$0xf]
  %v38 = vld [vmem:[%s1 + $0xc] sm:$0xf]
  %v39 = vld [vmem:[%s1 + $0x10] sm:$0xf]
  %v40 = vld [vmem:[%s1 + $0x14] sm:$0xf]
  %v41 = vld [vmem:[%s1 + $0x18] sm:$0xf]
  %v42 = vld [vmem:[%s1 + $0x1c] sm:$0xf]
  %v43 = vld [vmem:[%s1 + $0x20] sm:$0xf]
  %v44 = vld [vmem:[%s1 + $0x24] sm:$0xf]
  %v45 = vld [vmem:[%s1 + $0x28] sm:$0xf]
  %v46 = vld [vmem:[%s1 + $0x2c] sm:$0xf]
  %v47 = vld [vmem:[%s1 + $0x30] sm:$0xf]
  %v48 = vld [vmem:[%s1 + $0x34] sm:$0xf]
  %v49 = vld [vmem:[%s1 + $0x38] sm:$0xf]
  %v50 = vld [vmem:[%s1 + $0x3c] sm:$0xf]
  %v51 = vld [vmem:[%s1 + $0x40] sm:$0xf]
  %v52 = vld [vmem:[%s1 + $0x44] sm:$0xf]
  %v53 = vld [vmem:[%s1 + $0x48] sm:$0xf]
  %v54 = vld [vmem:[%s1 + $0x4c] sm:$0xf]
  %v55 = vld [vmem:[%s1 + $0x50] sm:$0xf]
  %v56 = vld [vmem:[%s1 + $0x54] sm:$0xf]
  %v57 = vld [vmem:[%s1 + $0x58] sm:$0xf]
  %v58 = vld [vmem:[%s1 + $0x5c] sm:$0xf]
  %v59 = vld [vmem:[%s1 + $0x60] sm:$0xf]
  %v60 = vld [vmem:[%s1 + $0x64] sm:$0xf]
  %v61 = vld [vmem:[%s1 + $0x68] sm:$0xf]
  %v62 = vld [vmem:[%s1 + $0x6c] sm:$0xf]
  %v63 = vld [vmem:[%s1 + $0x70] sm:$0xf]
  %v64 = vld [vmem:[%s1 + $0x74] sm:$0xf]
  %v65 = vld [vmem:[%s1 + $0x78] sm:$0xf]
  %v66 = vld [vmem:[%s1 + $0x7c] sm:$0xf]
  %v67 = vld [vmem:[%s1 + $0x80] sm:$0xf]
  %v68 = vld [vmem:[%s1 + $0x84] sm:$0xf]
  %v69 = vld [vmem:[%s1 + $0x88] sm:$0xf]
  %v70 = vld [vmem:[%s1 + $0x8c] sm:$0xf]
  %v71 = vld [vmem:[%s1 + $0x90] sm:$0xf]
  %v72 = vld [vmem:[%s1 + $0x94] sm:$0xf]
  %v73 = vld [vmem:[%s1 + $0x98] sm:$0xf]
  %v74 = vld [vmem:[%s1 + $0x9c] sm:$0xf]
  %v75 = vld [vmem:[%s1 + $0xa0] sm:$0xf]
  %v76 = vld [vmem:[%s1 + $0xa4] sm:$0xf]
  %v77 = vld [vmem:[%s1 + $0xa8] sm:$0xf]
  %v78 = vld [vmem:[%s1 + $0xac] sm:$0xf]
  %v79 = vld [vmem:[%s1 + $0xb0] sm:$0xf]
  %v80 = vld [vmem:[%s1 + $0xb4] sm:$0xf]
  %v81 = vld [vmem:[%s1 + $0xb8] sm:$0xf]
  %v82 = vld [vmem:[%s1 + $0xbc] sm:$0xf]
  %v83 = vld [vmem:[%s1 + $0xc0] sm:$0xf]
  %v84 = vld [vmem:[%s1 + $0xc4] sm:$0xf]
  %v85 = vld [vmem:[%s1 + $0xc8] sm:$0xf]
  %v86 = vld [vmem:[%s1 + $0xcc] sm:$0xf]
  %v87 = vld [vmem:[%s1 + $0xd0] sm:$0xf]
  %v88 = vld [vmem:[%s1 + $0xd4] sm:$0xf]
  %v89 = vld [vmem:[%s1 + $0xd8] sm:$0xf]
  %v90 = vld [vmem:[%s1 + $0xdc] sm:$0xf]
  %v91 = vld [vmem:[%s1 + $0xe0] sm:$0xf]
  %v92 = vld [vmem:[%s1 + $0xe4] sm:$0xf]
  %v93 = vld [vmem:[%s1 + $0xe8] sm:$0xf]
  %v94 = vld [vmem:[%s1 + $0xec] sm:$0xf]
  %v95 = vld [vmem:[%s1 + $0xf0] sm:$0xf]
  %v96 = vld [vmem:[%s1 + $0xf4] sm:$0xf]
  %v97 = vld [vmem:[%s1 + $0xf8] sm:$0xf]
  %v98 = vld [vmem:[%s1 + $0xfc] sm:$0xf]
  %v99 = vld [vmem:[%s1 + $0x100] sm:$0xf]
  %v100 = vld [vmem:[%s1 + $0x104] sm:$0xf]
  %v101 = vld [vmem:[%s1 + $0x108] sm:$0xf]
  %v102 = vld [vmem:[%s1 + $0x10c] sm:$0xf]
  %v103 = vld [vmem:[%s1 + $0x110] sm:$0xf]
  %v104 = vld [vmem:[%s1 + $0x114] sm:$0xf]
  %v105 = vld [vmem:[%s1 + $0x118] sm:$0xf]
  %v106 = vld [vmem:[%s1 + $0x11c] sm:$0xf]
  %v107 = vld [vmem:[%s1 + $0x120] sm:$0xf]
  %v108 = vld [vmem:[%s1 + $0x124] sm:$0xf]
  %v109 = vld [vmem:[%s1 + $0x128] sm:$0xf]
  %v110 = vld [vmem:[%s1 + $0x12c] sm:$0xf]
  %v111 = vld [vmem:[%s1 + $0x130] sm:$0xf]
  %v112 = vld [vmem:[%s1 + $0x134] sm:$0xf]
  %v113 = vld [vmem:[%s1 + $0x138] sm:$0xf]
  %v114 = vld [vmem:[%s1 + $0x13c] sm:$0xf]
  %v115 = vld [vmem:[%s1 + $0x140] sm:$0xf]
  %v116 = vld [vmem:[%s1 + $0x144] sm:$0xf]
  %v117 = vld [vmem:[%s1 + $0x148] sm:$0xf]
  %v118 = vld [vmem:[%s1 + $0x14c] sm:$0xf]
  %v119 = vld [vmem:[%s1 + $0x150] sm:$0xf]
  %v120 = vld [vmem:[%s1 + $0x154] sm:$0xf]
  %v121 = vld [vmem:[%s1 + $0x158] sm:$0xf]
  %v122 = vld [vmem:[%s1 + $0x15c] sm:$0xf]
  %v123 = vld [vmem:[%s1 + $0x160] sm:$0xf]
  %v124 = vld [vmem:[%s1 + $0x164] sm:$0xf]
  %v125 = vld [vmem:[%s1 + $0x168] sm:$0xf]
  %v126 = vld [vmem:[%s1 + $0x16c] sm:$0xf]
  %v127 = vld [vmem:[%s1 + $0x170] sm:$0xf]
  %v128 = vld [vmem:[%s1 + $0x174] sm:$0xf]
  %v129 = vld [vmem:[%s1 + $0x178] sm:$0xf]
  %v130 = vld [vmem:[%s1 + $0x17c] sm:$0xf]
  %v131 = vld [vmem:[%s1 + $0x180] sm:$0xf]
  %v132 = vld [vmem:[%s1 + $0x184] sm:$0xf]
  %v133 = vld [vmem:[%s1 + $0x188] sm:$0xf]
  %v134 = vld [vmem:[%s1 + $0x18c] sm:$0xf]
  %v135 = vld [vmem:[%s1 + $0x190] sm:$0xf]
  %v136 = vld [vmem:[%s1 + $0x194] sm:$0xf]
  %v137 = vld [vmem:[%s1 + $0x198] sm:$0xf]
  %v138 = vld [vmem:[%s1 + $0x19c] sm:$0xf]
  %v139 = vld [vmem:[%s1 + $0x1a0] sm:$0xf]
  %v140 = vld [vmem:[%s1 + $0x1a4] sm:$0xf]
  %v141 = vld [vmem:[%s1 + $0x1a8] sm:$0xf]
  %v142 = vld [vmem:[%s1 + $0x1ac] sm:$0xf]
  %v143 = vld [vmem:[%s1 + $0x1b0] sm:$0xf]
  %v144 = vld [vmem:[%s1 + $0x1b4] sm:$0xf]
  %v145 = vld [vmem:[%s1 + $0x1b8] sm:$0xf]
  %v146 = vld [vmem:[%s1 + $0x1bc] sm:$0xf]
  %v147 = vld [vmem:[%s1 + $0x1c0] sm:$0xf]
  %v148 = vld [vmem:[%s1 + $0x1c4] sm:$0xf]
  %v149 = vld [vmem:[%s1 + $0x1c8] sm:$0xf]
  %v150 = vld [vmem:[%s1 + $0x1cc] sm:$0xf]
  %v151 = vld [vmem:[%s1 + $0x1d0] sm:$0xf]
  %v152 = vld [vmem:[%s1 + $0x1d4] sm:$0xf]
  %v153 = vld [vmem:[%s1 + $0x1d8] sm:$0xf]
  %v154 = vld [vmem:[%s1 + $0x1dc] sm:$0xf]
  %v155 = vld [vmem:[%s1 + $0x1e0] sm:$0xf]
  %v156 = vld [vmem:[%s1 + $0x1e4] sm:$0xf]
  %v157 = vld [vmem:[%s1 + $0x1e8] sm:$0xf]
  %v158 = vld [vmem:[%s1 + $0x1ec] sm:$0xf]
  %v159 = vld [vmem:[%s1 + $0x1f0] sm:$0xf]
  %v160 = vld [vmem:[%s1 + $0x1f4] sm:$0xf]
  %v161 = vld [vmem:[%s1 + $0x1f8] sm:$0xf]
  %v162 = vld [vmem:[%s1 + $0x1fc] sm:$0xf]
  %v163 = vld [vmem:[%s1 + $0x200] sm:$0xf]
  %v164 = vld [vmem:[%s1 + $0x204] sm:$0xf]
  %v165 = vld [vmem:[%s1 + $0x208] sm:$0xf]
  %v166 = vld [vmem:[%s1 + $0x20c] sm:$0xf]
  %v167 = vld [vmem:[%s1 + $0x210] sm:$0xf]
  %v168 = vld [vmem:[%s1 + $0x214] sm:$0xf]
  %v169 = vld [vmem:[%s1 + $0x218] sm:$0xf]
  %v170 = vld [vmem:[%s1 + $0x21c] sm:$0xf]
  %v171 = vld [vmem:[%s1 + $0x220] sm:$0xf]
  %v172 = vld [vmem:[%s1 + $0x224] sm:$0xf]
  %v173 = vld [vmem:[%s1 + $0x228] sm:$0xf]
  %v174 = vld [vmem:[%s1 + $0x22c] sm:$0xf]
  %v175 = vld [vmem:[%s1 + $0x230] sm:$0xf]
  %v176 = vld [vmem:[%s1 + $0x234] sm:$0xf]
  %v177 = vld [vmem:[%s1 + $0x238] sm:$0xf]
  %v178 = vld [vmem:[%s1 + $0x23c] sm:$0xf]
  %v179 = vld [vmem:[%s2] sm:$0x1]
  %v181 = vlaneseq
  %v182 = vshrl.u32 %v181, 7
  %v183 = vsub.s32 0, %v182
  %v184 = vrot.slane %v179, %v183
  %v206 = vunpack.c.l.b16 %v15
  %v207 = vunpack.c.h.b16 %v15
  %v208 = vunpack.c.l.b16 %v16
  %v209 = vunpack.c.h.b16 %v16
  %v210 = vunpack.c.l.b16 %v17
  %v211 = vunpack.c.h.b16 %v17
  %v212 = vunpack.c.l.b16 %v18
  %v213 = vunpack.c.h.b16 %v18
  %v214 = vunpack.c.l.b16 %v19
  %v215 = vunpack.c.l.b16 %v20
  %v216 = vunpack.c.h.b16 %v20
  %v217 = vunpack.c.l.b16 %v21
  %v218 = vunpack.c.h.b16 %v21
  %v219 = vunpack.c.l.b16 %v22
  %v220 = vunpack.c.h.b16 %v22
  %v221 = vunpack.c.l.b16 %v23
  %v222 = vunpack.c.h.b16 %v23
  %v223 = vunpack.c.l.b16 %v24
  %v224 = vunpack.c.l.b16 %v25
  %v225 = vunpack.c.h.b16 %v25
  %v226 = vunpack.c.l.b16 %v26
  %v227 = vunpack.c.h.b16 %v26
  %v228 = vunpack.c.l.b16 %v27
  %v229 = vunpack.c.h.b16 %v27
  %v230 = vunpack.c.l.b16 %v28
  %v231 = vunpack.c.h.b16 %v28
  %v232 = vunpack.c.l.b16 %v29
  %v233 = vunpack.c.l.b16 %v30
  %v234 = vunpack.c.h.b16 %v30
  %v235 = vunpack.c.l.b16 %v31
  %v236 = vunpack.c.h.b16 %v31
  %v237 = vunpack.c.l.b16 %v32
  %v238 = vunpack.c.h.b16 %v32
  %v239 = vunpack.c.l.b16 %v33
  %v240 = vunpack.c.h.b16 %v33
  %v241 = vunpack.c.l.b16 %v34
  %v242 = vpack.c.b16 %v215, %v206
  %v243 = vpack.c.b16 %v216, %v207
  %v244 = vpack.c.b16 %v217, %v208
  %v245 = vpack.c.b16 %v218, %v209
  %v246 = vpack.c.b16 %v219, %v210
  %v247 = vpack.c.b16 %v220, %v211
  %v248 = vpack.c.b16 %v221, %v212
  %v249 = vpack.c.b16 %v222, %v213
  %v250 = vpack.c.b16 %v223, %v214
  %v251 = vpack.c.b16 %v233, %v224
  %v252 = vpack.c.b16 %v234, %v225
  %v253 = vpack.c.b16 %v235, %v226
  %v254 = vpack.c.b16 %v236, %v227
  %v255 = vpack.c.b16 %v237, %v228
  %v256 = vpack.c.b16 %v238, %v229
  %v257 = vpack.c.b16 %v239, %v230
  %v258 = vpack.c.b16 %v240, %v231
  %v259 = vpack.c.b16 %v241, %v232
  %v422 = vunpack.c.l.b16 %v35
  %v423 = vunpack.c.l.b16 %v36
  %v424 = vunpack.c.l.b16 %v37
  %v425 = vunpack.c.l.b16 %v38
  %v426 = vunpack.c.l.b16 %v39
  %v427 = vunpack.c.l.b16 %v40
  %v428 = vunpack.c.l.b16 %v41
  %v429 = vunpack.c.l.b16 %v42
  %v430 = vunpack.c.l.b16 %v43
  %v431 = vunpack.c.l.b16 %v44
  %v432 = vunpack.c.l.b16 %v45
  %v433 = vunpack.c.l.b16 %v46
  %v434 = vunpack.c.l.b16 %v47
  %v435 = vunpack.c.l.b16 %v48
  %v436 = vunpack.c.l.b16 %v49
  %v437 = vunpack.c.l.b16 %v50
  %v438 = vunpack.c.l.b16 %v51
  %v439 = vunpack.c.l.b16 %v52
  %v440 = vunpack.c.l.b16 %v53
  %v441 = vunpack.c.l.b16 %v54
  %v442 = vunpack.c.l.b16 %v55
  %v443 = vunpack.c.l.b16 %v56
  %v444 = vunpack.c.l.b16 %v57
  %v445 = vunpack.c.l.b16 %v58
  %v446 = vunpack.c.l.b16 %v59
  %v447 = vunpack.c.l.b16 %v60
  %v448 = vunpack.c.l.b16 %v61
  %v449 = vunpack.c.l.b16 %v62
  %v450 = vunpack.c.l.b16 %v63
  %v451 = vunpack.c.l.b16 %v64
  %v452 = vunpack.c.l.b16 %v65
  %v453 = vunpack.c.l.b16 %v66
  %v454 = vunpack.c.l.b16 %v67
  %v455 = vunpack.c.l.b16 %v68
  %v456 = vunpack.c.l.b16 %v69
  %v457 = vunpack.c.l.b16 %v70
  %v458 = vunpack.c.l.b16 %v71
  %v459 = vunpack.c.l.b16 %v72
  %v460 = vunpack.c.l.b16 %v73
  %v461 = vunpack.c.l.b16 %v74
  %v462 = vunpack.c.l.b16 %v75
  %v463 = vunpack.c.l.b16 %v76
  %v464 = vunpack.c.l.b16 %v77
  %v465 = vunpack.c.l.b16 %v78
  %v466 = vunpack.c.l.b16 %v79
  %v467 = vunpack.c.l.b16 %v80
  %v468 = vunpack.c.l.b16 %v81
  %v469 = vunpack.c.l.b16 %v82
  %v470 = vunpack.c.l.b16 %v83
  %v471 = vunpack.c.l.b16 %v84
  %v472 = vunpack.c.l.b16 %v85
  %v473 = vunpack.c.l.b16 %v86
  %v474 = vunpack.c.l.b16 %v87
  %v475 = vunpack.c.l.b16 %v88
  %v476 = vunpack.c.l.b16 %v89
  %v477 = vunpack.c.l.b16 %v90
  %v478 = vunpack.c.l.b16 %v91
  %v479 = vunpack.c.l.b16 %v92
  %v480 = vunpack.c.l.b16 %v93
  %v481 = vunpack.c.l.b16 %v94
  %v482 = vunpack.c.l.b16 %v95
  %v483 = vunpack.c.l.b16 %v96
  %v484 = vunpack.c.l.b16 %v97
  %v485 = vunpack.c.l.b16 %v98
  %v486 = vunpack.c.l.b16 %v99
  %v487 = vunpack.c.l.b16 %v100
  %v488 = vunpack.c.l.b16 %v101
  %v489 = vunpack.c.l.b16 %v102
  %v490 = vunpack.c.l.b16 %v103
  %v491 = vunpack.c.l.b16 %v104
  %v492 = vunpack.c.l.b16 %v105
  %v493 = vunpack.c.l.b16 %v106
  %v494 = vunpack.c.l.b16 %v107
  %v495 = vunpack.c.l.b16 %v108
  %v496 = vunpack.c.l.b16 %v109
  %v497 = vunpack.c.l.b16 %v110
  %v498 = vunpack.c.l.b16 %v111
  %v499 = vunpack.c.l.b16 %v112
  %v500 = vunpack.c.l.b16 %v113
  %v501 = vunpack.c.l.b16 %v114
  %v502 = vunpack.c.l.b16 %v115
  %v503 = vunpack.c.l.b16 %v116
  %v504 = vunpack.c.l.b16 %v117
  %v505 = vunpack.c.l.b16 %v118
  %v506 = vunpack.c.l.b16 %v119
  %v507 = vunpack.c.l.b16 %v120
  %v508 = vunpack.c.l.b16 %v121
  %v509 = vunpack.c.l.b16 %v122
  %v510 = vunpack.c.l.b16 %v123
  %v511 = vunpack.c.l.b16 %v124
  %v512 = vunpack.c.l.b16 %v125
  %v513 = vunpack.c.l.b16 %v126
  %v514 = vunpack.c.l.b16 %v127
  %v515 = vunpack.c.l.b16 %v128
  %v516 = vunpack.c.l.b16 %v129
  %v517 = vunpack.c.l.b16 %v130
  %v518 = vunpack.c.l.b16 %v131
  %v519 = vunpack.c.l.b16 %v132
  %v520 = vunpack.c.l.b16 %v133
  %v521 = vunpack.c.l.b16 %v134
  %v522 = vunpack.c.l.b16 %v135
  %v523 = vunpack.c.l.b16 %v136
  %v524 = vunpack.c.l.b16 %v137
  %v525 = vunpack.c.l.b16 %v138
  %v526 = vunpack.c.l.b16 %v139
  %v527 = vunpack.c.l.b16 %v140
  %v528 = vunpack.c.l.b16 %v141
  %v529 = vunpack.c.l.b16 %v142
  %v530 = vunpack.c.l.b16 %v143
  %v531 = vunpack.c.l.b16 %v144
  %v532 = vunpack.c.l.b16 %v145
  %v533 = vunpack.c.l.b16 %v146
  %v534 = vunpack.c.l.b16 %v147
  %v535 = vunpack.c.l.b16 %v148
  %v536 = vunpack.c.l.b16 %v149
  %v537 = vunpack.c.l.b16 %v150
  %v538 = vunpack.c.l.b16 %v151
  %v539 = vunpack.c.l.b16 %v152
  %v540 = vunpack.c.l.b16 %v153
  %v541 = vunpack.c.l.b16 %v154
  %v542 = vunpack.c.l.b16 %v155
  %v543 = vunpack.c.l.b16 %v156
  %v544 = vunpack.c.l.b16 %v157
  %v545 = vunpack.c.l.b16 %v158
  %v546 = vunpack.c.l.b16 %v159
  %v547 = vunpack.c.l.b16 %v160
  %v548 = vunpack.c.l.b16 %v161
  %v549 = vunpack.c.l.b16 %v162
  %v550 = vunpack.c.l.b16 %v163
  %v551 = vunpack.c.l.b16 %v164
  %v552 = vunpack.c.l.b16 %v165
  %v553 = vunpack.c.l.b16 %v166
  %v554 = vunpack.c.l.b16 %v167
  %v555 = vunpack.c.l.b16 %v168
  %v556 = vunpack.c.l.b16 %v169
  %v557 = vunpack.c.l.b16 %v170
  %v558 = vunpack.c.l.b16 %v171
  %v559 = vunpack.c.l.b16 %v172
  %v560 = vunpack.c.l.b16 %v173
  %v561 = vunpack.c.l.b16 %v174
  %v562 = vunpack.c.l.b16 %v175
  %v563 = vunpack.c.l.b16 %v176
  %v564 = vunpack.c.l.b16 %v177
  %v565 = vunpack.c.l.b16 %v178
  %v566 = vpack.c.b16 %v423, %v422
  %v567 = vpack.c.b16 %v425, %v424
  %v568 = vpack.c.b16 %v427, %v426
  %v569 = vpack.c.b16 %v429, %v428
  %v570 = vpack.c.b16 %v431, %v430
  %v571 = vpack.c.b16 %v433, %v432
  %v572 = vpack.c.b16 %v435, %v434
  %v573 = vpack.c.b16 %v437, %v436
  %v574 = vpack.c.b16 %v439, %v438
  %v575 = vpack.c.b16 %v441, %v440
  %v576 = vpack.c.b16 %v443, %v442
  %v577 = vpack.c.b16 %v445, %v444
  %v578 = vpack.c.b16 %v447, %v446
  %v579 = vpack.c.b16 %v449, %v448
  %v580 = vpack.c.b16 %v451, %v450
  %v581 = vpack.c.b16 %v453, %v452
  %v582 = vpack.c.b16 %v455, %v454
  %v583 = vpack.c.b16 %v457, %v456
  %v584 = vpack.c.b16 %v459, %v458
  %v585 = vpack.c.b16 %v461, %v460
  %v586 = vpack.c.b16 %v463, %v462
  %v587 = vpack.c.b16 %v465, %v464
  %v588 = vpack.c.b16 %v467, %v466
  %v589 = vpack.c.b16 %v469, %v468
  %v590 = vpack.c.b16 %v471, %v470
  %v591 = vpack.c.b16 %v473, %v472
  %v592 = vpack.c.b16 %v475, %v474
  %v593 = vpack.c.b16 %v477, %v476
  %v594 = vpack.c.b16 %v479, %v478
  %v595 = vpack.c.b16 %v481, %v480
  %v596 = vpack.c.b16 %v483, %v482
  %v597 = vpack.c.b16 %v485, %v484
  %v598 = vpack.c.b16 %v487, %v486
  %v599 = vpack.c.b16 %v489, %v488
  %v600 = vpack.c.b16 %v491, %v490
  %v601 = vpack.c.b16 %v493, %v492
  %v602 = vpack.c.b16 %v495, %v494
  %v603 = vpack.c.b16 %v497, %v496
  %v604 = vpack.c.b16 %v499, %v498
  %v605 = vpack.c.b16 %v501, %v500
  %v606 = vpack.c.b16 %v503, %v502
  %v607 = vpack.c.b16 %v505, %v504
  %v608 = vpack.c.b16 %v507, %v506
  %v609 = vpack.c.b16 %v509, %v508
  %v610 = vpack.c.b16 %v511, %v510
  %v611 = vpack.c.b16 %v513, %v512
  %v612 = vpack.c.b16 %v515, %v514
  %v613 = vpack.c.b16 %v517, %v516
  %v614 = vpack.c.b16 %v519, %v518
  %v615 = vpack.c.b16 %v521, %v520
  %v616 = vpack.c.b16 %v523, %v522
  %v617 = vpack.c.b16 %v525, %v524
  %v618 = vpack.c.b16 %v527, %v526
  %v619 = vpack.c.b16 %v529, %v528
  %v620 = vpack.c.b16 %v531, %v530
  %v621 = vpack.c.b16 %v533, %v532
  %v622 = vpack.c.b16 %v535, %v534
  %v623 = vpack.c.b16 %v537, %v536
  %v624 = vpack.c.b16 %v539, %v538
  %v625 = vpack.c.b16 %v541, %v540
  %v626 = vpack.c.b16 %v543, %v542
  %v627 = vpack.c.b16 %v545, %v544
  %v628 = vpack.c.b16 %v547, %v546
  %v629 = vpack.c.b16 %v549, %v548
  %v630 = vpack.c.b16 %v551, %v550
  %v631 = vpack.c.b16 %v553, %v552
  %v632 = vpack.c.b16 %v555, %v554
  %v633 = vpack.c.b16 %v557, %v556
  %v634 = vpack.c.b16 %v559, %v558
  %v635 = vpack.c.b16 %v561, %v560
  %v636 = vpack.c.b16 %v563, %v562
  %v637 = vpack.c.b16 %v565, %v564
  %710 = vmatprep.subr.bf16.mxu0 0
  %711 = vmatpush1.bf16.msra.mxu0 %v566
  %712 = vmatprep.subr.bf16.mxu0 0
  %713 = vmatpush1.bf16.msra.mxu0 %v567
  %714 = vmatprep.subr.bf16.mxu0 0
  %715 = vmatpush1.bf16.msra.mxu0 %v568
  %716 = vmatprep.subr.bf16.mxu0 0
  %717 = vmatpush1.bf16.msra.mxu0 %v569
  %718 = vmatprep.subr.bf16.mxu0 0
  %719 = vmatpush1.bf16.msra.mxu0 %v570
  %720 = vmatprep.subr.bf16.mxu0 0
  %721 = vmatpush1.bf16.msra.mxu0 %v571
  %722 = vmatprep.subr.bf16.mxu0 0
  %723 = vmatpush1.bf16.msra.mxu0 %v572
  %724 = vmatprep.subr.bf16.mxu0 0
  %725 = vmatpush1.bf16.msra.mxu0 %v573
  %726 = vmatprep.subr.bf16.mxu0 0
  %727 = vmatpush1.bf16.msra.mxu0 %v574
  %728 = vmatprep.subr.bf16.mxu0 0
  %729 = vmatpush1.bf16.msra.mxu0 %v575
  %730 = vmatprep.subr.bf16.mxu0 0
  %731 = vmatpush1.bf16.msra.mxu0 %v576
  %732 = vmatprep.subr.bf16.mxu0 0
  %733 = vmatpush1.bf16.msra.mxu0 %v577
  %734 = vmatprep.subr.bf16.mxu0 0
  %735 = vmatpush1.bf16.msra.mxu0 %v578
  %736 = vmatprep.subr.bf16.mxu0 0
  %737 = vmatpush1.bf16.msra.mxu0 %v579
  %738 = vmatprep.subr.bf16.mxu0 0
  %739 = vmatpush1.bf16.msra.mxu0 %v580
  %740 = vmatprep.subr.bf16.mxu0 0
  %741 = vmatpush1.bf16.msra.mxu0 %v581
  %742 = vmatprep.mubr.bf16.mxu0 %v243
  %743 = vmatmul.mubr.bf16.gmra.mrb[0].mxu0 %v242
  %v744 = vpop.f32.mrb[0].mxu0
  %v745 = vadd.f32 %v184, %v744
  %v746 = vpop.f32.mrb[0].mxu0
  %v747 = vpop.f32.mrb[0].mxu0
  %v748 = vadd.f32 %v184, %v747
  %v749 = vpop.f32.mrb[0].mxu0
  %750 = vmatprep.mubr.bf16.mxu0 %v252
  %751 = vmatmul.mubr.bf16.gmra.mrb[0].mxu0 %v251
  %v752 = vpop.f32.mrb[0].mxu0
  %v753 = vadd.f32 %v184, %v752
  %v754 = vpop.f32.mrb[0].mxu0
  %v755 = vpop.f32.mrb[0].mxu0
  %v756 = vadd.f32 %v184, %v755
  %v757 = vpop.f32.mrb[0].mxu0
  %758 = vdwg.mxu0
  %759 = vmatprep.subr.bf16.mxu0 0
  %760 = vmatpush1.bf16.msra.mxu0 %v582
  %761 = vmatprep.subr.bf16.mxu0 0
  %762 = vmatpush1.bf16.msra.mxu0 %v583
  %763 = vmatprep.subr.bf16.mxu0 0
  %764 = vmatpush1.bf16.msra.mxu0 %v584
  %765 = vmatprep.subr.bf16.mxu0 0
  %766 = vmatpush1.bf16.msra.mxu0 %v585
  %767 = vmatprep.subr.bf16.mxu0 0
  %768 = vmatpush1.bf16.msra.mxu0 %v586
  %769 = vmatprep.subr.bf16.mxu0 0
  %770 = vmatpush1.bf16.msra.mxu0 %v587
  %771 = vmatprep.subr.bf16.mxu0 0
  %772 = vmatpush1.bf16.msra.mxu0 %v588
  %773 = vmatprep.subr.bf16.mxu0 0
  %774 = vmatpush1.bf16.msra.mxu0 %v589
  %775 = vmatprep.subr.bf16.mxu0 0
  %776 = vmatpush1.bf16.msra.mxu0 %v590
  %777 = vmatprep.subr.bf16.mxu0 0
  %778 = vmatpush1.bf16.msra.mxu0 %v591
  %779 = vmatprep.subr.bf16.mxu0 0
  %780 = vmatpush1.bf16.msra.mxu0 %v592
  %781 = vmatprep.subr.bf16.mxu0 0
  %782 = vmatpush1.bf16.msra.mxu0 %v593
  %783 = vmatprep.subr.bf16.mxu0 0
  %784 = vmatpush1.bf16.msra.mxu0 %v594
  %785 = vmatprep.subr.bf16.mxu0 0
  %786 = vmatpush1.bf16.msra.mxu0 %v595
  %787 = vmatprep.subr.bf16.mxu0 0
  %788 = vmatpush1.bf16.msra.mxu0 %v596
  %789 = vmatprep.subr.bf16.mxu0 0
  %790 = vmatpush1.bf16.msra.mxu0 %v597
  %791 = vmatprep.mubr.bf16.mxu0 %v245
  %792 = vmatmul.mubr.bf16.gmra.mrb[0].mxu0 %v244
  %v793 = vpop.f32.mrb[0].mxu0
  %v794 = vadd.f32 %v745, %v793
  %v795 = vpop.f32.mrb[0].mxu0
  %v796 = vpop.f32.mrb[0].mxu0
  %v797 = vadd.f32 %v748, %v796
  %v798 = vpop.f32.mrb[0].mxu0
  %799 = vmatprep.mubr.bf16.mxu0 %v254
  %800 = vmatmul.mubr.bf16.gmra.mrb[0].mxu0 %v253
  %v801 = vpop.f32.mrb[0].mxu0
  %v802 = vadd.f32 %v753, %v801
  %v803 = vpop.f32.mrb[0].mxu0
  %v804 = vpop.f32.mrb[0].mxu0
  %v805 = vadd.f32 %v756, %v804
  %v806 = vpop.f32.mrb[0].mxu0
  %807 = vdwg.mxu0
  %808 = vmatprep.subr.bf16.mxu0 0
  %809 = vmatpush1.bf16.msra.mxu0 %v598
  %810 = vmatprep.subr.bf16.mxu0 0
  %811 = vmatpush1.bf16.msra.mxu0 %v599
  %812 = vmatprep.subr.bf16.mxu0 0
  %813 = vmatpush1.bf16.msra.mxu0 %v600
  %814 = vmatprep.subr.bf16.mxu0 0
  %815 = vmatpush1.bf16.msra.mxu0 %v601
  %816 = vmatprep.subr.bf16.mxu0 0
  %817 = vmatpush1.bf16.msra.mxu0 %v602
  %818 = vmatprep.subr.bf16.mxu0 0
  %819 = vmatpush1.bf16.msra.mxu0 %v603
  %820 = vmatprep.subr.bf16.mxu0 0
  %821 = vmatpush1.bf16.msra.mxu0 %v604
  %822 = vmatprep.subr.bf16.mxu0 0
  %823 = vmatpush1.bf16.msra.mxu0 %v605
  %824 = vmatprep.subr.bf16.mxu0 0
  %825 = vmatpush1.bf16.msra.mxu0 %v606
  %826 = vmatprep.subr.bf16.mxu0 0
  %827 = vmatpush1.bf16.msra.mxu0 %v607
  %828 = vmatprep.subr.bf16.mxu0 0
  %829 = vmatpush1.bf16.msra.mxu0 %v608
  %830 = vmatprep.subr.bf16.mxu0 0
  %831 = vmatpush1.bf16.msra.mxu0 %v609
  %832 = vmatprep.subr.bf16.mxu0 0
  %833 = vmatpush1.bf16.msra.mxu0 %v610
  %834 = vmatprep.subr.bf16.mxu0 0
  %835 = vmatpush1.bf16.msra.mxu0 %v611
  %836 = vmatprep.subr.bf16.mxu0 0
  %837 = vmatpush1.bf16.msra.mxu0 %v612
  %838 = vmatprep.subr.bf16.mxu0 0
  %839 = vmatpush1.bf16.msra.mxu0 %v613
  %840 = vmatprep.mubr.bf16.mxu0 %v247
  %841 = vmatmul.mubr.bf16.gmra.mrb[0].mxu0 %v246
  %v842 = vpop.f32.mrb[0].mxu0
  %v843 = vadd.f32 %v794, %v842
  %v844 = vpop.f32.mrb[0].mxu0
  %v845 = vpop.f32.mrb[0].mxu0
  %v846 = vadd.f32 %v797, %v845
  %v847 = vpop.f32.mrb[0].mxu0
  %848 = vmatprep.mubr.bf16.mxu0 %v256
  %849 = vmatmul.mubr.bf16.gmra.mrb[0].mxu0 %v255
  %v850 = vpop.f32.mrb[0].mxu0
  %v851 = vadd.f32 %v802, %v850
  %v852 = vpop.f32.mrb[0].mxu0
  %v853 = vpop.f32.mrb[0].mxu0
  %v854 = vadd.f32 %v805, %v853
  %v855 = vpop.f32.mrb[0].mxu0
  %856 = vdwg.mxu0
  %857 = vmatprep.subr.bf16.mxu0 0
  %858 = vmatpush1.bf16.msra.mxu0 %v614
  %859 = vmatprep.subr.bf16.mxu0 0
  %860 = vmatpush1.bf16.msra.mxu0 %v615
  %861 = vmatprep.subr.bf16.mxu0 0
  %862 = vmatpush1.bf16.msra.mxu0 %v616
  %863 = vmatprep.subr.bf16.mxu0 0
  %864 = vmatpush1.bf16.msra.mxu0 %v617
  %865 = vmatprep.subr.bf16.mxu0 0
  %866 = vmatpush1.bf16.msra.mxu0 %v618
  %867 = vmatprep.subr.bf16.mxu0 0
  %868 = vmatpush1.bf16.msra.mxu0 %v619
  %869 = vmatprep.subr.bf16.mxu0 0
  %870 = vmatpush1.bf16.msra.mxu0 %v620
  %871 = vmatprep.subr.bf16.mxu0 0
  %872 = vmatpush1.bf16.msra.mxu0 %v621
  %873 = vmatprep.subr.bf16.mxu0 0
  %874 = vmatpush1.bf16.msra.mxu0 %v622
  %875 = vmatprep.subr.bf16.mxu0 0
  %876 = vmatpush1.bf16.msra.mxu0 %v623
  %877 = vmatprep.subr.bf16.mxu0 0
  %878 = vmatpush1.bf16.msra.mxu0 %v624
  %879 = vmatprep.subr.bf16.mxu0 0
  %880 = vmatpush1.bf16.msra.mxu0 %v625
  %881 = vmatprep.subr.bf16.mxu0 0
  %882 = vmatpush1.bf16.msra.mxu0 %v626
  %883 = vmatprep.subr.bf16.mxu0 0
  %884 = vmatpush1.bf16.msra.mxu0 %v627
  %885 = vmatprep.subr.bf16.mxu0 0
  %886 = vmatpush1.bf16.msra.mxu0 %v628
  %887 = vmatprep.subr.bf16.mxu0 0
  %888 = vmatpush1.bf16.msra.mxu0 %v629
  %889 = vmatprep.mubr.bf16.mxu0 %v249
  %890 = vmatmul.mubr.bf16.gmra.mrb[0].mxu0 %v248
  %v891 = vpop.f32.mrb[0].mxu0
  %v892 = vadd.f32 %v843, %v891
  %v893 = vpop.f32.mrb[0].mxu0
  %v894 = vpop.f32.mrb[0].mxu0
  %v895 = vadd.f32 %v846, %v894
  %v896 = vpop.f32.mrb[0].mxu0
  %897 = vmatprep.mubr.bf16.mxu0 %v258
  %898 = vmatmul.mubr.bf16.gmra.mrb[0].mxu0 %v257
  %v899 = vpop.f32.mrb[0].mxu0
  %v900 = vadd.f32 %v851, %v899
  %v901 = vpop.f32.mrb[0].mxu0
  %v902 = vpop.f32.mrb[0].mxu0
  %v903 = vadd.f32 %v854, %v902
  %v904 = vpop.f32.mrb[0].mxu0
  %905 = vdwg.mxu0
  %906 = vmatprep.subr.bf16.mxu0 0
  %907 = vmatpush1.bf16.msra.mxu0 %v630
  %908 = vmatprep.subr.bf16.mxu0 0
  %909 = vmatpush1.bf16.msra.mxu0 %v631
  %910 = vmatprep.subr.bf16.mxu0 0
  %911 = vmatpush1.bf16.msra.mxu0 %v632
  %912 = vmatprep.subr.bf16.mxu0 0
  %913 = vmatpush1.bf16.msra.mxu0 %v633
  %914 = vmatprep.subr.bf16.mxu0 0
  %915 = vmatpush1.bf16.msra.mxu0 %v634
  %916 = vmatprep.subr.bf16.mxu0 0
  %917 = vmatpush1.bf16.msra.mxu0 %v635
  %918 = vmatprep.subr.bf16.mxu0 0
  %919 = vmatpush1.bf16.msra.mxu0 %v636
  %920 = vmatprep.subr.bf16.mxu0 0
  %921 = vmatpush1.bf16.msra.mxu0 %v637
  %922 = vmatprep.subr.bf16.mxu0 0
  %923 = vmatpush1.bf16.msra.mxu0 0
  %924 = vmatprep.subr.bf16.mxu0 0
  %925 = vmatpush1.bf16.msra.mxu0 0
  %926 = vmatprep.subr.bf16.mxu0 0
  %927 = vmatpush1.bf16.msra.mxu0 0
  %928 = vmatprep.subr.bf16.mxu0 0
  %929 = vmatpush1.bf16.msra.mxu0 0
  %930 = vmatprep.subr.bf16.mxu0 0
  %931 = vmatpush1.bf16.msra.mxu0 0
  %932 = vmatprep.subr.bf16.mxu0 0
  %933 = vmatpush1.bf16.msra.mxu0 0
  %934 = vmatprep.subr.bf16.mxu0 0
  %935 = vmatpush1.bf16.msra.mxu0 0
  %936 = vmatprep.subr.bf16.mxu0 0
  %937 = vmatpush1.bf16.msra.mxu0 0
  %938 = vmatprep.mubr.bf16.mxu0 0
  %939 = vmatmul.mubr.bf16.gmra.mrb[0].mxu0 %v250
  %v940 = vpop.f32.mrb[0].mxu0
  %v941 = vadd.f32 %v892, %v940
  %v942 = vpop.f32.mrb[0].mxu0
  %v943 = vpop.f32.mrb[0].mxu0
  %v944 = vadd.f32 %v895, %v943
  %v945 = vpop.f32.mrb[0].mxu0
  %946 = vmatprep.mubr.bf16.mxu0 0
  %947 = vmatmul.mubr.bf16.gmra.mrb[0].mxu0 %v259
  %v948 = vpop.f32.mrb[0].mxu0
  %v949 = vadd.f32 %v900, %v948
  %v950 = vpop.f32.mrb[0].mxu0
  %v951 = vpop.f32.mrb[0].mxu0
  %v952 = vadd.f32 %v903, %v951
  %v953 = vpop.f32.mrb[0].mxu0
  %954 = vdwg.mxu0
  %v955 = vmax.f32 %v941, 0.0
  %v956 = vmax.f32 %v944, 0.0
  %v957 = vmax.f32 %v949, 0.0
  %v958 = vmax.f32 %v952, 0.0
  %v959 = vpack.c.bf16 %v956, %v955
  %v960 = vpack.c.bf16 %v958, %v957
  %v963 = vunpack.c.l.b16 %v959
  %v964 = vunpack.c.h.b16 %v959
  %v965 = vunpack.c.l.b16 %v960
  %v966 = vunpack.c.h.b16 %v960
  %v967 = vpack.c.b16 %v963, %v963
  %v968 = vpack.c.b16 %v964, %v964
  %v969 = vpack.c.b16 %v965, %v965
  %v970 = vpack.c.b16 %v966, %v966
  %975 = vst [vmem:[%s3] sm:$0xf] %v967
  %976 = vst [vmem:[%s3 + $0x4] sm:$0xf] %v968
  %977 = vst [vmem:[%s3 + $0x8] sm:$0xf] %v969
  %978 = vst [vmem:[%s3 + $0xc] sm:$0xf] %v970
  // Predicated region
  $region14: #{resnet_tsa_forward.15} parent=0 // pred_check
    _
  $region15: #{resnet_tsa_forward.15} parent=0 // pred_check_branch
    %980 = sbr.rel (0) target = $region17
  $region16: #{resnet_tsa_forward.15} parent=0 // pred_region
    _
  $region17: #{resnet_tsa_forward.15} parent=0 // pred_fallthru
    _
  // Predicated region
  $region18: #{resnet_tsa_forward.15} parent=0 // pred_check
    _
  $region19: #{resnet_tsa_forward.15} parent=0 // pred_check_branch
    %982 = sbr.rel (0) target = $region21
  $region20: #{resnet_tsa_forward.15} parent=0 // pred_region
    _
  $region21: #{resnet_tsa_forward.15} parent=0 // pred_fallthru
    _

// kernel: resnet_tsa_forward.14
$region0: #{resnet_tsa_forward.14}
  #allocation0 [shape = 'u32[]', space=smem, size = 0x4, offset = 0x4, fixed_abs, tag = 'smem constant byte address 0x4 - core index']
  #allocation1 [shape = 'u32[144,128]{1,0:T(1,128)}', space=vmem, size = 0x12000, scoped, tag = 'internal scratch']
  %s0 = inlined_call_operand.vmem [shape: bf16[128,1152], index: 0, kind: input, shape index: {}]
  %s1 = inlined_call_operand.vmem [shape: bf16[1152,128], index: 1, kind: input, shape index: {}]
  %s2 = inlined_call_operand.vmem [shape: f32[1,128], index: 2, kind: input, shape index: {}]
  %s3 = inlined_call_operand.vmem [shape: bf16[128,128], index: 3, kind: input, shape index: {}]
  %s4 = inlined_call_operand.vmem [shape: bf16[128,128], index: 4, kind: input, shape index: {}]
  %s5 = inlined_call_operand.vmem [shape: f32[1,128], index: 5, kind: input, shape index: {}]
  %s6 = inlined_call_operand.vmem [shape: bf16[128,128], index: 6, kind: output, shape index: {}]
  %s7 = sld [smem:[#allocation0]]
  $region34: #{resnet_tsa_forward.14} parent=0
    _
  %s9 = ssub.s32 1, %s7
  %s10 = scalar_select 0, %s9, %s7
  // Predicated region
  $region2: #{resnet_tsa_forward.14} parent=0 // pred_check
    _
  $region3: #{resnet_tsa_forward.14} parent=0 // pred_check_branch
    %12 = sbr.rel (0) target = $region5
  $region4: #{resnet_tsa_forward.14} parent=0 // pred_region
    _
  $region5: #{resnet_tsa_forward.14} parent=0 // pred_fallthru
    _
  // Predicated region
  $region6: #{resnet_tsa_forward.14} parent=0 // pred_check
    _
  $region7: #{resnet_tsa_forward.14} parent=0 // pred_check_branch
    %14 = sbr.rel (0) target = $region9
  $region8: #{resnet_tsa_forward.14} parent=0 // pred_region
    _
  $region9: #{resnet_tsa_forward.14} parent=0 // pred_fallthru
    _
  // Predicated region
  $region10: #{resnet_tsa_forward.14} parent=0 // pred_check
    _
  $region11: #{resnet_tsa_forward.14} parent=0 // pred_check_branch
    %16 = sbr.rel (0) target = $region13
  $region12: #{resnet_tsa_forward.14} parent=0 // pred_region
    _
  $region13: #{resnet_tsa_forward.14} parent=0 // pred_fallthru
    _
  // Predicated region
  $region14: #{resnet_tsa_forward.14} parent=0 // pred_check
    _
  $region15: #{resnet_tsa_forward.14} parent=0 // pred_check_branch
    %18 = sbr.rel (0) target = $region17
  $region16: #{resnet_tsa_forward.14} parent=0 // pred_region
    _
  $region17: #{resnet_tsa_forward.14} parent=0 // pred_fallthru
    _
  // Predicated region
  $region18: #{resnet_tsa_forward.14} parent=0 // pred_check
    _
  $region19: #{resnet_tsa_forward.14} parent=0 // pred_check_branch
    %20 = sbr.rel (0) target = $region21
  $region20: #{resnet_tsa_forward.14} parent=0 // pred_region
    _
  $region21: #{resnet_tsa_forward.14} parent=0 // pred_fallthru
    _
  // Predicated region
  $region22: #{resnet_tsa_forward.14} parent=0 // pred_check
    _
  $region23: #{resnet_tsa_forward.14} parent=0 // pred_check_branch
    %22 = sbr.rel (0) target = $region25
  $region24: #{resnet_tsa_forward.14} parent=0 // pred_region
    _
  $region25: #{resnet_tsa_forward.14} parent=0 // pred_fallthru
    _
  %v24 = vld [vmem:[%s0] sm:$0xff]
  %v25 = vld [vmem:[%s0 + $0x8] sm:$0xff]
  %v26 = vld [vmem:[%s0 + $0x10] sm:$0xff]
  %v27 = vld [vmem:[%s0 + $0x18] sm:$0xff]
  %v28 = vld [vmem:[%s0 + $0x20] sm:$0xf]
  %v29 = vld [vmem:[%s0 + $0x24] sm:$0xff]
  %v30 = vld [vmem:[%s0 + $0x2c] sm:$0xff]
  %v31 = vld [vmem:[%s0 + $0x34] sm:$0xff]
  %v32 = vld [vmem:[%s0 + $0x3c] sm:$0xff]
  %v33 = vld [vmem:[%s0 + $0x44] sm:$0xf]
  %v34 = vld [vmem:[%s0 + $0x48] sm:$0xff]
  %v35 = vld [vmem:[%s0 + $0x50] sm:$0xff]
  %v36 = vld [vmem:[%s0 + $0x58] sm:$0xff]
  %v37 = vld [vmem:[%s0 + $0x60] sm:$0xff]
  %v38 = vld [vmem:[%s0 + $0x68] sm:$0xf]
  %v39 = vld [vmem:[%s0 + $0x6c] sm:$0xff]
  %v40 = vld [vmem:[%s0 + $0x74] sm:$0xff]
  %v41 = vld [vmem:[%s0 + $0x7c] sm:$0xff]
  %v42 = vld [vmem:[%s0 + $0x84] sm:$0xff]
  %v43 = vld [vmem:[%s0 + $0x8c] sm:$0xf]
  %v44 = vld [vmem:[%s0 + $0x90] sm:$0xff]
  %v45 = vld [vmem:[%s0 + $0x98] sm:$0xff]
  %v46 = vld [vmem:[%s0 + $0xa0] sm:$0xff]
  %v47 = vld [vmem:[%s0 + $0xa8] sm:$0xff]
  %v48 = vld [vmem:[%s0 + $0xb0] sm:$0xf]
  %v49 = vld [vmem:[%s0 + $0xb4] sm:$0xff]
  %v50 = vld [vmem:[%s0 + $0xbc] sm:$0xff]
  %v51 = vld [vmem:[%s0 + $0xc4] sm:$0xff]
  %v52 = vld [vmem:[%s0 + $0xcc] sm:$0xff]
  %v53 = vld [vmem:[%s0 + $0xd4] sm:$0xf]
  %v54 = vld [vmem:[%s0 + $0xd8] sm:$0xff]
  %v55 = vld [vmem:[%s0 + $0xe0] sm:$0xff]
  %v56 = vld [vmem:[%s0 + $0xe8] sm:$0xff]
  %v57 = vld [vmem:[%s0 + $0xf0] sm:$0xff]
  %v58 = vld [vmem:[%s0 + $0xf8] sm:$0xf]
  %v59 = vld [vmem:[%s0 + $0xfc] sm:$0xff]
  %v60 = vld [vmem:[%s0 + $0x104] sm:$0xff]
  %v61 = vld [vmem:[%s0 + $0x10c] sm:$0xff]
  %v62 = vld [vmem:[%s0 + $0x114] sm:$0xff]
  %v63 = vld [vmem:[%s0 + $0x11c] sm:$0xf]
  %v64 = vld [vmem:[%s0 + $0x120] sm:$0xff]
  %v65 = vld [vmem:[%s0 + $0x128] sm:$0xff]
  %v66 = vld [vmem:[%s0 + $0x130] sm:$0xff]
  %v67 = vld [vmem:[%s0 + $0x138] sm:$0xff]
  %v68 = vld [vmem:[%s0 + $0x140] sm:$0xf]
  %v69 = vld [vmem:[%s0 + $0x144] sm:$0xff]
  %v70 = vld [vmem:[%s0 + $0x14c] sm:$0xff]
  %v71 = vld [vmem:[%s0 + $0x154] sm:$0xff]
  %v72 = vld [vmem:[%s0 + $0x15c] sm:$0xff]
  %v73 = vld [vmem:[%s0 + $0x164] sm:$0xf]
  %v74 = vld [vmem:[%s0 + $0x168] sm:$0xff]
  %v75 = vld [vmem:[%s0 + $0x170] sm:$0xff]
  %v76 = vld [vmem:[%s0 + $0x178] sm:$0xff]
  %v77 = vld [vmem:[%s0 + $0x180] sm:$0xff]
  %v78 = vld [vmem:[%s0 + $0x188] sm:$0xf]
  %v79 = vld [vmem:[%s0 + $0x18c] sm:$0xff]
  %v80 = vld [vmem:[%s0 + $0x194] sm:$0xff]
  %v81 = vld [vmem:[%s0 + $0x19c] sm:$0xff]
  %v82 = vld [vmem:[%s0 + $0x1a4] sm:$0xff]
  %v83 = vld [vmem:[%s0 + $0x1ac] sm:$0xf]
  %v84 = vld [vmem:[%s0 + $0x1b0] sm:$0xff]
  %v85 = vld [vmem:[%s0 + $0x1b8] sm:$0xff]
  %v86 = vld [vmem:[%s0 + $0x1c0] sm:$0xff]
  %v87 = vld [vmem:[%s0 + $0x1c8] sm:$0xff]
  %v88 = vld [vmem:[%s0 + $0x1d0] sm:$0xf]
  %v89 = vld [vmem:[%s0 + $0x1d4] sm:$0xff]
  %v90 = vld [vmem:[%s0 + $0x1dc] sm:$0xff]
  %v91 = vld [vmem:[%s0 + $0x1e4] sm:$0xff]
  %v92 = vld [vmem:[%s0 + $0x1ec] sm:$0xff]
  %v93 = vld [vmem:[%s0 + $0x1f4] sm:$0xf]
  %v94 = vld [vmem:[%s0 + $0x1f8] sm:$0xff]
  %v95 = vld [vmem:[%s0 + $0x200] sm:$0xff]
  %v96 = vld [vmem:[%s0 + $0x208] sm:$0xff]
  %v97 = vld [vmem:[%s0 + $0x210] sm:$0xff]
  %v98 = vld [vmem:[%s0 + $0x218] sm:$0xf]
  %v99 = vld [vmem:[%s0 + $0x21c] sm:$0xff]
  %v100 = vld [vmem:[%s0 + $0x224] sm:$0xff]
  %v101 = vld [vmem:[%s0 + $0x22c] sm:$0xff]
  %v102 = vld [vmem:[%s0 + $0x234] sm:$0xff]
  %v103 = vld [vmem:[%s0 + $0x23c] sm:$0xf]
  %v104 = vld [vmem:[%s1] sm:$0xf]
  %v105 = vld [vmem:[%s1 + $0x4] sm:$0xf]
  %v106 = vld [vmem:[%s1 + $0x8] sm:$0xf]
  %v107 = vld [vmem:[%s1 + $0xc] sm:$0xf]
  %v108 = vld [vmem:[%s1 + $0x10] sm:$0xf]
  %v109 = vld [vmem:[%s1 + $0x14] sm:$0xf]
  %v110 = vld [vmem:[%s1 + $0x18] sm:$0xf]
  %v111 = vld [vmem:[%s1 + $0x1c] sm:$0xf]
  %v112 = vld [vmem:[%s1 + $0x20] sm:$0xf]
  %v113 = vld [vmem:[%s1 + $0x24] sm:$0xf]
  %v114 = vld [vmem:[%s1 + $0x28] sm:$0xf]
  %v115 = vld [vmem:[%s1 + $0x2c] sm:$0xf]
  %v116 = vld [vmem:[%s1 + $0x30] sm:$0xf]
  %v117 = vld [vmem:[%s1 + $0x34] sm:$0xf]
  %v118 = vld [vmem:[%s1 + $0x38] sm:$0xf]
  %v119 = vld [vmem:[%s1 + $0x3c] sm:$0xf]
  %v120 = vld [vmem:[%s1 + $0x40] sm:$0xf]
  %v121 = vld [vmem:[%s1 + $0x44] sm:$0xf]
  %v122 = vld [vmem:[%s1 + $0x48] sm:$0xf]
  %v123 = vld [vmem:[%s1 + $0x4c] sm:$0xf]
  %v124 = vld [vmem:[%s1 + $0x50] sm:$0xf]
  %v125 = vld [vmem:[%s1 + $0x54] sm:$0xf]
  %v126 = vld [vmem:[%s1 + $0x58] sm:$0xf]
  %v127 = vld [vmem:[%s1 + $0x5c] sm:$0xf]
  %v128 = vld [vmem:[%s1 + $0x60] sm:$0xf]
  %v129 = vld [vmem:[%s1 + $0x64] sm:$0xf]
  %v130 = vld [vmem:[%s1 + $0x68] sm:$0xf]
  %v131 = vld [vmem:[%s1 + $0x6c] sm:$0xf]
  %v132 = vld [vmem:[%s1 + $0x70] sm:$0xf]
  %v133 = vld [vmem:[%s1 + $0x74] sm:$0xf]
  %v134 = vld [vmem:[%s1 + $0x78] sm:$0xf]
  %v135 = vld [vmem:[%s1 + $0x7c] sm:$0xf]
  %v136 = vld [vmem:[%s1 + $0x80] sm:$0xf]
  %v137 = vld [vmem:[%s1 + $0x84] sm:$0xf]
  %v138 = vld [vmem:[%s1 + $0x88] sm:$0xf]
  %v139 = vld [vmem:[%s1 + $0x8c] sm:$0xf]
  %v140 = vld [vmem:[%s1 + $0x90] sm:$0xf]
  %v141 = vld [vmem:[%s1 + $0x94] sm:$0xf]
  %v142 = vld [vmem:[%s1 + $0x98] sm:$0xf]
  %v143 = vld [vmem:[%s1 + $0x9c] sm:$0xf]
  %v144 = vld [vmem:[%s1 + $0xa0] sm:$0xf]
  %v145 = vld [vmem:[%s1 + $0xa4] sm:$0xf]
  %v146 = vld [vmem:[%s1 + $0xa8] sm:$0xf]
  %v147 = vld [vmem:[%s1 + $0xac] sm:$0xf]
  %v148 = vld [vmem:[%s1 + $0xb0] sm:$0xf]
  %v149 = vld [vmem:[%s1 + $0xb4] sm:$0xf]
  %v150 = vld [vmem:[%s1 + $0xb8] sm:$0xf]
  %v151 = vld [vmem:[%s1 + $0xbc] sm:$0xf]
  %v152 = vld [vmem:[%s1 + $0xc0] sm:$0xf]
  %v153 = vld [vmem:[%s1 + $0xc4] sm:$0xf]
  %v154 = vld [vmem:[%s1 + $0xc8] sm:$0xf]
  %v155 = vld [vmem:[%s1 + $0xcc] sm:$0xf]
  %v156 = vld [vmem:[%s1 + $0xd0] sm:$0xf]
  %v157 = vld [vmem:[%s1 + $0xd4] sm:$0xf]
  %v158 = vld [vmem:[%s1 + $0xd8] sm:$0xf]
  %v159 = vld [vmem:[%s1 + $0xdc] sm:$0xf]
  %v160 = vld [vmem:[%s1 + $0xe0] sm:$0xf]
  %v161 = vld [vmem:[%s1 + $0xe4] sm:$0xf]
  %v162 = vld [vmem:[%s1 + $0xe8] sm:$0xf]
  %v163 = vld [vmem:[%s1 + $0xec] sm:$0xf]
  %v164 = vld [vmem:[%s1 + $0xf0] sm:$0xf]
  %v165 = vld [vmem:[%s1 + $0xf4] sm:$0xf]
  %v166 = vld [vmem:[%s1 + $0xf8] sm:$0xf]
  %v167 = vld [vmem:[%s1 + $0xfc] sm:$0xf]
  %v168 = vld [vmem:[%s1 + $0x100] sm:$0xf]
  %v169 = vld [vmem:[%s1 + $0x104] sm:$0xf]
  %v170 = vld [vmem:[%s1 + $0x108] sm:$0xf]
  %v171 = vld [vmem:[%s1 + $0x10c] sm:$0xf]
  %v172 = vld [vmem:[%s1 + $0x110] sm:$0xf]
  %v173 = vld [vmem:[%s1 + $0x114] sm:$0xf]
  %v174 = vld [vmem:[%s1 + $0x118] sm:$0xf]
  %v175 = vld [vmem:[%s1 + $0x11c] sm:$0xf]
  %v176 = vld [vmem:[%s1 + $0x120] sm:$0xf]
  %v177 = vld [vmem:[%s1 + $0x124] sm:$0xf]
  %v178 = vld [vmem:[%s1 + $0x128] sm:$0xf]
  %v179 = vld [vmem:[%s1 + $0x12c] sm:$0xf]
  %v180 = vld [vmem:[%s1 + $0x130] sm:$0xf]
  %v181 = vld [vmem:[%s1 + $0x134] sm:$0xf]
  %v182 = vld [vmem:[%s1 + $0x138] sm:$0xf]
  %v183 = vld [vmem:[%s1 + $0x13c] sm:$0xf]
  %v184 = vld [vmem:[%s1 + $0x140] sm:$0xf]
  %v185 = vld [vmem:[%s1 + $0x144] sm:$0xf]
  %v186 = vld [vmem:[%s1 + $0x148] sm:$0xf]
  %v187 = vld [vmem:[%s1 + $0x14c] sm:$0xf]
  %v188 = vld [vmem:[%s1 + $0x150] sm:$0xf]
  %v189 = vld [vmem:[%s1 + $0x154] sm:$0xf]
  %v190 = vld [vmem:[%s1 + $0x158] sm:$0xf]
  %v191 = vld [vmem:[%s1 + $0x15c] sm:$0xf]
  %v192 = vld [vmem:[%s1 + $0x160] sm:$0xf]
  %v193 = vld [vmem:[%s1 + $0x164] sm:$0xf]
  %v194 = vld [vmem:[%s1 + $0x168] sm:$0xf]
  %v195 = vld [vmem:[%s1 + $0x16c] sm:$0xf]
  %v196 = vld [vmem:[%s1 + $0x170] sm:$0xf]
  %v197 = vld [vmem:[%s1 + $0x174] sm:$0xf]
  %v198 = vld [vmem:[%s1 + $0x178] sm:$0xf]
  %v199 = vld [vmem:[%s1 + $0x17c] sm:$0xf]
  %v200 = vld [vmem:[%s1 + $0x180] sm:$0xf]
  %v201 = vld [vmem:[%s1 + $0x184] sm:$0xf]
  %v202 = vld [vmem:[%s1 + $0x188] sm:$0xf]
  %v203 = vld [vmem:[%s1 + $0x18c] sm:$0xf]
  %v204 = vld [vmem:[%s1 + $0x190] sm:$0xf]
  %v205 = vld [vmem:[%s1 + $0x194] sm:$0xf]
  %v206 = vld [vmem:[%s1 + $0x198] sm:$0xf]
  %v207 = vld [vmem:[%s1 + $0x19c] sm:$0xf]
  %v208 = vld [vmem:[%s1 + $0x1a0] sm:$0xf]
  %v209 = vld [vmem:[%s1 + $0x1a4] sm:$0xf]
  %v210 = vld [vmem:[%s1 + $0x1a8] sm:$0xf]
  %v211 = vld [vmem:[%s1 + $0x1ac] sm:$0xf]
  %v212 = vld [vmem:[%s1 + $0x1b0] sm:$0xf]
  %v213 = vld [vmem:[%s1 + $0x1b4] sm:$0xf]
  %v214 = vld [vmem:[%s1 + $0x1b8] sm:$0xf]
  %v215 = vld [vmem:[%s1 + $0x1bc] sm:$0xf]
  %v216 = vld [vmem:[%s1 + $0x1c0] sm:$0xf]
  %v217 = vld [vmem:[%s1 + $0x1c4] sm:$0xf]
  %v218 = vld [vmem:[%s1 + $0x1c8] sm:$0xf]
  %v219 = vld [vmem:[%s1 + $0x1cc] sm:$0xf]
  %v220 = vld [vmem:[%s1 + $0x1d0] sm:$0xf]
  %v221 = vld [vmem:[%s1 + $0x1d4] sm:$0xf]
  %v222 = vld [vmem:[%s1 + $0x1d8] sm:$0xf]
  %v223 = vld [vmem:[%s1 + $0x1dc] sm:$0xf]
  %v224 = vld [vmem:[%s1 + $0x1e0] sm:$0xf]
  %v225 = vld [vmem:[%s1 + $0x1e4] sm:$0xf]
  %v226 = vld [vmem:[%s1 + $0x1e8] sm:$0xf]
  %v227 = vld [vmem:[%s1 + $0x1ec] sm:$0xf]
  %v228 = vld [vmem:[%s1 + $0x1f0] sm:$0xf]
  %v229 = vld [vmem:[%s1 + $0x1f4] sm:$0xf]
  %v230 = vld [vmem:[%s1 + $0x1f8] sm:$0xf]
  %v231 = vld [vmem:[%s1 + $0x1fc] sm:$0xf]
  %v232 = vld [vmem:[%s1 + $0x200] sm:$0xf]
  %v233 = vld [vmem:[%s1 + $0x204] sm:$0xf]
  %v234 = vld [vmem:[%s1 + $0x208] sm:$0xf]
  %v235 = vld [vmem:[%s1 + $0x20c] sm:$0xf]
  %v236 = vld [vmem:[%s1 + $0x210] sm:$0xf]
  %v237 = vld [vmem:[%s1 + $0x214] sm:$0xf]
  %v238 = vld [vmem:[%s1 + $0x218] sm:$0xf]
  %v239 = vld [vmem:[%s1 + $0x21c] sm:$0xf]
  %v240 = vld [vmem:[%s1 + $0x220] sm:$0xf]
  %v241 = vld [vmem:[%s1 + $0x224] sm:$0xf]
  %v242 = vld [vmem:[%s1 + $0x228] sm:$0xf]
  %v243 = vld [vmem:[%s1 + $0x22c] sm:$0xf]
  %v244 = vld [vmem:[%s1 + $0x230] sm:$0xf]
  %v245 = vld [vmem:[%s1 + $0x234] sm:$0xf]
  %v246 = vld [vmem:[%s1 + $0x238] sm:$0xf]
  %v247 = vld [vmem:[%s1 + $0x23c] sm:$0xf]
  %v248 = vld [vmem:[%s3] sm:$0xf]
  %v249 = vld [vmem:[%s3 + $0x4] sm:$0xf]
  %v250 = vld [vmem:[%s3 + $0x8] sm:$0xf]
  %v251 = vld [vmem:[%s3 + $0xc] sm:$0xf]
  %v252 = vld [vmem:[%s3 + $0x10] sm:$0xf]
  %v253 = vld [vmem:[%s3 + $0x14] sm:$0xf]
  %v254 = vld [vmem:[%s3 + $0x18] sm:$0xf]
  %v255 = vld [vmem:[%s3 + $0x1c] sm:$0xf]
  %v256 = vld [vmem:[%s3 + $0x20] sm:$0xf]
  %v257 = vld [vmem:[%s3 + $0x24] sm:$0xf]
  %v258 = vld [vmem:[%s3 + $0x28] sm:$0xf]
  %v259 = vld [vmem:[%s3 + $0x2c] sm:$0xf]
  %v260 = vld [vmem:[%s3 + $0x30] sm:$0xf]
  %v261 = vld [vmem:[%s3 + $0x34] sm:$0xf]
  %v262 = vld [vmem:[%s3 + $0x38] sm:$0xf]
  %v263 = vld [vmem:[%s3 + $0x3c] sm:$0xf]
  %v264 = vld [vmem:[%s4] sm:$0xf]
  %v265 = vld [vmem:[%s4 + $0x4] sm:$0xf]
  %v266 = vld [vmem:[%s4 + $0x8] sm:$0xf]
  %v267 = vld [vmem:[%s4 + $0xc] sm:$0xf]
  %v268 = vld [vmem:[%s4 + $0x10] sm:$0xf]
  %v269 = vld [vmem:[%s4 + $0x14] sm:$0xf]
  %v270 = vld [vmem:[%s4 + $0x18] sm:$0xf]
  %v271 = vld [vmem:[%s4 + $0x1c] sm:$0xf]
  %v272 = vld [vmem:[%s4 + $0x20] sm:$0xf]
  %v273 = vld [vmem:[%s4 + $0x24] sm:$0xf]
  %v274 = vld [vmem:[%s4 + $0x28] sm:$0xf]
  %v275 = vld [vmem:[%s4 + $0x2c] sm:$0xf]
  %v276 = vld [vmem:[%s4 + $0x30] sm:$0xf]
  %v277 = vld [vmem:[%s4 + $0x34] sm:$0xf]
  %v278 = vld [vmem:[%s4 + $0x38] sm:$0xf]
  %v279 = vld [vmem:[%s4 + $0x3c] sm:$0xf]
  %v296 = vunpack.c.l.b16 %v248
  %v297 = vunpack.c.l.b16 %v249
  %v298 = vunpack.c.l.b16 %v250
  %v299 = vunpack.c.l.b16 %v251
  %v300 = vunpack.c.l.b16 %v252
  %v301 = vunpack.c.l.b16 %v253
  %v302 = vunpack.c.l.b16 %v254
  %v303 = vunpack.c.l.b16 %v255
  %v304 = vunpack.c.l.b16 %v256
  %v305 = vunpack.c.l.b16 %v257
  %v306 = vunpack.c.l.b16 %v258
  %v307 = vunpack.c.l.b16 %v259
  %v308 = vunpack.c.l.b16 %v260
  %v309 = vunpack.c.l.b16 %v261
  %v310 = vunpack.c.l.b16 %v262
  %v311 = vunpack.c.l.b16 %v263
  %v312 = vpack.c.b16 %v297, %v296
  %v313 = vpack.c.b16 %v299, %v298
  %v314 = vpack.c.b16 %v301, %v300
  %v315 = vpack.c.b16 %v303, %v302
  %v316 = vpack.c.b16 %v305, %v304
  %v317 = vpack.c.b16 %v307, %v306
  %v318 = vpack.c.b16 %v309, %v308
  %v319 = vpack.c.b16 %v311, %v310
  %v344 = vunpack.c.l.b16 %v264
  %v345 = vunpack.c.l.b16 %v265
  %v346 = vunpack.c.l.b16 %v266
  %v347 = vunpack.c.l.b16 %v267
  %v348 = vunpack.c.l.b16 %v268
  %v349 = vunpack.c.l.b16 %v269
  %v350 = vunpack.c.l.b16 %v270
  %v351 = vunpack.c.l.b16 %v271
  %v352 = vunpack.c.l.b16 %v272
  %v353 = vunpack.c.l.b16 %v273
  %v354 = vunpack.c.l.b16 %v274
  %v355 = vunpack.c.l.b16 %v275
  %v356 = vunpack.c.l.b16 %v276
  %v357 = vunpack.c.l.b16 %v277
  %v358 = vunpack.c.l.b16 %v278
  %v359 = vunpack.c.l.b16 %v279
  %v360 = vpack.c.b16 %v345, %v344
  %v361 = vpack.c.b16 %v347, %v346
  %v362 = vpack.c.b16 %v349, %v348
  %v363 = vpack.c.b16 %v351, %v350
  %v364 = vpack.c.b16 %v353, %v352
  %v365 = vpack.c.b16 %v355, %v354
  %v366 = vpack.c.b16 %v357, %v356
  %v367 = vpack.c.b16 %v359, %v358
  %376 = vmatprep.subr.bf16.mxu0 0
  %377 = vmatpush1.bf16.msra.mxu0 %v360
  %378 = vmatprep.subr.bf16.mxu0 0
  %379 = vmatpush1.bf16.msra.mxu0 %v361
  %380 = vmatprep.subr.bf16.mxu0 0
  %381 = vmatpush1.bf16.msra.mxu0 %v362
  %382 = vmatprep.subr.bf16.mxu0 0
  %383 = vmatpush1.bf16.msra.mxu0 %v363
  %384 = vmatprep.subr.bf16.mxu0 0
  %385 = vmatpush1.bf16.msra.mxu0 %v364
  %386 = vmatprep.subr.bf16.mxu0 0
  %387 = vmatpush1.bf16.msra.mxu0 %v365
  %388 = vmatprep.subr.bf16.mxu0 0
  %389 = vmatpush1.bf16.msra.mxu0 %v366
  %390 = vmatprep.subr.bf16.mxu0 0
  %391 = vmatpush1.bf16.msra.mxu0 %v367
  %392 = vmatprep.subr.bf16.mxu0 0
  %393 = vmatpush1.bf16.msra.mxu0 0
  %394 = vmatprep.subr.bf16.mxu0 0
  %395 = vmatpush1.bf16.msra.mxu0 0
  %396 = vmatprep.subr.bf16.mxu0 0
  %397 = vmatpush1.bf16.msra.mxu0 0
  %398 = vmatprep.subr.bf16.mxu0 0
  %399 = vmatpush1.bf16.msra.mxu0 0
  %400 = vmatprep.subr.bf16.mxu0 0
  %401 = vmatpush1.bf16.msra.mxu0 0
  %402 = vmatprep.subr.bf16.mxu0 0
  %403 = vmatpush1.bf16.msra.mxu0 0
  %404 = vmatprep.subr.bf16.mxu0 0
  %405 = vmatpush1.bf16.msra.mxu0 0
  %406 = vmatprep.subr.bf16.mxu0 0
  %407 = vmatpush1.bf16.msra.mxu0 0
  %408 = vmatprep.mubr.bf16.mxu0 0
  %409 = vmatmul.mubr.bf16.gmra.mrb[0].mxu0 %v312
  %v410 = vpop.f32.mrb[0].mxu0
  %v411 = vadd.f32 0.0, %v410
  %v412 = vpop.f32.mrb[0].mxu0
  %v413 = vpop.f32.mrb[0].mxu0
  %v414 = vadd.f32 0.0, %v413
  %v415 = vpop.f32.mrb[0].mxu0
  %416 = vmatprep.mubr.bf16.mxu0 0
  %417 = vmatmul.mubr.bf16.gmra.mrb[0].mxu0 %v313
  %v418 = vpop.f32.mrb[0].mxu0
  %v419 = vadd.f32 0.0, %v418
  %v420 = vpop.f32.mrb[0].mxu0
  %v421 = vpop.f32.mrb[0].mxu0
  %v422 = vadd.f32 0.0, %v421
  %v423 = vpop.f32.mrb[0].mxu0
  %424 = vmatprep.mubr.bf16.mxu0 0
  %425 = vmatmul.mubr.bf16.gmra.mrb[0].mxu0 %v314
  %v426 = vpop.f32.mrb[0].mxu0
  %v427 = vadd.f32 0.0, %v426
  %v428 = vpop.f32.mrb[0].mxu0
  %v429 = vpop.f32.mrb[0].mxu0
  %v430 = vadd.f32 0.0, %v429
  %v431 = vpop.f32.mrb[0].mxu0
  %432 = vmatprep.mubr.bf16.mxu0 0
  %433 = vmatmul.mubr.bf16.gmra.mrb[0].mxu0 %v315
  %v434 = vpop.f32.mrb[0].mxu0
  %v435 = vadd.f32 0.0, %v434
  %v436 = vpop.f32.mrb[0].mxu0
  %v437 = vpop.f32.mrb[0].mxu0
  %v438 = vadd.f32 0.0, %v437
  %v439 = vpop.f32.mrb[0].mxu0
  %440 = vmatprep.mubr.bf16.mxu0 0
  %441 = vmatmul.mubr.bf16.gmra.mrb[0].mxu0 %v316
  %v442 = vpop.f32.mrb[0].mxu0
  %v443 = vadd.f32 0.0, %v442
  %v444 = vpop.f32.mrb[0].mxu0
  %v445 = vpop.f32.mrb[0].mxu0
  %v446 = vadd.f32 0.0, %v445
  %v447 = vpop.f32.mrb[0].mxu0
  %448 = vmatprep.mubr.bf16.mxu0 0
  %449 = vmatmul.mubr.bf16.gmra.mrb[0].mxu0 %v317
  %v450 = vpop.f32.mrb[0].mxu0
  %v451 = vadd.f32 0.0, %v450
  %v452 = vpop.f32.mrb[0].mxu0
  %v453 = vpop.f32.mrb[0].mxu0
  %v454 = vadd.f32 0.0, %v453
  %v455 = vpop.f32.mrb[0].mxu0
  %456 = vmatprep.mubr.bf16.mxu0 0
  %457 = vmatmul.mubr.bf16.gmra.mrb[0].mxu0 %v318
  %v458 = vpop.f32.mrb[0].mxu0
  %v459 = vadd.f32 0.0, %v458
  %v460 = vpop.f32.mrb[0].mxu0
  %v461 = vpop.f32.mrb[0].mxu0
  %v462 = vadd.f32 0.0, %v461
  %v463 = vpop.f32.mrb[0].mxu0
  %464 = vmatprep.mubr.bf16.mxu0 0
  %465 = vmatmul.mubr.bf16.gmra.mrb[0].mxu0 %v319
  %v466 = vpop.f32.mrb[0].mxu0
  %v467 = vadd.f32 0.0, %v466
  %v468 = vpop.f32.mrb[0].mxu0
  %v469 = vpop.f32.mrb[0].mxu0
  %v470 = vadd.f32 0.0, %v469
  %v471 = vpop.f32.mrb[0].mxu0
  %472 = vdwg.mxu0
  %v473 = vld [vmem:[%s2] sm:$0x1]
  %v475 = vlaneseq
  %v476 = vshrl.u32 %v475, 7
  %v477 = vsub.s32 0, %v476
  %v478 = vrot.slane %v473, %v477
  %v560 = vunpack.c.l.b16 %v24
  %v561 = vunpack.c.h.b16 %v24
  %v562 = vunpack.c.l.b16 %v25
  %v563 = vunpack.c.h.b16 %v25
  %v564 = vunpack.c.l.b16 %v26
  %v565 = vunpack.c.h.b16 %v26
  %v566 = vunpack.c.l.b16 %v27
  %v567 = vunpack.c.h.b16 %v27
  %v568 = vunpack.c.l.b16 %v28
  %v569 = vunpack.c.l.b16 %v29
  %v570 = vunpack.c.h.b16 %v29
  %v571 = vunpack.c.l.b16 %v30
  %v572 = vunpack.c.h.b16 %v30
  %v573 = vunpack.c.l.b16 %v31
  %v574 = vunpack.c.h.b16 %v31
  %v575 = vunpack.c.l.b16 %v32
  %v576 = vunpack.c.h.b16 %v32
  %v577 = vunpack.c.l.b16 %v33
  %v578 = vunpack.c.l.b16 %v34
  %v579 = vunpack.c.h.b16 %v34
  %v580 = vunpack.c.l.b16 %v35
  %v581 = vunpack.c.h.b16 %v35
  %v582 = vunpack.c.l.b16 %v36
  %v583 = vunpack.c.h.b16 %v36
  %v584 = vunpack.c.l.b16 %v37
  %v585 = vunpack.c.h.b16 %v37
  %v586 = vunpack.c.l.b16 %v38
  %v587 = vunpack.c.l.b16 %v39
  %v588 = vunpack.c.h.b16 %v39
  %v589 = vunpack.c.l.b16 %v40
  %v590 = vunpack.c.h.b16 %v40
  %v591 = vunpack.c.l.b16 %v41
  %v592 = vunpack.c.h.b16 %v41
  %v593 = vunpack.c.l.b16 %v42
  %v594 = vunpack.c.h.b16 %v42
  %v595 = vunpack.c.l.b16 %v43
  %v596 = vunpack.c.l.b16 %v44
  %v597 = vunpack.c.h.b16 %v44
  %v598 = vunpack.c.l.b16 %v45
  %v599 = vunpack.c.h.b16 %v45
  %v600 = vunpack.c.l.b16 %v46
  %v601 = vunpack.c.h.b16 %v46
  %v602 = vunpack.c.l.b16 %v47
  %v603 = vunpack.c.h.b16 %v47
  %v604 = vunpack.c.l.b16 %v48
  %v605 = vunpack.c.l.b16 %v49
  %v606 = vunpack.c.h.b16 %v49
  %v607 = vunpack.c.l.b16 %v50
  %v608 = vunpack.c.h.b16 %v50
  %v609 = vunpack.c.l.b16 %v51
  %v610 = vunpack.c.h.b16 %v51
  %v611 = vunpack.c.l.b16 %v52
  %v612 = vunpack.c.h.b16 %v52
  %v613 = vunpack.c.l.b16 %v53
  %v614 = vunpack.c.l.b16 %v54
  %v615 = vunpack.c.h.b16 %v54
  %v616 = vunpack.c.l.b16 %v55
  %v617 = vunpack.c.h.b16 %v55
  %v618 = vunpack.c.l.b16 %v56
  %v619 = vunpack.c.h.b16 %v56
  %v620 = vunpack.c.l.b16 %v57
  %v621 = vunpack.c.h.b16 %v57
  %v622 = vunpack.c.l.b16 %v58
  %v623 = vunpack.c.l.b16 %v59
  %v624 = vunpack.c.h.b16 %v59
  %v625 = vunpack.c.l.b16 %v60
  %v626 = vunpack.c.h.b16 %v60
  %v627 = vunpack.c.l.b16 %v61
  %v628 = vunpack.c.h.b16 %v61
  %v629 = vunpack.c.l.b16 %v62
  %v630 = vunpack.c.h.b16 %v62
  %v631 = vunpack.c.l.b16 %v63
  %v632 = vunpack.c.l.b16 %v64
  %v633 = vunpack.c.h.b16 %v64
  %v634 = vunpack.c.l.b16 %v65
  %v635 = vunpack.c.h.b16 %v65
  %v636 = vunpack.c.l.b16 %v66
  %v637 = vunpack.c.h.b16 %v66
  %v638 = vunpack.c.l.b16 %v67
  %v639 = vunpack.c.h.b16 %v67
  %v640 = vunpack.c.l.b16 %v68
  %v641 = vunpack.c.l.b16 %v69
  %v642 = vunpack.c.h.b16 %v69
  %v643 = vunpack.c.l.b16 %v70
  %v644 = vunpack.c.h.b16 %v70
  %v645 = vunpack.c.l.b16 %v71
  %v646 = vunpack.c.h.b16 %v71
  %v647 = vunpack.c.l.b16 %v72
  %v648 = vunpack.c.h.b16 %v72
  %v649 = vunpack.c.l.b16 %v73
  %v650 = vunpack.c.l.b16 %v74
  %v651 = vunpack.c.h.b16 %v74
  %v652 = vunpack.c.l.b16 %v75
  %v653 = vunpack.c.h.b16 %v75
  %v654 = vunpack.c.l.b16 %v76
  %v655 = vunpack.c.h.b16 %v76
  %v656 = vunpack.c.l.b16 %v77
  %v657 = vunpack.c.h.b16 %v77
  %v658 = vunpack.c.l.b16 %v78
  %v659 = vunpack.c.l.b16 %v79
  %v660 = vunpack.c.h.b16 %v79
  %v661 = vunpack.c.l.b16 %v80
  %v662 = vunpack.c.h.b16 %v80
  %v663 = vunpack.c.l.b16 %v81
  %v664 = vunpack.c.h.b16 %v81
  %v665 = vunpack.c.l.b16 %v82
  %v666 = vunpack.c.h.b16 %v82
  %v667 = vunpack.c.l.b16 %v83
  %v668 = vunpack.c.l.b16 %v84
  %v669 = vunpack.c.h.b16 %v84
  %v670 = vunpack.c.l.b16 %v85
  %v671 = vunpack.c.h.b16 %v85
  %v672 = vunpack.c.l.b16 %v86
  %v673 = vunpack.c.h.b16 %v86
  %v674 = vunpack.c.l.b16 %v87
  %v675 = vunpack.c.h.b16 %v87
  %v676 = vunpack.c.l.b16 %v88
  %v677 = vunpack.c.l.b16 %v89
  %v678 = vunpack.c.h.b16 %v89
  %v679 = vunpack.c.l.b16 %v90
  %v680 = vunpack.c.h.b16 %v90
  %v681 = vunpack.c.l.b16 %v91
  %v682 = vunpack.c.h.b16 %v91
  %v683 = vunpack.c.l.b16 %v92
  %v684 = vunpack.c.h.b16 %v92
  %v685 = vunpack.c.l.b16 %v93
  %v686 = vunpack.c.l.b16 %v94
  %v687 = vunpack.c.h.b16 %v94
  %v688 = vunpack.c.l.b16 %v95
  %v689 = vunpack.c.h.b16 %v95
  %v690 = vunpack.c.l.b16 %v96
  %v691 = vunpack.c.h.b16 %v96
  %v692 = vunpack.c.l.b16 %v97
  %v693 = vunpack.c.h.b16 %v97
  %v694 = vunpack.c.l.b16 %v98
  %v695 = vunpack.c.l.b16 %v99
  %v696 = vunpack.c.h.b16 %v99
  %v697 = vunpack.c.l.b16 %v100
  %v698 = vunpack.c.h.b16 %v100
  %v699 = vunpack.c.l.b16 %v101
  %v700 = vunpack.c.h.b16 %v101
  %v701 = vunpack.c.l.b16 %v102
  %v702 = vunpack.c.h.b16 %v102
  %v703 = vunpack.c.l.b16 %v103
  %v704 = vpack.c.b16 %v569, %v560
  %v705 = vpack.c.b16 %v570, %v561
  %v706 = vpack.c.b16 %v571, %v562
  %v707 = vpack.c.b16 %v572, %v563
  %v708 = vpack.c.b16 %v573, %v564
  %v709 = vpack.c.b16 %v574, %v565
  %v710 = vpack.c.b16 %v575, %v566
  %v711 = vpack.c.b16 %v576, %v567
  %v712 = vpack.c.b16 %v577, %v568
  %v713 = vpack.c.b16 %v587, %v578
  %v714 = vpack.c.b16 %v588, %v579
  %v715 = vpack.c.b16 %v589, %v580
  %v716 = vpack.c.b16 %v590, %v581
  %v717 = vpack.c.b16 %v591, %v582
  %v718 = vpack.c.b16 %v592, %v583
  %v719 = vpack.c.b16 %v593, %v584
  %v720 = vpack.c.b16 %v594, %v585
  %v721 = vpack.c.b16 %v595, %v586
  %v722 = vpack.c.b16 %v605, %v596
  %v723 = vpack.c.b16 %v606, %v597
  %v724 = vpack.c.b16 %v607, %v598
  %v725 = vpack.c.b16 %v608, %v599
  %v726 = vpack.c.b16 %v609, %v600
  %v727 = vpack.c.b16 %v610, %v601
  %v728 = vpack.c.b16 %v611, %v602
  %v729 = vpack.c.b16 %v612, %v603
  %v730 = vpack.c.b16 %v613, %v604
  %v731 = vpack.c.b16 %v623, %v614
  %v732 = vpack.c.b16 %v624, %v615
  %v733 = vpack.c.b16 %v625, %v616
  %v734 = vpack.c.b16 %v626, %v617
  %v735 = vpack.c.b16 %v627, %v618
  %v736 = vpack.c.b16 %v628, %v619
  %v737 = vpack.c.b16 %v629, %v620
  %v738 = vpack.c.b16 %v630, %v621
  %v739 = vpack.c.b16 %v631, %v622
  %v740 = vpack.c.b16 %v641, %v632
  %v741 = vpack.c.b16 %v642, %v633
  %v742 = vpack.c.b16 %v643, %v634
  %v743 = vpack.c.b16 %v644, %v635
  %v744 = vpack.c.b16 %v645, %v636
  %v745 = vpack.c.b16 %v646, %v637
  %v746 = vpack.c.b16 %v647, %v638
  %v747 = vpack.c.b16 %v648, %v639
  %v748 = vpack.c.b16 %v649, %v640
  %v749 = vpack.c.b16 %v659, %v650
  %v750 = vpack.c.b16 %v660, %v651
  %v751 = vpack.c.b16 %v661, %v652
  %v752 = vpack.c.b16 %v662, %v653
  %v753 = vpack.c.b16 %v663, %v654
  %v754 = vpack.c.b16 %v664, %v655
  %v755 = vpack.c.b16 %v665, %v656
  %v756 = vpack.c.b16 %v666, %v657
  %v757 = vpack.c.b16 %v667, %v658
  %v758 = vpack.c.b16 %v677, %v668
  %v759 = vpack.c.b16 %v678, %v669
  %v760 = vpack.c.b16 %v679, %v670
  %v761 = vpack.c.b16 %v680, %v671
  %v762 = vpack.c.b16 %v681, %v672
  %v763 = vpack.c.b16 %v682, %v673
  %v764 = vpack.c.b16 %v683, %v674
  %v765 = vpack.c.b16 %v684, %v675
  %v766 = vpack.c.b16 %v685, %v676
  %v767 = vpack.c.b16 %v695, %v686
  %v768 = vpack.c.b16 %v696, %v687
  %v769 = vpack.c.b16 %v697, %v688
  %v770 = vpack.c.b16 %v698, %v689
  %v771 = vpack.c.b16 %v699, %v690
  %v772 = vpack.c.b16 %v700, %v691
  %v773 = vpack.c.b16 %v701, %v692
  %v774 = vpack.c.b16 %v702, %v693
  %v775 = vpack.c.b16 %v703, %v694
  %v992 = vunpack.c.l.b16 %v104
  %v993 = vunpack.c.l.b16 %v105
  %v994 = vunpack.c.l.b16 %v106
  %v995 = vunpack.c.l.b16 %v107
  %v996 = vunpack.c.l.b16 %v108
  %v997 = vunpack.c.l.b16 %v109
  %v998 = vunpack.c.l.b16 %v110
  %v999 = vunpack.c.l.b16 %v111
  %v1000 = vunpack.c.l.b16 %v112
  %v1001 = vunpack.c.l.b16 %v113
  %v1002 = vunpack.c.l.b16 %v114
  %v1003 = vunpack.c.l.b16 %v115
  %v1004 = vunpack.c.l.b16 %v116
  %v1005 = vunpack.c.l.b16 %v117
  %v1006 = vunpack.c.l.b16 %v118
  %v1007 = vunpack.c.l.b16 %v119
  %v1008 = vunpack.c.l.b16 %v120
  %v1009 = vunpack.c.l.b16 %v121
  %v1010 = vunpack.c.l.b16 %v122
  %v1011 = vunpack.c.l.b16 %v123
  %v1012 = vunpack.c.l.b16 %v124
  %v1013 = vunpack.c.l.b16 %v125
  %v1014 = vunpack.c.l.b16 %v126
  %v1015 = vunpack.c.l.b16 %v127
  %v1016 = vunpack.c.l.b16 %v128
  %v1017 = vunpack.c.l.b16 %v129
  %v1018 = vunpack.c.l.b16 %v130
  %v1019 = vunpack.c.l.b16 %v131
  %v1020 = vunpack.c.l.b16 %v132
  %v1021 = vunpack.c.l.b16 %v133
  %v1022 = vunpack.c.l.b16 %v134
  %v1023 = vunpack.c.l.b16 %v135
  %v1024 = vunpack.c.l.b16 %v136
  %v1025 = vunpack.c.l.b16 %v137
  %v1026 = vunpack.c.l.b16 %v138
  %v1027 = vunpack.c.l.b16 %v139
  %v1028 = vunpack.c.l.b16 %v140
  %v1029 = vunpack.c.l.b16 %v141
  %v1030 = vunpack.c.l.b16 %v142
  %v1031 = vunpack.c.l.b16 %v143
  %v1032 = vunpack.c.l.b16 %v144
  %v1033 = vunpack.c.l.b16 %v145
  %v1034 = vunpack.c.l.b16 %v146
  %v1035 = vunpack.c.l.b16 %v147
  %v1036 = vunpack.c.l.b16 %v148
  %v1037 = vunpack.c.l.b16 %v149
  %v1038 = vunpack.c.l.b16 %v150
  %v1039 = vunpack.c.l.b16 %v151
  %v1040 = vunpack.c.l.b16 %v152
  %v1041 = vunpack.c.l.b16 %v153
  %v1042 = vunpack.c.l.b16 %v154
  %v1043 = vunpack.c.l.b16 %v155
  %v1044 = vunpack.c.l.b16 %v156
  %v1045 = vunpack.c.l.b16 %v157
  %v1046 = vunpack.c.l.b16 %v158
  %v1047 = vunpack.c.l.b16 %v159
  %v1048 = vunpack.c.l.b16 %v160
  %v1049 = vunpack.c.l.b16 %v161
  %v1050 = vunpack.c.l.b16 %v162
  %v1051 = vunpack.c.l.b16 %v163
  %v1052 = vunpack.c.l.b16 %v164
  %v1053 = vunpack.c.l.b16 %v165
  %v1054 = vunpack.c.l.b16 %v166
  %v1055 = vunpack.c.l.b16 %v167
  %v1056 = vunpack.c.l.b16 %v168
  %v1057 = vunpack.c.l.b16 %v169
  %v1058 = vunpack.c.l.b16 %v170
  %v1059 = vunpack.c.l.b16 %v171
  %v1060 = vunpack.c.l.b16 %v172
  %v1061 = vunpack.c.l.b16 %v173
  %v1062 = vunpack.c.l.b16 %v174
  %v1063 = vunpack.c.l.b16 %v175
  %v1064 = vunpack.c.l.b16 %v176
  %v1065 = vunpack.c.l.b16 %v177
  %v1066 = vunpack.c.l.b16 %v178
  %v1067 = vunpack.c.l.b16 %v179
  %v1068 = vunpack.c.l.b16 %v180
  %v1069 = vunpack.c.l.b16 %v181
  %v1070 = vunpack.c.l.b16 %v182
  %v1071 = vunpack.c.l.b16 %v183
  %v1072 = vunpack.c.l.b16 %v184
  %v1073 = vunpack.c.l.b16 %v185
  %v1074 = vunpack.c.l.b16 %v186
  %v1075 = vunpack.c.l.b16 %v187
  %v1076 = vunpack.c.l.b16 %v188
  %v1077 = vunpack.c.l.b16 %v189
  %v1078 = vunpack.c.l.b16 %v190
  %v1079 = vunpack.c.l.b16 %v191
  %v1080 = vunpack.c.l.b16 %v192
  %v1081 = vunpack.c.l.b16 %v193
  %v1082 = vunpack.c.l.b16 %v194
  %v1083 = vunpack.c.l.b16 %v195
  %v1084 = vunpack.c.l.b16 %v196
  %v1085 = vunpack.c.l.b16 %v197
  %v1086 = vunpack.c.l.b16 %v198
  %v1087 = vunpack.c.l.b16 %v199
  %v1088 = vunpack.c.l.b16 %v200
  %v1089 = vunpack.c.l.b16 %v201
  %v1090 = vunpack.c.l.b16 %v202
  %v1091 = vunpack.c.l.b16 %v203
  %v1092 = vunpack.c.l.b16 %v204
  %v1093 = vunpack.c.l.b16 %v205
  %v1094 = vunpack.c.l.b16 %v206
  %v1095 = vunpack.c.l.b16 %v207
  %v1096 = vunpack.c.l.b16 %v208
  %v1097 = vunpack.c.l.b16 %v209
  %v1098 = vunpack.c.l.b16 %v210
  %v1099 = vunpack.c.l.b16 %v211
  %v1100 = vunpack.c.l.b16 %v212
  %v1101 = vunpack.c.l.b16 %v213
  %v1102 = vunpack.c.l.b16 %v214
  %v1103 = vunpack.c.l.b16 %v215
  %v1104 = vunpack.c.l.b16 %v216
  %v1105 = vunpack.c.l.b16 %v217
  %v1106 = vunpack.c.l.b16 %v218
  %v1107 = vunpack.c.l.b16 %v219
  %v1108 = vunpack.c.l.b16 %v220
  %v1109 = vunpack.c.l.b16 %v221
  %v1110 = vunpack.c.l.b16 %v222
  %v1111 = vunpack.c.l.b16 %v223
  %v1112 = vunpack.c.l.b16 %v224
  %v1113 = vunpack.c.l.b16 %v225
  %v1114 = vunpack.c.l.b16 %v226
  %v1115 = vunpack.c.l.b16 %v227
  %v1116 = vunpack.c.l.b16 %v228
  %v1117 = vunpack.c.l.b16 %v229
  %v1118 = vunpack.c.l.b16 %v230
  %v1119 = vunpack.c.l.b16 %v231
  %v1120 = vunpack.c.l.b16 %v232
  %v1121 = vunpack.c.l.b16 %v233
  %v1122 = vunpack.c.l.b16 %v234
  %v1123 = vunpack.c.l.b16 %v235
  %v1124 = vunpack.c.l.b16 %v236
  %v1125 = vunpack.c.l.b16 %v237
  %v1126 = vunpack.c.l.b16 %v238
  %v1127 = vunpack.c.l.b16 %v239
  %v1128 = vunpack.c.l.b16 %v240
  %v1129 = vunpack.c.l.b16 %v241
  %v1130 = vunpack.c.l.b16 %v242
  %v1131 = vunpack.c.l.b16 %v243
  %v1132 = vunpack.c.l.b16 %v244
  %v1133 = vunpack.c.l.b16 %v245
  %v1134 = vunpack.c.l.b16 %v246
  %v1135 = vunpack.c.l.b16 %v247
  %v1136 = vpack.c.b16 %v993, %v992
  %v1137 = vpack.c.b16 %v995, %v994
  %v1138 = vpack.c.b16 %v997, %v996
  %v1139 = vpack.c.b16 %v999, %v998
  %v1140 = vpack.c.b16 %v1001, %v1000
  %v1141 = vpack.c.b16 %v1003, %v1002
  %v1142 = vpack.c.b16 %v1005, %v1004
  %v1143 = vpack.c.b16 %v1007, %v1006
  %v1144 = vpack.c.b16 %v1009, %v1008
  %v1145 = vpack.c.b16 %v1011, %v1010
  %v1146 = vpack.c.b16 %v1013, %v1012
  %v1147 = vpack.c.b16 %v1015, %v1014
  %v1148 = vpack.c.b16 %v1017, %v1016
  %v1149 = vpack.c.b16 %v1019, %v1018
  %v1150 = vpack.c.b16 %v1021, %v1020
  %v1151 = vpack.c.b16 %v1023, %v1022
  %v1152 = vpack.c.b16 %v1025, %v1024
  %v1153 = vpack.c.b16 %v1027, %v1026
  %v1154 = vpack.c.b16 %v1029, %v1028
  %v1155 = vpack.c.b16 %v1031, %v1030
  %v1156 = vpack.c.b16 %v1033, %v1032
  %v1157 = vpack.c.b16 %v1035, %v1034
  %v1158 = vpack.c.b16 %v1037, %v1036
  %v1159 = vpack.c.b16 %v1039, %v1038
  %v1160 = vpack.c.b16 %v1041, %v1040
  %v1161 = vpack.c.b16 %v1043, %v1042
  %v1162 = vpack.c.b16 %v1045, %v1044
  %v1163 = vpack.c.b16 %v1047, %v1046
  %v1164 = vpack.c.b16 %v1049, %v1048
  %v1165 = vpack.c.b16 %v1051, %v1050
  %v1166 = vpack.c.b16 %v1053, %v1052
  %v1167 = vpack.c.b16 %v1055, %v1054
  %v1168 = vpack.c.b16 %v1057, %v1056
  %v1169 = vpack.c.b16 %v1059, %v1058
  %v1170 = vpack.c.b16 %v1061, %v1060
  %v1171 = vpack.c.b16 %v1063, %v1062
  %v1172 = vpack.c.b16 %v1065, %v1064
  %v1173 = vpack.c.b16 %v1067, %v1066
  %v1174 = vpack.c.b16 %v1069, %v1068
  %v1175 = vpack.c.b16 %v1071, %v1070
  %v1176 = vpack.c.b16 %v1073, %v1072
  %v1177 = vpack.c.b16 %v1075, %v1074
  %v1178 = vpack.c.b16 %v1077, %v1076
  %v1179 = vpack.c.b16 %v1079, %v1078
  %v1180 = vpack.c.b16 %v1081, %v1080
  %v1181 = vpack.c.b16 %v1083, %v1082
  %v1182 = vpack.c.b16 %v1085, %v1084
  %v1183 = vpack.c.b16 %v1087, %v1086
  %v1184 = vpack.c.b16 %v1089, %v1088
  %v1185 = vpack.c.b16 %v1091, %v1090
  %v1186 = vpack.c.b16 %v1093, %v1092
  %v1187 = vpack.c.b16 %v1095, %v1094
  %v1188 = vpack.c.b16 %v1097, %v1096
  %v1189 = vpack.c.b16 %v1099, %v1098
  %v1190 = vpack.c.b16 %v1101, %v1100
  %v1191 = vpack.c.b16 %v1103, %v1102
  %v1192 = vpack.c.b16 %v1105, %v1104
  %v1193 = vpack.c.b16 %v1107, %v1106
  %v1194 = vpack.c.b16 %v1109, %v1108
  %v1195 = vpack.c.b16 %v1111, %v1110
  %v1196 = vpack.c.b16 %v1113, %v1112
  %v1197 = vpack.c.b16 %v1115, %v1114
  %v1198 = vpack.c.b16 %v1117, %v1116
  %v1199 = vpack.c.b16 %v1119, %v1118
  %v1200 = vpack.c.b16 %v1121, %v1120
  %v1201 = vpack.c.b16 %v1123, %v1122
  %v1202 = vpack.c.b16 %v1125, %v1124
  %v1203 = vpack.c.b16 %v1127, %v1126
  %v1204 = vpack.c.b16 %v1129, %v1128
  %v1205 = vpack.c.b16 %v1131, %v1130
  %v1206 = vpack.c.b16 %v1133, %v1132
  %v1207 = vpack.c.b16 %v1135, %v1134
  %1280 = vmatprep.subr.bf16.mxu0 0
  %1281 = vmatpush1.bf16.msra.mxu0 %v1136
  %1282 = vmatprep.subr.bf16.mxu0 0
  %1283 = vmatpush1.bf16.msra.mxu0 %v1137
  %1284 = vmatprep.subr.bf16.mxu0 0
  %1285 = vmatpush1.bf16.msra.mxu0 %v1138
  %1286 = vmatprep.subr.bf16.mxu0 0
  %1287 = vmatpush1.bf16.msra.mxu0 %v1139
  %1288 = vmatprep.subr.bf16.mxu0 0
  %1289 = vmatpush1.bf16.msra.mxu0 %v1140
  %1290 = vmatprep.subr.bf16.mxu0 0
  %1291 = vmatpush1.bf16.msra.mxu0 %v1141
  %1292 = vmatprep.subr.bf16.mxu0 0
  %1293 = vmatpush1.bf16.msra.mxu0 %v1142
  %1294 = vmatprep.subr.bf16.mxu0 0
  %1295 = vmatpush1.bf16.msra.mxu0 %v1143
  %1296 = vmatprep.subr.bf16.mxu0 0
  %1297 = vmatpush1.bf16.msra.mxu0 %v1144
  %1298 = vmatprep.subr.bf16.mxu0 0
  %1299 = vmatpush1.bf16.msra.mxu0 %v1145
  %1300 = vmatprep.subr.bf16.mxu0 0
  %1301 = vmatpush1.bf16.msra.mxu0 %v1146
  %1302 = vmatprep.subr.bf16.mxu0 0
  %1303 = vmatpush1.bf16.msra.mxu0 %v1147
  %1304 = vmatprep.subr.bf16.mxu0 0
  %1305 = vmatpush1.bf16.msra.mxu0 %v1148
  %1306 = vmatprep.subr.bf16.mxu0 0
  %1307 = vmatpush1.bf16.msra.mxu0 %v1149
  %1308 = vmatprep.subr.bf16.mxu0 0
  %1309 = vmatpush1.bf16.msra.mxu0 %v1150
  %1310 = vmatprep.subr.bf16.mxu0 0
  %1311 = vmatpush1.bf16.msra.mxu0 %v1151
  %1312 = vmatprep.mubr.bf16.mxu0 %v705
  %1313 = vmatmul.mubr.bf16.gmra.mrb[0].mxu0 %v704
  %v1314 = vpop.f32.mrb[0].mxu0
  %v1315 = vadd.f32 %v478, %v1314
  %v1316 = vpop.f32.mrb[0].mxu0
  %v1317 = vpop.f32.mrb[0].mxu0
  %v1318 = vadd.f32 %v478, %v1317
  %v1319 = vpop.f32.mrb[0].mxu0
  %1320 = vmatprep.mubr.bf16.mxu0 %v714
  %1321 = vmatmul.mubr.bf16.gmra.mrb[0].mxu0 %v713
  %v1322 = vpop.f32.mrb[0].mxu0
  %v1323 = vadd.f32 %v478, %v1322
  %v1324 = vpop.f32.mrb[0].mxu0
  %v1325 = vpop.f32.mrb[0].mxu0
  %v1326 = vadd.f32 %v478, %v1325
  %v1327 = vpop.f32.mrb[0].mxu0
  %1328 = vmatprep.mubr.bf16.mxu0 %v723
  %1329 = vmatmul.mubr.bf16.gmra.mrb[0].mxu0 %v722
  %v1330 = vpop.f32.mrb[0].mxu0
  %v1331 = vadd.f32 %v478, %v1330
  %v1332 = vpop.f32.mrb[0].mxu0
  %v1333 = vpop.f32.mrb[0].mxu0
  %v1334 = vadd.f32 %v478, %v1333
  %v1335 = vpop.f32.mrb[0].mxu0
  %1336 = vmatprep.mubr.bf16.mxu0 %v732
  %1337 = vmatmul.mubr.bf16.gmra.mrb[0].mxu0 %v731
  %v1338 = vpop.f32.mrb[0].mxu0
  %v1339 = vadd.f32 %v478, %v1338
  %v1340 = vpop.f32.mrb[0].mxu0
  %v1341 = vpop.f32.mrb[0].mxu0
  %v1342 = vadd.f32 %v478, %v1341
  %v1343 = vpop.f32.mrb[0].mxu0
  %1344 = vmatprep.mubr.bf16.mxu0 %v741
  %1345 = vmatmul.mubr.bf16.gmra.mrb[0].mxu0 %v740
  %v1346 = vpop.f32.mrb[0].mxu0
  %v1347 = vadd.f32 %v478, %v1346
  %v1348 = vpop.f32.mrb[0].mxu0
  %v1349 = vpop.f32.mrb[0].mxu0
  %v1350 = vadd.f32 %v478, %v1349
  %v1351 = vpop.f32.mrb[0].mxu0
  %1352 = vmatprep.mubr.bf16.mxu0 %v750
  %1353 = vmatmul.mubr.bf16.gmra.mrb[0].mxu0 %v749
  %v1354 = vpop.f32.mrb[0].mxu0
  %v1355 = vadd.f32 %v478, %v1354
  %v1356 = vpop.f32.mrb[0].mxu0
  %v1357 = vpop.f32.mrb[0].mxu0
  %v1358 = vadd.f32 %v478, %v1357
  %v1359 = vpop.f32.mrb[0].mxu0
  %1360 = vmatprep.mubr.bf16.mxu0 %v759
  %1361 = vmatmul.mubr.bf16.gmra.mrb[0].mxu0 %v758
  %v1362 = vpop.f32.mrb[0].mxu0
  %v1363 = vadd.f32 %v478, %v1362
  %v1364 = vpop.f32.mrb[0].mxu0
  %v1365 = vpop.f32.mrb[0].mxu0
  %v1366 = vadd.f32 %v478, %v1365
  %v1367 = vpop.f32.mrb[0].mxu0
  %1368 = vmatprep.mubr.bf16.mxu0 %v768
  %1369 = vmatmul.mubr.bf16.gmra.mrb[0].mxu0 %v767
  %v1370 = vpop.f32.mrb[0].mxu0
  %v1371 = vadd.f32 %v478, %v1370
  %v1372 = vpop.f32.mrb[0].mxu0
  %v1373 = vpop.f32.mrb[0].mxu0
  %v1374 = vadd.f32 %v478, %v1373
  %v1375 = vpop.f32.mrb[0].mxu0
  %1376 = vdwg.mxu0
  %1377 = vmatprep.subr.bf16.mxu0 0
  %1378 = vmatpush1.bf16.msra.mxu0 %v1152
  %1379 = vmatprep.subr.bf16.mxu0 0
  %1380 = vmatpush1.bf16.msra.mxu0 %v1153
  %1381 = vmatprep.subr.bf16.mxu0 0
  %1382 = vmatpush1.bf16.msra.mxu0 %v1154
  %1383 = vmatprep.subr.bf16.mxu0 0
  %1384 = vmatpush1.bf16.msra.mxu0 %v1155
  %1385 = vmatprep.subr.bf16.mxu0 0
  %1386 = vmatpush1.bf16.msra.mxu0 %v1156
  %1387 = vmatprep.subr.bf16.mxu0 0
  %1388 = vmatpush1.bf16.msra.mxu0 %v1157
  %1389 = vmatprep.subr.bf16.mxu0 0
  %1390 = vmatpush1.bf16.msra.mxu0 %v1158
  %1391 = vmatprep.subr.bf16.mxu0 0
  %1392 = vmatpush1.bf16.msra.mxu0 %v1159
  %1393 = vmatprep.subr.bf16.mxu0 0
  %1394 = vmatpush1.bf16.msra.mxu0 %v1160
  %1395 = vmatprep.subr.bf16.mxu0 0
  %1396 = vmatpush1.bf16.msra.mxu0 %v1161
  %1397 = vmatprep.subr.bf16.mxu0 0
  %1398 = vmatpush1.bf16.msra.mxu0 %v1162
  %1399 = vmatprep.subr.bf16.mxu0 0
  %1400 = vmatpush1.bf16.msra.mxu0 %v1163
  %1401 = vmatprep.subr.bf16.mxu0 0
  %1402 = vmatpush1.bf16.msra.mxu0 %v1164
  %1403 = vmatprep.subr.bf16.mxu0 0
  %1404 = vmatpush1.bf16.msra.mxu0 %v1165
  %1405 = vmatprep.subr.bf16.mxu0 0
  %1406 = vmatpush1.bf16.msra.mxu0 %v1166
  %1407 = vmatprep.subr.bf16.mxu0 0
  %1408 = vmatpush1.bf16.msra.mxu0 %v1167
  %1409 = vmatprep.mubr.bf16.mxu0 %v707
  %1410 = vmatmul.mubr.bf16.gmra.mrb[0].mxu0 %v706
  %v1411 = vpop.f32.mrb[0].mxu0
  %v1412 = vadd.f32 %v1315, %v1411
  %v1413 = vpop.f32.mrb[0].mxu0
  %v1414 = vpop.f32.mrb[0].mxu0
  %v1415 = vadd.f32 %v1318, %v1414
  %v1416 = vpop.f32.mrb[0].mxu0
  %1417 = vmatprep.mubr.bf16.mxu0 %v716
  %1418 = vmatmul.mubr.bf16.gmra.mrb[0].mxu0 %v715
  %v1419 = vpop.f32.mrb[0].mxu0
  %v1420 = vadd.f32 %v1323, %v1419
  %v1421 = vpop.f32.mrb[0].mxu0
  %v1422 = vpop.f32.mrb[0].mxu0
  %v1423 = vadd.f32 %v1326, %v1422
  %v1424 = vpop.f32.mrb[0].mxu0
  %1425 = vmatprep.mubr.bf16.mxu0 %v725
  %1426 = vmatmul.mubr.bf16.gmra.mrb[0].mxu0 %v724
  %v1427 = vpop.f32.mrb[0].mxu0
  %v1428 = vadd.f32 %v1331, %v1427
  %v1429 = vpop.f32.mrb[0].mxu0
  %v1430 = vpop.f32.mrb[0].mxu0
  %v1431 = vadd.f32 %v1334, %v1430
  %v1432 = vpop.f32.mrb[0].mxu0
  %1433 = vmatprep.mubr.bf16.mxu0 %v734
  %1434 = vmatmul.mubr.bf16.gmra.mrb[0].mxu0 %v733
  %v1435 = vpop.f32.mrb[0].mxu0
  %v1436 = vadd.f32 %v1339, %v1435
  %v1437 = vpop.f32.mrb[0].mxu0
  %v1438 = vpop.f32.mrb[0].mxu0
  %v1439 = vadd.f32 %v1342, %v1438
  %v1440 = vpop.f32.mrb[0].mxu0
  %1441 = vmatprep.mubr.bf16.mxu0 %v743
  %1442 = vmatmul.mubr.bf16.gmra.mrb[0].mxu0 %v742
  %v1443 = vpop.f32.mrb[0].mxu0
  %v1444 = vadd.f32 %v1347, %v1443
  %v1445 = vpop.f32.mrb[0].mxu0
  %v1446 = vpop.f32.mrb[0].mxu0
  %v1447 = vadd.f32 %v1350, %v1446
  %v1448 = vpop.f32.mrb[0].mxu0
  %1449 = vmatprep.mubr.bf16.mxu0 %v752
  %1450 = vmatmul.mubr.bf16.gmra.mrb[0].mxu0 %v751
  %v1451 = vpop.f32.mrb[0].mxu0
  %v1452 = vadd.f32 %v1355, %v1451
  %v1453 = vpop.f32.mrb[0].mxu0
  %v1454 = vpop.f32.mrb[0].mxu0
  %v1455 = vadd.f32 %v1358, %v1454
  %v1456 = vpop.f32.mrb[0].mxu0
  %1457 = vmatprep.mubr.bf16.mxu0 %v761
  %1458 = vmatmul.mubr.bf16.gmra.mrb[0].mxu0 %v760
  %v1459 = vpop.f32.mrb[0].mxu0
  %v1460 = vadd.f32 %v1363, %v1459
  %v1461 = vpop.f32.mrb[0].mxu0
  %v1462 = vpop.f32.mrb[0].mxu0
  %v1463 = vadd.f32 %v1366, %v1462
  %v1464 = vpop.f32.mrb[0].mxu0
  %1465 = vmatprep.mubr.bf16.mxu0 %v770
  %1466 = vmatmul.mubr.bf16.gmra.mrb[0].mxu0 %v769
  %v1467 = vpop.f32.mrb[0].mxu0
  %v1468 = vadd.f32 %v1371, %v1467
  %v1469 = vpop.f32.mrb[0].mxu0
  %v1470 = vpop.f32.mrb[0].mxu0
  %v1471 = vadd.f32 %v1374, %v1470
  %v1472 = vpop.f32.mrb[0].mxu0
  %1473 = vdwg.mxu0
  %1474 = vmatprep.subr.bf16.mxu0 0
  %1475 = vmatpush1.bf16.msra.mxu0 %v1168
  %1476 = vmatprep.subr.bf16.mxu0 0
  %1477 = vmatpush1.bf16.msra.mxu0 %v1169
  %1478 = vmatprep.subr.bf16.mxu0 0
  %1479 = vmatpush1.bf16.msra.mxu0 %v1170
  %1480 = vmatprep.subr.bf16.mxu0 0
  %1481 = vmatpush1.bf16.msra.mxu0 %v1171
  %1482 = vmatprep.subr.bf16.mxu0 0
  %1483 = vmatpush1.bf16.msra.mxu0 %v1172
  %1484 = vmatprep.subr.bf16.mxu0 0
  %1485 = vmatpush1.bf16.msra.mxu0 %v1173
  %1486 = vmatprep.subr.bf16.mxu0 0
  %1487 = vmatpush1.bf16.msra.mxu0 %v1174
  %1488 = vmatprep.subr.bf16.mxu0 0
  %1489 = vmatpush1.bf16.msra.mxu0 %v1175
  %1490 = vmatprep.subr.bf16.mxu0 0
  %1491 = vmatpush1.bf16.msra.mxu0 %v1176
  %1492 = vmatprep.subr.bf16.mxu0 0
  %1493 = vmatpush1.bf16.msra.mxu0 %v1177
  %1494 = vmatprep.subr.bf16.mxu0 0
  %1495 = vmatpush1.bf16.msra.mxu0 %v1178
  %1496 = vmatprep.subr.bf16.mxu0 0
  %1497 = vmatpush1.bf16.msra.mxu0 %v1179
  %1498 = vmatprep.subr.bf16.mxu0 0
  %1499 = vmatpush1.bf16.msra.mxu0 %v1180
  %1500 = vmatprep.subr.bf16.mxu0 0
  %1501 = vmatpush1.bf16.msra.mxu0 %v1181
  %1502 = vmatprep.subr.bf16.mxu0 0
  %1503 = vmatpush1.bf16.msra.mxu0 %v1182
  %1504 = vmatprep.subr.bf16.mxu0 0
  %1505 = vmatpush1.bf16.msra.mxu0 %v1183
  %1506 = vmatprep.mubr.bf16.mxu0 %v709
  %1507 = vmatmul.mubr.bf16.gmra.mrb[0].mxu0 %v708
  %v1508 = vpop.f32.mrb[0].mxu0
  %v1509 = vadd.f32 %v1412, %v1508
  %v1510 = vpop.f32.mrb[0].mxu0
  %v1511 = vpop.f32.mrb[0].mxu0
  %v1512 = vadd.f32 %v1415, %v1511
  %v1513 = vpop.f32.mrb[0].mxu0
  %1514 = vmatprep.mubr.bf16.mxu0 %v718
  %1515 = vmatmul.mubr.bf16.gmra.mrb[0].mxu0 %v717
  %v1516 = vpop.f32.mrb[0].mxu0
  %v1517 = vadd.f32 %v1420, %v1516
  %v1518 = vpop.f32.mrb[0].mxu0
  %v1519 = vpop.f32.mrb[0].mxu0
  %v1520 = vadd.f32 %v1423, %v1519
  %v1521 = vpop.f32.mrb[0].mxu0
  %1522 = vmatprep.mubr.bf16.mxu0 %v727
  %1523 = vmatmul.mubr.bf16.gmra.mrb[0].mxu0 %v726
  %v1524 = vpop.f32.mrb[0].mxu0
  %v1525 = vadd.f32 %v1428, %v1524
  %v1526 = vpop.f32.mrb[0].mxu0
  %v1527 = vpop.f32.mrb[0].mxu0
  %v1528 = vadd.f32 %v1431, %v1527
  %v1529 = vpop.f32.mrb[0].mxu0
  %1530 = vmatprep.mubr.bf16.mxu0 %v736
  %1531 = vmatmul.mubr.bf16.gmra.mrb[0].mxu0 %v735
  %v1532 = vpop.f32.mrb[0].mxu0
  %v1533 = vadd.f32 %v1436, %v1532
  %v1534 = vpop.f32.mrb[0].mxu0
  %v1535 = vpop.f32.mrb[0].mxu0
  %v1536 = vadd.f32 %v1439, %v1535
  %v1537 = vpop.f32.mrb[0].mxu0
  %1538 = vmatprep.mubr.bf16.mxu0 %v745
  %1539 = vmatmul.mubr.bf16.gmra.mrb[0].mxu0 %v744
  %v1540 = vpop.f32.mrb[0].mxu0
  %v1541 = vadd.f32 %v1444, %v1540
  %v1542 = vpop.f32.mrb[0].mxu0
  %v1543 = vpop.f32.mrb[0].mxu0
  %v1544 = vadd.f32 %v1447, %v1543
  %v1545 = vpop.f32.mrb[0].mxu0
  %1546 = vmatprep.mubr.bf16.mxu0 %v754
  %1547 = vmatmul.mubr.bf16.gmra.mrb[0].mxu0 %v753
  %v1548 = vpop.f32.mrb[0].mxu0
  %v1549 = vadd.f32 %v1452, %v1548
  %v1550 = vpop.f32.mrb[0].mxu0
  %v1551 = vpop.f32.mrb[0].mxu0
  %v1552 = vadd.f32 %v1455, %v1551
  %v1553 = vpop.f32.mrb[0].mxu0
  %1554 = vmatprep.mubr.bf16.mxu0 %v763
  %1555 = vmatmul.mubr.bf16.gmra.mrb[0].mxu0 %v762
  %v1556 = vpop.f32.mrb[0].mxu0
  %v1557 = vadd.f32 %v1460, %v1556
  %v1558 = vpop.f32.mrb[0].mxu0
  %v1559 = vpop.f32.mrb[0].mxu0
  %v1560 = vadd.f32 %v1463, %v1559
  %v1561 = vpop.f32.mrb[0].mxu0
  %1562 = vmatprep.mubr.bf16.mxu0 %v772
  %1563 = vmatmul.mubr.bf16.gmra.mrb[0].mxu0 %v771
  %v1564 = vpop.f32.mrb[0].mxu0
  %v1565 = vadd.f32 %v1468, %v1564
  %v1566 = vpop.f32.mrb[0].mxu0
  %v1567 = vpop.f32.mrb[0].mxu0
  %v1568 = vadd.f32 %v1471, %v1567
  %v1569 = vpop.f32.mrb[0].mxu0
  %1570 = vdwg.mxu0
  %1571 = vmatprep.subr.bf16.mxu0 0
  %1572 = vmatpush1.bf16.msra.mxu0 %v1184
  %1573 = vmatprep.subr.bf16.mxu0 0
  %1574 = vmatpush1.bf16.msra.mxu0 %v1185
  %1575 = vmatprep.subr.bf16.mxu0 0
  %1576 = vmatpush1.bf16.msra.mxu0 %v1186
  %1577 = vmatprep.subr.bf16.mxu0 0
  %1578 = vmatpush1.bf16.msra.mxu0 %v1187
  %1579 = vmatprep.subr.bf16.mxu0 0
  %1580 = vmatpush1.bf16.msra.mxu0 %v1188
  %1581 = vmatprep.subr.bf16.mxu0 0
  %1582 = vmatpush1.bf16.msra.mxu0 %v1189
  %1583 = vmatprep.subr.bf16.mxu0 0
  %1584 = vmatpush1.bf16.msra.mxu0 %v1190
  %1585 = vmatprep.subr.bf16.mxu0 0
  %1586 = vmatpush1.bf16.msra.mxu0 %v1191
  %1587 = vmatprep.subr.bf16.mxu0 0
  %1588 = vmatpush1.bf16.msra.mxu0 %v1192
  %1589 = vmatprep.subr.bf16.mxu0 0
  %1590 = vmatpush1.bf16.msra.mxu0 %v1193
  %1591 = vmatprep.subr.bf16.mxu0 0
  %1592 = vmatpush1.bf16.msra.mxu0 %v1194
  %1593 = vmatprep.subr.bf16.mxu0 0
  %1594 = vmatpush1.bf16.msra.mxu0 %v1195
  %1595 = vmatprep.subr.bf16.mxu0 0
  %1596 = vmatpush1.bf16.msra.mxu0 %v1196
  %1597 = vmatprep.subr.bf16.mxu0 0
  %1598 = vmatpush1.bf16.msra.mxu0 %v1197
  %1599 = vmatprep.subr.bf16.mxu0 0
  %1600 = vmatpush1.bf16.msra.mxu0 %v1198
  %1601 = vmatprep.subr.bf16.mxu0 0
  %1602 = vmatpush1.bf16.msra.mxu0 %v1199
  %1603 = vmatprep.mubr.bf16.mxu0 %v711
  %1604 = vmatmul.mubr.bf16.gmra.mrb[0].mxu0 %v710
  %v1605 = vpop.f32.mrb[0].mxu0
  %v1606 = vadd.f32 %v1509, %v1605
  %v1607 = vpop.f32.mrb[0].mxu0
  %v1608 = vpop.f32.mrb[0].mxu0
  %v1609 = vadd.f32 %v1512, %v1608
  %v1610 = vpop.f32.mrb[0].mxu0
  %1611 = vmatprep.mubr.bf16.mxu0 %v720
  %1612 = vmatmul.mubr.bf16.gmra.mrb[0].mxu0 %v719
  %v1613 = vpop.f32.mrb[0].mxu0
  %v1614 = vadd.f32 %v1517, %v1613
  %v1615 = vpop.f32.mrb[0].mxu0
  %v1616 = vpop.f32.mrb[0].mxu0
  %v1617 = vadd.f32 %v1520, %v1616
  %v1618 = vpop.f32.mrb[0].mxu0
  %1619 = vmatprep.mubr.bf16.mxu0 %v729
  %1620 = vmatmul.mubr.bf16.gmra.mrb[0].mxu0 %v728
  %v1621 = vpop.f32.mrb[0].mxu0
  %v1622 = vadd.f32 %v1525, %v1621
  %v1623 = vpop.f32.mrb[0].mxu0
  %v1624 = vpop.f32.mrb[0].mxu0
  %v1625 = vadd.f32 %v1528, %v1624
  %v1626 = vpop.f32.mrb[0].mxu0
  %1627 = vmatprep.mubr.bf16.mxu0 %v738
  %1628 = vmatmul.mubr.bf16.gmra.mrb[0].mxu0 %v737
  %v1629 = vpop.f32.mrb[0].mxu0
  %v1630 = vadd.f32 %v1533, %v1629
  %v1631 = vpop.f32.mrb[0].mxu0
  %v1632 = vpop.f32.mrb[0].mxu0
  %v1633 = vadd.f32 %v1536, %v1632
  %v1634 = vpop.f32.mrb[0].mxu0
  %1635 = vmatprep.mubr.bf16.mxu0 %v747
  %1636 = vmatmul.mubr.bf16.gmra.mrb[0].mxu0 %v746
  %v1637 = vpop.f32.mrb[0].mxu0
  %v1638 = vadd.f32 %v1541, %v1637
  %v1639 = vpop.f32.mrb[0].mxu0
  %v1640 = vpop.f32.mrb[0].mxu0
  %v1641 = vadd.f32 %v1544, %v1640
  %v1642 = vpop.f32.mrb[0].mxu0
  %1643 = vmatprep.mubr.bf16.mxu0 %v756
  %1644 = vmatmul.mubr.bf16.gmra.mrb[0].mxu0 %v755
  %v1645 = vpop.f32.mrb[0].mxu0
  %v1646 = vadd.f32 %v1549, %v1645
  %v1647 = vpop.f32.mrb[0].mxu0
  %v1648 = vpop.f32.mrb[0].mxu0
  %v1649 = vadd.f32 %v1552, %v1648
  %v1650 = vpop.f32.mrb[0].mxu0
  %1651 = vmatprep.mubr.bf16.mxu0 %v765
  %1652 = vmatmul.mubr.bf16.gmra.mrb[0].mxu0 %v764
  %v1653 = vpop.f32.mrb[0].mxu0
  %v1654 = vadd.f32 %v1557, %v1653
  %v1655 = vpop.f32.mrb[0].mxu0
  %v1656 = vpop.f32.mrb[0].mxu0
  %v1657 = vadd.f32 %v1560, %v1656
  %v1658 = vpop.f32.mrb[0].mxu0
  %1659 = vmatprep.mubr.bf16.mxu0 %v774
  %1660 = vmatmul.mubr.bf16.gmra.mrb[0].mxu0 %v773
  %v1661 = vpop.f32.mrb[0].mxu0
  %v1662 = vadd.f32 %v1565, %v1661
  %v1663 = vpop.f32.mrb[0].mxu0
  %v1664 = vpop.f32.mrb[0].mxu0
  %v1665 = vadd.f32 %v1568, %v1664
  %v1666 = vpop.f32.mrb[0].mxu0
  %1667 = vdwg.mxu0
  %1668 = vmatprep.subr.bf16.mxu0 0
  %1669 = vmatpush1.bf16.msra.mxu0 %v1200
  %1670 = vmatprep.subr.bf16.mxu0 0
  %1671 = vmatpush1.bf16.msra.mxu0 %v1201
  %1672 = vmatprep.subr.bf16.mxu0 0
  %1673 = vmatpush1.bf16.msra.mxu0 %v1202
  %1674 = vmatprep.subr.bf16.mxu0 0
  %1675 = vmatpush1.bf16.msra.mxu0 %v1203
  %1676 = vmatprep.subr.bf16.mxu0 0
  %1677 = vmatpush1.bf16.msra.mxu0 %v1204
  %1678 = vmatprep.subr.bf16.mxu0 0
  %1679 = vmatpush1.bf16.msra.mxu0 %v1205
  %1680 = vmatprep.subr.bf16.mxu0 0
  %1681 = vmatpush1.bf16.msra.mxu0 %v1206
  %1682 = vmatprep.subr.bf16.mxu0 0
  %1683 = vmatpush1.bf16.msra.mxu0 %v1207
  %1684 = vmatprep.subr.bf16.mxu0 0
  %1685 = vmatpush1.bf16.msra.mxu0 0
  %1686 = vmatprep.subr.bf16.mxu0 0
  %1687 = vmatpush1.bf16.msra.mxu0 0
  %1688 = vmatprep.subr.bf16.mxu0 0
  %1689 = vmatpush1.bf16.msra.mxu0 0
  %1690 = vmatprep.subr.bf16.mxu0 0
  %1691 = vmatpush1.bf16.msra.mxu0 0
  %1692 = vmatprep.subr.bf16.mxu0 0
  %1693 = vmatpush1.bf16.msra.mxu0 0
  %1694 = vmatprep.subr.bf16.mxu0 0
  %1695 = vmatpush1.bf16.msra.mxu0 0
  %1696 = vmatprep.subr.bf16.mxu0 0
  %1697 = vmatpush1.bf16.msra.mxu0 0
  %1698 = vmatprep.subr.bf16.mxu0 0
  %1699 = vmatpush1.bf16.msra.mxu0 0
  %1700 = vmatprep.mubr.bf16.mxu0 0
  %1701 = vmatmul.mubr.bf16.gmra.mrb[0].mxu0 %v712
  %v1702 = vpop.f32.mrb[0].mxu0
  %v1703 = vadd.f32 %v1606, %v1702
  %v1704 = vpop.f32.mrb[0].mxu0
  %v1705 = vpop.f32.mrb[0].mxu0
  %v1706 = vadd.f32 %v1609, %v1705
  %v1707 = vpop.f32.mrb[0].mxu0
  %1708 = vmatprep.mubr.bf16.mxu0 0
  %1709 = vmatmul.mubr.bf16.gmra.mrb[0].mxu0 %v721
  %v1710 = vpop.f32.mrb[0].mxu0
  %v1711 = vadd.f32 %v1614, %v1710
  %v1712 = vpop.f32.mrb[0].mxu0
  %v1713 = vpop.f32.mrb[0].mxu0
  %v1714 = vadd.f32 %v1617, %v1713
  %v1715 = vpop.f32.mrb[0].mxu0
  %1716 = vmatprep.mubr.bf16.mxu0 0
  %1717 = vmatmul.mubr.bf16.gmra.mrb[0].mxu0 %v730
  %v1718 = vpop.f32.mrb[0].mxu0
  %v1719 = vadd.f32 %v1622, %v1718
  %v1720 = vpop.f32.mrb[0].mxu0
  %v1721 = vpop.f32.mrb[0].mxu0
  %v1722 = vadd.f32 %v1625, %v1721
  %v1723 = vpop.f32.mrb[0].mxu0
  %1724 = vmatprep.mubr.bf16.mxu0 0
  %1725 = vmatmul.mubr.bf16.gmra.mrb[0].mxu0 %v739
  %v1726 = vpop.f32.mrb[0].mxu0
  %v1727 = vadd.f32 %v1630, %v1726
  %v1728 = vpop.f32.mrb[0].mxu0
  %v1729 = vpop.f32.mrb[0].mxu0
  %v1730 = vadd.f32 %v1633, %v1729
  %v1731 = vpop.f32.mrb[0].mxu0
  %1732 = vmatprep.mubr.bf16.mxu0 0
  %1733 = vmatmul.mubr.bf16.gmra.mrb[0].mxu0 %v748
  %v1734 = vpop.f32.mrb[0].mxu0
  %v1735 = vadd.f32 %v1638, %v1734
  %v1736 = vpop.f32.mrb[0].mxu0
  %v1737 = vpop.f32.mrb[0].mxu0
  %v1738 = vadd.f32 %v1641, %v1737
  %v1739 = vpop.f32.mrb[0].mxu0
  %1740 = vmatprep.mubr.bf16.mxu0 0
  %1741 = vmatmul.mubr.bf16.gmra.mrb[0].mxu0 %v757
  %v1742 = vpop.f32.mrb[0].mxu0
  %v1743 = vadd.f32 %v1646, %v1742
  %v1744 = vpop.f32.mrb[0].mxu0
  %v1745 = vpop.f32.mrb[0].mxu0
  %v1746 = vadd.f32 %v1649, %v1745
  %v1747 = vpop.f32.mrb[0].mxu0
  %1748 = vmatprep.mubr.bf16.mxu0 0
  %1749 = vmatmul.mubr.bf16.gmra.mrb[0].mxu0 %v766
  %v1750 = vpop.f32.mrb[0].mxu0
  %v1751 = vadd.f32 %v1654, %v1750
  %v1752 = vpop.f32.mrb[0].mxu0
  %v1753 = vpop.f32.mrb[0].mxu0
  %v1754 = vadd.f32 %v1657, %v1753
  %v1755 = vpop.f32.mrb[0].mxu0
  %1756 = vmatprep.mubr.bf16.mxu0 0
  %1757 = vmatmul.mubr.bf16.gmra.mrb[0].mxu0 %v775
  %v1758 = vpop.f32.mrb[0].mxu0
  %v1759 = vadd.f32 %v1662, %v1758
  %v1760 = vpop.f32.mrb[0].mxu0
  %v1761 = vpop.f32.mrb[0].mxu0
  %v1762 = vadd.f32 %v1665, %v1761
  %v1763 = vpop.f32.mrb[0].mxu0
  %1764 = vdwg.mxu0
  %v1765 = vadd.f32 %v1703, %v411
  %v1766 = vadd.f32 %v1706, %v414
  %v1767 = vadd.f32 %v1711, %v419
  %v1768 = vadd.f32 %v1714, %v422
  %v1769 = vadd.f32 %v1719, %v427
  %v1770 = vadd.f32 %v1722, %v430
  %v1771 = vadd.f32 %v1727, %v435
  %v1772 = vadd.f32 %v1730, %v438
  %v1773 = vadd.f32 %v1735, %v443
  %v1774 = vadd.f32 %v1738, %v446
  %v1775 = vadd.f32 %v1743, %v451
  %v1776 = vadd.f32 %v1746, %v454
  %v1777 = vadd.f32 %v1751, %v459
  %v1778 = vadd.f32 %v1754, %v462
  %v1779 = vadd.f32 %v1759, %v467
  %v1780 = vadd.f32 %v1762, %v470
  %v1781 = vld [vmem:[%s5] sm:$0x1]
  %v1783 = vlaneseq
  %v1784 = vshrl.u32 %v1783, 7
  %v1785 = vsub.s32 0, %v1784
  %v1786 = vrot.slane %v1781, %v1785
  %v1788 = vadd.f32 %v1765, %v1786
  %v1789 = vadd.f32 %v1766, %v1786
  %v1790 = vadd.f32 %v1767, %v1786
  %v1791 = vadd.f32 %v1768, %v1786
  %v1792 = vadd.f32 %v1769, %v1786
  %v1793 = vadd.f32 %v1770, %v1786
  %v1794 = vadd.f32 %v1771, %v1786
  %v1795 = vadd.f32 %v1772, %v1786
  %v1796 = vadd.f32 %v1773, %v1786
  %v1797 = vadd.f32 %v1774, %v1786
  %v1798 = vadd.f32 %v1775, %v1786
  %v1799 = vadd.f32 %v1776, %v1786
  %v1800 = vadd.f32 %v1777, %v1786
  %v1801 = vadd.f32 %v1778, %v1786
  %v1802 = vadd.f32 %v1779, %v1786
  %v1803 = vadd.f32 %v1780, %v1786
  %v1804 = vmax.f32 %v1788, 0.0
  %v1805 = vmax.f32 %v1789, 0.0
  %v1806 = vmax.f32 %v1790, 0.0
  %v1807 = vmax.f32 %v1791, 0.0
  %v1808 = vmax.f32 %v1792, 0.0
  %v1809 = vmax.f32 %v1793, 0.0
  %v1810 = vmax.f32 %v1794, 0.0
  %v1811 = vmax.f32 %v1795, 0.0
  %v1812 = vmax.f32 %v1796, 0.0
  %v1813 = vmax.f32 %v1797, 0.0
  %v1814 = vmax.f32 %v1798, 0.0
  %v1815 = vmax.f32 %v1799, 0.0
  %v1816 = vmax.f32 %v1800, 0.0
  %v1817 = vmax.f32 %v1801, 0.0
  %v1818 = vmax.f32 %v1802, 0.0
  %v1819 = vmax.f32 %v1803, 0.0
  %v1820 = vpack.c.bf16 %v1805, %v1804
  %v1821 = vpack.c.bf16 %v1807, %v1806
  %v1822 = vpack.c.bf16 %v1809, %v1808
  %v1823 = vpack.c.bf16 %v1811, %v1810
  %v1824 = vpack.c.bf16 %v1813, %v1812
  %v1825 = vpack.c.bf16 %v1815, %v1814
  %v1826 = vpack.c.bf16 %v1817, %v1816
  %v1827 = vpack.c.bf16 %v1819, %v1818
  %v1836 = vunpack.c.l.b16 %v1820
  %v1837 = vunpack.c.h.b16 %v1820
  %v1838 = vunpack.c.l.b16 %v1821
  %v1839 = vunpack.c.h.b16 %v1821
  %v1840 = vunpack.c.l.b16 %v1822
  %v1841 = vunpack.c.h.b16 %v1822
  %v1842 = vunpack.c.l.b16 %v1823
  %v1843 = vunpack.c.h.b16 %v1823
  %v1844 = vunpack.c.l.b16 %v1824
  %v1845 = vunpack.c.h.b16 %v1824
  %v1846 = vunpack.c.l.b16 %v1825
  %v1847 = vunpack.c.h.b16 %v1825
  %v1848 = vunpack.c.l.b16 %v1826
  %v1849 = vunpack.c.h.b16 %v1826
  %v1850 = vunpack.c.l.b16 %v1827
  %v1851 = vunpack.c.h.b16 %v1827
  %v1852 = vpack.c.b16 %v1836, %v1836
  %v1853 = vpack.c.b16 %v1837, %v1837
  %v1854 = vpack.c.b16 %v1838, %v1838
  %v1855 = vpack.c.b16 %v1839, %v1839
  %v1856 = vpack.c.b16 %v1840, %v1840
  %v1857 = vpack.c.b16 %v1841, %v1841
  %v1858 = vpack.c.b16 %v1842, %v1842
  %v1859 = vpack.c.b16 %v1843, %v1843
  %v1860 = vpack.c.b16 %v1844, %v1844
  %v1861 = vpack.c.b16 %v1845, %v1845
  %v1862 = vpack.c.b16 %v1846, %v1846
  %v1863 = vpack.c.b16 %v1847, %v1847
  %v1864 = vpack.c.b16 %v1848, %v1848
  %v1865 = vpack.c.b16 %v1849, %v1849
  %v1866 = vpack.c.b16 %v1850, %v1850
  %v1867 = vpack.c.b16 %v1851, %v1851
  %1884 = vst [vmem:[%s6] sm:$0xf] %v1852
  %1885 = vst [vmem:[%s6 + $0x4] sm:$0xf] %v1853
  %1886 = vst [vmem:[%s6 + $0x8] sm:$0xf] %v1854
  %1887 = vst [vmem:[%s6 + $0xc] sm:$0xf] %v1855
  %1888 = vst [vmem:[%s6 + $0x10] sm:$0xf] %v1856
  %1889 = vst [vmem:[%s6 + $0x14] sm:$0xf] %v1857
  %1890 = vst [vmem:[%s6 + $0x18] sm:$0xf] %v1858
  %1891 = vst [vmem:[%s6 + $0x1c] sm:$0xf] %v1859
  %1892 = vst [vmem:[%s6 + $0x20] sm:$0xf] %v1860
  %1893 = vst [vmem:[%s6 + $0x24] sm:$0xf] %v1861
  %1894 = vst [vmem:[%s6 + $0x28] sm:$0xf] %v1862
  %1895 = vst [vmem:[%s6 + $0x2c] sm:$0xf] %v1863
  %1896 = vst [vmem:[%s6 + $0x30] sm:$0xf] %v1864
  %1897 = vst [vmem:[%s6 + $0x34] sm:$0xf] %v1865
  %1898 = vst [vmem:[%s6 + $0x38] sm:$0xf] %v1866
  %1899 = vst [vmem:[%s6 + $0x3c] sm:$0xf] %v1867
  // Predicated region
  $region26: #{resnet_tsa_forward.14} parent=0 // pred_check
    _
  $region27: #{resnet_tsa_forward.14} parent=0 // pred_check_branch
    %1901 = sbr.rel (0) target = $region29
  $region28: #{resnet_tsa_forward.14} parent=0 // pred_region
    _
  $region29: #{resnet_tsa_forward.14} parent=0 // pred_fallthru
    _
  // Predicated region
  $region30: #{resnet_tsa_forward.14} parent=0 // pred_check
    _
  $region31: #{resnet_tsa_forward.14} parent=0 // pred_check_branch
    %1903 = sbr.rel (0) target = $region33
  $region32: #{resnet_tsa_forward.14} parent=0 // pred_region
    _
  $region33: #{resnet_tsa_forward.14} parent=0 // pred_fallthru
    _

// kernel: resnet_tsa_forward.16
$region0: #{resnet_tsa_forward.16}
  #allocation0 [shape = 'u32[]', space=smem, size = 0x4, offset = 0x4, fixed_abs, tag = 'smem constant byte address 0x4 - core index']
  #allocation1 [shape = 'u32[144,128]{1,0:T(1,128)}', space=vmem, size = 0x12000, scoped, tag = 'internal scratch']
  %s0 = inlined_call_operand.vmem [shape: bf16[32,1152], index: 0, kind: input, shape index: {}]
  %s1 = inlined_call_operand.vmem [shape: bf16[1152,128], index: 1, kind: input, shape index: {}]
  %s2 = inlined_call_operand.vmem [shape: f32[1,128], index: 2, kind: input, shape index: {}]
  %s3 = inlined_call_operand.vmem [shape: bf16[32,128], index: 3, kind: input, shape index: {}]
  %s4 = inlined_call_operand.vmem [shape: bf16[128,128], index: 4, kind: input, shape index: {}]
  %s5 = inlined_call_operand.vmem [shape: f32[1,128], index: 5, kind: input, shape index: {}]
  %s6 = inlined_call_operand.vmem [shape: bf16[32,128], index: 6, kind: output, shape index: {}]
  %s7 = sld [smem:[#allocation0]]
  $region34: #{resnet_tsa_forward.16} parent=0
    _
  %s9 = ssub.s32 1, %s7
  %s10 = scalar_select 0, %s9, %s7
  // Predicated region
  $region2: #{resnet_tsa_forward.16} parent=0 // pred_check
    _
  $region3: #{resnet_tsa_forward.16} parent=0 // pred_check_branch
    %12 = sbr.rel (0) target = $region5
  $region4: #{resnet_tsa_forward.16} parent=0 // pred_region
    _
  $region5: #{resnet_tsa_forward.16} parent=0 // pred_fallthru
    _
  // Predicated region
  $region6: #{resnet_tsa_forward.16} parent=0 // pred_check
    _
  $region7: #{resnet_tsa_forward.16} parent=0 // pred_check_branch
    %14 = sbr.rel (0) target = $region9
  $region8: #{resnet_tsa_forward.16} parent=0 // pred_region
    _
  $region9: #{resnet_tsa_forward.16} parent=0 // pred_fallthru
    _
  // Predicated region
  $region10: #{resnet_tsa_forward.16} parent=0 // pred_check
    _
  $region11: #{resnet_tsa_forward.16} parent=0 // pred_check_branch
    %16 = sbr.rel (0) target = $region13
  $region12: #{resnet_tsa_forward.16} parent=0 // pred_region
    _
  $region13: #{resnet_tsa_forward.16} parent=0 // pred_fallthru
    _
  // Predicated region
  $region14: #{resnet_tsa_forward.16} parent=0 // pred_check
    _
  $region15: #{resnet_tsa_forward.16} parent=0 // pred_check_branch
    %18 = sbr.rel (0) target = $region17
  $region16: #{resnet_tsa_forward.16} parent=0 // pred_region
    _
  $region17: #{resnet_tsa_forward.16} parent=0 // pred_fallthru
    _
  // Predicated region
  $region18: #{resnet_tsa_forward.16} parent=0 // pred_check
    _
  $region19: #{resnet_tsa_forward.16} parent=0 // pred_check_branch
    %20 = sbr.rel (0) target = $region21
  $region20: #{resnet_tsa_forward.16} parent=0 // pred_region
    _
  $region21: #{resnet_tsa_forward.16} parent=0 // pred_fallthru
    _
  // Predicated region
  $region22: #{resnet_tsa_forward.16} parent=0 // pred_check
    _
  $region23: #{resnet_tsa_forward.16} parent=0 // pred_check_branch
    %22 = sbr.rel (0) target = $region25
  $region24: #{resnet_tsa_forward.16} parent=0 // pred_region
    _
  $region25: #{resnet_tsa_forward.16} parent=0 // pred_fallthru
    _
  %v24 = vld [vmem:[%s0] sm:$0xff]
  %v25 = vld [vmem:[%s0 + $0x8] sm:$0xff]
  %v26 = vld [vmem:[%s0 + $0x10] sm:$0xff]
  %v27 = vld [vmem:[%s0 + $0x18] sm:$0xff]
  %v28 = vld [vmem:[%s0 + $0x20] sm:$0xf]
  %v29 = vld [vmem:[%s0 + $0x24] sm:$0xff]
  %v30 = vld [vmem:[%s0 + $0x2c] sm:$0xff]
  %v31 = vld [vmem:[%s0 + $0x34] sm:$0xff]
  %v32 = vld [vmem:[%s0 + $0x3c] sm:$0xff]
  %v33 = vld [vmem:[%s0 + $0x44] sm:$0xf]
  %v34 = vld [vmem:[%s0 + $0x48] sm:$0xff]
  %v35 = vld [vmem:[%s0 + $0x50] sm:$0xff]
  %v36 = vld [vmem:[%s0 + $0x58] sm:$0xff]
  %v37 = vld [vmem:[%s0 + $0x60] sm:$0xff]
  %v38 = vld [vmem:[%s0 + $0x68] sm:$0xf]
  %v39 = vld [vmem:[%s0 + $0x6c] sm:$0xff]
  %v40 = vld [vmem:[%s0 + $0x74] sm:$0xff]
  %v41 = vld [vmem:[%s0 + $0x7c] sm:$0xff]
  %v42 = vld [vmem:[%s0 + $0x84] sm:$0xff]
  %v43 = vld [vmem:[%s0 + $0x8c] sm:$0xf]
  %v44 = vld [vmem:[%s1] sm:$0xf]
  %v45 = vld [vmem:[%s1 + $0x4] sm:$0xf]
  %v46 = vld [vmem:[%s1 + $0x8] sm:$0xf]
  %v47 = vld [vmem:[%s1 + $0xc] sm:$0xf]
  %v48 = vld [vmem:[%s1 + $0x10] sm:$0xf]
  %v49 = vld [vmem:[%s1 + $0x14] sm:$0xf]
  %v50 = vld [vmem:[%s1 + $0x18] sm:$0xf]
  %v51 = vld [vmem:[%s1 + $0x1c] sm:$0xf]
  %v52 = vld [vmem:[%s1 + $0x20] sm:$0xf]
  %v53 = vld [vmem:[%s1 + $0x24] sm:$0xf]
  %v54 = vld [vmem:[%s1 + $0x28] sm:$0xf]
  %v55 = vld [vmem:[%s1 + $0x2c] sm:$0xf]
  %v56 = vld [vmem:[%s1 + $0x30] sm:$0xf]
  %v57 = vld [vmem:[%s1 + $0x34] sm:$0xf]
  %v58 = vld [vmem:[%s1 + $0x38] sm:$0xf]
  %v59 = vld [vmem:[%s1 + $0x3c] sm:$0xf]
  %v60 = vld [vmem:[%s1 + $0x40] sm:$0xf]
  %v61 = vld [vmem:[%s1 + $0x44] sm:$0xf]
  %v62 = vld [vmem:[%s1 + $0x48] sm:$0xf]
  %v63 = vld [vmem:[%s1 + $0x4c] sm:$0xf]
  %v64 = vld [vmem:[%s1 + $0x50] sm:$0xf]
  %v65 = vld [vmem:[%s1 + $0x54] sm:$0xf]
  %v66 = vld [vmem:[%s1 + $0x58] sm:$0xf]
  %v67 = vld [vmem:[%s1 + $0x5c] sm:$0xf]
  %v68 = vld [vmem:[%s1 + $0x60] sm:$0xf]
  %v69 = vld [vmem:[%s1 + $0x64] sm:$0xf]
  %v70 = vld [vmem:[%s1 + $0x68] sm:$0xf]
  %v71 = vld [vmem:[%s1 + $0x6c] sm:$0xf]
  %v72 = vld [vmem:[%s1 + $0x70] sm:$0xf]
  %v73 = vld [vmem:[%s1 + $0x74] sm:$0xf]
  %v74 = vld [vmem:[%s1 + $0x78] sm:$0xf]
  %v75 = vld [vmem:[%s1 + $0x7c] sm:$0xf]
  %v76 = vld [vmem:[%s1 + $0x80] sm:$0xf]
  %v77 = vld [vmem:[%s1 + $0x84] sm:$0xf]
  %v78 = vld [vmem:[%s1 + $0x88] sm:$0xf]
  %v79 = vld [vmem:[%s1 + $0x8c] sm:$0xf]
  %v80 = vld [vmem:[%s1 + $0x90] sm:$0xf]
  %v81 = vld [vmem:[%s1 + $0x94] sm:$0xf]
  %v82 = vld [vmem:[%s1 + $0x98] sm:$0xf]
  %v83 = vld [vmem:[%s1 + $0x9c] sm:$0xf]
  %v84 = vld [vmem:[%s1 + $0xa0] sm:$0xf]
  %v85 = vld [vmem:[%s1 + $0xa4] sm:$0xf]
  %v86 = vld [vmem:[%s1 + $0xa8] sm:$0xf]
  %v87 = vld [vmem:[%s1 + $0xac] sm:$0xf]
  %v88 = vld [vmem:[%s1 + $0xb0] sm:$0xf]
  %v89 = vld [vmem:[%s1 + $0xb4] sm:$0xf]
  %v90 = vld [vmem:[%s1 + $0xb8] sm:$0xf]
  %v91 = vld [vmem:[%s1 + $0xbc] sm:$0xf]
  %v92 = vld [vmem:[%s1 + $0xc0] sm:$0xf]
  %v93 = vld [vmem:[%s1 + $0xc4] sm:$0xf]
  %v94 = vld [vmem:[%s1 + $0xc8] sm:$0xf]
  %v95 = vld [vmem:[%s1 + $0xcc] sm:$0xf]
  %v96 = vld [vmem:[%s1 + $0xd0] sm:$0xf]
  %v97 = vld [vmem:[%s1 + $0xd4] sm:$0xf]
  %v98 = vld [vmem:[%s1 + $0xd8] sm:$0xf]
  %v99 = vld [vmem:[%s1 + $0xdc] sm:$0xf]
  %v100 = vld [vmem:[%s1 + $0xe0] sm:$0xf]
  %v101 = vld [vmem:[%s1 + $0xe4] sm:$0xf]
  %v102 = vld [vmem:[%s1 + $0xe8] sm:$0xf]
  %v103 = vld [vmem:[%s1 + $0xec] sm:$0xf]
  %v104 = vld [vmem:[%s1 + $0xf0] sm:$0xf]
  %v105 = vld [vmem:[%s1 + $0xf4] sm:$0xf]
  %v106 = vld [vmem:[%s1 + $0xf8] sm:$0xf]
  %v107 = vld [vmem:[%s1 + $0xfc] sm:$0xf]
  %v108 = vld [vmem:[%s1 + $0x100] sm:$0xf]
  %v109 = vld [vmem:[%s1 + $0x104] sm:$0xf]
  %v110 = vld [vmem:[%s1 + $0x108] sm:$0xf]
  %v111 = vld [vmem:[%s1 + $0x10c] sm:$0xf]
  %v112 = vld [vmem:[%s1 + $0x110] sm:$0xf]
  %v113 = vld [vmem:[%s1 + $0x114] sm:$0xf]
  %v114 = vld [vmem:[%s1 + $0x118] sm:$0xf]
  %v115 = vld [vmem:[%s1 + $0x11c] sm:$0xf]
  %v116 = vld [vmem:[%s1 + $0x120] sm:$0xf]
  %v117 = vld [vmem:[%s1 + $0x124] sm:$0xf]
  %v118 = vld [vmem:[%s1 + $0x128] sm:$0xf]
  %v119 = vld [vmem:[%s1 + $0x12c] sm:$0xf]
  %v120 = vld [vmem:[%s1 + $0x130] sm:$0xf]
  %v121 = vld [vmem:[%s1 + $0x134] sm:$0xf]
  %v122 = vld [vmem:[%s1 + $0x138] sm:$0xf]
  %v123 = vld [vmem:[%s1 + $0x13c] sm:$0xf]
  %v124 = vld [vmem:[%s1 + $0x140] sm:$0xf]
  %v125 = vld [vmem:[%s1 + $0x144] sm:$0xf]
  %v126 = vld [vmem:[%s1 + $0x148] sm:$0xf]
  %v127 = vld [vmem:[%s1 + $0x14c] sm:$0xf]
  %v128 = vld [vmem:[%s1 + $0x150] sm:$0xf]
  %v129 = vld [vmem:[%s1 + $0x154] sm:$0xf]
  %v130 = vld [vmem:[%s1 + $0x158] sm:$0xf]
  %v131 = vld [vmem:[%s1 + $0x15c] sm:$0xf]
  %v132 = vld [vmem:[%s1 + $0x160] sm:$0xf]
  %v133 = vld [vmem:[%s1 + $0x164] sm:$0xf]
  %v134 = vld [vmem:[%s1 + $0x168] sm:$0xf]
  %v135 = vld [vmem:[%s1 + $0x16c] sm:$0xf]
  %v136 = vld [vmem:[%s1 + $0x170] sm:$0xf]
  %v137 = vld [vmem:[%s1 + $0x174] sm:$0xf]
  %v138 = vld [vmem:[%s1 + $0x178] sm:$0xf]
  %v139 = vld [vmem:[%s1 + $0x17c] sm:$0xf]
  %v140 = vld [vmem:[%s1 + $0x180] sm:$0xf]
  %v141 = vld [vmem:[%s1 + $0x184] sm:$0xf]
  %v142 = vld [vmem:[%s1 + $0x188] sm:$0xf]
  %v143 = vld [vmem:[%s1 + $0x18c] sm:$0xf]
  %v144 = vld [vmem:[%s1 + $0x190] sm:$0xf]
  %v145 = vld [vmem:[%s1 + $0x194] sm:$0xf]
  %v146 = vld [vmem:[%s1 + $0x198] sm:$0xf]
  %v147 = vld [vmem:[%s1 + $0x19c] sm:$0xf]
  %v148 = vld [vmem:[%s1 + $0x1a0] sm:$0xf]
  %v149 = vld [vmem:[%s1 + $0x1a4] sm:$0xf]
  %v150 = vld [vmem:[%s1 + $0x1a8] sm:$0xf]
  %v151 = vld [vmem:[%s1 + $0x1ac] sm:$0xf]
  %v152 = vld [vmem:[%s1 + $0x1b0] sm:$0xf]
  %v153 = vld [vmem:[%s1 + $0x1b4] sm:$0xf]
  %v154 = vld [vmem:[%s1 + $0x1b8] sm:$0xf]
  %v155 = vld [vmem:[%s1 + $0x1bc] sm:$0xf]
  %v156 = vld [vmem:[%s1 + $0x1c0] sm:$0xf]
  %v157 = vld [vmem:[%s1 + $0x1c4] sm:$0xf]
  %v158 = vld [vmem:[%s1 + $0x1c8] sm:$0xf]
  %v159 = vld [vmem:[%s1 + $0x1cc] sm:$0xf]
  %v160 = vld [vmem:[%s1 + $0x1d0] sm:$0xf]
  %v161 = vld [vmem:[%s1 + $0x1d4] sm:$0xf]
  %v162 = vld [vmem:[%s1 + $0x1d8] sm:$0xf]
  %v163 = vld [vmem:[%s1 + $0x1dc] sm:$0xf]
  %v164 = vld [vmem:[%s1 + $0x1e0] sm:$0xf]
  %v165 = vld [vmem:[%s1 + $0x1e4] sm:$0xf]
  %v166 = vld [vmem:[%s1 + $0x1e8] sm:$0xf]
  %v167 = vld [vmem:[%s1 + $0x1ec] sm:$0xf]
  %v168 = vld [vmem:[%s1 + $0x1f0] sm:$0xf]
  %v169 = vld [vmem:[%s1 + $0x1f4] sm:$0xf]
  %v170 = vld [vmem:[%s1 + $0x1f8] sm:$0xf]
  %v171 = vld [vmem:[%s1 + $0x1fc] sm:$0xf]
  %v172 = vld [vmem:[%s1 + $0x200] sm:$0xf]
  %v173 = vld [vmem:[%s1 + $0x204] sm:$0xf]
  %v174 = vld [vmem:[%s1 + $0x208] sm:$0xf]
  %v175 = vld [vmem:[%s1 + $0x20c] sm:$0xf]
  %v176 = vld [vmem:[%s1 + $0x210] sm:$0xf]
  %v177 = vld [vmem:[%s1 + $0x214] sm:$0xf]
  %v178 = vld [vmem:[%s1 + $0x218] sm:$0xf]
  %v179 = vld [vmem:[%s1 + $0x21c] sm:$0xf]
  %v180 = vld [vmem:[%s1 + $0x220] sm:$0xf]
  %v181 = vld [vmem:[%s1 + $0x224] sm:$0xf]
  %v182 = vld [vmem:[%s1 + $0x228] sm:$0xf]
  %v183 = vld [vmem:[%s1 + $0x22c] sm:$0xf]
  %v184 = vld [vmem:[%s1 + $0x230] sm:$0xf]
  %v185 = vld [vmem:[%s1 + $0x234] sm:$0xf]
  %v186 = vld [vmem:[%s1 + $0x238] sm:$0xf]
  %v187 = vld [vmem:[%s1 + $0x23c] sm:$0xf]
  %v188 = vld [vmem:[%s3] sm:$0xf]
  %v189 = vld [vmem:[%s3 + $0x4] sm:$0xf]
  %v190 = vld [vmem:[%s3 + $0x8] sm:$0xf]
  %v191 = vld [vmem:[%s3 + $0xc] sm:$0xf]
  %v192 = vld [vmem:[%s4] sm:$0xf]
  %v193 = vld [vmem:[%s4 + $0x4] sm:$0xf]
  %v194 = vld [vmem:[%s4 + $0x8] sm:$0xf]
  %v195 = vld [vmem:[%s4 + $0xc] sm:$0xf]
  %v196 = vld [vmem:[%s4 + $0x10] sm:$0xf]
  %v197 = vld [vmem:[%s4 + $0x14] sm:$0xf]
  %v198 = vld [vmem:[%s4 + $0x18] sm:$0xf]
  %v199 = vld [vmem:[%s4 + $0x1c] sm:$0xf]
  %v200 = vld [vmem:[%s4 + $0x20] sm:$0xf]
  %v201 = vld [vmem:[%s4 + $0x24] sm:$0xf]
  %v202 = vld [vmem:[%s4 + $0x28] sm:$0xf]
  %v203 = vld [vmem:[%s4 + $0x2c] sm:$0xf]
  %v204 = vld [vmem:[%s4 + $0x30] sm:$0xf]
  %v205 = vld [vmem:[%s4 + $0x34] sm:$0xf]
  %v206 = vld [vmem:[%s4 + $0x38] sm:$0xf]
  %v207 = vld [vmem:[%s4 + $0x3c] sm:$0xf]
  %v212 = vunpack.c.l.b16 %v188
  %v213 = vunpack.c.l.b16 %v189
  %v214 = vunpack.c.l.b16 %v190
  %v215 = vunpack.c.l.b16 %v191
  %v216 = vpack.c.b16 %v213, %v212
  %v217 = vpack.c.b16 %v215, %v214
  %v236 = vunpack.c.l.b16 %v192
  %v237 = vunpack.c.l.b16 %v193
  %v238 = vunpack.c.l.b16 %v194
  %v239 = vunpack.c.l.b16 %v195
  %v240 = vunpack.c.l.b16 %v196
  %v241 = vunpack.c.l.b16 %v197
  %v242 = vunpack.c.l.b16 %v198
  %v243 = vunpack.c.l.b16 %v199
  %v244 = vunpack.c.l.b16 %v200
  %v245 = vunpack.c.l.b16 %v201
  %v246 = vunpack.c.l.b16 %v202
  %v247 = vunpack.c.l.b16 %v203
  %v248 = vunpack.c.l.b16 %v204
  %v249 = vunpack.c.l.b16 %v205
  %v250 = vunpack.c.l.b16 %v206
  %v251 = vunpack.c.l.b16 %v207
  %v252 = vpack.c.b16 %v237, %v236
  %v253 = vpack.c.b16 %v239, %v238
  %v254 = vpack.c.b16 %v241, %v240
  %v255 = vpack.c.b16 %v243, %v242
  %v256 = vpack.c.b16 %v245, %v244
  %v257 = vpack.c.b16 %v247, %v246
  %v258 = vpack.c.b16 %v249, %v248
  %v259 = vpack.c.b16 %v251, %v250
  %268 = vmatprep.subr.bf16.mxu0 0
  %269 = vmatpush1.bf16.msra.mxu0 %v252
  %270 = vmatprep.subr.bf16.mxu0 0
  %271 = vmatpush1.bf16.msra.mxu0 %v253
  %272 = vmatprep.subr.bf16.mxu0 0
  %273 = vmatpush1.bf16.msra.mxu0 %v254
  %274 = vmatprep.subr.bf16.mxu0 0
  %275 = vmatpush1.bf16.msra.mxu0 %v255
  %276 = vmatprep.subr.bf16.mxu0 0
  %277 = vmatpush1.bf16.msra.mxu0 %v256
  %278 = vmatprep.subr.bf16.mxu0 0
  %279 = vmatpush1.bf16.msra.mxu0 %v257
  %280 = vmatprep.subr.bf16.mxu0 0
  %281 = vmatpush1.bf16.msra.mxu0 %v258
  %282 = vmatprep.subr.bf16.mxu0 0
  %283 = vmatpush1.bf16.msra.mxu0 %v259
  %284 = vmatprep.subr.bf16.mxu0 0
  %285 = vmatpush1.bf16.msra.mxu0 0
  %286 = vmatprep.subr.bf16.mxu0 0
  %287 = vmatpush1.bf16.msra.mxu0 0
  %288 = vmatprep.subr.bf16.mxu0 0
  %289 = vmatpush1.bf16.msra.mxu0 0
  %290 = vmatprep.subr.bf16.mxu0 0
  %291 = vmatpush1.bf16.msra.mxu0 0
  %292 = vmatprep.subr.bf16.mxu0 0
  %293 = vmatpush1.bf16.msra.mxu0 0
  %294 = vmatprep.subr.bf16.mxu0 0
  %295 = vmatpush1.bf16.msra.mxu0 0
  %296 = vmatprep.subr.bf16.mxu0 0
  %297 = vmatpush1.bf16.msra.mxu0 0
  %298 = vmatprep.subr.bf16.mxu0 0
  %299 = vmatpush1.bf16.msra.mxu0 0
  %300 = vmatprep.mubr.bf16.mxu0 0
  %301 = vmatmul.mubr.bf16.gmra.mrb[0].mxu0 %v216
  %v302 = vpop.f32.mrb[0].mxu0
  %v303 = vadd.f32 0.0, %v302
  %v304 = vpop.f32.mrb[0].mxu0
  %v305 = vpop.f32.mrb[0].mxu0
  %v306 = vadd.f32 0.0, %v305
  %v307 = vpop.f32.mrb[0].mxu0
  %308 = vmatprep.mubr.bf16.mxu0 0
  %309 = vmatmul.mubr.bf16.gmra.mrb[0].mxu0 %v217
  %v310 = vpop.f32.mrb[0].mxu0
  %v311 = vadd.f32 0.0, %v310
  %v312 = vpop.f32.mrb[0].mxu0
  %v313 = vpop.f32.mrb[0].mxu0
  %v314 = vadd.f32 0.0, %v313
  %v315 = vpop.f32.mrb[0].mxu0
  %316 = vdwg.mxu0
  %v317 = vld [vmem:[%s2] sm:$0x1]
  %v319 = vlaneseq
  %v320 = vshrl.u32 %v319, 7
  %v321 = vsub.s32 0, %v320
  %v322 = vrot.slane %v317, %v321
  %v344 = vunpack.c.l.b16 %v24
  %v345 = vunpack.c.h.b16 %v24
  %v346 = vunpack.c.l.b16 %v25
  %v347 = vunpack.c.h.b16 %v25
  %v348 = vunpack.c.l.b16 %v26
  %v349 = vunpack.c.h.b16 %v26
  %v350 = vunpack.c.l.b16 %v27
  %v351 = vunpack.c.h.b16 %v27
  %v352 = vunpack.c.l.b16 %v28
  %v353 = vunpack.c.l.b16 %v29
  %v354 = vunpack.c.h.b16 %v29
  %v355 = vunpack.c.l.b16 %v30
  %v356 = vunpack.c.h.b16 %v30
  %v357 = vunpack.c.l.b16 %v31
  %v358 = vunpack.c.h.b16 %v31
  %v359 = vunpack.c.l.b16 %v32
  %v360 = vunpack.c.h.b16 %v32
  %v361 = vunpack.c.l.b16 %v33
  %v362 = vunpack.c.l.b16 %v34
  %v363 = vunpack.c.h.b16 %v34
  %v364 = vunpack.c.l.b16 %v35
  %v365 = vunpack.c.h.b16 %v35
  %v366 = vunpack.c.l.b16 %v36
  %v367 = vunpack.c.h.b16 %v36
  %v368 = vunpack.c.l.b16 %v37
  %v369 = vunpack.c.h.b16 %v37
  %v370 = vunpack.c.l.b16 %v38
  %v371 = vunpack.c.l.b16 %v39
  %v372 = vunpack.c.h.b16 %v39
  %v373 = vunpack.c.l.b16 %v40
  %v374 = vunpack.c.h.b16 %v40
  %v375 = vunpack.c.l.b16 %v41
  %v376 = vunpack.c.h.b16 %v41
  %v377 = vunpack.c.l.b16 %v42
  %v378 = vunpack.c.h.b16 %v42
  %v379 = vunpack.c.l.b16 %v43
  %v380 = vpack.c.b16 %v353, %v344
  %v381 = vpack.c.b16 %v354, %v345
  %v382 = vpack.c.b16 %v355, %v346
  %v383 = vpack.c.b16 %v356, %v347
  %v384 = vpack.c.b16 %v357, %v348
  %v385 = vpack.c.b16 %v358, %v349
  %v386 = vpack.c.b16 %v359, %v350
  %v387 = vpack.c.b16 %v360, %v351
  %v388 = vpack.c.b16 %v361, %v352
  %v389 = vpack.c.b16 %v371, %v362
  %v390 = vpack.c.b16 %v372, %v363
  %v391 = vpack.c.b16 %v373, %v364
  %v392 = vpack.c.b16 %v374, %v365
  %v393 = vpack.c.b16 %v375, %v366
  %v394 = vpack.c.b16 %v376, %v367
  %v395 = vpack.c.b16 %v377, %v368
  %v396 = vpack.c.b16 %v378, %v369
  %v397 = vpack.c.b16 %v379, %v370
  %v560 = vunpack.c.l.b16 %v44
  %v561 = vunpack.c.l.b16 %v45
  %v562 = vunpack.c.l.b16 %v46
  %v563 = vunpack.c.l.b16 %v47
  %v564 = vunpack.c.l.b16 %v48
  %v565 = vunpack.c.l.b16 %v49
  %v566 = vunpack.c.l.b16 %v50
  %v567 = vunpack.c.l.b16 %v51
  %v568 = vunpack.c.l.b16 %v52
  %v569 = vunpack.c.l.b16 %v53
  %v570 = vunpack.c.l.b16 %v54
  %v571 = vunpack.c.l.b16 %v55
  %v572 = vunpack.c.l.b16 %v56
  %v573 = vunpack.c.l.b16 %v57
  %v574 = vunpack.c.l.b16 %v58
  %v575 = vunpack.c.l.b16 %v59
  %v576 = vunpack.c.l.b16 %v60
  %v577 = vunpack.c.l.b16 %v61
  %v578 = vunpack.c.l.b16 %v62
  %v579 = vunpack.c.l.b16 %v63
  %v580 = vunpack.c.l.b16 %v64
  %v581 = vunpack.c.l.b16 %v65
  %v582 = vunpack.c.l.b16 %v66
  %v583 = vunpack.c.l.b16 %v67
  %v584 = vunpack.c.l.b16 %v68
  %v585 = vunpack.c.l.b16 %v69
  %v586 = vunpack.c.l.b16 %v70
  %v587 = vunpack.c.l.b16 %v71
  %v588 = vunpack.c.l.b16 %v72
  %v589 = vunpack.c.l.b16 %v73
  %v590 = vunpack.c.l.b16 %v74
  %v591 = vunpack.c.l.b16 %v75
  %v592 = vunpack.c.l.b16 %v76
  %v593 = vunpack.c.l.b16 %v77
  %v594 = vunpack.c.l.b16 %v78
  %v595 = vunpack.c.l.b16 %v79
  %v596 = vunpack.c.l.b16 %v80
  %v597 = vunpack.c.l.b16 %v81
  %v598 = vunpack.c.l.b16 %v82
  %v599 = vunpack.c.l.b16 %v83
  %v600 = vunpack.c.l.b16 %v84
  %v601 = vunpack.c.l.b16 %v85
  %v602 = vunpack.c.l.b16 %v86
  %v603 = vunpack.c.l.b16 %v87
  %v604 = vunpack.c.l.b16 %v88
  %v605 = vunpack.c.l.b16 %v89
  %v606 = vunpack.c.l.b16 %v90
  %v607 = vunpack.c.l.b16 %v91
  %v608 = vunpack.c.l.b16 %v92
  %v609 = vunpack.c.l.b16 %v93
  %v610 = vunpack.c.l.b16 %v94
  %v611 = vunpack.c.l.b16 %v95
  %v612 = vunpack.c.l.b16 %v96
  %v613 = vunpack.c.l.b16 %v97
  %v614 = vunpack.c.l.b16 %v98
  %v615 = vunpack.c.l.b16 %v99
  %v616 = vunpack.c.l.b16 %v100
  %v617 = vunpack.c.l.b16 %v101
  %v618 = vunpack.c.l.b16 %v102
  %v619 = vunpack.c.l.b16 %v103
  %v620 = vunpack.c.l.b16 %v104
  %v621 = vunpack.c.l.b16 %v105
  %v622 = vunpack.c.l.b16 %v106
  %v623 = vunpack.c.l.b16 %v107
  %v624 = vunpack.c.l.b16 %v108
  %v625 = vunpack.c.l.b16 %v109
  %v626 = vunpack.c.l.b16 %v110
  %v627 = vunpack.c.l.b16 %v111
  %v628 = vunpack.c.l.b16 %v112
  %v629 = vunpack.c.l.b16 %v113
  %v630 = vunpack.c.l.b16 %v114
  %v631 = vunpack.c.l.b16 %v115
  %v632 = vunpack.c.l.b16 %v116
  %v633 = vunpack.c.l.b16 %v117
  %v634 = vunpack.c.l.b16 %v118
  %v635 = vunpack.c.l.b16 %v119
  %v636 = vunpack.c.l.b16 %v120
  %v637 = vunpack.c.l.b16 %v121
  %v638 = vunpack.c.l.b16 %v122
  %v639 = vunpack.c.l.b16 %v123
  %v640 = vunpack.c.l.b16 %v124
  %v641 = vunpack.c.l.b16 %v125
  %v642 = vunpack.c.l.b16 %v126
  %v643 = vunpack.c.l.b16 %v127
  %v644 = vunpack.c.l.b16 %v128
  %v645 = vunpack.c.l.b16 %v129
  %v646 = vunpack.c.l.b16 %v130
  %v647 = vunpack.c.l.b16 %v131
  %v648 = vunpack.c.l.b16 %v132
  %v649 = vunpack.c.l.b16 %v133
  %v650 = vunpack.c.l.b16 %v134
  %v651 = vunpack.c.l.b16 %v135
  %v652 = vunpack.c.l.b16 %v136
  %v653 = vunpack.c.l.b16 %v137
  %v654 = vunpack.c.l.b16 %v138
  %v655 = vunpack.c.l.b16 %v139
  %v656 = vunpack.c.l.b16 %v140
  %v657 = vunpack.c.l.b16 %v141
  %v658 = vunpack.c.l.b16 %v142
  %v659 = vunpack.c.l.b16 %v143
  %v660 = vunpack.c.l.b16 %v144
  %v661 = vunpack.c.l.b16 %v145
  %v662 = vunpack.c.l.b16 %v146
  %v663 = vunpack.c.l.b16 %v147
  %v664 = vunpack.c.l.b16 %v148
  %v665 = vunpack.c.l.b16 %v149
  %v666 = vunpack.c.l.b16 %v150
  %v667 = vunpack.c.l.b16 %v151
  %v668 = vunpack.c.l.b16 %v152
  %v669 = vunpack.c.l.b16 %v153
  %v670 = vunpack.c.l.b16 %v154
  %v671 = vunpack.c.l.b16 %v155
  %v672 = vunpack.c.l.b16 %v156
  %v673 = vunpack.c.l.b16 %v157
  %v674 = vunpack.c.l.b16 %v158
  %v675 = vunpack.c.l.b16 %v159
  %v676 = vunpack.c.l.b16 %v160
  %v677 = vunpack.c.l.b16 %v161
  %v678 = vunpack.c.l.b16 %v162
  %v679 = vunpack.c.l.b16 %v163
  %v680 = vunpack.c.l.b16 %v164
  %v681 = vunpack.c.l.b16 %v165
  %v682 = vunpack.c.l.b16 %v166
  %v683 = vunpack.c.l.b16 %v167
  %v684 = vunpack.c.l.b16 %v168
  %v685 = vunpack.c.l.b16 %v169
  %v686 = vunpack.c.l.b16 %v170
  %v687 = vunpack.c.l.b16 %v171
  %v688 = vunpack.c.l.b16 %v172
  %v689 = vunpack.c.l.b16 %v173
  %v690 = vunpack.c.l.b16 %v174
  %v691 = vunpack.c.l.b16 %v175
  %v692 = vunpack.c.l.b16 %v176
  %v693 = vunpack.c.l.b16 %v177
  %v694 = vunpack.c.l.b16 %v178
  %v695 = vunpack.c.l.b16 %v179
  %v696 = vunpack.c.l.b16 %v180
  %v697 = vunpack.c.l.b16 %v181
  %v698 = vunpack.c.l.b16 %v182
  %v699 = vunpack.c.l.b16 %v183
  %v700 = vunpack.c.l.b16 %v184
  %v701 = vunpack.c.l.b16 %v185
  %v702 = vunpack.c.l.b16 %v186
  %v703 = vunpack.c.l.b16 %v187
  %v704 = vpack.c.b16 %v561, %v560
  %v705 = vpack.c.b16 %v563, %v562
  %v706 = vpack.c.b16 %v565, %v564
  %v707 = vpack.c.b16 %v567, %v566
  %v708 = vpack.c.b16 %v569, %v568
  %v709 = vpack.c.b16 %v571, %v570
  %v710 = vpack.c.b16 %v573, %v572
  %v711 = vpack.c.b16 %v575, %v574
  %v712 = vpack.c.b16 %v577, %v576
  %v713 = vpack.c.b16 %v579, %v578
  %v714 = vpack.c.b16 %v581, %v580
  %v715 = vpack.c.b16 %v583, %v582
  %v716 = vpack.c.b16 %v585, %v584
  %v717 = vpack.c.b16 %v587, %v586
  %v718 = vpack.c.b16 %v589, %v588
  %v719 = vpack.c.b16 %v591, %v590
  %v720 = vpack.c.b16 %v593, %v592
  %v721 = vpack.c.b16 %v595, %v594
  %v722 = vpack.c.b16 %v597, %v596
  %v723 = vpack.c.b16 %v599, %v598
  %v724 = vpack.c.b16 %v601, %v600
  %v725 = vpack.c.b16 %v603, %v602
  %v726 = vpack.c.b16 %v605, %v604
  %v727 = vpack.c.b16 %v607, %v606
  %v728 = vpack.c.b16 %v609, %v608
  %v729 = vpack.c.b16 %v611, %v610
  %v730 = vpack.c.b16 %v613, %v612
  %v731 = vpack.c.b16 %v615, %v614
  %v732 = vpack.c.b16 %v617, %v616
  %v733 = vpack.c.b16 %v619, %v618
  %v734 = vpack.c.b16 %v621, %v620
  %v735 = vpack.c.b16 %v623, %v622
  %v736 = vpack.c.b16 %v625, %v624
  %v737 = vpack.c.b16 %v627, %v626
  %v738 = vpack.c.b16 %v629, %v628
  %v739 = vpack.c.b16 %v631, %v630
  %v740 = vpack.c.b16 %v633, %v632
  %v741 = vpack.c.b16 %v635, %v634
  %v742 = vpack.c.b16 %v637, %v636
  %v743 = vpack.c.b16 %v639, %v638
  %v744 = vpack.c.b16 %v641, %v640
  %v745 = vpack.c.b16 %v643, %v642
  %v746 = vpack.c.b16 %v645, %v644
  %v747 = vpack.c.b16 %v647, %v646
  %v748 = vpack.c.b16 %v649, %v648
  %v749 = vpack.c.b16 %v651, %v650
  %v750 = vpack.c.b16 %v653, %v652
  %v751 = vpack.c.b16 %v655, %v654
  %v752 = vpack.c.b16 %v657, %v656
  %v753 = vpack.c.b16 %v659, %v658
  %v754 = vpack.c.b16 %v661, %v660
  %v755 = vpack.c.b16 %v663, %v662
  %v756 = vpack.c.b16 %v665, %v664
  %v757 = vpack.c.b16 %v667, %v666
  %v758 = vpack.c.b16 %v669, %v668
  %v759 = vpack.c.b16 %v671, %v670
  %v760 = vpack.c.b16 %v673, %v672
  %v761 = vpack.c.b16 %v675, %v674
  %v762 = vpack.c.b16 %v677, %v676
  %v763 = vpack.c.b16 %v679, %v678
  %v764 = vpack.c.b16 %v681, %v680
  %v765 = vpack.c.b16 %v683, %v682
  %v766 = vpack.c.b16 %v685, %v684
  %v767 = vpack.c.b16 %v687, %v686
  %v768 = vpack.c.b16 %v689, %v688
  %v769 = vpack.c.b16 %v691, %v690
  %v770 = vpack.c.b16 %v693, %v692
  %v771 = vpack.c.b16 %v695, %v694
  %v772 = vpack.c.b16 %v697, %v696
  %v773 = vpack.c.b16 %v699, %v698
  %v774 = vpack.c.b16 %v701, %v700
  %v775 = vpack.c.b16 %v703, %v702
  %848 = vmatprep.subr.bf16.mxu0 0
  %849 = vmatpush1.bf16.msra.mxu0 %v704
  %850 = vmatprep.subr.bf16.mxu0 0
  %851 = vmatpush1.bf16.msra.mxu0 %v705
  %852 = vmatprep.subr.bf16.mxu0 0
  %853 = vmatpush1.bf16.msra.mxu0 %v706
  %854 = vmatprep.subr.bf16.mxu0 0
  %855 = vmatpush1.bf16.msra.mxu0 %v707
  %856 = vmatprep.subr.bf16.mxu0 0
  %857 = vmatpush1.bf16.msra.mxu0 %v708
  %858 = vmatprep.subr.bf16.mxu0 0
  %859 = vmatpush1.bf16.msra.mxu0 %v709
  %860 = vmatprep.subr.bf16.mxu0 0
  %861 = vmatpush1.bf16.msra.mxu0 %v710
  %862 = vmatprep.subr.bf16.mxu0 0
  %863 = vmatpush1.bf16.msra.mxu0 %v711
  %864 = vmatprep.subr.bf16.mxu0 0
  %865 = vmatpush1.bf16.msra.mxu0 %v712
  %866 = vmatprep.subr.bf16.mxu0 0
  %867 = vmatpush1.bf16.msra.mxu0 %v713
  %868 = vmatprep.subr.bf16.mxu0 0
  %869 = vmatpush1.bf16.msra.mxu0 %v714
  %870 = vmatprep.subr.bf16.mxu0 0
  %871 = vmatpush1.bf16.msra.mxu0 %v715
  %872 = vmatprep.subr.bf16.mxu0 0
  %873 = vmatpush1.bf16.msra.mxu0 %v716
  %874 = vmatprep.subr.bf16.mxu0 0
  %875 = vmatpush1.bf16.msra.mxu0 %v717
  %876 = vmatprep.subr.bf16.mxu0 0
  %877 = vmatpush1.bf16.msra.mxu0 %v718
  %878 = vmatprep.subr.bf16.mxu0 0
  %879 = vmatpush1.bf16.msra.mxu0 %v719
  %880 = vmatprep.mubr.bf16.mxu0 %v381
  %881 = vmatmul.mubr.bf16.gmra.mrb[0].mxu0 %v380
  %v882 = vpop.f32.mrb[0].mxu0
  %v883 = vadd.f32 %v322, %v882
  %v884 = vpop.f32.mrb[0].mxu0
  %v885 = vpop.f32.mrb[0].mxu0
  %v886 = vadd.f32 %v322, %v885
  %v887 = vpop.f32.mrb[0].mxu0
  %888 = vmatprep.mubr.bf16.mxu0 %v390
  %889 = vmatmul.mubr.bf16.gmra.mrb[0].mxu0 %v389
  %v890 = vpop.f32.mrb[0].mxu0
  %v891 = vadd.f32 %v322, %v890
  %v892 = vpop.f32.mrb[0].mxu0
  %v893 = vpop.f32.mrb[0].mxu0
  %v894 = vadd.f32 %v322, %v893
  %v895 = vpop.f32.mrb[0].mxu0
  %896 = vdwg.mxu0
  %897 = vmatprep.subr.bf16.mxu0 0
  %898 = vmatpush1.bf16.msra.mxu0 %v720
  %899 = vmatprep.subr.bf16.mxu0 0
  %900 = vmatpush1.bf16.msra.mxu0 %v721
  %901 = vmatprep.subr.bf16.mxu0 0
  %902 = vmatpush1.bf16.msra.mxu0 %v722
  %903 = vmatprep.subr.bf16.mxu0 0
  %904 = vmatpush1.bf16.msra.mxu0 %v723
  %905 = vmatprep.subr.bf16.mxu0 0
  %906 = vmatpush1.bf16.msra.mxu0 %v724
  %907 = vmatprep.subr.bf16.mxu0 0
  %908 = vmatpush1.bf16.msra.mxu0 %v725
  %909 = vmatprep.subr.bf16.mxu0 0
  %910 = vmatpush1.bf16.msra.mxu0 %v726
  %911 = vmatprep.subr.bf16.mxu0 0
  %912 = vmatpush1.bf16.msra.mxu0 %v727
  %913 = vmatprep.subr.bf16.mxu0 0
  %914 = vmatpush1.bf16.msra.mxu0 %v728
  %915 = vmatprep.subr.bf16.mxu0 0
  %916 = vmatpush1.bf16.msra.mxu0 %v729
  %917 = vmatprep.subr.bf16.mxu0 0
  %918 = vmatpush1.bf16.msra.mxu0 %v730
  %919 = vmatprep.subr.bf16.mxu0 0
  %920 = vmatpush1.bf16.msra.mxu0 %v731
  %921 = vmatprep.subr.bf16.mxu0 0
  %922 = vmatpush1.bf16.msra.mxu0 %v732
  %923 = vmatprep.subr.bf16.mxu0 0
  %924 = vmatpush1.bf16.msra.mxu0 %v733
  %925 = vmatprep.subr.bf16.mxu0 0
  %926 = vmatpush1.bf16.msra.mxu0 %v734
  %927 = vmatprep.subr.bf16.mxu0 0
  %928 = vmatpush1.bf16.msra.mxu0 %v735
  %929 = vmatprep.mubr.bf16.mxu0 %v383
  %930 = vmatmul.mubr.bf16.gmra.mrb[0].mxu0 %v382
  %v931 = vpop.f32.mrb[0].mxu0
  %v932 = vadd.f32 %v883, %v931
  %v933 = vpop.f32.mrb[0].mxu0
  %v934 = vpop.f32.mrb[0].mxu0
  %v935 = vadd.f32 %v886, %v934
  %v936 = vpop.f32.mrb[0].mxu0
  %937 = vmatprep.mubr.bf16.mxu0 %v392
  %938 = vmatmul.mubr.bf16.gmra.mrb[0].mxu0 %v391
  %v939 = vpop.f32.mrb[0].mxu0
  %v940 = vadd.f32 %v891, %v939
  %v941 = vpop.f32.mrb[0].mxu0
  %v942 = vpop.f32.mrb[0].mxu0
  %v943 = vadd.f32 %v894, %v942
  %v944 = vpop.f32.mrb[0].mxu0
  %945 = vdwg.mxu0
  %946 = vmatprep.subr.bf16.mxu0 0
  %947 = vmatpush1.bf16.msra.mxu0 %v736
  %948 = vmatprep.subr.bf16.mxu0 0
  %949 = vmatpush1.bf16.msra.mxu0 %v737
  %950 = vmatprep.subr.bf16.mxu0 0
  %951 = vmatpush1.bf16.msra.mxu0 %v738
  %952 = vmatprep.subr.bf16.mxu0 0
  %953 = vmatpush1.bf16.msra.mxu0 %v739
  %954 = vmatprep.subr.bf16.mxu0 0
  %955 = vmatpush1.bf16.msra.mxu0 %v740
  %956 = vmatprep.subr.bf16.mxu0 0
  %957 = vmatpush1.bf16.msra.mxu0 %v741
  %958 = vmatprep.subr.bf16.mxu0 0
  %959 = vmatpush1.bf16.msra.mxu0 %v742
  %960 = vmatprep.subr.bf16.mxu0 0
  %961 = vmatpush1.bf16.msra.mxu0 %v743
  %962 = vmatprep.subr.bf16.mxu0 0
  %963 = vmatpush1.bf16.msra.mxu0 %v744
  %964 = vmatprep.subr.bf16.mxu0 0
  %965 = vmatpush1.bf16.msra.mxu0 %v745
  %966 = vmatprep.subr.bf16.mxu0 0
  %967 = vmatpush1.bf16.msra.mxu0 %v746
  %968 = vmatprep.subr.bf16.mxu0 0
  %969 = vmatpush1.bf16.msra.mxu0 %v747
  %970 = vmatprep.subr.bf16.mxu0 0
  %971 = vmatpush1.bf16.msra.mxu0 %v748
  %972 = vmatprep.subr.bf16.mxu0 0
  %973 = vmatpush1.bf16.msra.mxu0 %v749
  %974 = vmatprep.subr.bf16.mxu0 0
  %975 = vmatpush1.bf16.msra.mxu0 %v750
  %976 = vmatprep.subr.bf16.mxu0 0
  %977 = vmatpush1.bf16.msra.mxu0 %v751
  %978 = vmatprep.mubr.bf16.mxu0 %v385
  %979 = vmatmul.mubr.bf16.gmra.mrb[0].mxu0 %v384
  %v980 = vpop.f32.mrb[0].mxu0
  %v981 = vadd.f32 %v932, %v980
  %v982 = vpop.f32.mrb[0].mxu0
  %v983 = vpop.f32.mrb[0].mxu0
  %v984 = vadd.f32 %v935, %v983
  %v985 = vpop.f32.mrb[0].mxu0
  %986 = vmatprep.mubr.bf16.mxu0 %v394
  %987 = vmatmul.mubr.bf16.gmra.mrb[0].mxu0 %v393
  %v988 = vpop.f32.mrb[0].mxu0
  %v989 = vadd.f32 %v940, %v988
  %v990 = vpop.f32.mrb[0].mxu0
  %v991 = vpop.f32.mrb[0].mxu0
  %v992 = vadd.f32 %v943, %v991
  %v993 = vpop.f32.mrb[0].mxu0
  %994 = vdwg.mxu0
  %995 = vmatprep.subr.bf16.mxu0 0
  %996 = vmatpush1.bf16.msra.mxu0 %v752
  %997 = vmatprep.subr.bf16.mxu0 0
  %998 = vmatpush1.bf16.msra.mxu0 %v753
  %999 = vmatprep.subr.bf16.mxu0 0
  %1000 = vmatpush1.bf16.msra.mxu0 %v754
  %1001 = vmatprep.subr.bf16.mxu0 0
  %1002 = vmatpush1.bf16.msra.mxu0 %v755
  %1003 = vmatprep.subr.bf16.mxu0 0
  %1004 = vmatpush1.bf16.msra.mxu0 %v756
  %1005 = vmatprep.subr.bf16.mxu0 0
  %1006 = vmatpush1.bf16.msra.mxu0 %v757
  %1007 = vmatprep.subr.bf16.mxu0 0
  %1008 = vmatpush1.bf16.msra.mxu0 %v758
  %1009 = vmatprep.subr.bf16.mxu0 0
  %1010 = vmatpush1.bf16.msra.mxu0 %v759
  %1011 = vmatprep.subr.bf16.mxu0 0
  %1012 = vmatpush1.bf16.msra.mxu0 %v760
  %1013 = vmatprep.subr.bf16.mxu0 0
  %1014 = vmatpush1.bf16.msra.mxu0 %v761
  %1015 = vmatprep.subr.bf16.mxu0 0
  %1016 = vmatpush1.bf16.msra.mxu0 %v762
  %1017 = vmatprep.subr.bf16.mxu0 0
  %1018 = vmatpush1.bf16.msra.mxu0 %v763
  %1019 = vmatprep.subr.bf16.mxu0 0
  %1020 = vmatpush1.bf16.msra.mxu0 %v764
  %1021 = vmatprep.subr.bf16.mxu0 0
  %1022 = vmatpush1.bf16.msra.mxu0 %v765
  %1023 = vmatprep.subr.bf16.mxu0 0
  %1024 = vmatpush1.bf16.msra.mxu0 %v766
  %1025 = vmatprep.subr.bf16.mxu0 0
  %1026 = vmatpush1.bf16.msra.mxu0 %v767
  %1027 = vmatprep.mubr.bf16.mxu0 %v387
  %1028 = vmatmul.mubr.bf16.gmra.mrb[0].mxu0 %v386
  %v1029 = vpop.f32.mrb[0].mxu0
  %v1030 = vadd.f32 %v981, %v1029
  %v1031 = vpop.f32.mrb[0].mxu0
  %v1032 = vpop.f32.mrb[0].mxu0
  %v1033 = vadd.f32 %v984, %v1032
  %v1034 = vpop.f32.mrb[0].mxu0
  %1035 = vmatprep.mubr.bf16.mxu0 %v396
  %1036 = vmatmul.mubr.bf16.gmra.mrb[0].mxu0 %v395
  %v1037 = vpop.f32.mrb[0].mxu0
  %v1038 = vadd.f32 %v989, %v1037
  %v1039 = vpop.f32.mrb[0].mxu0
  %v1040 = vpop.f32.mrb[0].mxu0
  %v1041 = vadd.f32 %v992, %v1040
  %v1042 = vpop.f32.mrb[0].mxu0
  %1043 = vdwg.mxu0
  %1044 = vmatprep.subr.bf16.mxu0 0
  %1045 = vmatpush1.bf16.msra.mxu0 %v768
  %1046 = vmatprep.subr.bf16.mxu0 0
  %1047 = vmatpush1.bf16.msra.mxu0 %v769
  %1048 = vmatprep.subr.bf16.mxu0 0
  %1049 = vmatpush1.bf16.msra.mxu0 %v770
  %1050 = vmatprep.subr.bf16.mxu0 0
  %1051 = vmatpush1.bf16.msra.mxu0 %v771
  %1052 = vmatprep.subr.bf16.mxu0 0
  %1053 = vmatpush1.bf16.msra.mxu0 %v772
  %1054 = vmatprep.subr.bf16.mxu0 0
  %1055 = vmatpush1.bf16.msra.mxu0 %v773
  %1056 = vmatprep.subr.bf16.mxu0 0
  %1057 = vmatpush1.bf16.msra.mxu0 %v774
  %1058 = vmatprep.subr.bf16.mxu0 0
  %1059 = vmatpush1.bf16.msra.mxu0 %v775
  %1060 = vmatprep.subr.bf16.mxu0 0
  %1061 = vmatpush1.bf16.msra.mxu0 0
  %1062 = vmatprep.subr.bf16.mxu0 0
  %1063 = vmatpush1.bf16.msra.mxu0 0
  %1064 = vmatprep.subr.bf16.mxu0 0
  %1065 = vmatpush1.bf16.msra.mxu0 0
  %1066 = vmatprep.subr.bf16.mxu0 0
  %1067 = vmatpush1.bf16.msra.mxu0 0
  %1068 = vmatprep.subr.bf16.mxu0 0
  %1069 = vmatpush1.bf16.msra.mxu0 0
  %1070 = vmatprep.subr.bf16.mxu0 0
  %1071 = vmatpush1.bf16.msra.mxu0 0
  %1072 = vmatprep.subr.bf16.mxu0 0
  %1073 = vmatpush1.bf16.msra.mxu0 0
  %1074 = vmatprep.subr.bf16.mxu0 0
  %1075 = vmatpush1.bf16.msra.mxu0 0
  %1076 = vmatprep.mubr.bf16.mxu0 0
  %1077 = vmatmul.mubr.bf16.gmra.mrb[0].mxu0 %v388
  %v1078 = vpop.f32.mrb[0].mxu0
  %v1079 = vadd.f32 %v1030, %v1078
  %v1080 = vpop.f32.mrb[0].mxu0
  %v1081 = vpop.f32.mrb[0].mxu0
  %v1082 = vadd.f32 %v1033, %v1081
  %v1083 = vpop.f32.mrb[0].mxu0
  %1084 = vmatprep.mubr.bf16.mxu0 0
  %1085 = vmatmul.mubr.bf16.gmra.mrb[0].mxu0 %v397
  %v1086 = vpop.f32.mrb[0].mxu0
  %v1087 = vadd.f32 %v1038, %v1086
  %v1088 = vpop.f32.mrb[0].mxu0
  %v1089 = vpop.f32.mrb[0].mxu0
  %v1090 = vadd.f32 %v1041, %v1089
  %v1091 = vpop.f32.mrb[0].mxu0
  %1092 = vdwg.mxu0
  %v1093 = vadd.f32 %v1079, %v303
  %v1094 = vadd.f32 %v1082, %v306
  %v1095 = vadd.f32 %v1087, %v311
  %v1096 = vadd.f32 %v1090, %v314
  %v1097 = vld [vmem:[%s5] sm:$0x1]
  %v1099 = vlaneseq
  %v1100 = vshrl.u32 %v1099, 7
  %v1101 = vsub.s32 0, %v1100
  %v1102 = vrot.slane %v1097, %v1101
  %v1104 = vadd.f32 %v1093, %v1102
  %v1105 = vadd.f32 %v1094, %v1102
  %v1106 = vadd.f32 %v1095, %v1102
  %v1107 = vadd.f32 %v1096, %v1102
  %v1108 = vmax.f32 %v1104, 0.0
  %v1109 = vmax.f32 %v1105, 0.0
  %v1110 = vmax.f32 %v1106, 0.0
  %v1111 = vmax.f32 %v1107, 0.0
  %v1112 = vpack.c.bf16 %v1109, %v1108
  %v1113 = vpack.c.bf16 %v1111, %v1110
  %v1116 = vunpack.c.l.b16 %v1112
  %v1117 = vunpack.c.h.b16 %v1112
  %v1118 = vunpack.c.l.b16 %v1113
  %v1119 = vunpack.c.h.b16 %v1113
  %v1120 = vpack.c.b16 %v1116, %v1116
  %v1121 = vpack.c.b16 %v1117, %v1117
  %v1122 = vpack.c.b16 %v1118, %v1118
  %v1123 = vpack.c.b16 %v1119, %v1119
  %1128 = vst [vmem:[%s6] sm:$0xf] %v1120
  %1129 = vst [vmem:[%s6 + $0x4] sm:$0xf] %v1121
  %1130 = vst [vmem:[%s6 + $0x8] sm:$0xf] %v1122
  %1131 = vst [vmem:[%s6 + $0xc] sm:$0xf] %v1123
  // Predicated region
  $region26: #{resnet_tsa_forward.16} parent=0 // pred_check
    _
  $region27: #{resnet_tsa_forward.16} parent=0 // pred_check_branch
    %1133 = sbr.rel (0) target = $region29
  $region28: #{resnet_tsa_forward.16} parent=0 // pred_region
    _
  $region29: #{resnet_tsa_forward.16} parent=0 // pred_fallthru
    _
  // Predicated region
  $region30: #{resnet_tsa_forward.16} parent=0 // pred_check
    _
  $region31: #{resnet_tsa_forward.16} parent=0 // pred_check_branch
    %1135 = sbr.rel (0) target = $region33
  $region32: #{resnet_tsa_forward.16} parent=0 // pred_region
    _
  $region33: #{resnet_tsa_forward.16} parent=0 // pred_fallthru
    _

// kernel: resnet_tsa_forward.19
$region0: #{resnet_tsa_forward.19}
  #allocation0 [shape = 'u32[]', space=smem, size = 0x4, offset = 0x4, fixed_abs, tag = 'smem constant byte address 0x4 - core index']
  #allocation1 [shape = 'u32[144,128]{1,0:T(1,128)}', space=vmem, size = 0x12000, scoped, tag = 'internal scratch']
  %s0 = inlined_call_operand.vmem [shape: bf16[2,4,128], index: 0, kind: input, shape index: {}]
  %s1 = inlined_call_operand.hbm [shape: f32[2,128], index: 1, kind: output, shape index: {}]
  %s2 = sld [smem:[#allocation0]]
  $region14: #{resnet_tsa_forward.19} parent=0
    _
  %s4 = ssub.s32 1, %s2
  %s5 = scalar_select 0, %s4, %s2
  $region1: #{resnet_tsa_forward.19} parent=0
    #allocation2 [shape = 'u8[1024]{0}', space=vmem, size = 0x400, scoped, tag = 'output window, operand 0, single buffered']
    #allocation3 [shape = 's32[1]{0}', space=sflag, size = 0x4, scoped, tag = 'scoped memory for resnet_tsa_forward.19']
    %6 = vsyncpa [#allocation3], 0
    // Predicated region
    $region2: #{resnet_tsa_forward.19} parent=1 // pred_check
      _
    $region3: #{resnet_tsa_forward.19} parent=1 // pred_check_branch
      %8 = sbr.rel (0) target = $region5
    $region4: #{resnet_tsa_forward.19} parent=1 // pred_region
      _
    $region5: #{resnet_tsa_forward.19} parent=1 // pred_fallthru
      _
    %v9 = vld [vmem:[%s0] sm:$0x3]
    %v10 = vld [vmem:[%s0 + $0x2] sm:$0x3]
    %v11 = vunpack.c.l.bf16 %v9
    %v12 = vunpack.c.l.bf16 %v10
    %vm13 = vcmask 1043456
    %v14 = vsel %vm13, %v11, 0.0
    %v15 = vrot.slane %v14, 4
    %v16 = vadd.f32 %v14, %v15
    %v17 = vrot.slane %v16, 2
    %v18 = vadd.f32 %v16, %v17
    %v19 = vrot.slane %v18, 1
    %v20 = vadd.f32 %v18, %v19
    %v21 = vsel %vm13, %v12, 0.0
    %v22 = vrot.slane %v21, 4
    %v23 = vadd.f32 %v21, %v22
    %v24 = vrot.slane %v23, 2
    %v25 = vadd.f32 %v23, %v24
    %v26 = vrot.slane %v25, 1
    %v27 = vadd.f32 %v25, %v26
    %v28 = vrcp.pop 4.0
    %v29 = vmul.f32 %v20, %v28
    %v30 = vmul.f32 %v27, %v28
    %vm33 = vcmask 1041409
    %v34 = vsel %vm33, %v30, %v29
    %36 = vst [vmem:[#allocation2] sm:$0x3] %v34
    // Predicated region
    $region6: #{resnet_tsa_forward.19} parent=1 // pred_check
      _
    $region7: #{resnet_tsa_forward.19} parent=1 // pred_check_branch
      %38 = sbr.rel (0) target = $region9
    $region8: #{resnet_tsa_forward.19} parent=1 // pred_region
      %s40 = ssub.s32 32, 32
      %41 = vsyncadd [#allocation3], %s40
      %s43 = sshll.u32 [#allocation2], 4
      %s44 = int_to_ptr.vmem [resolvable:$true] %s43
      %46 = dma.vmem_to_hbm [thread:$0]  %s44, 32, %s1, [#allocation3]
    $region9: #{resnet_tsa_forward.19} parent=1 // pred_fallthru
      _
    // Predicated region
    $region10: #{resnet_tsa_forward.19} parent=1 // pred_check
      _
    $region11: #{resnet_tsa_forward.19} parent=1 // pred_check_branch
      %48 = sbr.rel (0) target = $region13
    $region12: #{resnet_tsa_forward.19} parent=1 // pred_region
      %49 = dma.done [#allocation3], 32
    $region13: #{resnet_tsa_forward.19} parent=1 // pred_fallthru
      _
    %50 = vsyncpa [#allocation3], 1

// kernel: resnet_tsa_forward.17
$region0: #{resnet_tsa_forward.17}
  #allocation0 [shape = 'u32[]', space=smem, size = 0x4, offset = 0x4, fixed_abs, tag = 'smem constant byte address 0x4 - core index']
  #allocation1 [shape = 'u32[144,128]{1,0:T(1,128)}', space=vmem, size = 0x12000, scoped, tag = 'internal scratch']
  %s0 = inlined_call_operand.vmem [shape: bf16[8,1152], index: 0, kind: input, shape index: {}]
  %s1 = inlined_call_operand.vmem [shape: bf16[1152,128], index: 1, kind: input, shape index: {}]
  %s2 = inlined_call_operand.vmem [shape: f32[1,128], index: 2, kind: input, shape index: {}]
  %s3 = inlined_call_operand.vmem [shape: bf16[8,128], index: 3, kind: output, shape index: {}]
  %s4 = sld [smem:[#allocation0]]
  $region22: #{resnet_tsa_forward.17} parent=0
    _
  %s6 = ssub.s32 1, %s4
  %s7 = scalar_select 0, %s6, %s4
  // Predicated region
  $region2: #{resnet_tsa_forward.17} parent=0 // pred_check
    _
  $region3: #{resnet_tsa_forward.17} parent=0 // pred_check_branch
    %9 = sbr.rel (0) target = $region5
  $region4: #{resnet_tsa_forward.17} parent=0 // pred_region
    _
  $region5: #{resnet_tsa_forward.17} parent=0 // pred_fallthru
    _
  // Predicated region
  $region6: #{resnet_tsa_forward.17} parent=0 // pred_check
    _
  $region7: #{resnet_tsa_forward.17} parent=0 // pred_check_branch
    %11 = sbr.rel (0) target = $region9
  $region8: #{resnet_tsa_forward.17} parent=0 // pred_region
    _
  $region9: #{resnet_tsa_forward.17} parent=0 // pred_fallthru
    _
  // Predicated region
  $region10: #{resnet_tsa_forward.17} parent=0 // pred_check
    _
  $region11: #{resnet_tsa_forward.17} parent=0 // pred_check_branch
    %13 = sbr.rel (0) target = $region13
  $region12: #{resnet_tsa_forward.17} parent=0 // pred_region
    _
  $region13: #{resnet_tsa_forward.17} parent=0 // pred_fallthru
    _
  %v15 = vld [vmem:[%s0] sm:$0xff]
  %v16 = vld [vmem:[%s0 + $0x8] sm:$0xff]
  %v17 = vld [vmem:[%s0 + $0x10] sm:$0xff]
  %v18 = vld [vmem:[%s0 + $0x18] sm:$0xff]
  %v19 = vld [vmem:[%s0 + $0x20] sm:$0xf]
  %v20 = vld [vmem:[%s1] sm:$0xf]
  %v21 = vld [vmem:[%s1 + $0x4] sm:$0xf]
  %v22 = vld [vmem:[%s1 + $0x8] sm:$0xf]
  %v23 = vld [vmem:[%s1 + $0xc] sm:$0xf]
  %v24 = vld [vmem:[%s1 + $0x10] sm:$0xf]
  %v25 = vld [vmem:[%s1 + $0x14] sm:$0xf]
  %v26 = vld [vmem:[%s1 + $0x18] sm:$0xf]
  %v27 = vld [vmem:[%s1 + $0x1c] sm:$0xf]
  %v28 = vld [vmem:[%s1 + $0x20] sm:$0xf]
  %v29 = vld [vmem:[%s1 + $0x24] sm:$0xf]
  %v30 = vld [vmem:[%s1 + $0x28] sm:$0xf]
  %v31 = vld [vmem:[%s1 + $0x2c] sm:$0xf]
  %v32 = vld [vmem:[%s1 + $0x30] sm:$0xf]
  %v33 = vld [vmem:[%s1 + $0x34] sm:$0xf]
  %v34 = vld [vmem:[%s1 + $0x38] sm:$0xf]
  %v35 = vld [vmem:[%s1 + $0x3c] sm:$0xf]
  %v36 = vld [vmem:[%s1 + $0x40] sm:$0xf]
  %v37 = vld [vmem:[%s1 + $0x44] sm:$0xf]
  %v38 = vld [vmem:[%s1 + $0x48] sm:$0xf]
  %v39 = vld [vmem:[%s1 + $0x4c] sm:$0xf]
  %v40 = vld [vmem:[%s1 + $0x50] sm:$0xf]
  %v41 = vld [vmem:[%s1 + $0x54] sm:$0xf]
  %v42 = vld [vmem:[%s1 + $0x58] sm:$0xf]
  %v43 = vld [vmem:[%s1 + $0x5c] sm:$0xf]
  %v44 = vld [vmem:[%s1 + $0x60] sm:$0xf]
  %v45 = vld [vmem:[%s1 + $0x64] sm:$0xf]
  %v46 = vld [vmem:[%s1 + $0x68] sm:$0xf]
  %v47 = vld [vmem:[%s1 + $0x6c] sm:$0xf]
  %v48 = vld [vmem:[%s1 + $0x70] sm:$0xf]
  %v49 = vld [vmem:[%s1 + $0x74] sm:$0xf]
  %v50 = vld [vmem:[%s1 + $0x78] sm:$0xf]
  %v51 = vld [vmem:[%s1 + $0x7c] sm:$0xf]
  %v52 = vld [vmem:[%s1 + $0x80] sm:$0xf]
  %v53 = vld [vmem:[%s1 + $0x84] sm:$0xf]
  %v54 = vld [vmem:[%s1 + $0x88] sm:$0xf]
  %v55 = vld [vmem:[%s1 + $0x8c] sm:$0xf]
  %v56 = vld [vmem:[%s1 + $0x90] sm:$0xf]
  %v57 = vld [vmem:[%s1 + $0x94] sm:$0xf]
  %v58 = vld [vmem:[%s1 + $0x98] sm:$0xf]
  %v59 = vld [vmem:[%s1 + $0x9c] sm:$0xf]
  %v60 = vld [vmem:[%s1 + $0xa0] sm:$0xf]
  %v61 = vld [vmem:[%s1 + $0xa4] sm:$0xf]
  %v62 = vld [vmem:[%s1 + $0xa8] sm:$0xf]
  %v63 = vld [vmem:[%s1 + $0xac] sm:$0xf]
  %v64 = vld [vmem:[%s1 + $0xb0] sm:$0xf]
  %v65 = vld [vmem:[%s1 + $0xb4] sm:$0xf]
  %v66 = vld [vmem:[%s1 + $0xb8] sm:$0xf]
  %v67 = vld [vmem:[%s1 + $0xbc] sm:$0xf]
  %v68 = vld [vmem:[%s1 + $0xc0] sm:$0xf]
  %v69 = vld [vmem:[%s1 + $0xc4] sm:$0xf]
  %v70 = vld [vmem:[%s1 + $0xc8] sm:$0xf]
  %v71 = vld [vmem:[%s1 + $0xcc] sm:$0xf]
  %v72 = vld [vmem:[%s1 + $0xd0] sm:$0xf]
  %v73 = vld [vmem:[%s1 + $0xd4] sm:$0xf]
  %v74 = vld [vmem:[%s1 + $0xd8] sm:$0xf]
  %v75 = vld [vmem:[%s1 + $0xdc] sm:$0xf]
  %v76 = vld [vmem:[%s1 + $0xe0] sm:$0xf]
  %v77 = vld [vmem:[%s1 + $0xe4] sm:$0xf]
  %v78 = vld [vmem:[%s1 + $0xe8] sm:$0xf]
  %v79 = vld [vmem:[%s1 + $0xec] sm:$0xf]
  %v80 = vld [vmem:[%s1 + $0xf0] sm:$0xf]
  %v81 = vld [vmem:[%s1 + $0xf4] sm:$0xf]
  %v82 = vld [vmem:[%s1 + $0xf8] sm:$0xf]
  %v83 = vld [vmem:[%s1 + $0xfc] sm:$0xf]
  %v84 = vld [vmem:[%s1 + $0x100] sm:$0xf]
  %v85 = vld [vmem:[%s1 + $0x104] sm:$0xf]
  %v86 = vld [vmem:[%s1 + $0x108] sm:$0xf]
  %v87 = vld [vmem:[%s1 + $0x10c] sm:$0xf]
  %v88 = vld [vmem:[%s1 + $0x110] sm:$0xf]
  %v89 = vld [vmem:[%s1 + $0x114] sm:$0xf]
  %v90 = vld [vmem:[%s1 + $0x118] sm:$0xf]
  %v91 = vld [vmem:[%s1 + $0x11c] sm:$0xf]
  %v92 = vld [vmem:[%s1 + $0x120] sm:$0xf]
  %v93 = vld [vmem:[%s1 + $0x124] sm:$0xf]
  %v94 = vld [vmem:[%s1 + $0x128] sm:$0xf]
  %v95 = vld [vmem:[%s1 + $0x12c] sm:$0xf]
  %v96 = vld [vmem:[%s1 + $0x130] sm:$0xf]
  %v97 = vld [vmem:[%s1 + $0x134] sm:$0xf]
  %v98 = vld [vmem:[%s1 + $0x138] sm:$0xf]
  %v99 = vld [vmem:[%s1 + $0x13c] sm:$0xf]
  %v100 = vld [vmem:[%s1 + $0x140] sm:$0xf]
  %v101 = vld [vmem:[%s1 + $0x144] sm:$0xf]
  %v102 = vld [vmem:[%s1 + $0x148] sm:$0xf]
  %v103 = vld [vmem:[%s1 + $0x14c] sm:$0xf]
  %v104 = vld [vmem:[%s1 + $0x150] sm:$0xf]
  %v105 = vld [vmem:[%s1 + $0x154] sm:$0xf]
  %v106 = vld [vmem:[%s1 + $0x158] sm:$0xf]
  %v107 = vld [vmem:[%s1 + $0x15c] sm:$0xf]
  %v108 = vld [vmem:[%s1 + $0x160] sm:$0xf]
  %v109 = vld [vmem:[%s1 + $0x164] sm:$0xf]
  %v110 = vld [vmem:[%s1 + $0x168] sm:$0xf]
  %v111 = vld [vmem:[%s1 + $0x16c] sm:$0xf]
  %v112 = vld [vmem:[%s1 + $0x170] sm:$0xf]
  %v113 = vld [vmem:[%s1 + $0x174] sm:$0xf]
  %v114 = vld [vmem:[%s1 + $0x178] sm:$0xf]
  %v115 = vld [vmem:[%s1 + $0x17c] sm:$0xf]
  %v116 = vld [vmem:[%s1 + $0x180] sm:$0xf]
  %v117 = vld [vmem:[%s1 + $0x184] sm:$0xf]
  %v118 = vld [vmem:[%s1 + $0x188] sm:$0xf]
  %v119 = vld [vmem:[%s1 + $0x18c] sm:$0xf]
  %v120 = vld [vmem:[%s1 + $0x190] sm:$0xf]
  %v121 = vld [vmem:[%s1 + $0x194] sm:$0xf]
  %v122 = vld [vmem:[%s1 + $0x198] sm:$0xf]
  %v123 = vld [vmem:[%s1 + $0x19c] sm:$0xf]
  %v124 = vld [vmem:[%s1 + $0x1a0] sm:$0xf]
  %v125 = vld [vmem:[%s1 + $0x1a4] sm:$0xf]
  %v126 = vld [vmem:[%s1 + $0x1a8] sm:$0xf]
  %v127 = vld [vmem:[%s1 + $0x1ac] sm:$0xf]
  %v128 = vld [vmem:[%s1 + $0x1b0] sm:$0xf]
  %v129 = vld [vmem:[%s1 + $0x1b4] sm:$0xf]
  %v130 = vld [vmem:[%s1 + $0x1b8] sm:$0xf]
  %v131 = vld [vmem:[%s1 + $0x1bc] sm:$0xf]
  %v132 = vld [vmem:[%s1 + $0x1c0] sm:$0xf]
  %v133 = vld [vmem:[%s1 + $0x1c4] sm:$0xf]
  %v134 = vld [vmem:[%s1 + $0x1c8] sm:$0xf]
  %v135 = vld [vmem:[%s1 + $0x1cc] sm:$0xf]
  %v136 = vld [vmem:[%s1 + $0x1d0] sm:$0xf]
  %v137 = vld [vmem:[%s1 + $0x1d4] sm:$0xf]
  %v138 = vld [vmem:[%s1 + $0x1d8] sm:$0xf]
  %v139 = vld [vmem:[%s1 + $0x1dc] sm:$0xf]
  %v140 = vld [vmem:[%s1 + $0x1e0] sm:$0xf]
  %v141 = vld [vmem:[%s1 + $0x1e4] sm:$0xf]
  %v142 = vld [vmem:[%s1 + $0x1e8] sm:$0xf]
  %v143 = vld [vmem:[%s1 + $0x1ec] sm:$0xf]
  %v144 = vld [vmem:[%s1 + $0x1f0] sm:$0xf]
  %v145 = vld [vmem:[%s1 + $0x1f4] sm:$0xf]
  %v146 = vld [vmem:[%s1 + $0x1f8] sm:$0xf]
  %v147 = vld [vmem:[%s1 + $0x1fc] sm:$0xf]
  %v148 = vld [vmem:[%s1 + $0x200] sm:$0xf]
  %v149 = vld [vmem:[%s1 + $0x204] sm:$0xf]
  %v150 = vld [vmem:[%s1 + $0x208] sm:$0xf]
  %v151 = vld [vmem:[%s1 + $0x20c] sm:$0xf]
  %v152 = vld [vmem:[%s1 + $0x210] sm:$0xf]
  %v153 = vld [vmem:[%s1 + $0x214] sm:$0xf]
  %v154 = vld [vmem:[%s1 + $0x218] sm:$0xf]
  %v155 = vld [vmem:[%s1 + $0x21c] sm:$0xf]
  %v156 = vld [vmem:[%s1 + $0x220] sm:$0xf]
  %v157 = vld [vmem:[%s1 + $0x224] sm:$0xf]
  %v158 = vld [vmem:[%s1 + $0x228] sm:$0xf]
  %v159 = vld [vmem:[%s1 + $0x22c] sm:$0xf]
  %v160 = vld [vmem:[%s1 + $0x230] sm:$0xf]
  %v161 = vld [vmem:[%s1 + $0x234] sm:$0xf]
  %v162 = vld [vmem:[%s1 + $0x238] sm:$0xf]
  %v163 = vld [vmem:[%s1 + $0x23c] sm:$0xf]
  %v164 = vld [vmem:[%s2] sm:$0x1]
  %v166 = vlaneseq
  %v167 = vshrl.u32 %v166, 7
  %v168 = vsub.s32 0, %v167
  %v169 = vrot.slane %v164, %v168
  %v176 = vunpack.c.l.b16 %v15
  %v177 = vunpack.c.h.b16 %v15
  %v178 = vunpack.c.l.b16 %v16
  %v179 = vunpack.c.h.b16 %v16
  %v180 = vunpack.c.l.b16 %v17
  %v181 = vunpack.c.h.b16 %v17
  %v182 = vunpack.c.l.b16 %v18
  %v183 = vunpack.c.h.b16 %v18
  %v184 = vunpack.c.l.b16 %v19
  %v185 = vpack.c.b16 %v176, %v176
  %v186 = vpack.c.b16 %v177, %v177
  %v187 = vpack.c.b16 %v178, %v178
  %v188 = vpack.c.b16 %v179, %v179
  %v189 = vpack.c.b16 %v180, %v180
  %v190 = vpack.c.b16 %v181, %v181
  %v191 = vpack.c.b16 %v182, %v182
  %v192 = vpack.c.b16 %v183, %v183
  %v193 = vpack.c.b16 %v184, %v184
  %v347 = vunpack.c.l.b16 %v20
  %v348 = vunpack.c.l.b16 %v21
  %v349 = vunpack.c.l.b16 %v22
  %v350 = vunpack.c.l.b16 %v23
  %v351 = vunpack.c.l.b16 %v24
  %v352 = vunpack.c.l.b16 %v25
  %v353 = vunpack.c.l.b16 %v26
  %v354 = vunpack.c.l.b16 %v27
  %v355 = vunpack.c.l.b16 %v28
  %v356 = vunpack.c.l.b16 %v29
  %v357 = vunpack.c.l.b16 %v30
  %v358 = vunpack.c.l.b16 %v31
  %v359 = vunpack.c.l.b16 %v32
  %v360 = vunpack.c.l.b16 %v33
  %v361 = vunpack.c.l.b16 %v34
  %v362 = vunpack.c.l.b16 %v35
  %v363 = vunpack.c.l.b16 %v36
  %v364 = vunpack.c.l.b16 %v37
  %v365 = vunpack.c.l.b16 %v38
  %v366 = vunpack.c.l.b16 %v39
  %v367 = vunpack.c.l.b16 %v40
  %v368 = vunpack.c.l.b16 %v41
  %v369 = vunpack.c.l.b16 %v42
  %v370 = vunpack.c.l.b16 %v43
  %v371 = vunpack.c.l.b16 %v44
  %v372 = vunpack.c.l.b16 %v45
  %v373 = vunpack.c.l.b16 %v46
  %v374 = vunpack.c.l.b16 %v47
  %v375 = vunpack.c.l.b16 %v48
  %v376 = vunpack.c.l.b16 %v49
  %v377 = vunpack.c.l.b16 %v50
  %v378 = vunpack.c.l.b16 %v51
  %v379 = vunpack.c.l.b16 %v52
  %v380 = vunpack.c.l.b16 %v53
  %v381 = vunpack.c.l.b16 %v54
  %v382 = vunpack.c.l.b16 %v55
  %v383 = vunpack.c.l.b16 %v56
  %v384 = vunpack.c.l.b16 %v57
  %v385 = vunpack.c.l.b16 %v58
  %v386 = vunpack.c.l.b16 %v59
  %v387 = vunpack.c.l.b16 %v60
  %v388 = vunpack.c.l.b16 %v61
  %v389 = vunpack.c.l.b16 %v62
  %v390 = vunpack.c.l.b16 %v63
  %v391 = vunpack.c.l.b16 %v64
  %v392 = vunpack.c.l.b16 %v65
  %v393 = vunpack.c.l.b16 %v66
  %v394 = vunpack.c.l.b16 %v67
  %v395 = vunpack.c.l.b16 %v68
  %v396 = vunpack.c.l.b16 %v69
  %v397 = vunpack.c.l.b16 %v70
  %v398 = vunpack.c.l.b16 %v71
  %v399 = vunpack.c.l.b16 %v72
  %v400 = vunpack.c.l.b16 %v73
  %v401 = vunpack.c.l.b16 %v74
  %v402 = vunpack.c.l.b16 %v75
  %v403 = vunpack.c.l.b16 %v76
  %v404 = vunpack.c.l.b16 %v77
  %v405 = vunpack.c.l.b16 %v78
  %v406 = vunpack.c.l.b16 %v79
  %v407 = vunpack.c.l.b16 %v80
  %v408 = vunpack.c.l.b16 %v81
  %v409 = vunpack.c.l.b16 %v82
  %v410 = vunpack.c.l.b16 %v83
  %v411 = vunpack.c.l.b16 %v84
  %v412 = vunpack.c.l.b16 %v85
  %v413 = vunpack.c.l.b16 %v86
  %v414 = vunpack.c.l.b16 %v87
  %v415 = vunpack.c.l.b16 %v88
  %v416 = vunpack.c.l.b16 %v89
  %v417 = vunpack.c.l.b16 %v90
  %v418 = vunpack.c.l.b16 %v91
  %v419 = vunpack.c.l.b16 %v92
  %v420 = vunpack.c.l.b16 %v93
  %v421 = vunpack.c.l.b16 %v94
  %v422 = vunpack.c.l.b16 %v95
  %v423 = vunpack.c.l.b16 %v96
  %v424 = vunpack.c.l.b16 %v97
  %v425 = vunpack.c.l.b16 %v98
  %v426 = vunpack.c.l.b16 %v99
  %v427 = vunpack.c.l.b16 %v100
  %v428 = vunpack.c.l.b16 %v101
  %v429 = vunpack.c.l.b16 %v102
  %v430 = vunpack.c.l.b16 %v103
  %v431 = vunpack.c.l.b16 %v104
  %v432 = vunpack.c.l.b16 %v105
  %v433 = vunpack.c.l.b16 %v106
  %v434 = vunpack.c.l.b16 %v107
  %v435 = vunpack.c.l.b16 %v108
  %v436 = vunpack.c.l.b16 %v109
  %v437 = vunpack.c.l.b16 %v110
  %v438 = vunpack.c.l.b16 %v111
  %v439 = vunpack.c.l.b16 %v112
  %v440 = vunpack.c.l.b16 %v113
  %v441 = vunpack.c.l.b16 %v114
  %v442 = vunpack.c.l.b16 %v115
  %v443 = vunpack.c.l.b16 %v116
  %v444 = vunpack.c.l.b16 %v117
  %v445 = vunpack.c.l.b16 %v118
  %v446 = vunpack.c.l.b16 %v119
  %v447 = vunpack.c.l.b16 %v120
  %v448 = vunpack.c.l.b16 %v121
  %v449 = vunpack.c.l.b16 %v122
  %v450 = vunpack.c.l.b16 %v123
  %v451 = vunpack.c.l.b16 %v124
  %v452 = vunpack.c.l.b16 %v125
  %v453 = vunpack.c.l.b16 %v126
  %v454 = vunpack.c.l.b16 %v127
  %v455 = vunpack.c.l.b16 %v128
  %v456 = vunpack.c.l.b16 %v129
  %v457 = vunpack.c.l.b16 %v130
  %v458 = vunpack.c.l.b16 %v131
  %v459 = vunpack.c.l.b16 %v132
  %v460 = vunpack.c.l.b16 %v133
  %v461 = vunpack.c.l.b16 %v134
  %v462 = vunpack.c.l.b16 %v135
  %v463 = vunpack.c.l.b16 %v136
  %v464 = vunpack.c.l.b16 %v137
  %v465 = vunpack.c.l.b16 %v138
  %v466 = vunpack.c.l.b16 %v139
  %v467 = vunpack.c.l.b16 %v140
  %v468 = vunpack.c.l.b16 %v141
  %v469 = vunpack.c.l.b16 %v142
  %v470 = vunpack.c.l.b16 %v143
  %v471 = vunpack.c.l.b16 %v144
  %v472 = vunpack.c.l.b16 %v145
  %v473 = vunpack.c.l.b16 %v146
  %v474 = vunpack.c.l.b16 %v147
  %v475 = vunpack.c.l.b16 %v148
  %v476 = vunpack.c.l.b16 %v149
  %v477 = vunpack.c.l.b16 %v150
  %v478 = vunpack.c.l.b16 %v151
  %v479 = vunpack.c.l.b16 %v152
  %v480 = vunpack.c.l.b16 %v153
  %v481 = vunpack.c.l.b16 %v154
  %v482 = vunpack.c.l.b16 %v155
  %v483 = vunpack.c.l.b16 %v156
  %v484 = vunpack.c.l.b16 %v157
  %v485 = vunpack.c.l.b16 %v158
  %v486 = vunpack.c.l.b16 %v159
  %v487 = vunpack.c.l.b16 %v160
  %v488 = vunpack.c.l.b16 %v161
  %v489 = vunpack.c.l.b16 %v162
  %v490 = vunpack.c.l.b16 %v163
  %v491 = vpack.c.b16 %v348, %v347
  %v492 = vpack.c.b16 %v350, %v349
  %v493 = vpack.c.b16 %v352, %v351
  %v494 = vpack.c.b16 %v354, %v353
  %v495 = vpack.c.b16 %v356, %v355
  %v496 = vpack.c.b16 %v358, %v357
  %v497 = vpack.c.b16 %v360, %v359
  %v498 = vpack.c.b16 %v362, %v361
  %v499 = vpack.c.b16 %v364, %v363
  %v500 = vpack.c.b16 %v366, %v365
  %v501 = vpack.c.b16 %v368, %v367
  %v502 = vpack.c.b16 %v370, %v369
  %v503 = vpack.c.b16 %v372, %v371
  %v504 = vpack.c.b16 %v374, %v373
  %v505 = vpack.c.b16 %v376, %v375
  %v506 = vpack.c.b16 %v378, %v377
  %v507 = vpack.c.b16 %v380, %v379
  %v508 = vpack.c.b16 %v382, %v381
  %v509 = vpack.c.b16 %v384, %v383
  %v510 = vpack.c.b16 %v386, %v385
  %v511 = vpack.c.b16 %v388, %v387
  %v512 = vpack.c.b16 %v390, %v389
  %v513 = vpack.c.b16 %v392, %v391
  %v514 = vpack.c.b16 %v394, %v393
  %v515 = vpack.c.b16 %v396, %v395
  %v516 = vpack.c.b16 %v398, %v397
  %v517 = vpack.c.b16 %v400, %v399
  %v518 = vpack.c.b16 %v402, %v401
  %v519 = vpack.c.b16 %v404, %v403
  %v520 = vpack.c.b16 %v406, %v405
  %v521 = vpack.c.b16 %v408, %v407
  %v522 = vpack.c.b16 %v410, %v409
  %v523 = vpack.c.b16 %v412, %v411
  %v524 = vpack.c.b16 %v414, %v413
  %v525 = vpack.c.b16 %v416, %v415
  %v526 = vpack.c.b16 %v418, %v417
  %v527 = vpack.c.b16 %v420, %v419
  %v528 = vpack.c.b16 %v422, %v421
  %v529 = vpack.c.b16 %v424, %v423
  %v530 = vpack.c.b16 %v426, %v425
  %v531 = vpack.c.b16 %v428, %v427
  %v532 = vpack.c.b16 %v430, %v429
  %v533 = vpack.c.b16 %v432, %v431
  %v534 = vpack.c.b16 %v434, %v433
  %v535 = vpack.c.b16 %v436, %v435
  %v536 = vpack.c.b16 %v438, %v437
  %v537 = vpack.c.b16 %v440, %v439
  %v538 = vpack.c.b16 %v442, %v441
  %v539 = vpack.c.b16 %v444, %v443
  %v540 = vpack.c.b16 %v446, %v445
  %v541 = vpack.c.b16 %v448, %v447
  %v542 = vpack.c.b16 %v450, %v449
  %v543 = vpack.c.b16 %v452, %v451
  %v544 = vpack.c.b16 %v454, %v453
  %v545 = vpack.c.b16 %v456, %v455
  %v546 = vpack.c.b16 %v458, %v457
  %v547 = vpack.c.b16 %v460, %v459
  %v548 = vpack.c.b16 %v462, %v461
  %v549 = vpack.c.b16 %v464, %v463
  %v550 = vpack.c.b16 %v466, %v465
  %v551 = vpack.c.b16 %v468, %v467
  %v552 = vpack.c.b16 %v470, %v469
  %v553 = vpack.c.b16 %v472, %v471
  %v554 = vpack.c.b16 %v474, %v473
  %v555 = vpack.c.b16 %v476, %v475
  %v556 = vpack.c.b16 %v478, %v477
  %v557 = vpack.c.b16 %v480, %v479
  %v558 = vpack.c.b16 %v482, %v481
  %v559 = vpack.c.b16 %v484, %v483
  %v560 = vpack.c.b16 %v486, %v485
  %v561 = vpack.c.b16 %v488, %v487
  %v562 = vpack.c.b16 %v490, %v489
  %635 = vmatprep.subr.bf16.mxu0 0
  %636 = vmatpush1.bf16.msra.mxu0 %v491
  %637 = vmatprep.subr.bf16.mxu0 0
  %638 = vmatpush1.bf16.msra.mxu0 %v492
  %639 = vmatprep.subr.bf16.mxu0 0
  %640 = vmatpush1.bf16.msra.mxu0 %v493
  %641 = vmatprep.subr.bf16.mxu0 0
  %642 = vmatpush1.bf16.msra.mxu0 %v494
  %643 = vmatprep.subr.bf16.mxu0 0
  %644 = vmatpush1.bf16.msra.mxu0 %v495
  %645 = vmatprep.subr.bf16.mxu0 0
  %646 = vmatpush1.bf16.msra.mxu0 %v496
  %647 = vmatprep.subr.bf16.mxu0 0
  %648 = vmatpush1.bf16.msra.mxu0 %v497
  %649 = vmatprep.subr.bf16.mxu0 0
  %650 = vmatpush1.bf16.msra.mxu0 %v498
  %651 = vmatprep.subr.bf16.mxu0 0
  %652 = vmatpush1.bf16.msra.mxu0 %v499
  %653 = vmatprep.subr.bf16.mxu0 0
  %654 = vmatpush1.bf16.msra.mxu0 %v500
  %655 = vmatprep.subr.bf16.mxu0 0
  %656 = vmatpush1.bf16.msra.mxu0 %v501
  %657 = vmatprep.subr.bf16.mxu0 0
  %658 = vmatpush1.bf16.msra.mxu0 %v502
  %659 = vmatprep.subr.bf16.mxu0 0
  %660 = vmatpush1.bf16.msra.mxu0 %v503
  %661 = vmatprep.subr.bf16.mxu0 0
  %662 = vmatpush1.bf16.msra.mxu0 %v504
  %663 = vmatprep.subr.bf16.mxu0 0
  %664 = vmatpush1.bf16.msra.mxu0 %v505
  %665 = vmatprep.subr.bf16.mxu0 0
  %666 = vmatpush1.bf16.msra.mxu0 %v506
  %667 = vmatprep.mubr.bf16.mxu0 %v186
  %668 = vmatmul.mubr.bf16.gmra.mrb[0].mxu0 %v185
  %v669 = vpop.f32.mrb[0].mxu0
  %v670 = vadd.f32 %v169, %v669
  %v671 = vpop.f32.mrb[0].mxu0
  %v672 = vpop.f32.mrb[0].mxu0
  %v673 = vpop.f32.mrb[0].mxu0
  %674 = vdwg.mxu0
  %675 = vmatprep.subr.bf16.mxu0 0
  %676 = vmatpush1.bf16.msra.mxu0 %v507
  %677 = vmatprep.subr.bf16.mxu0 0
  %678 = vmatpush1.bf16.msra.mxu0 %v508
  %679 = vmatprep.subr.bf16.mxu0 0
  %680 = vmatpush1.bf16.msra.mxu0 %v509
  %681 = vmatprep.subr.bf16.mxu0 0
  %682 = vmatpush1.bf16.msra.mxu0 %v510
  %683 = vmatprep.subr.bf16.mxu0 0
  %684 = vmatpush1.bf16.msra.mxu0 %v511
  %685 = vmatprep.subr.bf16.mxu0 0
  %686 = vmatpush1.bf16.msra.mxu0 %v512
  %687 = vmatprep.subr.bf16.mxu0 0
  %688 = vmatpush1.bf16.msra.mxu0 %v513
  %689 = vmatprep.subr.bf16.mxu0 0
  %690 = vmatpush1.bf16.msra.mxu0 %v514
  %691 = vmatprep.subr.bf16.mxu0 0
  %692 = vmatpush1.bf16.msra.mxu0 %v515
  %693 = vmatprep.subr.bf16.mxu0 0
  %694 = vmatpush1.bf16.msra.mxu0 %v516
  %695 = vmatprep.subr.bf16.mxu0 0
  %696 = vmatpush1.bf16.msra.mxu0 %v517
  %697 = vmatprep.subr.bf16.mxu0 0
  %698 = vmatpush1.bf16.msra.mxu0 %v518
  %699 = vmatprep.subr.bf16.mxu0 0
  %700 = vmatpush1.bf16.msra.mxu0 %v519
  %701 = vmatprep.subr.bf16.mxu0 0
  %702 = vmatpush1.bf16.msra.mxu0 %v520
  %703 = vmatprep.subr.bf16.mxu0 0
  %704 = vmatpush1.bf16.msra.mxu0 %v521
  %705 = vmatprep.subr.bf16.mxu0 0
  %706 = vmatpush1.bf16.msra.mxu0 %v522
  %707 = vmatprep.mubr.bf16.mxu0 %v188
  %708 = vmatmul.mubr.bf16.gmra.mrb[0].mxu0 %v187
  %v709 = vpop.f32.mrb[0].mxu0
  %v710 = vadd.f32 %v670, %v709
  %v711 = vpop.f32.mrb[0].mxu0
  %v712 = vpop.f32.mrb[0].mxu0
  %v713 = vpop.f32.mrb[0].mxu0
  %714 = vdwg.mxu0
  %715 = vmatprep.subr.bf16.mxu0 0
  %716 = vmatpush1.bf16.msra.mxu0 %v523
  %717 = vmatprep.subr.bf16.mxu0 0
  %718 = vmatpush1.bf16.msra.mxu0 %v524
  %719 = vmatprep.subr.bf16.mxu0 0
  %720 = vmatpush1.bf16.msra.mxu0 %v525
  %721 = vmatprep.subr.bf16.mxu0 0
  %722 = vmatpush1.bf16.msra.mxu0 %v526
  %723 = vmatprep.subr.bf16.mxu0 0
  %724 = vmatpush1.bf16.msra.mxu0 %v527
  %725 = vmatprep.subr.bf16.mxu0 0
  %726 = vmatpush1.bf16.msra.mxu0 %v528
  %727 = vmatprep.subr.bf16.mxu0 0
  %728 = vmatpush1.bf16.msra.mxu0 %v529
  %729 = vmatprep.subr.bf16.mxu0 0
  %730 = vmatpush1.bf16.msra.mxu0 %v530
  %731 = vmatprep.subr.bf16.mxu0 0
  %732 = vmatpush1.bf16.msra.mxu0 %v531
  %733 = vmatprep.subr.bf16.mxu0 0
  %734 = vmatpush1.bf16.msra.mxu0 %v532
  %735 = vmatprep.subr.bf16.mxu0 0
  %736 = vmatpush1.bf16.msra.mxu0 %v533
  %737 = vmatprep.subr.bf16.mxu0 0
  %738 = vmatpush1.bf16.msra.mxu0 %v534
  %739 = vmatprep.subr.bf16.mxu0 0
  %740 = vmatpush1.bf16.msra.mxu0 %v535
  %741 = vmatprep.subr.bf16.mxu0 0
  %742 = vmatpush1.bf16.msra.mxu0 %v536
  %743 = vmatprep.subr.bf16.mxu0 0
  %744 = vmatpush1.bf16.msra.mxu0 %v537
  %745 = vmatprep.subr.bf16.mxu0 0
  %746 = vmatpush1.bf16.msra.mxu0 %v538
  %747 = vmatprep.mubr.bf16.mxu0 %v190
  %748 = vmatmul.mubr.bf16.gmra.mrb[0].mxu0 %v189
  %v749 = vpop.f32.mrb[0].mxu0
  %v750 = vadd.f32 %v710, %v749
  %v751 = vpop.f32.mrb[0].mxu0
  %v752 = vpop.f32.mrb[0].mxu0
  %v753 = vpop.f32.mrb[0].mxu0
  %754 = vdwg.mxu0
  %755 = vmatprep.subr.bf16.mxu0 0
  %756 = vmatpush1.bf16.msra.mxu0 %v539
  %757 = vmatprep.subr.bf16.mxu0 0
  %758 = vmatpush1.bf16.msra.mxu0 %v540
  %759 = vmatprep.subr.bf16.mxu0 0
  %760 = vmatpush1.bf16.msra.mxu0 %v541
  %761 = vmatprep.subr.bf16.mxu0 0
  %762 = vmatpush1.bf16.msra.mxu0 %v542
  %763 = vmatprep.subr.bf16.mxu0 0
  %764 = vmatpush1.bf16.msra.mxu0 %v543
  %765 = vmatprep.subr.bf16.mxu0 0
  %766 = vmatpush1.bf16.msra.mxu0 %v544
  %767 = vmatprep.subr.bf16.mxu0 0
  %768 = vmatpush1.bf16.msra.mxu0 %v545
  %769 = vmatprep.subr.bf16.mxu0 0
  %770 = vmatpush1.bf16.msra.mxu0 %v546
  %771 = vmatprep.subr.bf16.mxu0 0
  %772 = vmatpush1.bf16.msra.mxu0 %v547
  %773 = vmatprep.subr.bf16.mxu0 0
  %774 = vmatpush1.bf16.msra.mxu0 %v548
  %775 = vmatprep.subr.bf16.mxu0 0
  %776 = vmatpush1.bf16.msra.mxu0 %v549
  %777 = vmatprep.subr.bf16.mxu0 0
  %778 = vmatpush1.bf16.msra.mxu0 %v550
  %779 = vmatprep.subr.bf16.mxu0 0
  %780 = vmatpush1.bf16.msra.mxu0 %v551
  %781 = vmatprep.subr.bf16.mxu0 0
  %782 = vmatpush1.bf16.msra.mxu0 %v552
  %783 = vmatprep.subr.bf16.mxu0 0
  %784 = vmatpush1.bf16.msra.mxu0 %v553
  %785 = vmatprep.subr.bf16.mxu0 0
  %786 = vmatpush1.bf16.msra.mxu0 %v554
  %787 = vmatprep.mubr.bf16.mxu0 %v192
  %788 = vmatmul.mubr.bf16.gmra.mrb[0].mxu0 %v191
  %v789 = vpop.f32.mrb[0].mxu0
  %v790 = vadd.f32 %v750, %v789
  %v791 = vpop.f32.mrb[0].mxu0
  %v792 = vpop.f32.mrb[0].mxu0
  %v793 = vpop.f32.mrb[0].mxu0
  %794 = vdwg.mxu0
  %795 = vmatprep.subr.bf16.mxu0 0
  %796 = vmatpush1.bf16.msra.mxu0 %v555
  %797 = vmatprep.subr.bf16.mxu0 0
  %798 = vmatpush1.bf16.msra.mxu0 %v556
  %799 = vmatprep.subr.bf16.mxu0 0
  %800 = vmatpush1.bf16.msra.mxu0 %v557
  %801 = vmatprep.subr.bf16.mxu0 0
  %802 = vmatpush1.bf16.msra.mxu0 %v558
  %803 = vmatprep.subr.bf16.mxu0 0
  %804 = vmatpush1.bf16.msra.mxu0 %v559
  %805 = vmatprep.subr.bf16.mxu0 0
  %806 = vmatpush1.bf16.msra.mxu0 %v560
  %807 = vmatprep.subr.bf16.mxu0 0
  %808 = vmatpush1.bf16.msra.mxu0 %v561
  %809 = vmatprep.subr.bf16.mxu0 0
  %810 = vmatpush1.bf16.msra.mxu0 %v562
  %811 = vmatprep.subr.bf16.mxu0 0
  %812 = vmatpush1.bf16.msra.mxu0 0
  %813 = vmatprep.subr.bf16.mxu0 0
  %814 = vmatpush1.bf16.msra.mxu0 0
  %815 = vmatprep.subr.bf16.mxu0 0
  %816 = vmatpush1.bf16.msra.mxu0 0
  %817 = vmatprep.subr.bf16.mxu0 0
  %818 = vmatpush1.bf16.msra.mxu0 0
  %819 = vmatprep.subr.bf16.mxu0 0
  %820 = vmatpush1.bf16.msra.mxu0 0
  %821 = vmatprep.subr.bf16.mxu0 0
  %822 = vmatpush1.bf16.msra.mxu0 0
  %823 = vmatprep.subr.bf16.mxu0 0
  %824 = vmatpush1.bf16.msra.mxu0 0
  %825 = vmatprep.subr.bf16.mxu0 0
  %826 = vmatpush1.bf16.msra.mxu0 0
  %827 = vmatprep.mubr.bf16.mxu0 0
  %828 = vmatmul.mubr.bf16.gmra.mrb[0].mxu0 %v193
  %v829 = vpop.f32.mrb[0].mxu0
  %v830 = vadd.f32 %v790, %v829
  %v831 = vpop.f32.mrb[0].mxu0
  %v832 = vpop.f32.mrb[0].mxu0
  %v833 = vpop.f32.mrb[0].mxu0
  %834 = vdwg.mxu0
  %v835 = vmax.f32 %v830, 0.0
  %v836 = vpack.c.bf16 %v835, %v835
  %837 = vst [vmem:[%s3] sm:$0xf] %v836
  // Predicated region
  $region14: #{resnet_tsa_forward.17} parent=0 // pred_check
    _
  $region15: #{resnet_tsa_forward.17} parent=0 // pred_check_branch
    %839 = sbr.rel (0) target = $region17
  $region16: #{resnet_tsa_forward.17} parent=0 // pred_region
    _
  $region17: #{resnet_tsa_forward.17} parent=0 // pred_fallthru
    _
  // Predicated region
  $region18: #{resnet_tsa_forward.17} parent=0 // pred_check
    _
  $region19: #{resnet_tsa_forward.17} parent=0 // pred_check_branch
    %841 = sbr.rel (0) target = $region21
  $region20: #{resnet_tsa_forward.17} parent=0 // pred_region
    _
  $region21: #{resnet_tsa_forward.17} parent=0 // pred_fallthru
    _

// kernel: resnet_tsa_forward.18
$region0: #{resnet_tsa_forward.18}
  #allocation0 [shape = 'u32[]', space=smem, size = 0x4, offset = 0x4, fixed_abs, tag = 'smem constant byte address 0x4 - core index']
  #allocation1 [shape = 'u32[144,128]{1,0:T(1,128)}', space=vmem, size = 0x12000, scoped, tag = 'internal scratch']
  %s0 = inlined_call_operand.vmem [shape: bf16[8,1152], index: 0, kind: input, shape index: {}]
  %s1 = inlined_call_operand.vmem [shape: bf16[1152,128], index: 1, kind: input, shape index: {}]
  %s2 = inlined_call_operand.vmem [shape: f32[1,128], index: 2, kind: input, shape index: {}]
  %s3 = inlined_call_operand.vmem [shape: bf16[8,128], index: 3, kind: input, shape index: {}]
  %s4 = inlined_call_operand.vmem [shape: bf16[128,128], index: 4, kind: input, shape index: {}]
  %s5 = inlined_call_operand.vmem [shape: f32[1,128], index: 5, kind: input, shape index: {}]
  %s6 = inlined_call_operand.vmem [shape: bf16[8,128], index: 6, kind: output, shape index: {}]
  %s7 = sld [smem:[#allocation0]]
  $region34: #{resnet_tsa_forward.18} parent=0
    _
  %s9 = ssub.s32 1, %s7
  %s10 = scalar_select 0, %s9, %s7
  // Predicated region
  $region2: #{resnet_tsa_forward.18} parent=0 // pred_check
    _
  $region3: #{resnet_tsa_forward.18} parent=0 // pred_check_branch
    %12 = sbr.rel (0) target = $region5
  $region4: #{resnet_tsa_forward.18} parent=0 // pred_region
    _
  $region5: #{resnet_tsa_forward.18} parent=0 // pred_fallthru
    _
  // Predicated region
  $region6: #{resnet_tsa_forward.18} parent=0 // pred_check
    _
  $region7: #{resnet_tsa_forward.18} parent=0 // pred_check_branch
    %14 = sbr.rel (0) target = $region9
  $region8: #{resnet_tsa_forward.18} parent=0 // pred_region
    _
  $region9: #{resnet_tsa_forward.18} parent=0 // pred_fallthru
    _
  // Predicated region
  $region10: #{resnet_tsa_forward.18} parent=0 // pred_check
    _
  $region11: #{resnet_tsa_forward.18} parent=0 // pred_check_branch
    %16 = sbr.rel (0) target = $region13
  $region12: #{resnet_tsa_forward.18} parent=0 // pred_region
    _
  $region13: #{resnet_tsa_forward.18} parent=0 // pred_fallthru
    _
  // Predicated region
  $region14: #{resnet_tsa_forward.18} parent=0 // pred_check
    _
  $region15: #{resnet_tsa_forward.18} parent=0 // pred_check_branch
    %18 = sbr.rel (0) target = $region17
  $region16: #{resnet_tsa_forward.18} parent=0 // pred_region
    _
  $region17: #{resnet_tsa_forward.18} parent=0 // pred_fallthru
    _
  // Predicated region
  $region18: #{resnet_tsa_forward.18} parent=0 // pred_check
    _
  $region19: #{resnet_tsa_forward.18} parent=0 // pred_check_branch
    %20 = sbr.rel (0) target = $region21
  $region20: #{resnet_tsa_forward.18} parent=0 // pred_region
    _
  $region21: #{resnet_tsa_forward.18} parent=0 // pred_fallthru
    _
  // Predicated region
  $region22: #{resnet_tsa_forward.18} parent=0 // pred_check
    _
  $region23: #{resnet_tsa_forward.18} parent=0 // pred_check_branch
    %22 = sbr.rel (0) target = $region25
  $region24: #{resnet_tsa_forward.18} parent=0 // pred_region
    _
  $region25: #{resnet_tsa_forward.18} parent=0 // pred_fallthru
    _
  %v24 = vld [vmem:[%s0] sm:$0xff]
  %v25 = vld [vmem:[%s0 + $0x8] sm:$0xff]
  %v26 = vld [vmem:[%s0 + $0x10] sm:$0xff]
  %v27 = vld [vmem:[%s0 + $0x18] sm:$0xff]
  %v28 = vld [vmem:[%s0 + $0x20] sm:$0xf]
  %v29 = vld [vmem:[%s1] sm:$0xf]
  %v30 = vld [vmem:[%s1 + $0x4] sm:$0xf]
  %v31 = vld [vmem:[%s1 + $0x8] sm:$0xf]
  %v32 = vld [vmem:[%s1 + $0xc] sm:$0xf]
  %v33 = vld [vmem:[%s1 + $0x10] sm:$0xf]
  %v34 = vld [vmem:[%s1 + $0x14] sm:$0xf]
  %v35 = vld [vmem:[%s1 + $0x18] sm:$0xf]
  %v36 = vld [vmem:[%s1 + $0x1c] sm:$0xf]
  %v37 = vld [vmem:[%s1 + $0x20] sm:$0xf]
  %v38 = vld [vmem:[%s1 + $0x24] sm:$0xf]
  %v39 = vld [vmem:[%s1 + $0x28] sm:$0xf]
  %v40 = vld [vmem:[%s1 + $0x2c] sm:$0xf]
  %v41 = vld [vmem:[%s1 + $0x30] sm:$0xf]
  %v42 = vld [vmem:[%s1 + $0x34] sm:$0xf]
  %v43 = vld [vmem:[%s1 + $0x38] sm:$0xf]
  %v44 = vld [vmem:[%s1 + $0x3c] sm:$0xf]
  %v45 = vld [vmem:[%s1 + $0x40] sm:$0xf]
  %v46 = vld [vmem:[%s1 + $0x44] sm:$0xf]
  %v47 = vld [vmem:[%s1 + $0x48] sm:$0xf]
  %v48 = vld [vmem:[%s1 + $0x4c] sm:$0xf]
  %v49 = vld [vmem:[%s1 + $0x50] sm:$0xf]
  %v50 = vld [vmem:[%s1 + $0x54] sm:$0xf]
  %v51 = vld [vmem:[%s1 + $0x58] sm:$0xf]
  %v52 = vld [vmem:[%s1 + $0x5c] sm:$0xf]
  %v53 = vld [vmem:[%s1 + $0x60] sm:$0xf]
  %v54 = vld [vmem:[%s1 + $0x64] sm:$0xf]
  %v55 = vld [vmem:[%s1 + $0x68] sm:$0xf]
  %v56 = vld [vmem:[%s1 + $0x6c] sm:$0xf]
  %v57 = vld [vmem:[%s1 + $0x70] sm:$0xf]
  %v58 = vld [vmem:[%s1 + $0x74] sm:$0xf]
  %v59 = vld [vmem:[%s1 + $0x78] sm:$0xf]
  %v60 = vld [vmem:[%s1 + $0x7c] sm:$0xf]
  %v61 = vld [vmem:[%s1 + $0x80] sm:$0xf]
  %v62 = vld [vmem:[%s1 + $0x84] sm:$0xf]
  %v63 = vld [vmem:[%s1 + $0x88] sm:$0xf]
  %v64 = vld [vmem:[%s1 + $0x8c] sm:$0xf]
  %v65 = vld [vmem:[%s1 + $0x90] sm:$0xf]
  %v66 = vld [vmem:[%s1 + $0x94] sm:$0xf]
  %v67 = vld [vmem:[%s1 + $0x98] sm:$0xf]
  %v68 = vld [vmem:[%s1 + $0x9c] sm:$0xf]
  %v69 = vld [vmem:[%s1 + $0xa0] sm:$0xf]
  %v70 = vld [vmem:[%s1 + $0xa4] sm:$0xf]
  %v71 = vld [vmem:[%s1 + $0xa8] sm:$0xf]
  %v72 = vld [vmem:[%s1 + $0xac] sm:$0xf]
  %v73 = vld [vmem:[%s1 + $0xb0] sm:$0xf]
  %v74 = vld [vmem:[%s1 + $0xb4] sm:$0xf]
  %v75 = vld [vmem:[%s1 + $0xb8] sm:$0xf]
  %v76 = vld [vmem:[%s1 + $0xbc] sm:$0xf]
  %v77 = vld [vmem:[%s1 + $0xc0] sm:$0xf]
  %v78 = vld [vmem:[%s1 + $0xc4] sm:$0xf]
  %v79 = vld [vmem:[%s1 + $0xc8] sm:$0xf]
  %v80 = vld [vmem:[%s1 + $0xcc] sm:$0xf]
  %v81 = vld [vmem:[%s1 + $0xd0] sm:$0xf]
  %v82 = vld [vmem:[%s1 + $0xd4] sm:$0xf]
  %v83 = vld [vmem:[%s1 + $0xd8] sm:$0xf]
  %v84 = vld [vmem:[%s1 + $0xdc] sm:$0xf]
  %v85 = vld [vmem:[%s1 + $0xe0] sm:$0xf]
  %v86 = vld [vmem:[%s1 + $0xe4] sm:$0xf]
  %v87 = vld [vmem:[%s1 + $0xe8] sm:$0xf]
  %v88 = vld [vmem:[%s1 + $0xec] sm:$0xf]
  %v89 = vld [vmem:[%s1 + $0xf0] sm:$0xf]
  %v90 = vld [vmem:[%s1 + $0xf4] sm:$0xf]
  %v91 = vld [vmem:[%s1 + $0xf8] sm:$0xf]
  %v92 = vld [vmem:[%s1 + $0xfc] sm:$0xf]
  %v93 = vld [vmem:[%s1 + $0x100] sm:$0xf]
  %v94 = vld [vmem:[%s1 + $0x104] sm:$0xf]
  %v95 = vld [vmem:[%s1 + $0x108] sm:$0xf]
  %v96 = vld [vmem:[%s1 + $0x10c] sm:$0xf]
  %v97 = vld [vmem:[%s1 + $0x110] sm:$0xf]
  %v98 = vld [vmem:[%s1 + $0x114] sm:$0xf]
  %v99 = vld [vmem:[%s1 + $0x118] sm:$0xf]
  %v100 = vld [vmem:[%s1 + $0x11c] sm:$0xf]
  %v101 = vld [vmem:[%s1 + $0x120] sm:$0xf]
  %v102 = vld [vmem:[%s1 + $0x124] sm:$0xf]
  %v103 = vld [vmem:[%s1 + $0x128] sm:$0xf]
  %v104 = vld [vmem:[%s1 + $0x12c] sm:$0xf]
  %v105 = vld [vmem:[%s1 + $0x130] sm:$0xf]
  %v106 = vld [vmem:[%s1 + $0x134] sm:$0xf]
  %v107 = vld [vmem:[%s1 + $0x138] sm:$0xf]
  %v108 = vld [vmem:[%s1 + $0x13c] sm:$0xf]
  %v109 = vld [vmem:[%s1 + $0x140] sm:$0xf]
  %v110 = vld [vmem:[%s1 + $0x144] sm:$0xf]
  %v111 = vld [vmem:[%s1 + $0x148] sm:$0xf]
  %v112 = vld [vmem:[%s1 + $0x14c] sm:$0xf]
  %v113 = vld [vmem:[%s1 + $0x150] sm:$0xf]
  %v114 = vld [vmem:[%s1 + $0x154] sm:$0xf]
  %v115 = vld [vmem:[%s1 + $0x158] sm:$0xf]
  %v116 = vld [vmem:[%s1 + $0x15c] sm:$0xf]
  %v117 = vld [vmem:[%s1 + $0x160] sm:$0xf]
  %v118 = vld [vmem:[%s1 + $0x164] sm:$0xf]
  %v119 = vld [vmem:[%s1 + $0x168] sm:$0xf]
  %v120 = vld [vmem:[%s1 + $0x16c] sm:$0xf]
  %v121 = vld [vmem:[%s1 + $0x170] sm:$0xf]
  %v122 = vld [vmem:[%s1 + $0x174] sm:$0xf]
  %v123 = vld [vmem:[%s1 + $0x178] sm:$0xf]
  %v124 = vld [vmem:[%s1 + $0x17c] sm:$0xf]
  %v125 = vld [vmem:[%s1 + $0x180] sm:$0xf]
  %v126 = vld [vmem:[%s1 + $0x184] sm:$0xf]
  %v127 = vld [vmem:[%s1 + $0x188] sm:$0xf]
  %v128 = vld [vmem:[%s1 + $0x18c] sm:$0xf]
  %v129 = vld [vmem:[%s1 + $0x190] sm:$0xf]
  %v130 = vld [vmem:[%s1 + $0x194] sm:$0xf]
  %v131 = vld [vmem:[%s1 + $0x198] sm:$0xf]
  %v132 = vld [vmem:[%s1 + $0x19c] sm:$0xf]
  %v133 = vld [vmem:[%s1 + $0x1a0] sm:$0xf]
  %v134 = vld [vmem:[%s1 + $0x1a4] sm:$0xf]
  %v135 = vld [vmem:[%s1 + $0x1a8] sm:$0xf]
  %v136 = vld [vmem:[%s1 + $0x1ac] sm:$0xf]
  %v137 = vld [vmem:[%s1 + $0x1b0] sm:$0xf]
  %v138 = vld [vmem:[%s1 + $0x1b4] sm:$0xf]
  %v139 = vld [vmem:[%s1 + $0x1b8] sm:$0xf]
  %v140 = vld [vmem:[%s1 + $0x1bc] sm:$0xf]
  %v141 = vld [vmem:[%s1 + $0x1c0] sm:$0xf]
  %v142 = vld [vmem:[%s1 + $0x1c4] sm:$0xf]
  %v143 = vld [vmem:[%s1 + $0x1c8] sm:$0xf]
  %v144 = vld [vmem:[%s1 + $0x1cc] sm:$0xf]
  %v145 = vld [vmem:[%s1 + $0x1d0] sm:$0xf]
  %v146 = vld [vmem:[%s1 + $0x1d4] sm:$0xf]
  %v147 = vld [vmem:[%s1 + $0x1d8] sm:$0xf]
  %v148 = vld [vmem:[%s1 + $0x1dc] sm:$0xf]
  %v149 = vld [vmem:[%s1 + $0x1e0] sm:$0xf]
  %v150 = vld [vmem:[%s1 + $0x1e4] sm:$0xf]
  %v151 = vld [vmem:[%s1 + $0x1e8] sm:$0xf]
  %v152 = vld [vmem:[%s1 + $0x1ec] sm:$0xf]
  %v153 = vld [vmem:[%s1 + $0x1f0] sm:$0xf]
  %v154 = vld [vmem:[%s1 + $0x1f4] sm:$0xf]
  %v155 = vld [vmem:[%s1 + $0x1f8] sm:$0xf]
  %v156 = vld [vmem:[%s1 + $0x1fc] sm:$0xf]
  %v157 = vld [vmem:[%s1 + $0x200] sm:$0xf]
  %v158 = vld [vmem:[%s1 + $0x204] sm:$0xf]
  %v159 = vld [vmem:[%s1 + $0x208] sm:$0xf]
  %v160 = vld [vmem:[%s1 + $0x20c] sm:$0xf]
  %v161 = vld [vmem:[%s1 + $0x210] sm:$0xf]
  %v162 = vld [vmem:[%s1 + $0x214] sm:$0xf]
  %v163 = vld [vmem:[%s1 + $0x218] sm:$0xf]
  %v164 = vld [vmem:[%s1 + $0x21c] sm:$0xf]
  %v165 = vld [vmem:[%s1 + $0x220] sm:$0xf]
  %v166 = vld [vmem:[%s1 + $0x224] sm:$0xf]
  %v167 = vld [vmem:[%s1 + $0x228] sm:$0xf]
  %v168 = vld [vmem:[%s1 + $0x22c] sm:$0xf]
  %v169 = vld [vmem:[%s1 + $0x230] sm:$0xf]
  %v170 = vld [vmem:[%s1 + $0x234] sm:$0xf]
  %v171 = vld [vmem:[%s1 + $0x238] sm:$0xf]
  %v172 = vld [vmem:[%s1 + $0x23c] sm:$0xf]
  %v173 = vld [vmem:[%s3] sm:$0xf]
  %v174 = vld [vmem:[%s4] sm:$0xf]
  %v175 = vld [vmem:[%s4 + $0x4] sm:$0xf]
  %v176 = vld [vmem:[%s4 + $0x8] sm:$0xf]
  %v177 = vld [vmem:[%s4 + $0xc] sm:$0xf]
  %v178 = vld [vmem:[%s4 + $0x10] sm:$0xf]
  %v179 = vld [vmem:[%s4 + $0x14] sm:$0xf]
  %v180 = vld [vmem:[%s4 + $0x18] sm:$0xf]
  %v181 = vld [vmem:[%s4 + $0x1c] sm:$0xf]
  %v182 = vld [vmem:[%s4 + $0x20] sm:$0xf]
  %v183 = vld [vmem:[%s4 + $0x24] sm:$0xf]
  %v184 = vld [vmem:[%s4 + $0x28] sm:$0xf]
  %v185 = vld [vmem:[%s4 + $0x2c] sm:$0xf]
  %v186 = vld [vmem:[%s4 + $0x30] sm:$0xf]
  %v187 = vld [vmem:[%s4 + $0x34] sm:$0xf]
  %v188 = vld [vmem:[%s4 + $0x38] sm:$0xf]
  %v189 = vld [vmem:[%s4 + $0x3c] sm:$0xf]
  %v206 = vunpack.c.l.b16 %v174
  %v207 = vunpack.c.l.b16 %v175
  %v208 = vunpack.c.l.b16 %v176
  %v209 = vunpack.c.l.b16 %v177
  %v210 = vunpack.c.l.b16 %v178
  %v211 = vunpack.c.l.b16 %v179
  %v212 = vunpack.c.l.b16 %v180
  %v213 = vunpack.c.l.b16 %v181
  %v214 = vunpack.c.l.b16 %v182
  %v215 = vunpack.c.l.b16 %v183
  %v216 = vunpack.c.l.b16 %v184
  %v217 = vunpack.c.l.b16 %v185
  %v218 = vunpack.c.l.b16 %v186
  %v219 = vunpack.c.l.b16 %v187
  %v220 = vunpack.c.l.b16 %v188
  %v221 = vunpack.c.l.b16 %v189
  %v222 = vpack.c.b16 %v207, %v206
  %v223 = vpack.c.b16 %v209, %v208
  %v224 = vpack.c.b16 %v211, %v210
  %v225 = vpack.c.b16 %v213, %v212
  %v226 = vpack.c.b16 %v215, %v214
  %v227 = vpack.c.b16 %v217, %v216
  %v228 = vpack.c.b16 %v219, %v218
  %v229 = vpack.c.b16 %v221, %v220
  %238 = vmatprep.subr.bf16.mxu0 0
  %239 = vmatpush1.bf16.msra.mxu0 %v222
  %240 = vmatprep.subr.bf16.mxu0 0
  %241 = vmatpush1.bf16.msra.mxu0 %v223
  %242 = vmatprep.subr.bf16.mxu0 0
  %243 = vmatpush1.bf16.msra.mxu0 %v224
  %244 = vmatprep.subr.bf16.mxu0 0
  %245 = vmatpush1.bf16.msra.mxu0 %v225
  %246 = vmatprep.subr.bf16.mxu0 0
  %247 = vmatpush1.bf16.msra.mxu0 %v226
  %248 = vmatprep.subr.bf16.mxu0 0
  %249 = vmatpush1.bf16.msra.mxu0 %v227
  %250 = vmatprep.subr.bf16.mxu0 0
  %251 = vmatpush1.bf16.msra.mxu0 %v228
  %252 = vmatprep.subr.bf16.mxu0 0
  %253 = vmatpush1.bf16.msra.mxu0 %v229
  %254 = vmatprep.subr.bf16.mxu0 0
  %255 = vmatpush1.bf16.msra.mxu0 0
  %256 = vmatprep.subr.bf16.mxu0 0
  %257 = vmatpush1.bf16.msra.mxu0 0
  %258 = vmatprep.subr.bf16.mxu0 0
  %259 = vmatpush1.bf16.msra.mxu0 0
  %260 = vmatprep.subr.bf16.mxu0 0
  %261 = vmatpush1.bf16.msra.mxu0 0
  %262 = vmatprep.subr.bf16.mxu0 0
  %263 = vmatpush1.bf16.msra.mxu0 0
  %264 = vmatprep.subr.bf16.mxu0 0
  %265 = vmatpush1.bf16.msra.mxu0 0
  %266 = vmatprep.subr.bf16.mxu0 0
  %267 = vmatpush1.bf16.msra.mxu0 0
  %268 = vmatprep.subr.bf16.mxu0 0
  %269 = vmatpush1.bf16.msra.mxu0 0
  %270 = vmatprep.mubr.bf16.mxu0 0
  %271 = vmatmul.mubr.bf16.gmra.mrb[0].mxu0 %v173
  %v272 = vpop.f32.mrb[0].mxu0
  %v273 = vadd.f32 0.0, %v272
  %v274 = vpop.f32.mrb[0].mxu0
  %v275 = vpop.f32.mrb[0].mxu0
  %v276 = vpop.f32.mrb[0].mxu0
  %277 = vdwg.mxu0
  %v278 = vld [vmem:[%s2] sm:$0x1]
  %v280 = vlaneseq
  %v281 = vshrl.u32 %v280, 7
  %v282 = vsub.s32 0, %v281
  %v283 = vrot.slane %v278, %v282
  %v290 = vunpack.c.l.b16 %v24
  %v291 = vunpack.c.h.b16 %v24
  %v292 = vunpack.c.l.b16 %v25
  %v293 = vunpack.c.h.b16 %v25
  %v294 = vunpack.c.l.b16 %v26
  %v295 = vunpack.c.h.b16 %v26
  %v296 = vunpack.c.l.b16 %v27
  %v297 = vunpack.c.h.b16 %v27
  %v298 = vunpack.c.l.b16 %v28
  %v299 = vpack.c.b16 %v290, %v290
  %v300 = vpack.c.b16 %v291, %v291
  %v301 = vpack.c.b16 %v292, %v292
  %v302 = vpack.c.b16 %v293, %v293
  %v303 = vpack.c.b16 %v294, %v294
  %v304 = vpack.c.b16 %v295, %v295
  %v305 = vpack.c.b16 %v296, %v296
  %v306 = vpack.c.b16 %v297, %v297
  %v307 = vpack.c.b16 %v298, %v298
  %v461 = vunpack.c.l.b16 %v29
  %v462 = vunpack.c.l.b16 %v30
  %v463 = vunpack.c.l.b16 %v31
  %v464 = vunpack.c.l.b16 %v32
  %v465 = vunpack.c.l.b16 %v33
  %v466 = vunpack.c.l.b16 %v34
  %v467 = vunpack.c.l.b16 %v35
  %v468 = vunpack.c.l.b16 %v36
  %v469 = vunpack.c.l.b16 %v37
  %v470 = vunpack.c.l.b16 %v38
  %v471 = vunpack.c.l.b16 %v39
  %v472 = vunpack.c.l.b16 %v40
  %v473 = vunpack.c.l.b16 %v41
  %v474 = vunpack.c.l.b16 %v42
  %v475 = vunpack.c.l.b16 %v43
  %v476 = vunpack.c.l.b16 %v44
  %v477 = vunpack.c.l.b16 %v45
  %v478 = vunpack.c.l.b16 %v46
  %v479 = vunpack.c.l.b16 %v47
  %v480 = vunpack.c.l.b16 %v48
  %v481 = vunpack.c.l.b16 %v49
  %v482 = vunpack.c.l.b16 %v50
  %v483 = vunpack.c.l.b16 %v51
  %v484 = vunpack.c.l.b16 %v52
  %v485 = vunpack.c.l.b16 %v53
  %v486 = vunpack.c.l.b16 %v54
  %v487 = vunpack.c.l.b16 %v55
  %v488 = vunpack.c.l.b16 %v56
  %v489 = vunpack.c.l.b16 %v57
  %v490 = vunpack.c.l.b16 %v58
  %v491 = vunpack.c.l.b16 %v59
  %v492 = vunpack.c.l.b16 %v60
  %v493 = vunpack.c.l.b16 %v61
  %v494 = vunpack.c.l.b16 %v62
  %v495 = vunpack.c.l.b16 %v63
  %v496 = vunpack.c.l.b16 %v64
  %v497 = vunpack.c.l.b16 %v65
  %v498 = vunpack.c.l.b16 %v66
  %v499 = vunpack.c.l.b16 %v67
  %v500 = vunpack.c.l.b16 %v68
  %v501 = vunpack.c.l.b16 %v69
  %v502 = vunpack.c.l.b16 %v70
  %v503 = vunpack.c.l.b16 %v71
  %v504 = vunpack.c.l.b16 %v72
  %v505 = vunpack.c.l.b16 %v73
  %v506 = vunpack.c.l.b16 %v74
  %v507 = vunpack.c.l.b16 %v75
  %v508 = vunpack.c.l.b16 %v76
  %v509 = vunpack.c.l.b16 %v77
  %v510 = vunpack.c.l.b16 %v78
  %v511 = vunpack.c.l.b16 %v79
  %v512 = vunpack.c.l.b16 %v80
  %v513 = vunpack.c.l.b16 %v81
  %v514 = vunpack.c.l.b16 %v82
  %v515 = vunpack.c.l.b16 %v83
  %v516 = vunpack.c.l.b16 %v84
  %v517 = vunpack.c.l.b16 %v85
  %v518 = vunpack.c.l.b16 %v86
  %v519 = vunpack.c.l.b16 %v87
  %v520 = vunpack.c.l.b16 %v88
  %v521 = vunpack.c.l.b16 %v89
  %v522 = vunpack.c.l.b16 %v90
  %v523 = vunpack.c.l.b16 %v91
  %v524 = vunpack.c.l.b16 %v92
  %v525 = vunpack.c.l.b16 %v93
  %v526 = vunpack.c.l.b16 %v94
  %v527 = vunpack.c.l.b16 %v95
  %v528 = vunpack.c.l.b16 %v96
  %v529 = vunpack.c.l.b16 %v97
  %v530 = vunpack.c.l.b16 %v98
  %v531 = vunpack.c.l.b16 %v99
  %v532 = vunpack.c.l.b16 %v100
  %v533 = vunpack.c.l.b16 %v101
  %v534 = vunpack.c.l.b16 %v102
  %v535 = vunpack.c.l.b16 %v103
  %v536 = vunpack.c.l.b16 %v104
  %v537 = vunpack.c.l.b16 %v105
  %v538 = vunpack.c.l.b16 %v106
  %v539 = vunpack.c.l.b16 %v107
  %v540 = vunpack.c.l.b16 %v108
  %v541 = vunpack.c.l.b16 %v109
  %v542 = vunpack.c.l.b16 %v110
  %v543 = vunpack.c.l.b16 %v111
  %v544 = vunpack.c.l.b16 %v112
  %v545 = vunpack.c.l.b16 %v113
  %v546 = vunpack.c.l.b16 %v114
  %v547 = vunpack.c.l.b16 %v115
  %v548 = vunpack.c.l.b16 %v116
  %v549 = vunpack.c.l.b16 %v117
  %v550 = vunpack.c.l.b16 %v118
  %v551 = vunpack.c.l.b16 %v119
  %v552 = vunpack.c.l.b16 %v120
  %v553 = vunpack.c.l.b16 %v121
  %v554 = vunpack.c.l.b16 %v122
  %v555 = vunpack.c.l.b16 %v123
  %v556 = vunpack.c.l.b16 %v124
  %v557 = vunpack.c.l.b16 %v125
  %v558 = vunpack.c.l.b16 %v126
  %v559 = vunpack.c.l.b16 %v127
  %v560 = vunpack.c.l.b16 %v128
  %v561 = vunpack.c.l.b16 %v129
  %v562 = vunpack.c.l.b16 %v130
  %v563 = vunpack.c.l.b16 %v131
  %v564 = vunpack.c.l.b16 %v132
  %v565 = vunpack.c.l.b16 %v133
  %v566 = vunpack.c.l.b16 %v134
  %v567 = vunpack.c.l.b16 %v135
  %v568 = vunpack.c.l.b16 %v136
  %v569 = vunpack.c.l.b16 %v137
  %v570 = vunpack.c.l.b16 %v138
  %v571 = vunpack.c.l.b16 %v139
  %v572 = vunpack.c.l.b16 %v140
  %v573 = vunpack.c.l.b16 %v141
  %v574 = vunpack.c.l.b16 %v142
  %v575 = vunpack.c.l.b16 %v143
  %v576 = vunpack.c.l.b16 %v144
  %v577 = vunpack.c.l.b16 %v145
  %v578 = vunpack.c.l.b16 %v146
  %v579 = vunpack.c.l.b16 %v147
  %v580 = vunpack.c.l.b16 %v148
  %v581 = vunpack.c.l.b16 %v149
  %v582 = vunpack.c.l.b16 %v150
  %v583 = vunpack.c.l.b16 %v151
  %v584 = vunpack.c.l.b16 %v152
  %v585 = vunpack.c.l.b16 %v153
  %v586 = vunpack.c.l.b16 %v154
  %v587 = vunpack.c.l.b16 %v155
  %v588 = vunpack.c.l.b16 %v156
  %v589 = vunpack.c.l.b16 %v157
  %v590 = vunpack.c.l.b16 %v158
  %v591 = vunpack.c.l.b16 %v159
  %v592 = vunpack.c.l.b16 %v160
  %v593 = vunpack.c.l.b16 %v161
  %v594 = vunpack.c.l.b16 %v162
  %v595 = vunpack.c.l.b16 %v163
  %v596 = vunpack.c.l.b16 %v164
  %v597 = vunpack.c.l.b16 %v165
  %v598 = vunpack.c.l.b16 %v166
  %v599 = vunpack.c.l.b16 %v167
  %v600 = vunpack.c.l.b16 %v168
  %v601 = vunpack.c.l.b16 %v169
  %v602 = vunpack.c.l.b16 %v170
  %v603 = vunpack.c.l.b16 %v171
  %v604 = vunpack.c.l.b16 %v172
  %v605 = vpack.c.b16 %v462, %v461
  %v606 = vpack.c.b16 %v464, %v463
  %v607 = vpack.c.b16 %v466, %v465
  %v608 = vpack.c.b16 %v468, %v467
  %v609 = vpack.c.b16 %v470, %v469
  %v610 = vpack.c.b16 %v472, %v471
  %v611 = vpack.c.b16 %v474, %v473
  %v612 = vpack.c.b16 %v476, %v475
  %v613 = vpack.c.b16 %v478, %v477
  %v614 = vpack.c.b16 %v480, %v479
  %v615 = vpack.c.b16 %v482, %v481
  %v616 = vpack.c.b16 %v484, %v483
  %v617 = vpack.c.b16 %v486, %v485
  %v618 = vpack.c.b16 %v488, %v487
  %v619 = vpack.c.b16 %v490, %v489
  %v620 = vpack.c.b16 %v492, %v491
  %v621 = vpack.c.b16 %v494, %v493
  %v622 = vpack.c.b16 %v496, %v495
  %v623 = vpack.c.b16 %v498, %v497
  %v624 = vpack.c.b16 %v500, %v499
  %v625 = vpack.c.b16 %v502, %v501
  %v626 = vpack.c.b16 %v504, %v503
  %v627 = vpack.c.b16 %v506, %v505
  %v628 = vpack.c.b16 %v508, %v507
  %v629 = vpack.c.b16 %v510, %v509
  %v630 = vpack.c.b16 %v512, %v511
  %v631 = vpack.c.b16 %v514, %v513
  %v632 = vpack.c.b16 %v516, %v515
  %v633 = vpack.c.b16 %v518, %v517
  %v634 = vpack.c.b16 %v520, %v519
  %v635 = vpack.c.b16 %v522, %v521
  %v636 = vpack.c.b16 %v524, %v523
  %v637 = vpack.c.b16 %v526, %v525
  %v638 = vpack.c.b16 %v528, %v527
  %v639 = vpack.c.b16 %v530, %v529
  %v640 = vpack.c.b16 %v532, %v531
  %v641 = vpack.c.b16 %v534, %v533
  %v642 = vpack.c.b16 %v536, %v535
  %v643 = vpack.c.b16 %v538, %v537
  %v644 = vpack.c.b16 %v540, %v539
  %v645 = vpack.c.b16 %v542, %v541
  %v646 = vpack.c.b16 %v544, %v543
  %v647 = vpack.c.b16 %v546, %v545
  %v648 = vpack.c.b16 %v548, %v547
  %v649 = vpack.c.b16 %v550, %v549
  %v650 = vpack.c.b16 %v552, %v551
  %v651 = vpack.c.b16 %v554, %v553
  %v652 = vpack.c.b16 %v556, %v555
  %v653 = vpack.c.b16 %v558, %v557
  %v654 = vpack.c.b16 %v560, %v559
  %v655 = vpack.c.b16 %v562, %v561
  %v656 = vpack.c.b16 %v564, %v563
  %v657 = vpack.c.b16 %v566, %v565
  %v658 = vpack.c.b16 %v568, %v567
  %v659 = vpack.c.b16 %v570, %v569
  %v660 = vpack.c.b16 %v572, %v571
  %v661 = vpack.c.b16 %v574, %v573
  %v662 = vpack.c.b16 %v576, %v575
  %v663 = vpack.c.b16 %v578, %v577
  %v664 = vpack.c.b16 %v580, %v579
  %v665 = vpack.c.b16 %v582, %v581
  %v666 = vpack.c.b16 %v584, %v583
  %v667 = vpack.c.b16 %v586, %v585
  %v668 = vpack.c.b16 %v588, %v587
  %v669 = vpack.c.b16 %v590, %v589
  %v670 = vpack.c.b16 %v592, %v591
  %v671 = vpack.c.b16 %v594, %v593
  %v672 = vpack.c.b16 %v596, %v595
  %v673 = vpack.c.b16 %v598, %v597
  %v674 = vpack.c.b16 %v600, %v599
  %v675 = vpack.c.b16 %v602, %v601
  %v676 = vpack.c.b16 %v604, %v603
  %749 = vmatprep.subr.bf16.mxu0 0
  %750 = vmatpush1.bf16.msra.mxu0 %v605
  %751 = vmatprep.subr.bf16.mxu0 0
  %752 = vmatpush1.bf16.msra.mxu0 %v606
  %753 = vmatprep.subr.bf16.mxu0 0
  %754 = vmatpush1.bf16.msra.mxu0 %v607
  %755 = vmatprep.subr.bf16.mxu0 0
  %756 = vmatpush1.bf16.msra.mxu0 %v608
  %757 = vmatprep.subr.bf16.mxu0 0
  %758 = vmatpush1.bf16.msra.mxu0 %v609
  %759 = vmatprep.subr.bf16.mxu0 0
  %760 = vmatpush1.bf16.msra.mxu0 %v610
  %761 = vmatprep.subr.bf16.mxu0 0
  %762 = vmatpush1.bf16.msra.mxu0 %v611
  %763 = vmatprep.subr.bf16.mxu0 0
  %764 = vmatpush1.bf16.msra.mxu0 %v612
  %765 = vmatprep.subr.bf16.mxu0 0
  %766 = vmatpush1.bf16.msra.mxu0 %v613
  %767 = vmatprep.subr.bf16.mxu0 0
  %768 = vmatpush1.bf16.msra.mxu0 %v614
  %769 = vmatprep.subr.bf16.mxu0 0
  %770 = vmatpush1.bf16.msra.mxu0 %v615
  %771 = vmatprep.subr.bf16.mxu0 0
  %772 = vmatpush1.bf16.msra.mxu0 %v616
  %773 = vmatprep.subr.bf16.mxu0 0
  %774 = vmatpush1.bf16.msra.mxu0 %v617
  %775 = vmatprep.subr.bf16.mxu0 0
  %776 = vmatpush1.bf16.msra.mxu0 %v618
  %777 = vmatprep.subr.bf16.mxu0 0
  %778 = vmatpush1.bf16.msra.mxu0 %v619
  %779 = vmatprep.subr.bf16.mxu0 0
  %780 = vmatpush1.bf16.msra.mxu0 %v620
  %781 = vmatprep.mubr.bf16.mxu0 %v300
  %782 = vmatmul.mubr.bf16.gmra.mrb[0].mxu0 %v299
  %v783 = vpop.f32.mrb[0].mxu0
  %v784 = vadd.f32 %v283, %v783
  %v785 = vpop.f32.mrb[0].mxu0
  %v786 = vpop.f32.mrb[0].mxu0
  %v787 = vpop.f32.mrb[0].mxu0
  %788 = vdwg.mxu0
  %789 = vmatprep.subr.bf16.mxu0 0
  %790 = vmatpush1.bf16.msra.mxu0 %v621
  %791 = vmatprep.subr.bf16.mxu0 0
  %792 = vmatpush1.bf16.msra.mxu0 %v622
  %793 = vmatprep.subr.bf16.mxu0 0
  %794 = vmatpush1.bf16.msra.mxu0 %v623
  %795 = vmatprep.subr.bf16.mxu0 0
  %796 = vmatpush1.bf16.msra.mxu0 %v624
  %797 = vmatprep.subr.bf16.mxu0 0
  %798 = vmatpush1.bf16.msra.mxu0 %v625
  %799 = vmatprep.subr.bf16.mxu0 0
  %800 = vmatpush1.bf16.msra.mxu0 %v626
  %801 = vmatprep.subr.bf16.mxu0 0
  %802 = vmatpush1.bf16.msra.mxu0 %v627
  %803 = vmatprep.subr.bf16.mxu0 0
  %804 = vmatpush1.bf16.msra.mxu0 %v628
  %805 = vmatprep.subr.bf16.mxu0 0
  %806 = vmatpush1.bf16.msra.mxu0 %v629
  %807 = vmatprep.subr.bf16.mxu0 0
  %808 = vmatpush1.bf16.msra.mxu0 %v630
  %809 = vmatprep.subr.bf16.mxu0 0
  %810 = vmatpush1.bf16.msra.mxu0 %v631
  %811 = vmatprep.subr.bf16.mxu0 0
  %812 = vmatpush1.bf16.msra.mxu0 %v632
  %813 = vmatprep.subr.bf16.mxu0 0
  %814 = vmatpush1.bf16.msra.mxu0 %v633
  %815 = vmatprep.subr.bf16.mxu0 0
  %816 = vmatpush1.bf16.msra.mxu0 %v634
  %817 = vmatprep.subr.bf16.mxu0 0
  %818 = vmatpush1.bf16.msra.mxu0 %v635
  %819 = vmatprep.subr.bf16.mxu0 0
  %820 = vmatpush1.bf16.msra.mxu0 %v636
  %821 = vmatprep.mubr.bf16.mxu0 %v302
  %822 = vmatmul.mubr.bf16.gmra.mrb[0].mxu0 %v301
  %v823 = vpop.f32.mrb[0].mxu0
  %v824 = vadd.f32 %v784, %v823
  %v825 = vpop.f32.mrb[0].mxu0
  %v826 = vpop.f32.mrb[0].mxu0
  %v827 = vpop.f32.mrb[0].mxu0
  %828 = vdwg.mxu0
  %829 = vmatprep.subr.bf16.mxu0 0
  %830 = vmatpush1.bf16.msra.mxu0 %v637
  %831 = vmatprep.subr.bf16.mxu0 0
  %832 = vmatpush1.bf16.msra.mxu0 %v638
  %833 = vmatprep.subr.bf16.mxu0 0
  %834 = vmatpush1.bf16.msra.mxu0 %v639
  %835 = vmatprep.subr.bf16.mxu0 0
  %836 = vmatpush1.bf16.msra.mxu0 %v640
  %837 = vmatprep.subr.bf16.mxu0 0
  %838 = vmatpush1.bf16.msra.mxu0 %v641
  %839 = vmatprep.subr.bf16.mxu0 0
  %840 = vmatpush1.bf16.msra.mxu0 %v642
  %841 = vmatprep.subr.bf16.mxu0 0
  %842 = vmatpush1.bf16.msra.mxu0 %v643
  %843 = vmatprep.subr.bf16.mxu0 0
  %844 = vmatpush1.bf16.msra.mxu0 %v644
  %845 = vmatprep.subr.bf16.mxu0 0
  %846 = vmatpush1.bf16.msra.mxu0 %v645
  %847 = vmatprep.subr.bf16.mxu0 0
  %848 = vmatpush1.bf16.msra.mxu0 %v646
  %849 = vmatprep.subr.bf16.mxu0 0
  %850 = vmatpush1.bf16.msra.mxu0 %v647
  %851 = vmatprep.subr.bf16.mxu0 0
  %852 = vmatpush1.bf16.msra.mxu0 %v648
  %853 = vmatprep.subr.bf16.mxu0 0
  %854 = vmatpush1.bf16.msra.mxu0 %v649
  %855 = vmatprep.subr.bf16.mxu0 0
  %856 = vmatpush1.bf16.msra.mxu0 %v650
  %857 = vmatprep.subr.bf16.mxu0 0
  %858 = vmatpush1.bf16.msra.mxu0 %v651
  %859 = vmatprep.subr.bf16.mxu0 0
  %860 = vmatpush1.bf16.msra.mxu0 %v652
  %861 = vmatprep.mubr.bf16.mxu0 %v304
  %862 = vmatmul.mubr.bf16.gmra.mrb[0].mxu0 %v303
  %v863 = vpop.f32.mrb[0].mxu0
  %v864 = vadd.f32 %v824, %v863
  %v865 = vpop.f32.mrb[0].mxu0
  %v866 = vpop.f32.mrb[0].mxu0
  %v867 = vpop.f32.mrb[0].mxu0
  %868 = vdwg.mxu0
  %869 = vmatprep.subr.bf16.mxu0 0
  %870 = vmatpush1.bf16.msra.mxu0 %v653
  %871 = vmatprep.subr.bf16.mxu0 0
  %872 = vmatpush1.bf16.msra.mxu0 %v654
  %873 = vmatprep.subr.bf16.mxu0 0
  %874 = vmatpush1.bf16.msra.mxu0 %v655
  %875 = vmatprep.subr.bf16.mxu0 0
  %876 = vmatpush1.bf16.msra.mxu0 %v656
  %877 = vmatprep.subr.bf16.mxu0 0
  %878 = vmatpush1.bf16.msra.mxu0 %v657
  %879 = vmatprep.subr.bf16.mxu0 0
  %880 = vmatpush1.bf16.msra.mxu0 %v658
  %881 = vmatprep.subr.bf16.mxu0 0
  %882 = vmatpush1.bf16.msra.mxu0 %v659
  %883 = vmatprep.subr.bf16.mxu0 0
  %884 = vmatpush1.bf16.msra.mxu0 %v660
  %885 = vmatprep.subr.bf16.mxu0 0
  %886 = vmatpush1.bf16.msra.mxu0 %v661
  %887 = vmatprep.subr.bf16.mxu0 0
  %888 = vmatpush1.bf16.msra.mxu0 %v662
  %889 = vmatprep.subr.bf16.mxu0 0
  %890 = vmatpush1.bf16.msra.mxu0 %v663
  %891 = vmatprep.subr.bf16.mxu0 0
  %892 = vmatpush1.bf16.msra.mxu0 %v664
  %893 = vmatprep.subr.bf16.mxu0 0
  %894 = vmatpush1.bf16.msra.mxu0 %v665
  %895 = vmatprep.subr.bf16.mxu0 0
  %896 = vmatpush1.bf16.msra.mxu0 %v666
  %897 = vmatprep.subr.bf16.mxu0 0
  %898 = vmatpush1.bf16.msra.mxu0 %v667
  %899 = vmatprep.subr.bf16.mxu0 0
  %900 = vmatpush1.bf16.msra.mxu0 %v668
  %901 = vmatprep.mubr.bf16.mxu0 %v306
  %902 = vmatmul.mubr.bf16.gmra.mrb[0].mxu0 %v305
  %v903 = vpop.f32.mrb[0].mxu0
  %v904 = vadd.f32 %v864, %v903
  %v905 = vpop.f32.mrb[0].mxu0
  %v906 = vpop.f32.mrb[0].mxu0
  %v907 = vpop.f32.mrb[0].mxu0
  %908 = vdwg.mxu0
  %909 = vmatprep.subr.bf16.mxu0 0
  %910 = vmatpush1.bf16.msra.mxu0 %v669
  %911 = vmatprep.subr.bf16.mxu0 0
  %912 = vmatpush1.bf16.msra.mxu0 %v670
  %913 = vmatprep.subr.bf16.mxu0 0
  %914 = vmatpush1.bf16.msra.mxu0 %v671
  %915 = vmatprep.subr.bf16.mxu0 0
  %916 = vmatpush1.bf16.msra.mxu0 %v672
  %917 = vmatprep.subr.bf16.mxu0 0
  %918 = vmatpush1.bf16.msra.mxu0 %v673
  %919 = vmatprep.subr.bf16.mxu0 0
  %920 = vmatpush1.bf16.msra.mxu0 %v674
  %921 = vmatprep.subr.bf16.mxu0 0
  %922 = vmatpush1.bf16.msra.mxu0 %v675
  %923 = vmatprep.subr.bf16.mxu0 0
  %924 = vmatpush1.bf16.msra.mxu0 %v676
  %925 = vmatprep.subr.bf16.mxu0 0
  %926 = vmatpush1.bf16.msra.mxu0 0
  %927 = vmatprep.subr.bf16.mxu0 0
  %928 = vmatpush1.bf16.msra.mxu0 0
  %929 = vmatprep.subr.bf16.mxu0 0
  %930 = vmatpush1.bf16.msra.mxu0 0
  %931 = vmatprep.subr.bf16.mxu0 0
  %932 = vmatpush1.bf16.msra.mxu0 0
  %933 = vmatprep.subr.bf16.mxu0 0
  %934 = vmatpush1.bf16.msra.mxu0 0
  %935 = vmatprep.subr.bf16.mxu0 0
  %936 = vmatpush1.bf16.msra.mxu0 0
  %937 = vmatprep.subr.bf16.mxu0 0
  %938 = vmatpush1.bf16.msra.mxu0 0
  %939 = vmatprep.subr.bf16.mxu0 0
  %940 = vmatpush1.bf16.msra.mxu0 0
  %941 = vmatprep.mubr.bf16.mxu0 0
  %942 = vmatmul.mubr.bf16.gmra.mrb[0].mxu0 %v307
  %v943 = vpop.f32.mrb[0].mxu0
  %v944 = vadd.f32 %v904, %v943
  %v945 = vpop.f32.mrb[0].mxu0
  %v946 = vpop.f32.mrb[0].mxu0
  %v947 = vpop.f32.mrb[0].mxu0
  %948 = vdwg.mxu0
  %v949 = vadd.f32 %v944, %v273
  %v950 = vld [vmem:[%s5] sm:$0x1]
  %v952 = vlaneseq
  %v953 = vshrl.u32 %v952, 7
  %v954 = vsub.s32 0, %v953
  %v955 = vrot.slane %v950, %v954
  %v957 = vadd.f32 %v949, %v955
  %v958 = vmax.f32 %v957, 0.0
  %v959 = vpack.c.bf16 %v958, %v958
  %960 = vst [vmem:[%s6] sm:$0xf] %v959
  // Predicated region
  $region26: #{resnet_tsa_forward.18} parent=0 // pred_check
    _
  $region27: #{resnet_tsa_forward.18} parent=0 // pred_check_branch
    %962 = sbr.rel (0) target = $region29
  $region28: #{resnet_tsa_forward.18} parent=0 // pred_region
    _
  $region29: #{resnet_tsa_forward.18} parent=0 // pred_fallthru
    _
  // Predicated region
  $region30: #{resnet_tsa_forward.18} parent=0 // pred_check
    _
  $region31: #{resnet_tsa_forward.18} parent=0 // pred_check_branch
    %964 = sbr.rel (0) target = $region33
  $region32: #{resnet_tsa_forward.18} parent=0 // pred_region
    _
  $region33: #{resnet_tsa_forward.18} parent=0 // pred_fallthru
    _

</llo_original>
